<compile_context>
chip_gen: v5e
topology: v5e:2x2
jax: 0.10.0
libtpu: 0.0.40
codegen_flags: <defaults>
</compile_context>

<pallas_src>
import functools

import jax
import jax.numpy as jnp
import numpy as np
from jax import lax
from jax.experimental import pallas as pl
from jax.experimental.pallas import tpu as pltpu

MODEL_DIM = 64
NUM_HEADS = 8
FFN_DIM = 512
LN_EPS = 1e-5
FFN_CHUNK = 256   # fills the 256-wide MXU on v6e/v7x; two passes on v5e's 128-wide MXU


# ----------------------------------------------------------------------------
# Fused kernel: everything in one body, no grid.
# ----------------------------------------------------------------------------
def grtrans_kernel(
    # inputs
    vsc_ref,       # (1, n_view)            SMEM  : (softmax(view_w))**-1
    w_ref,         # (n_view, n, n)         VMEM  : per-view adjacency slabs
    wemb_ref,      # (n, model_dim)               : seq_embedding weight (in,out)
    bemb_ref,      # (1, model_dim)
    wq_ref,        # (model_dim, model_dim)       : linear_q weight (in,out)
    bq_ref,        # (1, model_dim)
    wk_ref, bk_ref,
    wv_ref, bv_ref,
    wf_ref,        # (model_dim, model_dim)       : linear_final (in,out)
    bf_ref,        # (1, model_dim)
    w1_ref,        # (model_dim, ffn_dim)
    b1_ref,        # (1, ffn_dim)
    w2_ref,        # (ffn_dim, model_dim)
    b2_ref,        # (1, model_dim)
    l1w_ref,       # (model_dim, n_cluster)
    l1b_ref,       # (1, n_cluster)
    mask_ref,      # (n, model_dim)        0/1 : mask[rph*b+a, f] = [f//d == b]
    grepl_ref,     # (model_dim, model_dim) 0/1: grepl[f, g]      = [f%d == g%d]
    rep16_ref,     # (rph, n)              0/1 : rep16[a, rho]    = [rho%rph == a]
    # outputs
    cf_ref,        # (n, n_cluster)
    wnew_ref,      # (n, n)
    # scratch
    x_ref,         # (n, model_dim)
    q_ref, k_ref, v_ref,   # (n, model_dim) flat projections
    ctx_ref,       # (n, model_dim) flat context (torch layout)
    *, num_heads, eps, scale, ffn_chunk):
    n_view = w_ref.shape[0]
    n = w_ref.shape[1]
    model_dim = wemb_ref.shape[1]
    rph = n // num_heads
    ffn_dim = w1_ref.shape[1]
    t_last = (((1,), (1,)), ((), ()))     # contract last dims: A @ B^T on the MXU
    f32 = jnp.float32

    # ---- 1) view mix:  W_new = sum_v W[:, :, v] * (softmax(view_w) ** -1)[v]
    acc = w_ref[0] * vsc_ref[0, 0]
    for v in range(1, n_view):
        acc = acc + w_ref[v] * vsc_ref[0, v]
    wnew_ref[...] = acc

    # ---- 2) X = seq_embedding(W_new)
    x = jnp.dot(acc, wemb_ref[...], preferred_element_type=f32) + bemb_ref[...]
    x_ref[...] = x

    # ---- 3) flat q/k/v projections (lane-dense, biases folded ONCE).
    q_ref[...] = jnp.dot(x, wq_ref[...], preferred_element_type=f32) + bq_ref[...]
    k_ref[...] = jnp.dot(x, wk_ref[...], preferred_element_type=f32) + bk_ref[...]
    v_ref[...] = jnp.dot(x, wv_ref[...], preferred_element_type=f32) + bv_ref[...]

    mask = mask_ref[...]
    grepl = grepl_ref[...]
    rep16 = rep16_ref[...]

    # ---- 4) multi-head attention: per head, lane-dense masked formulation
    #         (contraction depth 64 everywhere, no (·, d) tensors, no masked
    #          8-lane copies; writeback is already in torch's flat layout).
    for h in range(num_heads):
        r0 = h * rph
        qf = q_ref[r0:r0 + rph, :]                     # (rph, model_dim)
        kf = k_ref[r0:r0 + rph, :]
        vf = v_ref[r0:r0 + rph, :]

        aq = jnp.concatenate([qf] * num_heads, axis=0) * mask        # (n, md)
        qt = jnp.dot(aq, grepl, preferred_element_type=f32)          # (n, md)
        ak = jnp.concatenate([kf] * num_heads, axis=0) * mask
        s = lax.dot_general(qt, ak, t_last, preferred_element_type=f32)  # (n, n)
        if scale and scale != 1.0:     # torch: `if scale: attention *= scale`; ==1.0 here
            s = s * scale
        s = s - jnp.max(s, axis=-1, keepdims=True)
        e = jnp.exp(s)
        p = e / jnp.sum(e, axis=-1, keepdims=True)                   # exact softmax
        av = jnp.concatenate([vf] * num_heads, axis=0) * mask
        dm = jnp.dot(p, av, preferred_element_type=f32)              # (n, md)
        eg = jnp.dot(dm, grepl, preferred_element_type=f32)          # (n, md)
        # collapse back to torch's flat context rows [16h, 16h+16)
        ctx_ref[r0:r0 + rph, :] = jnp.dot(rep16, eg * mask,
                                          preferred_element_type=f32)

    # ---- 5) linear_final on the flat context: ONE lane-dense matmul.
    attn_out = jnp.dot(ctx_ref[...], wf_ref[...], preferred_element_type=f32) + bf_ref[...]

    def layernorm(t):
        mu = jnp.mean(t, axis=-1, keepdims=True)
        tc = t - mu
        var = jnp.mean(tc * tc, axis=-1, keepdims=True)
        return tc * lax.rsqrt(var + eps)

    h1 = layernorm(x_ref[...] + attn_out)

    # ---- 6) position-wise FFN, chunked over the hidden dim (lane-aligned slices).
    chunk = ffn_chunk if ffn_dim % ffn_chunk == 0 else ffn_dim
    acc_ff = None
    for c in range(0, ffn_dim, chunk):
        a1 = jnp.dot(h1, w1_ref[:, c:c + chunk], preferred_element_type=f32)
        a1 = jnp.maximum(a1 + b1_ref[:, c:c + chunk], 0.0)
        t = jnp.dot(a1, w2_ref[c:c + chunk, :], preferred_element_type=f32)
        acc_ff = t if acc_ff is None else acc_ff + t
    h2 = layernorm(h1 + acc_ff + b2_ref[...])

    # ---- 7) cluster head + exact row softmax (this is the checked output).
    logits = jnp.dot(h2, l1w_ref[...], preferred_element_type=f32) + l1b_ref[...]
    logits = logits - jnp.max(logits, axis=-1, keepdims=True)
    ecf = jnp.exp(logits)
    cf_ref[...] = ecf / jnp.sum(ecf, axis=-1, keepdims=True)


# ----------------------------------------------------------------------------
# Wrapper
# ----------------------------------------------------------------------------
def grtrans_forward(W, params):
    n, _, n_view = W.shape
    model_dim = params["wemb"].shape[1]
    n_cluster = params["l1w"].shape[1]
    num_heads = NUM_HEADS
    assert model_dim % num_heads == 0 and n % num_heads == 0
    d = model_dim // num_heads
    rph = n // num_heads
    # torch uses integer floor division: (d // num_heads) ** -0.5; guard against
    # configs where that silently becomes 0 (d < num_heads).
    assert d // num_heads >= 1, "scale=(d//num_heads)**-0.5 requires d >= num_heads"
    scale = float((d // num_heads) ** (-0.5))        # == 1.0 for model_dim=64, heads=8
    f32 = jnp.float32

    view_scale = (1.0 / jax.nn.softmax(params["view_w"])).reshape(1, n_view).astype(f32)
    # views-last -> views-major so each view is a lane-dense (n, n) slab.
    W_t = jnp.transpose(W, (2, 0, 1))

    # Constant 0/1 shuffle matrices (data-independent -> folded at compile time).
    row_grp = jnp.arange(n, dtype=jnp.int32) // rph
    col_grp = jnp.arange(model_dim, dtype=jnp.int32) // d
    mask = (row_grp[:, None] == col_grp[None, :]).astype(f32)                # (n, md)
    lane_res = jnp.arange(model_dim, dtype=jnp.int32) % d
    grepl = (lane_res[:, None] == lane_res[None, :]).astype(f32)             # (md, md)
    rep16 = (jnp.arange(n, dtype=jnp.int32)[None, :] % rph ==
             jnp.arange(rph, dtype=jnp.int32)[:, None]).astype(f32)          # (rph, n)

    b2d = lambda name: params[name].reshape(1, -1)

    vm = pl.BlockSpec(memory_space=pltpu.MemorySpace.VMEM)
    sm = pl.BlockSpec(memory_space=pltpu.MemorySpace.SMEM)
    kernel = functools.partial(grtrans_kernel, num_heads=num_heads, eps=LN_EPS,
                               scale=scale, ffn_chunk=FFN_CHUNK)

    CF, W_new = pl.pallas_call(
        kernel,
        out_shape=(
            jax.ShapeDtypeStruct((n, n_cluster), f32),
            jax.ShapeDtypeStruct((n, n), f32),
        ),
        in_specs=[sm] + [vm] * 20,
        out_specs=(vm, vm),
        scratch_shapes=[
            pltpu.VMEM((n, model_dim), f32),   # x
            pltpu.VMEM((n, model_dim), f32),   # q (flat)
            pltpu.VMEM((n, model_dim), f32),   # k (flat)
            pltpu.VMEM((n, model_dim), f32),   # v (flat)
            pltpu.VMEM((n, model_dim), f32),   # ctx (flat, torch layout)
        ],
    )(view_scale, W_t,
      params["wemb"], b2d("bemb"),
      params["wq"], b2d("bq"), params["wk"], b2d("bk"), params["wv"], b2d("bv"),
      params["wf"], b2d("bf"),
      params["w1"], b2d("b1"), params["w2"], b2d("b2"),
      params["l1w"], b2d("l1b"),
      mask, grepl, rep16)

    return CF, W_new


# ----------------------------------------------------------------------------
# Pure-JAX reference (for correctness check)
# ----------------------------------------------------------------------------
def ref_forward(W, params):
    n, _, n_view = W.shape
    model_dim = params["wemb"].shape[1]
    d = model_dim // NUM_HEADS
    scale = float((d // NUM_HEADS) ** (-0.5))

    def layernorm(x):
        mu = jnp.mean(x, axis=-1, keepdims=True)
        var = jnp.mean((x - mu) ** 2, axis=-1, keepdims=True)
        return (x - mu) / jnp.sqrt(var + LN_EPS)

    wv = 1.0 / jax.nn.softmax(params["view_w"])
    W_new = jnp.einsum("ijv,v->ij", W, wv)
    X = W_new @ params["wemb"] + params["bemb"]
    q = (X @ params["wq"] + params["bq"]).reshape(NUM_HEADS, -1, d)
    k = (X @ params["wk"] + params["bk"]).reshape(NUM_HEADS, -1, d)
    v = (X @ params["wv"] + params["bv"]).reshape(NUM_HEADS, -1, d)
    s = jnp.einsum("hqd,hkd->hqk", q, k) * scale
    a = jax.nn.softmax(s, axis=-1)
    ctx = jnp.einsum("hqk,hkd->hqd", a, v).reshape(-1, model_dim)
    h = layernorm(X + ctx @ params["wf"] + params["bf"])
    ff = jax.nn.relu(h @ params["w1"] + params["b1"]) @ params["w2"] + params["b2"]
    h2 = layernorm(h + ff)
    logits = h2 @ params["l1w"] + params["l1b"]
    return jax.nn.softmax(logits, axis=1), W_new


# ----------------------------------------------------------------------------
# Deterministic parameter init (synthetic; mirrors the module's shapes)
# ----------------------------------------------------------------------------
def make_params(key, n_sample, n_view, n_cluster, model_dim=MODEL_DIM, ffn_dim=FFN_DIM):
    ks = jax.random.split(key, 8)
    std = 0.01
    f32 = jnp.float32
    return {
        "view_w": jnp.ones((n_view,), f32),                                  # nn.Parameter full(1.0)
        "wemb": (jax.random.normal(ks[0], (n_sample, model_dim)) * std).astype(f32),
        "bemb": jnp.zeros((model_dim,), f32),
        "wq": (jax.random.normal(ks[1], (model_dim, model_dim)) * std).astype(f32),
        "bq": jnp.zeros((model_dim,), f32),
        "wk": (jax.random.normal(ks[2], (model_dim, model_dim)) * std).astype(f32),
        "bk": jnp.zeros((model_dim,), f32),
        "wv": (jax.random.normal(ks[3], (model_dim, model_dim)) * std).astype(f32),
        "bv": jnp.zeros((model_dim,), f32),
        "wf": (jax.random.normal(ks[4], (model_dim, model_dim)) * std).astype(f32),
        "bf": jnp.zeros((model_dim,), f32),
        "w1": (jax.random.normal(ks[5], (model_dim, ffn_dim)) * std).astype(f32),
        "b1": jnp.zeros((ffn_dim,), f32),
        "w2": (jax.random.normal(ks[6], (ffn_dim, model_dim)) * std).astype(f32),
        "b2": jnp.zeros((model_dim,), f32),
        "l1w": (jax.random.normal(ks[7], (model_dim, n_cluster)) * std).astype(f32),
        "l1b": jnp.zeros((n_cluster,), f32),
    }


if __name__ == "__main__":
    n_sample, n_view, n_cluster = 128, 3, 4

    key = jax.random.PRNGKey(0)
    k_w, k_p = jax.random.split(key)
    W = jax.random.normal(k_w, (n_sample, n_sample, n_view), dtype=jnp.float32)
    params = make_params(k_p, n_sample, n_view, n_cluster)

    CF, W_new = jax.jit(grtrans_forward)(W, params)
    CF, W_new = jax.block_until_ready((CF, W_new))

    CF_ref, W_new_ref = ref_forward(W, params)
    assert np.allclose(np.asarray(W_new), np.asarray(W_new_ref), atol=1e-3, rtol=1e-3)
    assert np.allclose(np.asarray(CF), np.asarray(CF_ref), atol=1e-3, rtol=1e-3)

    print("KERNEL_OK")
</pallas_src>

<mosaic_0001>
module attributes {stable_mosaic.version = 11 : i64} {
  func.func @grtrans_kernel(%arg0: memref<1x3xf32, #tpu.memory_space<smem>>, %arg1: memref<3x128x128xf32, #tpu.memory_space<vmem>>, %arg2: memref<128x64xf32, #tpu.memory_space<vmem>>, %arg3: memref<1x64xf32, #tpu.memory_space<vmem>>, %arg4: memref<64x64xf32, #tpu.memory_space<vmem>>, %arg5: memref<1x64xf32, #tpu.memory_space<vmem>>, %arg6: memref<64x64xf32, #tpu.memory_space<vmem>>, %arg7: memref<1x64xf32, #tpu.memory_space<vmem>>, %arg8: memref<64x64xf32, #tpu.memory_space<vmem>>, %arg9: memref<1x64xf32, #tpu.memory_space<vmem>>, %arg10: memref<64x64xf32, #tpu.memory_space<vmem>>, %arg11: memref<1x64xf32, #tpu.memory_space<vmem>>, %arg12: memref<64x512xf32, #tpu.memory_space<vmem>>, %arg13: memref<1x512xf32, #tpu.memory_space<vmem>>, %arg14: memref<512x64xf32, #tpu.memory_space<vmem>>, %arg15: memref<1x64xf32, #tpu.memory_space<vmem>>, %arg16: memref<64x4xf32, #tpu.memory_space<vmem>>, %arg17: memref<1x4xf32, #tpu.memory_space<vmem>>, %arg18: memref<128x64xf32, #tpu.memory_space<vmem>>, %arg19: memref<64x64xf32, #tpu.memory_space<vmem>>, %arg20: memref<16x128xf32, #tpu.memory_space<vmem>>, %arg21: memref<128x4xf32, #tpu.memory_space<vmem>>, %arg22: memref<128x128xf32, #tpu.memory_space<vmem>>, %arg23: memref<128x64xf32, #tpu.memory_space<vmem>>, %arg24: memref<128x64xf32, #tpu.memory_space<vmem>>, %arg25: memref<128x64xf32, #tpu.memory_space<vmem>>, %arg26: memref<128x64xf32, #tpu.memory_space<vmem>>, %arg27: memref<128x64xf32, #tpu.memory_space<vmem>>) attributes {dimension_semantics = [], scalar_prefetch = 0 : i64, scratch_operands = 5 : i64, tpu.core_type = #tpu.core_type<tc>} {
    %c0 = arith.constant 0 : index
    %c0_0 = arith.constant 0 : index
    %c0_1 = arith.constant 0 : index
    %0 = vector.load %arg1[%c0, %c0_0, %c0_1] : memref<3x128x128xf32, #tpu.memory_space<vmem>>, vector<1x128x128xf32>
    %1 = vector.shape_cast %0 : vector<1x128x128xf32> to vector<128x128xf32>
    %c0_2 = arith.constant 0 : index
    %c0_3 = arith.constant 0 : index
    %2 = memref.load %arg0[%c0_2, %c0_3] : memref<1x3xf32, #tpu.memory_space<smem>>
    %3 = vector.broadcast %2 : f32 to vector<128x128xf32>
    %4 = arith.mulf %1, %3 : vector<128x128xf32>
    %c1 = arith.constant 1 : index
    %c0_4 = arith.constant 0 : index
    %c0_5 = arith.constant 0 : index
    %5 = vector.load %arg1[%c1, %c0_4, %c0_5] : memref<3x128x128xf32, #tpu.memory_space<vmem>>, vector<1x128x128xf32>
    %6 = vector.shape_cast %5 : vector<1x128x128xf32> to vector<128x128xf32>
    %c0_6 = arith.constant 0 : index
    %c1_7 = arith.constant 1 : index
    %7 = memref.load %arg0[%c0_6, %c1_7] : memref<1x3xf32, #tpu.memory_space<smem>>
    %8 = vector.broadcast %7 : f32 to vector<128x128xf32>
    %9 = arith.mulf %6, %8 : vector<128x128xf32>
    %10 = arith.addf %4, %9 : vector<128x128xf32>
    %c2 = arith.constant 2 : index
    %c0_8 = arith.constant 0 : index
    %c0_9 = arith.constant 0 : index
    %11 = vector.load %arg1[%c2, %c0_8, %c0_9] : memref<3x128x128xf32, #tpu.memory_space<vmem>>, vector<1x128x128xf32>
    %12 = vector.shape_cast %11 : vector<1x128x128xf32> to vector<128x128xf32>
    %c0_10 = arith.constant 0 : index
    %c2_11 = arith.constant 2 : index
    %13 = memref.load %arg0[%c0_10, %c2_11] : memref<1x3xf32, #tpu.memory_space<smem>>
    %14 = vector.broadcast %13 : f32 to vector<128x128xf32>
    %15 = arith.mulf %12, %14 : vector<128x128xf32>
    %16 = arith.addf %10, %15 : vector<128x128xf32>
    %c0_12 = arith.constant 0 : index
    %c0_13 = arith.constant 0 : index
    %17 = vector.load %arg22[%c0_12, %c0_13] : memref<128x128xf32, #tpu.memory_space<vmem>>, vector<128x128xf32>
    tpu.vector_store %arg22[%c0_12, %c0_13], %16 {strides = array<i32>} : memref<128x128xf32, #tpu.memory_space<vmem>>, vector<128x128xf32>,
    %c0_14 = arith.constant 0 : index
    %c0_15 = arith.constant 0 : index
    %18 = vector.load %arg2[%c0_14, %c0_15] : memref<128x64xf32, #tpu.memory_space<vmem>>, vector<128x64xf32>
    %cst = arith.constant dense<0.000000e+00> : vector<128x64xf32>
    %19 = tpu.matmul %16, %18, %cst {dimension_numbers = #tpu.dot_dimension_numbers<[1], [0], [0], [1], [0, 0, 1, 1], [], []>} : vector<128x128xf32>, vector<128x64xf32>, vector<128x64xf32> -> vector<128x64xf32>
    %c0_16 = arith.constant 0 : index
    %c0_17 = arith.constant 0 : index
    %20 = vector.load %arg3[%c0_16, %c0_17] : memref<1x64xf32, #tpu.memory_space<vmem>>, vector<1x64xf32>
    %21 = vector.broadcast %20 : vector<1x64xf32> to vector<128x64xf32>
    %22 = arith.addf %19, %21 : vector<128x64xf32>
    %c0_18 = arith.constant 0 : index
    %c0_19 = arith.constant 0 : index
    %23 = vector.load %arg23[%c0_18, %c0_19] : memref<128x64xf32, #tpu.memory_space<vmem>>, vector<128x64xf32>
    tpu.vector_store %arg23[%c0_18, %c0_19], %22 {strides = array<i32>} : memref<128x64xf32, #tpu.memory_space<vmem>>, vector<128x64xf32>,
    %c0_20 = arith.constant 0 : index
    %c0_21 = arith.constant 0 : index
    %24 = vector.load %arg4[%c0_20, %c0_21] : memref<64x64xf32, #tpu.memory_space<vmem>>, vector<64x64xf32>
    %cst_22 = arith.constant dense<0.000000e+00> : vector<128x64xf32>
    %25 = tpu.matmul %22, %24, %cst_22 {dimension_numbers = #tpu.dot_dimension_numbers<[1], [0], [0], [1], [0, 0, 1, 1], [], []>} : vector<128x64xf32>, vector<64x64xf32>, vector<128x64xf32> -> vector<128x64xf32>
    %c0_23 = arith.constant 0 : index
    %c0_24 = arith.constant 0 : index
    %26 = vector.load %arg5[%c0_23, %c0_24] : memref<1x64xf32, #tpu.memory_space<vmem>>, vector<1x64xf32>
    %27 = vector.broadcast %26 : vector<1x64xf32> to vector<128x64xf32>
    %28 = arith.addf %25, %27 : vector<128x64xf32>
    %c0_25 = arith.constant 0 : index
    %c0_26 = arith.constant 0 : index
    %29 = vector.load %arg24[%c0_25, %c0_26] : memref<128x64xf32, #tpu.memory_space<vmem>>, vector<128x64xf32>
    tpu.vector_store %arg24[%c0_25, %c0_26], %28 {strides = array<i32>} : memref<128x64xf32, #tpu.memory_space<vmem>>, vector<128x64xf32>,
    %c0_27 = arith.constant 0 : index
    %c0_28 = arith.constant 0 : index
    %30 = vector.load %arg6[%c0_27, %c0_28] : memref<64x64xf32, #tpu.memory_space<vmem>>, vector<64x64xf32>
    %cst_29 = arith.constant dense<0.000000e+00> : vector<128x64xf32>
    %31 = tpu.matmul %22, %30, %cst_29 {dimension_numbers = #tpu.dot_dimension_numbers<[1], [0], [0], [1], [0, 0, 1, 1], [], []>} : vector<128x64xf32>, vector<64x64xf32>, vector<128x64xf32> -> vector<128x64xf32>
    %c0_30 = arith.constant 0 : index
    %c0_31 = arith.constant 0 : index
    %32 = vector.load %arg7[%c0_30, %c0_31] : memref<1x64xf32, #tpu.memory_space<vmem>>, vector<1x64xf32>
    %33 = vector.broadcast %32 : vector<1x64xf32> to vector<128x64xf32>
    %34 = arith.addf %31, %33 : vector<128x64xf32>
    %c0_32 = arith.constant 0 : index
    %c0_33 = arith.constant 0 : index
    %35 = vector.load %arg25[%c0_32, %c0_33] : memref<128x64xf32, #tpu.memory_space<vmem>>, vector<128x64xf32>
    tpu.vector_store %arg25[%c0_32, %c0_33], %34 {strides = array<i32>} : memref<128x64xf32, #tpu.memory_space<vmem>>, vector<128x64xf32>,
    %c0_34 = arith.constant 0 : index
    %c0_35 = arith.constant 0 : index
    %36 = vector.load %arg8[%c0_34, %c0_35] : memref<64x64xf32, #tpu.memory_space<vmem>>, vector<64x64xf32>
    %cst_36 = arith.constant dense<0.000000e+00> : vector<128x64xf32>
    %37 = tpu.matmul %22, %36, %cst_36 {dimension_numbers = #tpu.dot_dimension_numbers<[1], [0], [0], [1], [0, 0, 1, 1], [], []>} : vector<128x64xf32>, vector<64x64xf32>, vector<128x64xf32> -> vector<128x64xf32>
    %c0_37 = arith.constant 0 : index
    %c0_38 = arith.constant 0 : index
    %38 = vector.load %arg9[%c0_37, %c0_38] : memref<1x64xf32, #tpu.memory_space<vmem>>, vector<1x64xf32>
    %39 = vector.broadcast %38 : vector<1x64xf32> to vector<128x64xf32>
    %40 = arith.addf %37, %39 : vector<128x64xf32>
    %c0_39 = arith.constant 0 : index
    %c0_40 = arith.constant 0 : index
    %41 = vector.load %arg26[%c0_39, %c0_40] : memref<128x64xf32, #tpu.memory_space<vmem>>, vector<128x64xf32>
    tpu.vector_store %arg26[%c0_39, %c0_40], %40 {strides = array<i32>} : memref<128x64xf32, #tpu.memory_space<vmem>>, vector<128x64xf32>,
    %c0_41 = arith.constant 0 : index
    %c0_42 = arith.constant 0 : index
    %42 = vector.load %arg18[%c0_41, %c0_42] : memref<128x64xf32, #tpu.memory_space<vmem>>, vector<128x64xf32>
    %c0_43 = arith.constant 0 : index
    %c0_44 = arith.constant 0 : index
    %43 = vector.load %arg19[%c0_43, %c0_44] : memref<64x64xf32, #tpu.memory_space<vmem>>, vector<64x64xf32>
    %c0_45 = arith.constant 0 : index
    %c0_46 = arith.constant 0 : index
    %44 = vector.load %arg20[%c0_45, %c0_46] : memref<16x128xf32, #tpu.memory_space<vmem>>, vector<16x128xf32>
    %c0_47 = arith.constant 0 : index
    %c0_48 = arith.constant 0 : index
    %45 = vector.load %arg24[%c0_47, %c0_48] : memref<128x64xf32, #tpu.memory_space<vmem>>, vector<16x64xf32>
    %c0_49 = arith.constant 0 : index
    %c0_50 = arith.constant 0 : index
    %46 = vector.load %arg25[%c0_49, %c0_50] : memref<128x64xf32, #tpu.memory_space<vmem>>, vector<16x64xf32>
    %c0_51 = arith.constant 0 : index
    %c0_52 = arith.constant 0 : index
    %47 = vector.load %arg26[%c0_51, %c0_52] : memref<128x64xf32, #tpu.memory_space<vmem>>, vector<16x64xf32>
    %48 = tpu.concatenate %45, %45, %45, %45, %45, %45, %45, %45 in 0 : vector<16x64xf32>, vector<16x64xf32>, vector<16x64xf32>, vector<16x64xf32>, vector<16x64xf32>, vector<16x64xf32>, vector<16x64xf32>, vector<16x64xf32> -> vector<128x64xf32>
    %49 = arith.mulf %48, %42 : vector<128x64xf32>
    %cst_53 = arith.constant dense<0.000000e+00> : vector<128x64xf32>
    %50 = tpu.matmul %49, %43, %cst_53 {dimension_numbers = #tpu.dot_dimension_numbers<[1], [0], [0], [1], [0, 0, 1, 1], [], []>} : vector<128x64xf32>, vector<64x64xf32>, vector<128x64xf32> -> vector<128x64xf32>
    %51 = tpu.concatenate %46, %46, %46, %46, %46, %46, %46, %46 in 0 : vector<16x64xf32>, vector<16x64xf32>, vector<16x64xf32>, vector<16x64xf32>, vector<16x64xf32>, vector<16x64xf32>, vector<16x64xf32>, vector<16x64xf32> -> vector<128x64xf32>
    %52 = arith.mulf %51, %42 : vector<128x64xf32>
    %cst_54 = arith.constant dense<0.000000e+00> : vector<128x128xf32>
    %53 = tpu.matmul %50, %52, %cst_54 {dimension_numbers = #tpu.dot_dimension_numbers<[1], [1], [0], [0], [0, 0, 1, 0], [], []>} : vector<128x64xf32>, vector<128x64xf32>, vector<128x128xf32> -> vector<128x128xf32>
    %cst_55 = arith.constant dense<0xFF800000> : vector<128xf32>
    %54 = vector.multi_reduction <maximumf>, %53, %cst_55 [1] : vector<128x128xf32> to vector<128xf32>
    %55 = vector.shape_cast %54 : vector<128xf32> to vector<128x1xf32>
    %56 = vector.broadcast %55 : vector<128x1xf32> to vector<128x128xf32>
    %57 = arith.subf %53, %56 : vector<128x128xf32>
    %58 = math.exp %57 : vector<128x128xf32>
    %cst_56 = arith.constant dense<0.000000e+00> : vector<128xf32>
    %59 = vector.multi_reduction <add>, %58, %cst_56 [1] : vector<128x128xf32> to vector<128xf32>
    %60 = vector.shape_cast %59 : vector<128xf32> to vector<128x1xf32>
    %61 = vector.broadcast %60 : vector<128x1xf32> to vector<128x128xf32>
    %62 = arith.divf %58, %61 : vector<128x128xf32>
    %63 = tpu.concatenate %47, %47, %47, %47, %47, %47, %47, %47 in 0 : vector<16x64xf32>, vector<16x64xf32>, vector<16x64xf32>, vector<16x64xf32>, vector<16x64xf32>, vector<16x64xf32>, vector<16x64xf32>, vector<16x64xf32> -> vector<128x64xf32>
    %64 = arith.mulf %63, %42 : vector<128x64xf32>
    %cst_57 = arith.constant dense<0.000000e+00> : vector<128x64xf32>
    %65 = tpu.matmul %62, %64, %cst_57 {dimension_numbers = #tpu.dot_dimension_numbers<[1], [0], [0], [1], [0, 0, 1, 1], [], []>} : vector<128x128xf32>, vector<128x64xf32>, vector<128x64xf32> -> vector<128x64xf32>
    %cst_58 = arith.constant dense<0.000000e+00> : vector<128x64xf32>
    %66 = tpu.matmul %65, %43, %cst_58 {dimension_numbers = #tpu.dot_dimension_numbers<[1], [0], [0], [1], [0, 0, 1, 1], [], []>} : vector<128x64xf32>, vector<64x64xf32>, vector<128x64xf32> -> vector<128x64xf32>
    %67 = arith.mulf %66, %42 : vector<128x64xf32>
    %cst_59 = arith.constant dense<0.000000e+00> : vector<16x64xf32>
    %68 = tpu.matmul %44, %67, %cst_59 {dimension_numbers = #tpu.dot_dimension_numbers<[1], [0], [0], [1], [0, 0, 1, 1], [], []>} : vector<16x128xf32>, vector<128x64xf32>, vector<16x64xf32> -> vector<16x64xf32>
    %c0_60 = arith.constant 0 : index
    %c0_61 = arith.constant 0 : index
    %69 = vector.load %arg27[%c0_60, %c0_61] : memref<128x64xf32, #tpu.memory_space<vmem>>, vector<16x64xf32>
    tpu.vector_store %arg27[%c0_60, %c0_61], %68 {strides = array<i32>} : memref<128x64xf32, #tpu.memory_space<vmem>>, vector<16x64xf32>,
    %c16 = arith.constant 16 : index
    %c0_62 = arith.constant 0 : index
    %70 = vector.load %arg24[%c16, %c0_62] : memref<128x64xf32, #tpu.memory_space<vmem>>, vector<16x64xf32>
    %c16_63 = arith.constant 16 : index
    %c0_64 = arith.constant 0 : index
    %71 = vector.load %arg25[%c16_63, %c0_64] : memref<128x64xf32, #tpu.memory_space<vmem>>, vector<16x64xf32>
    %c16_65 = arith.constant 16 : index
    %c0_66 = arith.constant 0 : index
    %72 = vector.load %arg26[%c16_65, %c0_66] : memref<128x64xf32, #tpu.memory_space<vmem>>, vector<16x64xf32>
    %73 = tpu.concatenate %70, %70, %70, %70, %70, %70, %70, %70 in 0 : vector<16x64xf32>, vector<16x64xf32>, vector<16x64xf32>, vector<16x64xf32>, vector<16x64xf32>, vector<16x64xf32>, vector<16x64xf32>, vector<16x64xf32> -> vector<128x64xf32>
    %74 = arith.mulf %73, %42 : vector<128x64xf32>
    %cst_67 = arith.constant dense<0.000000e+00> : vector<128x64xf32>
    %75 = tpu.matmul %74, %43, %cst_67 {dimension_numbers = #tpu.dot_dimension_numbers<[1], [0], [0], [1], [0, 0, 1, 1], [], []>} : vector<128x64xf32>, vector<64x64xf32>, vector<128x64xf32> -> vector<128x64xf32>
    %76 = tpu.concatenate %71, %71, %71, %71, %71, %71, %71, %71 in 0 : vector<16x64xf32>, vector<16x64xf32>, vector<16x64xf32>, vector<16x64xf32>, vector<16x64xf32>, vector<16x64xf32>, vector<16x64xf32>, vector<16x64xf32> -> vector<128x64xf32>
    %77 = arith.mulf %76, %42 : vector<128x64xf32>
    %cst_68 = arith.constant dense<0.000000e+00> : vector<128x128xf32>
    %78 = tpu.matmul %75, %77, %cst_68 {dimension_numbers = #tpu.dot_dimension_numbers<[1], [1], [0], [0], [0, 0, 1, 0], [], []>} : vector<128x64xf32>, vector<128x64xf32>, vector<128x128xf32> -> vector<128x128xf32>
    %cst_69 = arith.constant dense<0xFF800000> : vector<128xf32>
    %79 = vector.multi_reduction <maximumf>, %78, %cst_69 [1] : vector<128x128xf32> to vector<128xf32>
    %80 = vector.shape_cast %79 : vector<128xf32> to vector<128x1xf32>
    %81 = vector.broadcast %80 : vector<128x1xf32> to vector<128x128xf32>
    %82 = arith.subf %78, %81 : vector<128x128xf32>
    %83 = math.exp %82 : vector<128x128xf32>
    %cst_70 = arith.constant dense<0.000000e+00> : vector<128xf32>
    %84 = vector.multi_reduction <add>, %83, %cst_70 [1] : vector<128x128xf32> to vector<128xf32>
    %85 = vector.shape_cast %84 : vector<128xf32> to vector<128x1xf32>
    %86 = vector.broadcast %85 : vector<128x1xf32> to vector<128x128xf32>
    %87 = arith.divf %83, %86 : vector<128x128xf32>
    %88 = tpu.concatenate %72, %72, %72, %72, %72, %72, %72, %72 in 0 : vector<16x64xf32>, vector<16x64xf32>, vector<16x64xf32>, vector<16x64xf32>, vector<16x64xf32>, vector<16x64xf32>, vector<16x64xf32>, vector<16x64xf32> -> vector<128x64xf32>
    %89 = arith.mulf %88, %42 : vector<128x64xf32>
    %cst_71 = arith.constant dense<0.000000e+00> : vector<128x64xf32>
    %90 = tpu.matmul %87, %89, %cst_71 {dimension_numbers = #tpu.dot_dimension_numbers<[1], [0], [0], [1], [0, 0, 1, 1], [], []>} : vector<128x128xf32>, vector<128x64xf32>, vector<128x64xf32> -> vector<128x64xf32>
    %cst_72 = arith.constant dense<0.000000e+00> : vector<128x64xf32>
    %91 = tpu.matmul %90, %43, %cst_72 {dimension_numbers = #tpu.dot_dimension_numbers<[1], [0], [0], [1], [0, 0, 1, 1], [], []>} : vector<128x64xf32>, vector<64x64xf32>, vector<128x64xf32> -> vector<128x64xf32>
    %92 = arith.mulf %91, %42 : vector<128x64xf32>
    %cst_73 = arith.constant dense<0.000000e+00> : vector<16x64xf32>
    %93 = tpu.matmul %44, %92, %cst_73 {dimension_numbers = #tpu.dot_dimension_numbers<[1], [0], [0], [1], [0, 0, 1, 1], [], []>} : vector<16x128xf32>, vector<128x64xf32>, vector<16x64xf32> -> vector<16x64xf32>
    %c16_74 = arith.constant 16 : index
    %c0_75 = arith.constant 0 : index
    %94 = vector.load %arg27[%c16_74, %c0_75] : memref<128x64xf32, #tpu.memory_space<vmem>>, vector<16x64xf32>
    tpu.vector_store %arg27[%c16_74, %c0_75], %93 {strides = array<i32>} : memref<128x64xf32, #tpu.memory_space<vmem>>, vector<16x64xf32>,
    %c32 = arith.constant 32 : index
    %c0_76 = arith.constant 0 : index
    %95 = vector.load %arg24[%c32, %c0_76] : memref<128x64xf32, #tpu.memory_space<vmem>>, vector<16x64xf32>
    %c32_77 = arith.constant 32 : index
    %c0_78 = arith.constant 0 : index
    %96 = vector.load %arg25[%c32_77, %c0_78] : memref<128x64xf32, #tpu.memory_space<vmem>>, vector<16x64xf32>
    %c32_79 = arith.constant 32 : index
    %c0_80 = arith.constant 0 : index
    %97 = vector.load %arg26[%c32_79, %c0_80] : memref<128x64xf32, #tpu.memory_space<vmem>>, vector<16x64xf32>
    %98 = tpu.concatenate %95, %95, %95, %95, %95, %95, %95, %95 in 0 : vector<16x64xf32>, vector<16x64xf32>, vector<16x64xf32>, vector<16x64xf32>, vector<16x64xf32>, vector<16x64xf32>, vector<16x64xf32>, vector<16x64xf32> -> vector<128x64xf32>
    %99 = arith.mulf %98, %42 : vector<128x64xf32>
    %cst_81 = arith.constant dense<0.000000e+00> : vector<128x64xf32>
    %100 = tpu.matmul %99, %43, %cst_81 {dimension_numbers = #tpu.dot_dimension_numbers<[1], [0], [0], [1], [0, 0, 1, 1], [], []>} : vector<128x64xf32>, vector<64x64xf32>, vector<128x64xf32> -> vector<128x64xf32>
    %101 = tpu.concatenate %96, %96, %96, %96, %96, %96, %96, %96 in 0 : vector<16x64xf32>, vector<16x64xf32>, vector<16x64xf32>, vector<16x64xf32>, vector<16x64xf32>, vector<16x64xf32>, vector<16x64xf32>, vector<16x64xf32> -> vector<128x64xf32>
    %102 = arith.mulf %101, %42 : vector<128x64xf32>
    %cst_82 = arith.constant dense<0.000000e+00> : vector<128x128xf32>
    %103 = tpu.matmul %100, %102, %cst_82 {dimension_numbers = #tpu.dot_dimension_numbers<[1], [1], [0], [0], [0, 0, 1, 0], [], []>} : vector<128x64xf32>, vector<128x64xf32>, vector<128x128xf32> -> vector<128x128xf32>
    %cst_83 = arith.constant dense<0xFF800000> : vector<128xf32>
    %104 = vector.multi_reduction <maximumf>, %103, %cst_83 [1] : vector<128x128xf32> to vector<128xf32>
    %105 = vector.shape_cast %104 : vector<128xf32> to vector<128x1xf32>
    %106 = vector.broadcast %105 : vector<128x1xf32> to vector<128x128xf32>
    %107 = arith.subf %103, %106 : vector<128x128xf32>
    %108 = math.exp %107 : vector<128x128xf32>
    %cst_84 = arith.constant dense<0.000000e+00> : vector<128xf32>
    %109 = vector.multi_reduction <add>, %108, %cst_84 [1] : vector<128x128xf32> to vector<128xf32>
    %110 = vector.shape_cast %109 : vector<128xf32> to vector<128x1xf32>
    %111 = vector.broadcast %110 : vector<128x1xf32> to vector<128x128xf32>
    %112 = arith.divf %108, %111 : vector<128x128xf32>
    %113 = tpu.concatenate %97, %97, %97, %97, %97, %97, %97, %97 in 0 : vector<16x64xf32>, vector<16x64xf32>, vector<16x64xf32>, vector<16x64xf32>, vector<16x64xf32>, vector<16x64xf32>, vector<16x64xf32>, vector<16x64xf32> -> vector<128x64xf32>
    %114 = arith.mulf %113, %42 : vector<128x64xf32>
    %cst_85 = arith.constant dense<0.000000e+00> : vector<128x64xf32>
    %115 = tpu.matmul %112, %114, %cst_85 {dimension_numbers = #tpu.dot_dimension_numbers<[1], [0], [0], [1], [0, 0, 1, 1], [], []>} : vector<128x128xf32>, vector<128x64xf32>, vector<128x64xf32> -> vector<128x64xf32>
    %cst_86 = arith.constant dense<0.000000e+00> : vector<128x64xf32>
    %116 = tpu.matmul %115, %43, %cst_86 {dimension_numbers = #tpu.dot_dimension_numbers<[1], [0], [0], [1], [0, 0, 1, 1], [], []>} : vector<128x64xf32>, vector<64x64xf32>, vector<128x64xf32> -> vector<128x64xf32>
    %117 = arith.mulf %116, %42 : vector<128x64xf32>
    %cst_87 = arith.constant dense<0.000000e+00> : vector<16x64xf32>
    %118 = tpu.matmul %44, %117, %cst_87 {dimension_numbers = #tpu.dot_dimension_numbers<[1], [0], [0], [1], [0, 0, 1, 1], [], []>} : vector<16x128xf32>, vector<128x64xf32>, vector<16x64xf32> -> vector<16x64xf32>
    %c32_88 = arith.constant 32 : index
    %c0_89 = arith.constant 0 : index
    %119 = vector.load %arg27[%c32_88, %c0_89] : memref<128x64xf32, #tpu.memory_space<vmem>>, vector<16x64xf32>
    tpu.vector_store %arg27[%c32_88, %c0_89], %118 {strides = array<i32>} : memref<128x64xf32, #tpu.memory_space<vmem>>, vector<16x64xf32>,
    %c48 = arith.constant 48 : index
    %c0_90 = arith.constant 0 : index
    %120 = vector.load %arg24[%c48, %c0_90] : memref<128x64xf32, #tpu.memory_space<vmem>>, vector<16x64xf32>
    %c48_91 = arith.constant 48 : index
    %c0_92 = arith.constant 0 : index
    %121 = vector.load %arg25[%c48_91, %c0_92] : memref<128x64xf32, #tpu.memory_space<vmem>>, vector<16x64xf32>
    %c48_93 = arith.constant 48 : index
    %c0_94 = arith.constant 0 : index
    %122 = vector.load %arg26[%c48_93, %c0_94] : memref<128x64xf32, #tpu.memory_space<vmem>>, vector<16x64xf32>
    %123 = tpu.concatenate %120, %120, %120, %120, %120, %120, %120, %120 in 0 : vector<16x64xf32>, vector<16x64xf32>, vector<16x64xf32>, vector<16x64xf32>, vector<16x64xf32>, vector<16x64xf32>, vector<16x64xf32>, vector<16x64xf32> -> vector<128x64xf32>
    %124 = arith.mulf %123, %42 : vector<128x64xf32>
    %cst_95 = arith.constant dense<0.000000e+00> : vector<128x64xf32>
    %125 = tpu.matmul %124, %43, %cst_95 {dimension_numbers = #tpu.dot_dimension_numbers<[1], [0], [0], [1], [0, 0, 1, 1], [], []>} : vector<128x64xf32>, vector<64x64xf32>, vector<128x64xf32> -> vector<128x64xf32>
    %126 = tpu.concatenate %121, %121, %121, %121, %121, %121, %121, %121 in 0 : vector<16x64xf32>, vector<16x64xf32>, vector<16x64xf32>, vector<16x64xf32>, vector<16x64xf32>, vector<16x64xf32>, vector<16x64xf32>, vector<16x64xf32> -> vector<128x64xf32>
    %127 = arith.mulf %126, %42 : vector<128x64xf32>
    %cst_96 = arith.constant dense<0.000000e+00> : vector<128x128xf32>
    %128 = tpu.matmul %125, %127, %cst_96 {dimension_numbers = #tpu.dot_dimension_numbers<[1], [1], [0], [0], [0, 0, 1, 0], [], []>} : vector<128x64xf32>, vector<128x64xf32>, vector<128x128xf32> -> vector<128x128xf32>
    %cst_97 = arith.constant dense<0xFF800000> : vector<128xf32>
    %129 = vector.multi_reduction <maximumf>, %128, %cst_97 [1] : vector<128x128xf32> to vector<128xf32>
    %130 = vector.shape_cast %129 : vector<128xf32> to vector<128x1xf32>
    %131 = vector.broadcast %130 : vector<128x1xf32> to vector<128x128xf32>
    %132 = arith.subf %128, %131 : vector<128x128xf32>
    %133 = math.exp %132 : vector<128x128xf32>
    %cst_98 = arith.constant dense<0.000000e+00> : vector<128xf32>
    %134 = vector.multi_reduction <add>, %133, %cst_98 [1] : vector<128x128xf32> to vector<128xf32>
    %135 = vector.shape_cast %134 : vector<128xf32> to vector<128x1xf32>
    %136 = vector.broadcast %135 : vector<128x1xf32> to vector<128x128xf32>
    %137 = arith.divf %133, %136 : vector<128x128xf32>
    %138 = tpu.concatenate %122, %122, %122, %122, %122, %122, %122, %122 in 0 : vector<16x64xf32>, vector<16x64xf32>, vector<16x64xf32>, vector<16x64xf32>, vector<16x64xf32>, vector<16x64xf32>, vector<16x64xf32>, vector<16x64xf32> -> vector<128x64xf32>
    %139 = arith.mulf %138, %42 : vector<128x64xf32>
    %cst_99 = arith.constant dense<0.000000e+00> : vector<128x64xf32>
    %140 = tpu.matmul %137, %139, %cst_99 {dimension_numbers = #tpu.dot_dimension_numbers<[1], [0], [0], [1], [0, 0, 1, 1], [], []>} : vector<128x128xf32>, vector<128x64xf32>, vector<128x64xf32> -> vector<128x64xf32>
    %cst_100 = arith.constant dense<0.000000e+00> : vector<128x64xf32>
    %141 = tpu.matmul %140, %43, %cst_100 {dimension_numbers = #tpu.dot_dimension_numbers<[1], [0], [0], [1], [0, 0, 1, 1], [], []>} : vector<128x64xf32>, vector<64x64xf32>, vector<128x64xf32> -> vector<128x64xf32>
    %142 = arith.mulf %141, %42 : vector<128x64xf32>
    %cst_101 = arith.constant dense<0.000000e+00> : vector<16x64xf32>
    %143 = tpu.matmul %44, %142, %cst_101 {dimension_numbers = #tpu.dot_dimension_numbers<[1], [0], [0], [1], [0, 0, 1, 1], [], []>} : vector<16x128xf32>, vector<128x64xf32>, vector<16x64xf32> -> vector<16x64xf32>
    %c48_102 = arith.constant 48 : index
    %c0_103 = arith.constant 0 : index
    %144 = vector.load %arg27[%c48_102, %c0_103] : memref<128x64xf32, #tpu.memory_space<vmem>>, vector<16x64xf32>
    tpu.vector_store %arg27[%c48_102, %c0_103], %143 {strides = array<i32>} : memref<128x64xf32, #tpu.memory_space<vmem>>, vector<16x64xf32>,
    %c64 = arith.constant 64 : index
    %c0_104 = arith.constant 0 : index
    %145 = vector.load %arg24[%c64, %c0_104] : memref<128x64xf32, #tpu.memory_space<vmem>>, vector<16x64xf32>
    %c64_105 = arith.constant 64 : index
    %c0_106 = arith.constant 0 : index
    %146 = vector.load %arg25[%c64_105, %c0_106] : memref<128x64xf32, #tpu.memory_space<vmem>>, vector<16x64xf32>
    %c64_107 = arith.constant 64 : index
    %c0_108 = arith.constant 0 : index
    %147 = vector.load %arg26[%c64_107, %c0_108] : memref<128x64xf32, #tpu.memory_space<vmem>>, vector<16x64xf32>
    %148 = tpu.concatenate %145, %145, %145, %145, %145, %145, %145, %145 in 0 : vector<16x64xf32>, vector<16x64xf32>, vector<16x64xf32>, vector<16x64xf32>, vector<16x64xf32>, vector<16x64xf32>, vector<16x64xf32>, vector<16x64xf32> -> vector<128x64xf32>
    %149 = arith.mulf %148, %42 : vector<128x64xf32>
    %cst_109 = arith.constant dense<0.000000e+00> : vector<128x64xf32>
    %150 = tpu.matmul %149, %43, %cst_109 {dimension_numbers = #tpu.dot_dimension_numbers<[1], [0], [0], [1], [0, 0, 1, 1], [], []>} : vector<128x64xf32>, vector<64x64xf32>, vector<128x64xf32> -> vector<128x64xf32>
    %151 = tpu.concatenate %146, %146, %146, %146, %146, %146, %146, %146 in 0 : vector<16x64xf32>, vector<16x64xf32>, vector<16x64xf32>, vector<16x64xf32>, vector<16x64xf32>, vector<16x64xf32>, vector<16x64xf32>, vector<16x64xf32> -> vector<128x64xf32>
    %152 = arith.mulf %151, %42 : vector<128x64xf32>
    %cst_110 = arith.constant dense<0.000000e+00> : vector<128x128xf32>
    %153 = tpu.matmul %150, %152, %cst_110 {dimension_numbers = #tpu.dot_dimension_numbers<[1], [1], [0], [0], [0, 0, 1, 0], [], []>} : vector<128x64xf32>, vector<128x64xf32>, vector<128x128xf32> -> vector<128x128xf32>
    %cst_111 = arith.constant dense<0xFF800000> : vector<128xf32>
    %154 = vector.multi_reduction <maximumf>, %153, %cst_111 [1] : vector<128x128xf32> to vector<128xf32>
    %155 = vector.shape_cast %154 : vector<128xf32> to vector<128x1xf32>
    %156 = vector.broadcast %155 : vector<128x1xf32> to vector<128x128xf32>
    %157 = arith.subf %153, %156 : vector<128x128xf32>
    %158 = math.exp %157 : vector<128x128xf32>
    %cst_112 = arith.constant dense<0.000000e+00> : vector<128xf32>
    %159 = vector.multi_reduction <add>, %158, %cst_112 [1] : vector<128x128xf32> to vector<128xf32>
    %160 = vector.shape_cast %159 : vector<128xf32> to vector<128x1xf32>
    %161 = vector.broadcast %160 : vector<128x1xf32> to vector<128x128xf32>
    %162 = arith.divf %158, %161 : vector<128x128xf32>
    %163 = tpu.concatenate %147, %147, %147, %147, %147, %147, %147, %147 in 0 : vector<16x64xf32>, vector<16x64xf32>, vector<16x64xf32>, vector<16x64xf32>, vector<16x64xf32>, vector<16x64xf32>, vector<16x64xf32>, vector<16x64xf32> -> vector<128x64xf32>
    %164 = arith.mulf %163, %42 : vector<128x64xf32>
    %cst_113 = arith.constant dense<0.000000e+00> : vector<128x64xf32>
    %165 = tpu.matmul %162, %164, %cst_113 {dimension_numbers = #tpu.dot_dimension_numbers<[1], [0], [0], [1], [0, 0, 1, 1], [], []>} : vector<128x128xf32>, vector<128x64xf32>, vector<128x64xf32> -> vector<128x64xf32>
    %cst_114 = arith.constant dense<0.000000e+00> : vector<128x64xf32>
    %166 = tpu.matmul %165, %43, %cst_114 {dimension_numbers = #tpu.dot_dimension_numbers<[1], [0], [0], [1], [0, 0, 1, 1], [], []>} : vector<128x64xf32>, vector<64x64xf32>, vector<128x64xf32> -> vector<128x64xf32>
    %167 = arith.mulf %166, %42 : vector<128x64xf32>
    %cst_115 = arith.constant dense<0.000000e+00> : vector<16x64xf32>
    %168 = tpu.matmul %44, %167, %cst_115 {dimension_numbers = #tpu.dot_dimension_numbers<[1], [0], [0], [1], [0, 0, 1, 1], [], []>} : vector<16x128xf32>, vector<128x64xf32>, vector<16x64xf32> -> vector<16x64xf32>
    %c64_116 = arith.constant 64 : index
    %c0_117 = arith.constant 0 : index
    %169 = vector.load %arg27[%c64_116, %c0_117] : memref<128x64xf32, #tpu.memory_space<vmem>>, vector<16x64xf32>
    tpu.vector_store %arg27[%c64_116, %c0_117], %168 {strides = array<i32>} : memref<128x64xf32, #tpu.memory_space<vmem>>, vector<16x64xf32>,
    %c80 = arith.constant 80 : index
    %c0_118 = arith.constant 0 : index
    %170 = vector.load %arg24[%c80, %c0_118] : memref<128x64xf32, #tpu.memory_space<vmem>>, vector<16x64xf32>
    %c80_119 = arith.constant 80 : index
    %c0_120 = arith.constant 0 : index
    %171 = vector.load %arg25[%c80_119, %c0_120] : memref<128x64xf32, #tpu.memory_space<vmem>>, vector<16x64xf32>
    %c80_121 = arith.constant 80 : index
    %c0_122 = arith.constant 0 : index
    %172 = vector.load %arg26[%c80_121, %c0_122] : memref<128x64xf32, #tpu.memory_space<vmem>>, vector<16x64xf32>
    %173 = tpu.concatenate %170, %170, %170, %170, %170, %170, %170, %170 in 0 : vector<16x64xf32>, vector<16x64xf32>, vector<16x64xf32>, vector<16x64xf32>, vector<16x64xf32>, vector<16x64xf32>, vector<16x64xf32>, vector<16x64xf32> -> vector<128x64xf32>
    %174 = arith.mulf %173, %42 : vector<128x64xf32>
    %cst_123 = arith.constant dense<0.000000e+00> : vector<128x64xf32>
    %175 = tpu.matmul %174, %43, %cst_123 {dimension_numbers = #tpu.dot_dimension_numbers<[1], [0], [0], [1], [0, 0, 1, 1], [], []>} : vector<128x64xf32>, vector<64x64xf32>, vector<128x64xf32> -> vector<128x64xf32>
    %176 = tpu.concatenate %171, %171, %171, %171, %171, %171, %171, %171 in 0 : vector<16x64xf32>, vector<16x64xf32>, vector<16x64xf32>, vector<16x64xf32>, vector<16x64xf32>, vector<16x64xf32>, vector<16x64xf32>, vector<16x64xf32> -> vector<128x64xf32>
    %177 = arith.mulf %176, %42 : vector<128x64xf32>
    %cst_124 = arith.constant dense<0.000000e+00> : vector<128x128xf32>
    %178 = tpu.matmul %175, %177, %cst_124 {dimension_numbers = #tpu.dot_dimension_numbers<[1], [1], [0], [0], [0, 0, 1, 0], [], []>} : vector<128x64xf32>, vector<128x64xf32>, vector<128x128xf32> -> vector<128x128xf32>
    %cst_125 = arith.constant dense<0xFF800000> : vector<128xf32>
    %179 = vector.multi_reduction <maximumf>, %178, %cst_125 [1] : vector<128x128xf32> to vector<128xf32>
    %180 = vector.shape_cast %179 : vector<128xf32> to vector<128x1xf32>
    %181 = vector.broadcast %180 : vector<128x1xf32> to vector<128x128xf32>
    %182 = arith.subf %178, %181 : vector<128x128xf32>
    %183 = math.exp %182 : vector<128x128xf32>
    %cst_126 = arith.constant dense<0.000000e+00> : vector<128xf32>
    %184 = vector.multi_reduction <add>, %183, %cst_126 [1] : vector<128x128xf32> to vector<128xf32>
    %185 = vector.shape_cast %184 : vector<128xf32> to vector<128x1xf32>
    %186 = vector.broadcast %185 : vector<128x1xf32> to vector<128x128xf32>
    %187 = arith.divf %183, %186 : vector<128x128xf32>
    %188 = tpu.concatenate %172, %172, %172, %172, %172, %172, %172, %172 in 0 : vector<16x64xf32>, vector<16x64xf32>, vector<16x64xf32>, vector<16x64xf32>, vector<16x64xf32>, vector<16x64xf32>, vector<16x64xf32>, vector<16x64xf32> -> vector<128x64xf32>
    %189 = arith.mulf %188, %42 : vector<128x64xf32>
    %cst_127 = arith.constant dense<0.000000e+00> : vector<128x64xf32>
    %190 = tpu.matmul %187, %189, %cst_127 {dimension_numbers = #tpu.dot_dimension_numbers<[1], [0], [0], [1], [0, 0, 1, 1], [], []>} : vector<128x128xf32>, vector<128x64xf32>, vector<128x64xf32> -> vector<128x64xf32>
    %cst_128 = arith.constant dense<0.000000e+00> : vector<128x64xf32>
    %191 = tpu.matmul %190, %43, %cst_128 {dimension_numbers = #tpu.dot_dimension_numbers<[1], [0], [0], [1], [0, 0, 1, 1], [], []>} : vector<128x64xf32>, vector<64x64xf32>, vector<128x64xf32> -> vector<128x64xf32>
    %192 = arith.mulf %191, %42 : vector<128x64xf32>
    %cst_129 = arith.constant dense<0.000000e+00> : vector<16x64xf32>
    %193 = tpu.matmul %44, %192, %cst_129 {dimension_numbers = #tpu.dot_dimension_numbers<[1], [0], [0], [1], [0, 0, 1, 1], [], []>} : vector<16x128xf32>, vector<128x64xf32>, vector<16x64xf32> -> vector<16x64xf32>
    %c80_130 = arith.constant 80 : index
    %c0_131 = arith.constant 0 : index
    %194 = vector.load %arg27[%c80_130, %c0_131] : memref<128x64xf32, #tpu.memory_space<vmem>>, vector<16x64xf32>
    tpu.vector_store %arg27[%c80_130, %c0_131], %193 {strides = array<i32>} : memref<128x64xf32, #tpu.memory_space<vmem>>, vector<16x64xf32>,
    %c96 = arith.constant 96 : index
    %c0_132 = arith.constant 0 : index
    %195 = vector.load %arg24[%c96, %c0_132] : memref<128x64xf32, #tpu.memory_space<vmem>>, vector<16x64xf32>
    %c96_133 = arith.constant 96 : index
    %c0_134 = arith.constant 0 : index
    %196 = vector.load %arg25[%c96_133, %c0_134] : memref<128x64xf32, #tpu.memory_space<vmem>>, vector<16x64xf32>
    %c96_135 = arith.constant 96 : index
    %c0_136 = arith.constant 0 : index
    %197 = vector.load %arg26[%c96_135, %c0_136] : memref<128x64xf32, #tpu.memory_space<vmem>>, vector<16x64xf32>
    %198 = tpu.concatenate %195, %195, %195, %195, %195, %195, %195, %195 in 0 : vector<16x64xf32>, vector<16x64xf32>, vector<16x64xf32>, vector<16x64xf32>, vector<16x64xf32>, vector<16x64xf32>, vector<16x64xf32>, vector<16x64xf32> -> vector<128x64xf32>
    %199 = arith.mulf %198, %42 : vector<128x64xf32>
    %cst_137 = arith.constant dense<0.000000e+00> : vector<128x64xf32>
    %200 = tpu.matmul %199, %43, %cst_137 {dimension_numbers = #tpu.dot_dimension_numbers<[1], [0], [0], [1], [0, 0, 1, 1], [], []>} : vector<128x64xf32>, vector<64x64xf32>, vector<128x64xf32> -> vector<128x64xf32>
    %201 = tpu.concatenate %196, %196, %196, %196, %196, %196, %196, %196 in 0 : vector<16x64xf32>, vector<16x64xf32>, vector<16x64xf32>, vector<16x64xf32>, vector<16x64xf32>, vector<16x64xf32>, vector<16x64xf32>, vector<16x64xf32> -> vector<128x64xf32>
    %202 = arith.mulf %201, %42 : vector<128x64xf32>
    %cst_138 = arith.constant dense<0.000000e+00> : vector<128x128xf32>
    %203 = tpu.matmul %200, %202, %cst_138 {dimension_numbers = #tpu.dot_dimension_numbers<[1], [1], [0], [0], [0, 0, 1, 0], [], []>} : vector<128x64xf32>, vector<128x64xf32>, vector<128x128xf32> -> vector<128x128xf32>
    %cst_139 = arith.constant dense<0xFF800000> : vector<128xf32>
    %204 = vector.multi_reduction <maximumf>, %203, %cst_139 [1] : vector<128x128xf32> to vector<128xf32>
    %205 = vector.shape_cast %204 : vector<128xf32> to vector<128x1xf32>
    %206 = vector.broadcast %205 : vector<128x1xf32> to vector<128x128xf32>
    %207 = arith.subf %203, %206 : vector<128x128xf32>
    %208 = math.exp %207 : vector<128x128xf32>
    %cst_140 = arith.constant dense<0.000000e+00> : vector<128xf32>
    %209 = vector.multi_reduction <add>, %208, %cst_140 [1] : vector<128x128xf32> to vector<128xf32>
    %210 = vector.shape_cast %209 : vector<128xf32> to vector<128x1xf32>
    %211 = vector.broadcast %210 : vector<128x1xf32> to vector<128x128xf32>
    %212 = arith.divf %208, %211 : vector<128x128xf32>
    %213 = tpu.concatenate %197, %197, %197, %197, %197, %197, %197, %197 in 0 : vector<16x64xf32>, vector<16x64xf32>, vector<16x64xf32>, vector<16x64xf32>, vector<16x64xf32>, vector<16x64xf32>, vector<16x64xf32>, vector<16x64xf32> -> vector<128x64xf32>
    %214 = arith.mulf %213, %42 : vector<128x64xf32>
    %cst_141 = arith.constant dense<0.000000e+00> : vector<128x64xf32>
    %215 = tpu.matmul %212, %214, %cst_141 {dimension_numbers = #tpu.dot_dimension_numbers<[1], [0], [0], [1], [0, 0, 1, 1], [], []>} : vector<128x128xf32>, vector<128x64xf32>, vector<128x64xf32> -> vector<128x64xf32>
    %cst_142 = arith.constant dense<0.000000e+00> : vector<128x64xf32>
    %216 = tpu.matmul %215, %43, %cst_142 {dimension_numbers = #tpu.dot_dimension_numbers<[1], [0], [0], [1], [0, 0, 1, 1], [], []>} : vector<128x64xf32>, vector<64x64xf32>, vector<128x64xf32> -> vector<128x64xf32>
    %217 = arith.mulf %216, %42 : vector<128x64xf32>
    %cst_143 = arith.constant dense<0.000000e+00> : vector<16x64xf32>
    %218 = tpu.matmul %44, %217, %cst_143 {dimension_numbers = #tpu.dot_dimension_numbers<[1], [0], [0], [1], [0, 0, 1, 1], [], []>} : vector<16x128xf32>, vector<128x64xf32>, vector<16x64xf32> -> vector<16x64xf32>
    %c96_144 = arith.constant 96 : index
    %c0_145 = arith.constant 0 : index
    %219 = vector.load %arg27[%c96_144, %c0_145] : memref<128x64xf32, #tpu.memory_space<vmem>>, vector<16x64xf32>
    tpu.vector_store %arg27[%c96_144, %c0_145], %218 {strides = array<i32>} : memref<128x64xf32, #tpu.memory_space<vmem>>, vector<16x64xf32>,
    %c112 = arith.constant 112 : index
    %c0_146 = arith.constant 0 : index
    %220 = vector.load %arg24[%c112, %c0_146] : memref<128x64xf32, #tpu.memory_space<vmem>>, vector<16x64xf32>
    %c112_147 = arith.constant 112 : index
    %c0_148 = arith.constant 0 : index
    %221 = vector.load %arg25[%c112_147, %c0_148] : memref<128x64xf32, #tpu.memory_space<vmem>>, vector<16x64xf32>
    %c112_149 = arith.constant 112 : index
    %c0_150 = arith.constant 0 : index
    %222 = vector.load %arg26[%c112_149, %c0_150] : memref<128x64xf32, #tpu.memory_space<vmem>>, vector<16x64xf32>
    %223 = tpu.concatenate %220, %220, %220, %220, %220, %220, %220, %220 in 0 : vector<16x64xf32>, vector<16x64xf32>, vector<16x64xf32>, vector<16x64xf32>, vector<16x64xf32>, vector<16x64xf32>, vector<16x64xf32>, vector<16x64xf32> -> vector<128x64xf32>
    %224 = arith.mulf %223, %42 : vector<128x64xf32>
    %cst_151 = arith.constant dense<0.000000e+00> : vector<128x64xf32>
    %225 = tpu.matmul %224, %43, %cst_151 {dimension_numbers = #tpu.dot_dimension_numbers<[1], [0], [0], [1], [0, 0, 1, 1], [], []>} : vector<128x64xf32>, vector<64x64xf32>, vector<128x64xf32> -> vector<128x64xf32>
    %226 = tpu.concatenate %221, %221, %221, %221, %221, %221, %221, %221 in 0 : vector<16x64xf32>, vector<16x64xf32>, vector<16x64xf32>, vector<16x64xf32>, vector<16x64xf32>, vector<16x64xf32>, vector<16x64xf32>, vector<16x64xf32> -> vector<128x64xf32>
    %227 = arith.mulf %226, %42 : vector<128x64xf32>
    %cst_152 = arith.constant dense<0.000000e+00> : vector<128x128xf32>
    %228 = tpu.matmul %225, %227, %cst_152 {dimension_numbers = #tpu.dot_dimension_numbers<[1], [1], [0], [0], [0, 0, 1, 0], [], []>} : vector<128x64xf32>, vector<128x64xf32>, vector<128x128xf32> -> vector<128x128xf32>
    %cst_153 = arith.constant dense<0xFF800000> : vector<128xf32>
    %229 = vector.multi_reduction <maximumf>, %228, %cst_153 [1] : vector<128x128xf32> to vector<128xf32>
    %230 = vector.shape_cast %229 : vector<128xf32> to vector<128x1xf32>
    %231 = vector.broadcast %230 : vector<128x1xf32> to vector<128x128xf32>
    %232 = arith.subf %228, %231 : vector<128x128xf32>
    %233 = math.exp %232 : vector<128x128xf32>
    %cst_154 = arith.constant dense<0.000000e+00> : vector<128xf32>
    %234 = vector.multi_reduction <add>, %233, %cst_154 [1] : vector<128x128xf32> to vector<128xf32>
    %235 = vector.shape_cast %234 : vector<128xf32> to vector<128x1xf32>
    %236 = vector.broadcast %235 : vector<128x1xf32> to vector<128x128xf32>
    %237 = arith.divf %233, %236 : vector<128x128xf32>
    %238 = tpu.concatenate %222, %222, %222, %222, %222, %222, %222, %222 in 0 : vector<16x64xf32>, vector<16x64xf32>, vector<16x64xf32>, vector<16x64xf32>, vector<16x64xf32>, vector<16x64xf32>, vector<16x64xf32>, vector<16x64xf32> -> vector<128x64xf32>
    %239 = arith.mulf %238, %42 : vector<128x64xf32>
    %cst_155 = arith.constant dense<0.000000e+00> : vector<128x64xf32>
    %240 = tpu.matmul %237, %239, %cst_155 {dimension_numbers = #tpu.dot_dimension_numbers<[1], [0], [0], [1], [0, 0, 1, 1], [], []>} : vector<128x128xf32>, vector<128x64xf32>, vector<128x64xf32> -> vector<128x64xf32>
    %cst_156 = arith.constant dense<0.000000e+00> : vector<128x64xf32>
    %241 = tpu.matmul %240, %43, %cst_156 {dimension_numbers = #tpu.dot_dimension_numbers<[1], [0], [0], [1], [0, 0, 1, 1], [], []>} : vector<128x64xf32>, vector<64x64xf32>, vector<128x64xf32> -> vector<128x64xf32>
    %242 = arith.mulf %241, %42 : vector<128x64xf32>
    %cst_157 = arith.constant dense<0.000000e+00> : vector<16x64xf32>
    %243 = tpu.matmul %44, %242, %cst_157 {dimension_numbers = #tpu.dot_dimension_numbers<[1], [0], [0], [1], [0, 0, 1, 1], [], []>} : vector<16x128xf32>, vector<128x64xf32>, vector<16x64xf32> -> vector<16x64xf32>
    %c112_158 = arith.constant 112 : index
    %c0_159 = arith.constant 0 : index
    %244 = vector.load %arg27[%c112_158, %c0_159] : memref<128x64xf32, #tpu.memory_space<vmem>>, vector<16x64xf32>
    tpu.vector_store %arg27[%c112_158, %c0_159], %243 {strides = array<i32>} : memref<128x64xf32, #tpu.memory_space<vmem>>, vector<16x64xf32>,
    %c0_160 = arith.constant 0 : index
    %c0_161 = arith.constant 0 : index
    %245 = vector.load %arg27[%c0_160, %c0_161] : memref<128x64xf32, #tpu.memory_space<vmem>>, vector<128x64xf32>
    %c0_162 = arith.constant 0 : index
    %c0_163 = arith.constant 0 : index
    %246 = vector.load %arg10[%c0_162, %c0_163] : memref<64x64xf32, #tpu.memory_space<vmem>>, vector<64x64xf32>
    %cst_164 = arith.constant dense<0.000000e+00> : vector<128x64xf32>
    %247 = tpu.matmul %245, %246, %cst_164 {dimension_numbers = #tpu.dot_dimension_numbers<[1], [0], [0], [1], [0, 0, 1, 1], [], []>} : vector<128x64xf32>, vector<64x64xf32>, vector<128x64xf32> -> vector<128x64xf32>
    %c0_165 = arith.constant 0 : index
    %c0_166 = arith.constant 0 : index
    %248 = vector.load %arg11[%c0_165, %c0_166] : memref<1x64xf32, #tpu.memory_space<vmem>>, vector<1x64xf32>
    %249 = vector.broadcast %248 : vector<1x64xf32> to vector<128x64xf32>
    %250 = arith.addf %247, %249 : vector<128x64xf32>
    %c0_167 = arith.constant 0 : index
    %c0_168 = arith.constant 0 : index
    %251 = vector.load %arg23[%c0_167, %c0_168] : memref<128x64xf32, #tpu.memory_space<vmem>>, vector<128x64xf32>
    %252 = arith.addf %251, %250 : vector<128x64xf32>
    %cst_169 = arith.constant dense<0.000000e+00> : vector<128xf32>
    %253 = vector.multi_reduction <add>, %252, %cst_169 [1] : vector<128x64xf32> to vector<128xf32>
    %254 = vector.shape_cast %253 : vector<128xf32> to vector<128x1xf32>
    %cst_170 = arith.constant 6.400000e+01 : f32
    %255 = vector.broadcast %cst_170 : f32 to vector<128x1xf32>
    %256 = arith.divf %254, %255 : vector<128x1xf32>
    %257 = vector.broadcast %256 : vector<128x1xf32> to vector<128x64xf32>
    %258 = arith.subf %252, %257 : vector<128x64xf32>
    %259 = arith.mulf %258, %258 : vector<128x64xf32>
    %cst_171 = arith.constant dense<0.000000e+00> : vector<128xf32>
    %260 = vector.multi_reduction <add>, %259, %cst_171 [1] : vector<128x64xf32> to vector<128xf32>
    %261 = vector.shape_cast %260 : vector<128xf32> to vector<128x1xf32>
    %cst_172 = arith.constant 6.400000e+01 : f32
    %262 = vector.broadcast %cst_172 : f32 to vector<128x1xf32>
    %263 = arith.divf %261, %262 : vector<128x1xf32>
    %cst_173 = arith.constant 9.99999974E-6 : f32
    %264 = vector.broadcast %cst_173 : f32 to vector<128x1xf32>
    %265 = arith.addf %263, %264 : vector<128x1xf32>
    %266 = math.rsqrt %265 : vector<128x1xf32>
    %267 = vector.broadcast %266 : vector<128x1xf32> to vector<128x64xf32>
    %268 = arith.mulf %258, %267 : vector<128x64xf32>
    %c0_174 = arith.constant 0 : index
    %c0_175 = arith.constant 0 : index
    %269 = vector.load %arg12[%c0_174, %c0_175] : memref<64x512xf32, #tpu.memory_space<vmem>>, vector<64x256xf32>
    %cst_176 = arith.constant dense<0.000000e+00> : vector<128x256xf32>
    %270 = tpu.matmul %268, %269, %cst_176 {dimension_numbers = #tpu.dot_dimension_numbers<[1], [0], [0], [1], [0, 0, 1, 1], [], []>} : vector<128x64xf32>, vector<64x256xf32>, vector<128x256xf32> -> vector<128x256xf32>
    %c0_177 = arith.constant 0 : index
    %c0_178 = arith.constant 0 : index
    %271 = vector.load %arg13[%c0_177, %c0_178] : memref<1x512xf32, #tpu.memory_space<vmem>>, vector<1x256xf32>
    %272 = vector.broadcast %271 : vector<1x256xf32> to vector<128x256xf32>
    %273 = arith.addf %270, %272 : vector<128x256xf32>
    %cst_179 = arith.constant 0.000000e+00 : f32
    %274 = vector.broadcast %cst_179 : f32 to vector<128x256xf32>
    %275 = arith.maximumf %273, %274 : vector<128x256xf32>
    %c0_180 = arith.constant 0 : index
    %c0_181 = arith.constant 0 : index
    %276 = vector.load %arg14[%c0_180, %c0_181] : memref<512x64xf32, #tpu.memory_space<vmem>>, vector<256x64xf32>
    %cst_182 = arith.constant dense<0.000000e+00> : vector<128x64xf32>
    %277 = tpu.matmul %275, %276, %cst_182 {dimension_numbers = #tpu.dot_dimension_numbers<[1], [0], [0], [1], [0, 0, 1, 1], [], []>} : vector<128x256xf32>, vector<256x64xf32>, vector<128x64xf32> -> vector<128x64xf32>
    %c0_183 = arith.constant 0 : index
    %c256 = arith.constant 256 : index
    %278 = vector.load %arg12[%c0_183, %c256] : memref<64x512xf32, #tpu.memory_space<vmem>>, vector<64x256xf32>
    %cst_184 = arith.constant dense<0.000000e+00> : vector<128x256xf32>
    %279 = tpu.matmul %268, %278, %cst_184 {dimension_numbers = #tpu.dot_dimension_numbers<[1], [0], [0], [1], [0, 0, 1, 1], [], []>} : vector<128x64xf32>, vector<64x256xf32>, vector<128x256xf32> -> vector<128x256xf32>
    %c0_185 = arith.constant 0 : index
    %c256_186 = arith.constant 256 : index
    %280 = vector.load %arg13[%c0_185, %c256_186] : memref<1x512xf32, #tpu.memory_space<vmem>>, vector<1x256xf32>
    %281 = vector.broadcast %280 : vector<1x256xf32> to vector<128x256xf32>
    %282 = arith.addf %279, %281 : vector<128x256xf32>
    %cst_187 = arith.constant 0.000000e+00 : f32
    %283 = vector.broadcast %cst_187 : f32 to vector<128x256xf32>
    %284 = arith.maximumf %282, %283 : vector<128x256xf32>
    %c256_188 = arith.constant 256 : index
    %c0_189 = arith.constant 0 : index
    %285 = vector.load %arg14[%c256_188, %c0_189] : memref<512x64xf32, #tpu.memory_space<vmem>>, vector<256x64xf32>
    %cst_190 = arith.constant dense<0.000000e+00> : vector<128x64xf32>
    %286 = tpu.matmul %284, %285, %cst_190 {dimension_numbers = #tpu.dot_dimension_numbers<[1], [0], [0], [1], [0, 0, 1, 1], [], []>} : vector<128x256xf32>, vector<256x64xf32>, vector<128x64xf32> -> vector<128x64xf32>
    %287 = arith.addf %277, %286 : vector<128x64xf32>
    %288 = arith.addf %268, %287 : vector<128x64xf32>
    %c0_191 = arith.constant 0 : index
    %c0_192 = arith.constant 0 : index
    %289 = vector.load %arg15[%c0_191, %c0_192] : memref<1x64xf32, #tpu.memory_space<vmem>>, vector<1x64xf32>
    %290 = vector.broadcast %289 : vector<1x64xf32> to vector<128x64xf32>
    %291 = arith.addf %288, %290 : vector<128x64xf32>
    %cst_193 = arith.constant dense<0.000000e+00> : vector<128xf32>
    %292 = vector.multi_reduction <add>, %291, %cst_193 [1] : vector<128x64xf32> to vector<128xf32>
    %293 = vector.shape_cast %292 : vector<128xf32> to vector<128x1xf32>
    %cst_194 = arith.constant 6.400000e+01 : f32
    %294 = vector.broadcast %cst_194 : f32 to vector<128x1xf32>
    %295 = arith.divf %293, %294 : vector<128x1xf32>
    %296 = vector.broadcast %295 : vector<128x1xf32> to vector<128x64xf32>
    %297 = arith.subf %291, %296 : vector<128x64xf32>
    %298 = arith.mulf %297, %297 : vector<128x64xf32>
    %cst_195 = arith.constant dense<0.000000e+00> : vector<128xf32>
    %299 = vector.multi_reduction <add>, %298, %cst_195 [1] : vector<128x64xf32> to vector<128xf32>
    %300 = vector.shape_cast %299 : vector<128xf32> to vector<128x1xf32>
    %cst_196 = arith.constant 6.400000e+01 : f32
    %301 = vector.broadcast %cst_196 : f32 to vector<128x1xf32>
    %302 = arith.divf %300, %301 : vector<128x1xf32>
    %cst_197 = arith.constant 9.99999974E-6 : f32
    %303 = vector.broadcast %cst_197 : f32 to vector<128x1xf32>
    %304 = arith.addf %302, %303 : vector<128x1xf32>
    %305 = math.rsqrt %304 : vector<128x1xf32>
    %306 = vector.broadcast %305 : vector<128x1xf32> to vector<128x64xf32>
    %307 = arith.mulf %297, %306 : vector<128x64xf32>
    %c0_198 = arith.constant 0 : index
    %c0_199 = arith.constant 0 : index
    %308 = vector.load %arg16[%c0_198, %c0_199] : memref<64x4xf32, #tpu.memory_space<vmem>>, vector<64x4xf32>
    %cst_200 = arith.constant dense<0.000000e+00> : vector<128x4xf32>
    %309 = tpu.matmul %307, %308, %cst_200 {dimension_numbers = #tpu.dot_dimension_numbers<[1], [0], [0], [1], [0, 0, 1, 1], [], []>} : vector<128x64xf32>, vector<64x4xf32>, vector<128x4xf32> -> vector<128x4xf32>
    %c0_201 = arith.constant 0 : index
    %c0_202 = arith.constant 0 : index
    %310 = vector.load %arg17[%c0_201, %c0_202] : memref<1x4xf32, #tpu.memory_space<vmem>>, vector<1x4xf32>
    %311 = vector.broadcast %310 : vector<1x4xf32> to vector<128x4xf32>
    %312 = arith.addf %309, %311 : vector<128x4xf32>
    %cst_203 = arith.constant dense<0xFF800000> : vector<128xf32>
    %313 = vector.multi_reduction <maximumf>, %312, %cst_203 [1] : vector<128x4xf32> to vector<128xf32>
    %314 = vector.shape_cast %313 : vector<128xf32> to vector<128x1xf32>
    %315 = vector.broadcast %314 : vector<128x1xf32> to vector<128x4xf32>
    %316 = arith.subf %312, %315 : vector<128x4xf32>
    %317 = math.exp %316 : vector<128x4xf32>
    %cst_204 = arith.constant dense<0.000000e+00> : vector<128xf32>
    %318 = vector.multi_reduction <add>, %317, %cst_204 [1] : vector<128x4xf32> to vector<128xf32>
    %319 = vector.shape_cast %318 : vector<128xf32> to vector<128x1xf32>
    %320 = vector.broadcast %319 : vector<128x1xf32> to vector<128x4xf32>
    %321 = arith.divf %317, %320 : vector<128x4xf32>
    %c0_205 = arith.constant 0 : index
    %c0_206 = arith.constant 0 : index
    %322 = vector.load %arg21[%c0_205, %c0_206] : memref<128x4xf32, #tpu.memory_space<vmem>>, vector<128x4xf32>
    tpu.vector_store %arg21[%c0_205, %c0_206], %321 {strides = array<i32>} : memref<128x4xf32, #tpu.memory_space<vmem>>, vector<128x4xf32>,
    return
  }
}

</mosaic_0001>

<llo_original>
// kernel: grtrans_forward.1
$region0: #{grtrans_forward.1}
  #allocation0 [shape = 'u32[]', space=smem, size = 0x4, offset = 0x4, fixed_abs, tag = 'smem constant byte address 0x4 - core index']
  #allocation1 [shape = 'u32[72,128]{1,0:T(1,128)}', space=vmem, size = 0x9000, scoped, tag = 'internal scratch']
  #allocation2 [shape = 'f32[128,64]{1,0:T(8,128)}', space=vmem, size = 0x10000, scoped, tag = 'scratch operand']
  #allocation3 [shape = 'f32[128,64]{1,0:T(8,128)}', space=vmem, size = 0x10000, scoped, tag = 'scratch operand']
  #allocation4 [shape = 'f32[128,64]{1,0:T(8,128)}', space=vmem, size = 0x10000, scoped, tag = 'scratch operand']
  #allocation5 [shape = 'f32[128,64]{1,0:T(8,128)}', space=vmem, size = 0x10000, scoped, tag = 'scratch operand']
  #allocation6 [shape = 'f32[128,64]{1,0:T(8,128)}', space=vmem, size = 0x10000, scoped, tag = 'scratch operand']
  %s0 = inlined_call_operand.vmem [shape: f32[1,3], index: 0, kind: input, shape index: {}]
  %s1 = inlined_call_operand.vmem [shape: f32[3,128,128], index: 1, kind: input, shape index: {}]
  %s2 = inlined_call_operand.vmem [shape: f32[128,64], index: 2, kind: input, shape index: {}]
  %s3 = inlined_call_operand.vmem [shape: f32[1,64], index: 3, kind: input, shape index: {}]
  %s4 = inlined_call_operand.vmem [shape: f32[64,64], index: 4, kind: input, shape index: {}]
  %s5 = inlined_call_operand.vmem [shape: f32[1,64], index: 5, kind: input, shape index: {}]
  %s6 = inlined_call_operand.vmem [shape: f32[64,64], index: 6, kind: input, shape index: {}]
  %s7 = inlined_call_operand.vmem [shape: f32[1,64], index: 7, kind: input, shape index: {}]
  %s8 = inlined_call_operand.vmem [shape: f32[64,64], index: 8, kind: input, shape index: {}]
  %s9 = inlined_call_operand.vmem [shape: f32[1,64], index: 9, kind: input, shape index: {}]
  %s10 = inlined_call_operand.vmem [shape: f32[64,64], index: 10, kind: input, shape index: {}]
  %s11 = inlined_call_operand.vmem [shape: f32[1,64], index: 11, kind: input, shape index: {}]
  %s12 = inlined_call_operand.vmem [shape: f32[64,512], index: 12, kind: input, shape index: {}]
  %s13 = inlined_call_operand.vmem [shape: f32[1,512], index: 13, kind: input, shape index: {}]
  %s14 = inlined_call_operand.vmem [shape: f32[512,64], index: 14, kind: input, shape index: {}]
  %s15 = inlined_call_operand.vmem [shape: f32[1,64], index: 15, kind: input, shape index: {}]
  %s16 = inlined_call_operand.vmem [shape: f32[64,4], index: 16, kind: input, shape index: {}]
  %s17 = inlined_call_operand.vmem [shape: f32[1,4], index: 17, kind: input, shape index: {}]
  %s18 = inlined_call_operand.vmem [shape: f32[128,64], index: 18, kind: input, shape index: {}]
  %s19 = inlined_call_operand.vmem [shape: f32[64,64], index: 19, kind: input, shape index: {}]
  %s20 = inlined_call_operand.vmem [shape: f32[16,128], index: 20, kind: input, shape index: {}]
  %s21 = inlined_call_operand.vmem [shape: f32[128,4], index: 21, kind: output, shape index: {0}]
  %s22 = inlined_call_operand.hbm [shape: f32[128,128], index: 22, kind: output, shape index: {1}]
  %23 = xla_tuple %s21, %s22
  %s24 = sld [smem:[#allocation0]]
  $region106: #{grtrans_forward.1} parent=0
    _
  %s26 = ssub.s32 1, %s24
  %s27 = scalar_select 0, %s26, %s24
  $region1: #{grtrans_forward.1} parent=0
    #allocation7 [shape = 'u8[512]{0}', space=smem, size = 0x200, scoped, tag = 'input window, operand 0, single buffered']
    #allocation8 [shape = 's32[1]{0}', space=sflag, size = 0x4, scoped, tag = 'scoped memory for grtrans_forward.1']
    #allocation9 [shape = 's32[1]{0}', space=sflag, size = 0x4, scoped, tag = 'scoped memory for grtrans_forward.1']
    #allocation10 [shape = 'u8[65536]{0}', space=vmem, size = 0x10000, scoped, tag = 'output window, operand 1, single buffered']
    %28 = vsyncpa [#allocation9], 0
    %29 = vsyncpa [#allocation8], 0
    // Predicated region
    $region2: #{grtrans_forward.1} parent=1 // pred_check
      _
    $region3: #{grtrans_forward.1} parent=1 // pred_check_branch
      %31 = sbr.rel (0) target = $region5
    $region4: #{grtrans_forward.1} parent=1 // pred_region
      %33 = vsyncadd [#allocation9], 0
      %s35 = sshll.u32 %s0, 4
      %s36 = int_to_ptr.vmem [resolvable:$true] %s35
      %38 = dma.vmem_to_smem %s36, 16, [#allocation7], [#allocation9]
    $region5: #{grtrans_forward.1} parent=1 // pred_fallthru
      _
    // Predicated region
    $region6: #{grtrans_forward.1} parent=1 // pred_check
      _
    $region7: #{grtrans_forward.1} parent=1 // pred_check_branch
      %40 = sbr.rel (0) target = $region9
    $region8: #{grtrans_forward.1} parent=1 // pred_region
      _
    $region9: #{grtrans_forward.1} parent=1 // pred_fallthru
      _
    // Predicated region
    $region10: #{grtrans_forward.1} parent=1 // pred_check
      _
    $region11: #{grtrans_forward.1} parent=1 // pred_check_branch
      %42 = sbr.rel (0) target = $region13
    $region12: #{grtrans_forward.1} parent=1 // pred_region
      _
    $region13: #{grtrans_forward.1} parent=1 // pred_fallthru
      _
    // Predicated region
    $region14: #{grtrans_forward.1} parent=1 // pred_check
      _
    $region15: #{grtrans_forward.1} parent=1 // pred_check_branch
      %44 = sbr.rel (0) target = $region17
    $region16: #{grtrans_forward.1} parent=1 // pred_region
      _
    $region17: #{grtrans_forward.1} parent=1 // pred_fallthru
      _
    // Predicated region
    $region18: #{grtrans_forward.1} parent=1 // pred_check
      _
    $region19: #{grtrans_forward.1} parent=1 // pred_check_branch
      %46 = sbr.rel (0) target = $region21
    $region20: #{grtrans_forward.1} parent=1 // pred_region
      _
    $region21: #{grtrans_forward.1} parent=1 // pred_fallthru
      _
    // Predicated region
    $region22: #{grtrans_forward.1} parent=1 // pred_check
      _
    $region23: #{grtrans_forward.1} parent=1 // pred_check_branch
      %48 = sbr.rel (0) target = $region25
    $region24: #{grtrans_forward.1} parent=1 // pred_region
      _
    $region25: #{grtrans_forward.1} parent=1 // pred_fallthru
      _
    // Predicated region
    $region26: #{grtrans_forward.1} parent=1 // pred_check
      _
    $region27: #{grtrans_forward.1} parent=1 // pred_check_branch
      %50 = sbr.rel (0) target = $region29
    $region28: #{grtrans_forward.1} parent=1 // pred_region
      _
    $region29: #{grtrans_forward.1} parent=1 // pred_fallthru
      _
    // Predicated region
    $region30: #{grtrans_forward.1} parent=1 // pred_check
      _
    $region31: #{grtrans_forward.1} parent=1 // pred_check_branch
      %52 = sbr.rel (0) target = $region33
    $region32: #{grtrans_forward.1} parent=1 // pred_region
      _
    $region33: #{grtrans_forward.1} parent=1 // pred_fallthru
      _
    // Predicated region
    $region34: #{grtrans_forward.1} parent=1 // pred_check
      _
    $region35: #{grtrans_forward.1} parent=1 // pred_check_branch
      %54 = sbr.rel (0) target = $region37
    $region36: #{grtrans_forward.1} parent=1 // pred_region
      _
    $region37: #{grtrans_forward.1} parent=1 // pred_fallthru
      _
    // Predicated region
    $region38: #{grtrans_forward.1} parent=1 // pred_check
      _
    $region39: #{grtrans_forward.1} parent=1 // pred_check_branch
      %56 = sbr.rel (0) target = $region41
    $region40: #{grtrans_forward.1} parent=1 // pred_region
      _
    $region41: #{grtrans_forward.1} parent=1 // pred_fallthru
      _
    // Predicated region
    $region42: #{grtrans_forward.1} parent=1 // pred_check
      _
    $region43: #{grtrans_forward.1} parent=1 // pred_check_branch
      %58 = sbr.rel (0) target = $region45
    $region44: #{grtrans_forward.1} parent=1 // pred_region
      _
    $region45: #{grtrans_forward.1} parent=1 // pred_fallthru
      _
    // Predicated region
    $region46: #{grtrans_forward.1} parent=1 // pred_check
      _
    $region47: #{grtrans_forward.1} parent=1 // pred_check_branch
      %60 = sbr.rel (0) target = $region49
    $region48: #{grtrans_forward.1} parent=1 // pred_region
      _
    $region49: #{grtrans_forward.1} parent=1 // pred_fallthru
      _
    // Predicated region
    $region50: #{grtrans_forward.1} parent=1 // pred_check
      _
    $region51: #{grtrans_forward.1} parent=1 // pred_check_branch
      %62 = sbr.rel (0) target = $region53
    $region52: #{grtrans_forward.1} parent=1 // pred_region
      _
    $region53: #{grtrans_forward.1} parent=1 // pred_fallthru
      _
    // Predicated region
    $region54: #{grtrans_forward.1} parent=1 // pred_check
      _
    $region55: #{grtrans_forward.1} parent=1 // pred_check_branch
      %64 = sbr.rel (0) target = $region57
    $region56: #{grtrans_forward.1} parent=1 // pred_region
      _
    $region57: #{grtrans_forward.1} parent=1 // pred_fallthru
      _
    // Predicated region
    $region58: #{grtrans_forward.1} parent=1 // pred_check
      _
    $region59: #{grtrans_forward.1} parent=1 // pred_check_branch
      %66 = sbr.rel (0) target = $region61
    $region60: #{grtrans_forward.1} parent=1 // pred_region
      _
    $region61: #{grtrans_forward.1} parent=1 // pred_fallthru
      _
    // Predicated region
    $region62: #{grtrans_forward.1} parent=1 // pred_check
      _
    $region63: #{grtrans_forward.1} parent=1 // pred_check_branch
      %68 = sbr.rel (0) target = $region65
    $region64: #{grtrans_forward.1} parent=1 // pred_region
      _
    $region65: #{grtrans_forward.1} parent=1 // pred_fallthru
      _
    // Predicated region
    $region66: #{grtrans_forward.1} parent=1 // pred_check
      _
    $region67: #{grtrans_forward.1} parent=1 // pred_check_branch
      %70 = sbr.rel (0) target = $region69
    $region68: #{grtrans_forward.1} parent=1 // pred_region
      _
    $region69: #{grtrans_forward.1} parent=1 // pred_fallthru
      _
    // Predicated region
    $region70: #{grtrans_forward.1} parent=1 // pred_check
      _
    $region71: #{grtrans_forward.1} parent=1 // pred_check_branch
      %72 = sbr.rel (0) target = $region73
    $region72: #{grtrans_forward.1} parent=1 // pred_region
      _
    $region73: #{grtrans_forward.1} parent=1 // pred_fallthru
      _
    // Predicated region
    $region74: #{grtrans_forward.1} parent=1 // pred_check
      _
    $region75: #{grtrans_forward.1} parent=1 // pred_check_branch
      %74 = sbr.rel (0) target = $region77
    $region76: #{grtrans_forward.1} parent=1 // pred_region
      _
    $region77: #{grtrans_forward.1} parent=1 // pred_fallthru
      _
    // Predicated region
    $region78: #{grtrans_forward.1} parent=1 // pred_check
      _
    $region79: #{grtrans_forward.1} parent=1 // pred_check_branch
      %76 = sbr.rel (0) target = $region81
    $region80: #{grtrans_forward.1} parent=1 // pred_region
      _
    $region81: #{grtrans_forward.1} parent=1 // pred_fallthru
      _
    // Predicated region
    $region82: #{grtrans_forward.1} parent=1 // pred_check
      _
    $region83: #{grtrans_forward.1} parent=1 // pred_check_branch
      %78 = sbr.rel (0) target = $region85
    $region84: #{grtrans_forward.1} parent=1 // pred_region
      _
    $region85: #{grtrans_forward.1} parent=1 // pred_fallthru
      _
    // Predicated region
    $region86: #{grtrans_forward.1} parent=1 // pred_check
      _
    $region87: #{grtrans_forward.1} parent=1 // pred_check_branch
      %80 = sbr.rel (0) target = $region89
    $region88: #{grtrans_forward.1} parent=1 // pred_region
      %82 = dma.done [#allocation9], 16
    $region89: #{grtrans_forward.1} parent=1 // pred_fallthru
      _
    %83 = sfence
    %v84 = vld [vmem:[%s1] sm:$0xff]
    %v85 = vld [vmem:[%s1 + $0x8] sm:$0xff]
    %v86 = vld [vmem:[%s1 + $0x10] sm:$0xff]
    %v87 = vld [vmem:[%s1 + $0x18] sm:$0xff]
    %v88 = vld [vmem:[%s1 + $0x20] sm:$0xff]
    %v89 = vld [vmem:[%s1 + $0x28] sm:$0xff]
    %v90 = vld [vmem:[%s1 + $0x30] sm:$0xff]
    %v91 = vld [vmem:[%s1 + $0x38] sm:$0xff]
    %v92 = vld [vmem:[%s1 + $0x40] sm:$0xff]
    %v93 = vld [vmem:[%s1 + $0x48] sm:$0xff]
    %v94 = vld [vmem:[%s1 + $0x50] sm:$0xff]
    %v95 = vld [vmem:[%s1 + $0x58] sm:$0xff]
    %v96 = vld [vmem:[%s1 + $0x60] sm:$0xff]
    %v97 = vld [vmem:[%s1 + $0x68] sm:$0xff]
    %v98 = vld [vmem:[%s1 + $0x70] sm:$0xff]
    %v99 = vld [vmem:[%s1 + $0x78] sm:$0xff]
    %s100 = sld [smem:[#allocation7]]
    %v101 = vstv %s100
    %v102 = vmul.f32 %v84, %v101
    %v103 = vmul.f32 %v85, %v101
    %v104 = vmul.f32 %v86, %v101
    %v105 = vmul.f32 %v87, %v101
    %v106 = vmul.f32 %v88, %v101
    %v107 = vmul.f32 %v89, %v101
    %v108 = vmul.f32 %v90, %v101
    %v109 = vmul.f32 %v91, %v101
    %v110 = vmul.f32 %v92, %v101
    %v111 = vmul.f32 %v93, %v101
    %v112 = vmul.f32 %v94, %v101
    %v113 = vmul.f32 %v95, %v101
    %v114 = vmul.f32 %v96, %v101
    %v115 = vmul.f32 %v97, %v101
    %v116 = vmul.f32 %v98, %v101
    %v117 = vmul.f32 %v99, %v101
    %s118 = scalar_lea.vmem %s1, 128
    %v119 = vld [vmem:[%s118] sm:$0xff]
    %v120 = vld [vmem:[%s118 + $0x8] sm:$0xff]
    %v121 = vld [vmem:[%s118 + $0x10] sm:$0xff]
    %v122 = vld [vmem:[%s118 + $0x18] sm:$0xff]
    %v123 = vld [vmem:[%s118 + $0x20] sm:$0xff]
    %v124 = vld [vmem:[%s118 + $0x28] sm:$0xff]
    %v125 = vld [vmem:[%s118 + $0x30] sm:$0xff]
    %v126 = vld [vmem:[%s118 + $0x38] sm:$0xff]
    %v127 = vld [vmem:[%s118 + $0x40] sm:$0xff]
    %v128 = vld [vmem:[%s118 + $0x48] sm:$0xff]
    %v129 = vld [vmem:[%s118 + $0x50] sm:$0xff]
    %v130 = vld [vmem:[%s118 + $0x58] sm:$0xff]
    %v131 = vld [vmem:[%s118 + $0x60] sm:$0xff]
    %v132 = vld [vmem:[%s118 + $0x68] sm:$0xff]
    %v133 = vld [vmem:[%s118 + $0x70] sm:$0xff]
    %v134 = vld [vmem:[%s118 + $0x78] sm:$0xff]
    %s135 = sld [smem:[#allocation7 + $0x1]]
    %v136 = vstv %s135
    %v137 = vmul.f32 %v119, %v136
    %v138 = vmul.f32 %v120, %v136
    %v139 = vmul.f32 %v121, %v136
    %v140 = vmul.f32 %v122, %v136
    %v141 = vmul.f32 %v123, %v136
    %v142 = vmul.f32 %v124, %v136
    %v143 = vmul.f32 %v125, %v136
    %v144 = vmul.f32 %v126, %v136
    %v145 = vmul.f32 %v127, %v136
    %v146 = vmul.f32 %v128, %v136
    %v147 = vmul.f32 %v129, %v136
    %v148 = vmul.f32 %v130, %v136
    %v149 = vmul.f32 %v131, %v136
    %v150 = vmul.f32 %v132, %v136
    %v151 = vmul.f32 %v133, %v136
    %v152 = vmul.f32 %v134, %v136
    %v153 = vadd.f32 %v102, %v137
    %v154 = vadd.f32 %v103, %v138
    %v155 = vadd.f32 %v104, %v139
    %v156 = vadd.f32 %v105, %v140
    %v157 = vadd.f32 %v106, %v141
    %v158 = vadd.f32 %v107, %v142
    %v159 = vadd.f32 %v108, %v143
    %v160 = vadd.f32 %v109, %v144
    %v161 = vadd.f32 %v110, %v145
    %v162 = vadd.f32 %v111, %v146
    %v163 = vadd.f32 %v112, %v147
    %v164 = vadd.f32 %v113, %v148
    %v165 = vadd.f32 %v114, %v149
    %v166 = vadd.f32 %v115, %v150
    %v167 = vadd.f32 %v116, %v151
    %v168 = vadd.f32 %v117, %v152
    %s169 = scalar_lea.vmem %s1, 256
    %v170 = vld [vmem:[%s169] sm:$0xff]
    %v171 = vld [vmem:[%s169 + $0x8] sm:$0xff]
    %v172 = vld [vmem:[%s169 + $0x10] sm:$0xff]
    %v173 = vld [vmem:[%s169 + $0x18] sm:$0xff]
    %v174 = vld [vmem:[%s169 + $0x20] sm:$0xff]
    %v175 = vld [vmem:[%s169 + $0x28] sm:$0xff]
    %v176 = vld [vmem:[%s169 + $0x30] sm:$0xff]
    %v177 = vld [vmem:[%s169 + $0x38] sm:$0xff]
    %v178 = vld [vmem:[%s169 + $0x40] sm:$0xff]
    %v179 = vld [vmem:[%s169 + $0x48] sm:$0xff]
    %v180 = vld [vmem:[%s169 + $0x50] sm:$0xff]
    %v181 = vld [vmem:[%s169 + $0x58] sm:$0xff]
    %v182 = vld [vmem:[%s169 + $0x60] sm:$0xff]
    %v183 = vld [vmem:[%s169 + $0x68] sm:$0xff]
    %v184 = vld [vmem:[%s169 + $0x70] sm:$0xff]
    %v185 = vld [vmem:[%s169 + $0x78] sm:$0xff]
    %s186 = sld [smem:[#allocation7 + $0x2]]
    %v187 = vstv %s186
    %v188 = vmul.f32 %v170, %v187
    %v189 = vmul.f32 %v171, %v187
    %v190 = vmul.f32 %v172, %v187
    %v191 = vmul.f32 %v173, %v187
    %v192 = vmul.f32 %v174, %v187
    %v193 = vmul.f32 %v175, %v187
    %v194 = vmul.f32 %v176, %v187
    %v195 = vmul.f32 %v177, %v187
    %v196 = vmul.f32 %v178, %v187
    %v197 = vmul.f32 %v179, %v187
    %v198 = vmul.f32 %v180, %v187
    %v199 = vmul.f32 %v181, %v187
    %v200 = vmul.f32 %v182, %v187
    %v201 = vmul.f32 %v183, %v187
    %v202 = vmul.f32 %v184, %v187
    %v203 = vmul.f32 %v185, %v187
    %v204 = vadd.f32 %v153, %v188
    %v205 = vadd.f32 %v154, %v189
    %v206 = vadd.f32 %v155, %v190
    %v207 = vadd.f32 %v156, %v191
    %v208 = vadd.f32 %v157, %v192
    %v209 = vadd.f32 %v158, %v193
    %v210 = vadd.f32 %v159, %v194
    %v211 = vadd.f32 %v160, %v195
    %v212 = vadd.f32 %v161, %v196
    %v213 = vadd.f32 %v162, %v197
    %v214 = vadd.f32 %v163, %v198
    %v215 = vadd.f32 %v164, %v199
    %v216 = vadd.f32 %v165, %v200
    %v217 = vadd.f32 %v166, %v201
    %v218 = vadd.f32 %v167, %v202
    %v219 = vadd.f32 %v168, %v203
    %220 = vst [vmem:[#allocation10] sm:$0xff] %v204
    %221 = vst [vmem:[#allocation10 + $0x8] sm:$0xff] %v205
    %222 = vst [vmem:[#allocation10 + $0x10] sm:$0xff] %v206
    %223 = vst [vmem:[#allocation10 + $0x18] sm:$0xff] %v207
    %224 = vst [vmem:[#allocation10 + $0x20] sm:$0xff] %v208
    %225 = vst [vmem:[#allocation10 + $0x28] sm:$0xff] %v209
    %226 = vst [vmem:[#allocation10 + $0x30] sm:$0xff] %v210
    %227 = vst [vmem:[#allocation10 + $0x38] sm:$0xff] %v211
    %228 = vst [vmem:[#allocation10 + $0x40] sm:$0xff] %v212
    %229 = vst [vmem:[#allocation10 + $0x48] sm:$0xff] %v213
    %230 = vst [vmem:[#allocation10 + $0x50] sm:$0xff] %v214
    %231 = vst [vmem:[#allocation10 + $0x58] sm:$0xff] %v215
    %232 = vst [vmem:[#allocation10 + $0x60] sm:$0xff] %v216
    %233 = vst [vmem:[#allocation10 + $0x68] sm:$0xff] %v217
    %234 = vst [vmem:[#allocation10 + $0x70] sm:$0xff] %v218
    %235 = vst [vmem:[#allocation10 + $0x78] sm:$0xff] %v219
    %v236 = vld [vmem:[%s2] sm:$0xff]
    %v237 = vld [vmem:[%s2 + $0x8] sm:$0xff]
    %v238 = vld [vmem:[%s2 + $0x10] sm:$0xff]
    %v239 = vld [vmem:[%s2 + $0x18] sm:$0xff]
    %v240 = vld [vmem:[%s2 + $0x20] sm:$0xff]
    %v241 = vld [vmem:[%s2 + $0x28] sm:$0xff]
    %v242 = vld [vmem:[%s2 + $0x30] sm:$0xff]
    %v243 = vld [vmem:[%s2 + $0x38] sm:$0xff]
    %v244 = vld [vmem:[%s2 + $0x40] sm:$0xff]
    %v245 = vld [vmem:[%s2 + $0x48] sm:$0xff]
    %v246 = vld [vmem:[%s2 + $0x50] sm:$0xff]
    %v247 = vld [vmem:[%s2 + $0x58] sm:$0xff]
    %v248 = vld [vmem:[%s2 + $0x60] sm:$0xff]
    %v249 = vld [vmem:[%s2 + $0x68] sm:$0xff]
    %v250 = vld [vmem:[%s2 + $0x70] sm:$0xff]
    %v251 = vld [vmem:[%s2 + $0x78] sm:$0xff]
    %v252 = vld [vmem:[%s3] sm:$0x1]
    %v254 = vperm.slane %v252, 0
    %256 = vmatpush.msra.mxu0 %v251
    %257 = vmatpush.msra.mxu0 %v250
    %258 = vmatpush.msra.mxu0 %v249
    %259 = vmatpush.msra.mxu0 %v248
    %260 = vmatpush.msra.mxu0 %v247
    %261 = vmatpush.msra.mxu0 %v246
    %262 = vmatpush.msra.mxu0 %v245
    %263 = vmatpush.msra.mxu0 %v244
    %264 = vmatpush.msra.mxu0 %v243
    %265 = vmatpush.msra.mxu0 %v242
    %266 = vmatpush.msra.mxu0 %v241
    %267 = vmatpush.msra.mxu0 %v240
    %268 = vmatpush.msra.mxu0 %v239
    %269 = vmatpush.msra.mxu0 %v238
    %270 = vmatpush.msra.mxu0 %v237
    %271 = vmatpush.msra.mxu0 %v236
    %272 = vmatmul.f32.gmra.mxu0 %v204
    %v273 = vpop.f32.mrf.mxu0
    %v274 = vadd.f32 %v254, %v273
    %275 = vmatmul.f32.gmra.mxu0 %v205
    %v276 = vpop.f32.mrf.mxu0
    %v277 = vadd.f32 %v254, %v276
    %278 = vmatmul.f32.gmra.mxu0 %v206
    %v279 = vpop.f32.mrf.mxu0
    %v280 = vadd.f32 %v254, %v279
    %281 = vmatmul.f32.gmra.mxu0 %v207
    %v282 = vpop.f32.mrf.mxu0
    %v283 = vadd.f32 %v254, %v282
    %284 = vmatmul.f32.gmra.mxu0 %v208
    %v285 = vpop.f32.mrf.mxu0
    %v286 = vadd.f32 %v254, %v285
    %287 = vmatmul.f32.gmra.mxu0 %v209
    %v288 = vpop.f32.mrf.mxu0
    %v289 = vadd.f32 %v254, %v288
    %290 = vmatmul.f32.gmra.mxu0 %v210
    %v291 = vpop.f32.mrf.mxu0
    %v292 = vadd.f32 %v254, %v291
    %293 = vmatmul.f32.gmra.mxu0 %v211
    %v294 = vpop.f32.mrf.mxu0
    %v295 = vadd.f32 %v254, %v294
    %296 = vmatmul.f32.gmra.mxu0 %v212
    %v297 = vpop.f32.mrf.mxu0
    %v298 = vadd.f32 %v254, %v297
    %299 = vmatmul.f32.gmra.mxu0 %v213
    %v300 = vpop.f32.mrf.mxu0
    %v301 = vadd.f32 %v254, %v300
    %302 = vmatmul.f32.gmra.mxu0 %v214
    %v303 = vpop.f32.mrf.mxu0
    %v304 = vadd.f32 %v254, %v303
    %305 = vmatmul.f32.gmra.mxu0 %v215
    %v306 = vpop.f32.mrf.mxu0
    %v307 = vadd.f32 %v254, %v306
    %308 = vmatmul.f32.gmra.mxu0 %v216
    %v309 = vpop.f32.mrf.mxu0
    %v310 = vadd.f32 %v254, %v309
    %311 = vmatmul.f32.gmra.mxu0 %v217
    %v312 = vpop.f32.mrf.mxu0
    %v313 = vadd.f32 %v254, %v312
    %314 = vmatmul.f32.gmra.mxu0 %v218
    %v315 = vpop.f32.mrf.mxu0
    %v316 = vadd.f32 %v254, %v315
    %317 = vmatmul.f32.gmra.mxu0 %v219
    %v318 = vpop.f32.mrf.mxu0
    %v319 = vadd.f32 %v254, %v318
    %320 = vdwg.mxu0
    %vm321 = vcmask 523264
    %322 = vst.msk [vmem:[#allocation2] sm:$0xff] %vm321, %v274
    %323 = vst.msk [vmem:[#allocation2 + $0x8] sm:$0xff] %vm321, %v277
    %324 = vst.msk [vmem:[#allocation2 + $0x10] sm:$0xff] %vm321, %v280
    %325 = vst.msk [vmem:[#allocation2 + $0x18] sm:$0xff] %vm321, %v283
    %326 = vst.msk [vmem:[#allocation2 + $0x20] sm:$0xff] %vm321, %v286
    %327 = vst.msk [vmem:[#allocation2 + $0x28] sm:$0xff] %vm321, %v289
    %328 = vst.msk [vmem:[#allocation2 + $0x30] sm:$0xff] %vm321, %v292
    %329 = vst.msk [vmem:[#allocation2 + $0x38] sm:$0xff] %vm321, %v295
    %330 = vst.msk [vmem:[#allocation2 + $0x40] sm:$0xff] %vm321, %v298
    %331 = vst.msk [vmem:[#allocation2 + $0x48] sm:$0xff] %vm321, %v301
    %332 = vst.msk [vmem:[#allocation2 + $0x50] sm:$0xff] %vm321, %v304
    %333 = vst.msk [vmem:[#allocation2 + $0x58] sm:$0xff] %vm321, %v307
    %334 = vst.msk [vmem:[#allocation2 + $0x60] sm:$0xff] %vm321, %v310
    %335 = vst.msk [vmem:[#allocation2 + $0x68] sm:$0xff] %vm321, %v313
    %336 = vst.msk [vmem:[#allocation2 + $0x70] sm:$0xff] %vm321, %v316
    %337 = vst.msk [vmem:[#allocation2 + $0x78] sm:$0xff] %vm321, %v319
    %v338 = vld [vmem:[%s4] sm:$0xff]
    %v339 = vld [vmem:[%s4 + $0x8] sm:$0xff]
    %v340 = vld [vmem:[%s4 + $0x10] sm:$0xff]
    %v341 = vld [vmem:[%s4 + $0x18] sm:$0xff]
    %v342 = vld [vmem:[%s4 + $0x20] sm:$0xff]
    %v343 = vld [vmem:[%s4 + $0x28] sm:$0xff]
    %v344 = vld [vmem:[%s4 + $0x30] sm:$0xff]
    %v345 = vld [vmem:[%s4 + $0x38] sm:$0xff]
    %v346 = vld [vmem:[%s5] sm:$0x1]
    %v348 = vperm.slane %v346, 0
    %v351 = vsel %vm321, %v274, 0
    %v354 = vsel %vm321, %v277, 0
    %v357 = vsel %vm321, %v280, 0
    %v360 = vsel %vm321, %v283, 0
    %v363 = vsel %vm321, %v286, 0
    %v366 = vsel %vm321, %v289, 0
    %v369 = vsel %vm321, %v292, 0
    %v372 = vsel %vm321, %v295, 0
    %v375 = vsel %vm321, %v298, 0
    %v378 = vsel %vm321, %v301, 0
    %v381 = vsel %vm321, %v304, 0
    %v384 = vsel %vm321, %v307, 0
    %v387 = vsel %vm321, %v310, 0
    %v390 = vsel %vm321, %v313, 0
    %v393 = vsel %vm321, %v316, 0
    %v396 = vsel %vm321, %v319, 0
    %398 = vmatpush.msra.mxu0 0.0
    %399 = vmatpush.msra.mxu0 0.0
    %400 = vmatpush.msra.mxu0 0.0
    %401 = vmatpush.msra.mxu0 0.0
    %402 = vmatpush.msra.mxu0 0.0
    %403 = vmatpush.msra.mxu0 0.0
    %404 = vmatpush.msra.mxu0 0.0
    %405 = vmatpush.msra.mxu0 0.0
    %406 = vmatpush.msra.mxu0 %v345
    %407 = vmatpush.msra.mxu0 %v344
    %408 = vmatpush.msra.mxu0 %v343
    %409 = vmatpush.msra.mxu0 %v342
    %410 = vmatpush.msra.mxu0 %v341
    %411 = vmatpush.msra.mxu0 %v340
    %412 = vmatpush.msra.mxu0 %v339
    %413 = vmatpush.msra.mxu0 %v338
    %414 = vmatmul.f32.gmra.mxu0 %v351
    %v415 = vpop.f32.mrf.mxu0
    %v416 = vadd.f32 %v348, %v415
    %417 = vmatmul.f32.gmra.mxu0 %v354
    %v418 = vpop.f32.mrf.mxu0
    %v419 = vadd.f32 %v348, %v418
    %420 = vmatmul.f32.gmra.mxu0 %v357
    %v421 = vpop.f32.mrf.mxu0
    %v422 = vadd.f32 %v348, %v421
    %423 = vmatmul.f32.gmra.mxu0 %v360
    %v424 = vpop.f32.mrf.mxu0
    %v425 = vadd.f32 %v348, %v424
    %426 = vmatmul.f32.gmra.mxu0 %v363
    %v427 = vpop.f32.mrf.mxu0
    %v428 = vadd.f32 %v348, %v427
    %429 = vmatmul.f32.gmra.mxu0 %v366
    %v430 = vpop.f32.mrf.mxu0
    %v431 = vadd.f32 %v348, %v430
    %432 = vmatmul.f32.gmra.mxu0 %v369
    %v433 = vpop.f32.mrf.mxu0
    %v434 = vadd.f32 %v348, %v433
    %435 = vmatmul.f32.gmra.mxu0 %v372
    %v436 = vpop.f32.mrf.mxu0
    %v437 = vadd.f32 %v348, %v436
    %438 = vmatmul.f32.gmra.mxu0 %v375
    %v439 = vpop.f32.mrf.mxu0
    %v440 = vadd.f32 %v348, %v439
    %441 = vmatmul.f32.gmra.mxu0 %v378
    %v442 = vpop.f32.mrf.mxu0
    %v443 = vadd.f32 %v348, %v442
    %444 = vmatmul.f32.gmra.mxu0 %v381
    %v445 = vpop.f32.mrf.mxu0
    %v446 = vadd.f32 %v348, %v445
    %447 = vmatmul.f32.gmra.mxu0 %v384
    %v448 = vpop.f32.mrf.mxu0
    %v449 = vadd.f32 %v348, %v448
    %450 = vmatmul.f32.gmra.mxu0 %v387
    %v451 = vpop.f32.mrf.mxu0
    %v452 = vadd.f32 %v348, %v451
    %453 = vmatmul.f32.gmra.mxu0 %v390
    %v454 = vpop.f32.mrf.mxu0
    %v455 = vadd.f32 %v348, %v454
    %456 = vmatmul.f32.gmra.mxu0 %v393
    %v457 = vpop.f32.mrf.mxu0
    %v458 = vadd.f32 %v348, %v457
    %459 = vmatmul.f32.gmra.mxu0 %v396
    %v460 = vpop.f32.mrf.mxu0
    %v461 = vadd.f32 %v348, %v460
    %462 = vdwg.mxu0
    %463 = vst.msk [vmem:[#allocation3] sm:$0xff] %vm321, %v416
    %464 = vst.msk [vmem:[#allocation3 + $0x8] sm:$0xff] %vm321, %v419
    %465 = vst.msk [vmem:[#allocation3 + $0x10] sm:$0xff] %vm321, %v422
    %466 = vst.msk [vmem:[#allocation3 + $0x18] sm:$0xff] %vm321, %v425
    %467 = vst.msk [vmem:[#allocation3 + $0x20] sm:$0xff] %vm321, %v428
    %468 = vst.msk [vmem:[#allocation3 + $0x28] sm:$0xff] %vm321, %v431
    %469 = vst.msk [vmem:[#allocation3 + $0x30] sm:$0xff] %vm321, %v434
    %470 = vst.msk [vmem:[#allocation3 + $0x38] sm:$0xff] %vm321, %v437
    %471 = vst.msk [vmem:[#allocation3 + $0x40] sm:$0xff] %vm321, %v440
    %472 = vst.msk [vmem:[#allocation3 + $0x48] sm:$0xff] %vm321, %v443
    %473 = vst.msk [vmem:[#allocation3 + $0x50] sm:$0xff] %vm321, %v446
    %474 = vst.msk [vmem:[#allocation3 + $0x58] sm:$0xff] %vm321, %v449
    %475 = vst.msk [vmem:[#allocation3 + $0x60] sm:$0xff] %vm321, %v452
    %476 = vst.msk [vmem:[#allocation3 + $0x68] sm:$0xff] %vm321, %v455
    %477 = vst.msk [vmem:[#allocation3 + $0x70] sm:$0xff] %vm321, %v458
    %478 = vst.msk [vmem:[#allocation3 + $0x78] sm:$0xff] %vm321, %v461
    %v479 = vld [vmem:[%s6] sm:$0xff]
    %v480 = vld [vmem:[%s6 + $0x8] sm:$0xff]
    %v481 = vld [vmem:[%s6 + $0x10] sm:$0xff]
    %v482 = vld [vmem:[%s6 + $0x18] sm:$0xff]
    %v483 = vld [vmem:[%s6 + $0x20] sm:$0xff]
    %v484 = vld [vmem:[%s6 + $0x28] sm:$0xff]
    %v485 = vld [vmem:[%s6 + $0x30] sm:$0xff]
    %v486 = vld [vmem:[%s6 + $0x38] sm:$0xff]
    %v487 = vld [vmem:[%s7] sm:$0x1]
    %v489 = vperm.slane %v487, 0
    %491 = vmatpush.msra.mxu0 0.0
    %492 = vmatpush.msra.mxu0 0.0
    %493 = vmatpush.msra.mxu0 0.0
    %494 = vmatpush.msra.mxu0 0.0
    %495 = vmatpush.msra.mxu0 0.0
    %496 = vmatpush.msra.mxu0 0.0
    %497 = vmatpush.msra.mxu0 0.0
    %498 = vmatpush.msra.mxu0 0.0
    %499 = vmatpush.msra.mxu0 %v486
    %500 = vmatpush.msra.mxu0 %v485
    %501 = vmatpush.msra.mxu0 %v484
    %502 = vmatpush.msra.mxu0 %v483
    %503 = vmatpush.msra.mxu0 %v482
    %504 = vmatpush.msra.mxu0 %v481
    %505 = vmatpush.msra.mxu0 %v480
    %506 = vmatpush.msra.mxu0 %v479
    %507 = vmatmul.f32.gmra.mxu0 %v351
    %v508 = vpop.f32.mrf.mxu0
    %v509 = vadd.f32 %v489, %v508
    %510 = vmatmul.f32.gmra.mxu0 %v354
    %v511 = vpop.f32.mrf.mxu0
    %v512 = vadd.f32 %v489, %v511
    %513 = vmatmul.f32.gmra.mxu0 %v357
    %v514 = vpop.f32.mrf.mxu0
    %v515 = vadd.f32 %v489, %v514
    %516 = vmatmul.f32.gmra.mxu0 %v360
    %v517 = vpop.f32.mrf.mxu0
    %v518 = vadd.f32 %v489, %v517
    %519 = vmatmul.f32.gmra.mxu0 %v363
    %v520 = vpop.f32.mrf.mxu0
    %v521 = vadd.f32 %v489, %v520
    %522 = vmatmul.f32.gmra.mxu0 %v366
    %v523 = vpop.f32.mrf.mxu0
    %v524 = vadd.f32 %v489, %v523
    %525 = vmatmul.f32.gmra.mxu0 %v369
    %v526 = vpop.f32.mrf.mxu0
    %v527 = vadd.f32 %v489, %v526
    %528 = vmatmul.f32.gmra.mxu0 %v372
    %v529 = vpop.f32.mrf.mxu0
    %v530 = vadd.f32 %v489, %v529
    %531 = vmatmul.f32.gmra.mxu0 %v375
    %v532 = vpop.f32.mrf.mxu0
    %v533 = vadd.f32 %v489, %v532
    %534 = vmatmul.f32.gmra.mxu0 %v378
    %v535 = vpop.f32.mrf.mxu0
    %v536 = vadd.f32 %v489, %v535
    %537 = vmatmul.f32.gmra.mxu0 %v381
    %v538 = vpop.f32.mrf.mxu0
    %v539 = vadd.f32 %v489, %v538
    %540 = vmatmul.f32.gmra.mxu0 %v384
    %v541 = vpop.f32.mrf.mxu0
    %v542 = vadd.f32 %v489, %v541
    %543 = vmatmul.f32.gmra.mxu0 %v387
    %v544 = vpop.f32.mrf.mxu0
    %v545 = vadd.f32 %v489, %v544
    %546 = vmatmul.f32.gmra.mxu0 %v390
    %v547 = vpop.f32.mrf.mxu0
    %v548 = vadd.f32 %v489, %v547
    %549 = vmatmul.f32.gmra.mxu0 %v393
    %v550 = vpop.f32.mrf.mxu0
    %v551 = vadd.f32 %v489, %v550
    %552 = vmatmul.f32.gmra.mxu0 %v396
    %v553 = vpop.f32.mrf.mxu0
    %v554 = vadd.f32 %v489, %v553
    %555 = vdwg.mxu0
    %556 = vst.msk [vmem:[#allocation4] sm:$0xff] %vm321, %v509
    %557 = vst.msk [vmem:[#allocation4 + $0x8] sm:$0xff] %vm321, %v512
    %558 = vst.msk [vmem:[#allocation4 + $0x10] sm:$0xff] %vm321, %v515
    %559 = vst.msk [vmem:[#allocation4 + $0x18] sm:$0xff] %vm321, %v518
    %560 = vst.msk [vmem:[#allocation4 + $0x20] sm:$0xff] %vm321, %v521
    %561 = vst.msk [vmem:[#allocation4 + $0x28] sm:$0xff] %vm321, %v524
    %562 = vst.msk [vmem:[#allocation4 + $0x30] sm:$0xff] %vm321, %v527
    %563 = vst.msk [vmem:[#allocation4 + $0x38] sm:$0xff] %vm321, %v530
    %564 = vst.msk [vmem:[#allocation4 + $0x40] sm:$0xff] %vm321, %v533
    %565 = vst.msk [vmem:[#allocation4 + $0x48] sm:$0xff] %vm321, %v536
    %566 = vst.msk [vmem:[#allocation4 + $0x50] sm:$0xff] %vm321, %v539
    %567 = vst.msk [vmem:[#allocation4 + $0x58] sm:$0xff] %vm321, %v542
    %568 = vst.msk [vmem:[#allocation4 + $0x60] sm:$0xff] %vm321, %v545
    %569 = vst.msk [vmem:[#allocation4 + $0x68] sm:$0xff] %vm321, %v548
    %570 = vst.msk [vmem:[#allocation4 + $0x70] sm:$0xff] %vm321, %v551
    %571 = vst.msk [vmem:[#allocation4 + $0x78] sm:$0xff] %vm321, %v554
    %v572 = vld [vmem:[%s8] sm:$0xff]
    %v573 = vld [vmem:[%s8 + $0x8] sm:$0xff]
    %v574 = vld [vmem:[%s8 + $0x10] sm:$0xff]
    %v575 = vld [vmem:[%s8 + $0x18] sm:$0xff]
    %v576 = vld [vmem:[%s8 + $0x20] sm:$0xff]
    %v577 = vld [vmem:[%s8 + $0x28] sm:$0xff]
    %v578 = vld [vmem:[%s8 + $0x30] sm:$0xff]
    %v579 = vld [vmem:[%s8 + $0x38] sm:$0xff]
    %v580 = vld [vmem:[%s9] sm:$0x1]
    %v582 = vperm.slane %v580, 0
    %584 = vmatpush.msra.mxu0 0.0
    %585 = vmatpush.msra.mxu0 0.0
    %586 = vmatpush.msra.mxu0 0.0
    %587 = vmatpush.msra.mxu0 0.0
    %588 = vmatpush.msra.mxu0 0.0
    %589 = vmatpush.msra.mxu0 0.0
    %590 = vmatpush.msra.mxu0 0.0
    %591 = vmatpush.msra.mxu0 0.0
    %592 = vmatpush.msra.mxu0 %v579
    %593 = vmatpush.msra.mxu0 %v578
    %594 = vmatpush.msra.mxu0 %v577
    %595 = vmatpush.msra.mxu0 %v576
    %596 = vmatpush.msra.mxu0 %v575
    %597 = vmatpush.msra.mxu0 %v574
    %598 = vmatpush.msra.mxu0 %v573
    %599 = vmatpush.msra.mxu0 %v572
    %600 = vmatmul.f32.gmra.mxu0 %v351
    %v601 = vpop.f32.mrf.mxu0
    %v602 = vadd.f32 %v582, %v601
    %603 = vmatmul.f32.gmra.mxu0 %v354
    %v604 = vpop.f32.mrf.mxu0
    %v605 = vadd.f32 %v582, %v604
    %606 = vmatmul.f32.gmra.mxu0 %v357
    %v607 = vpop.f32.mrf.mxu0
    %v608 = vadd.f32 %v582, %v607
    %609 = vmatmul.f32.gmra.mxu0 %v360
    %v610 = vpop.f32.mrf.mxu0
    %v611 = vadd.f32 %v582, %v610
    %612 = vmatmul.f32.gmra.mxu0 %v363
    %v613 = vpop.f32.mrf.mxu0
    %v614 = vadd.f32 %v582, %v613
    %615 = vmatmul.f32.gmra.mxu0 %v366
    %v616 = vpop.f32.mrf.mxu0
    %v617 = vadd.f32 %v582, %v616
    %618 = vmatmul.f32.gmra.mxu0 %v369
    %v619 = vpop.f32.mrf.mxu0
    %v620 = vadd.f32 %v582, %v619
    %621 = vmatmul.f32.gmra.mxu0 %v372
    %v622 = vpop.f32.mrf.mxu0
    %v623 = vadd.f32 %v582, %v622
    %624 = vmatmul.f32.gmra.mxu0 %v375
    %v625 = vpop.f32.mrf.mxu0
    %v626 = vadd.f32 %v582, %v625
    %627 = vmatmul.f32.gmra.mxu0 %v378
    %v628 = vpop.f32.mrf.mxu0
    %v629 = vadd.f32 %v582, %v628
    %630 = vmatmul.f32.gmra.mxu0 %v381
    %v631 = vpop.f32.mrf.mxu0
    %v632 = vadd.f32 %v582, %v631
    %633 = vmatmul.f32.gmra.mxu0 %v384
    %v634 = vpop.f32.mrf.mxu0
    %v635 = vadd.f32 %v582, %v634
    %636 = vmatmul.f32.gmra.mxu0 %v387
    %v637 = vpop.f32.mrf.mxu0
    %v638 = vadd.f32 %v582, %v637
    %639 = vmatmul.f32.gmra.mxu0 %v390
    %v640 = vpop.f32.mrf.mxu0
    %v641 = vadd.f32 %v582, %v640
    %642 = vmatmul.f32.gmra.mxu0 %v393
    %v643 = vpop.f32.mrf.mxu0
    %v644 = vadd.f32 %v582, %v643
    %645 = vmatmul.f32.gmra.mxu0 %v396
    %v646 = vpop.f32.mrf.mxu0
    %v647 = vadd.f32 %v582, %v646
    %648 = vdwg.mxu0
    %649 = vst.msk [vmem:[#allocation5] sm:$0xff] %vm321, %v602
    %650 = vst.msk [vmem:[#allocation5 + $0x8] sm:$0xff] %vm321, %v605
    %651 = vst.msk [vmem:[#allocation5 + $0x10] sm:$0xff] %vm321, %v608
    %652 = vst.msk [vmem:[#allocation5 + $0x18] sm:$0xff] %vm321, %v611
    %653 = vst.msk [vmem:[#allocation5 + $0x20] sm:$0xff] %vm321, %v614
    %654 = vst.msk [vmem:[#allocation5 + $0x28] sm:$0xff] %vm321, %v617
    %655 = vst.msk [vmem:[#allocation5 + $0x30] sm:$0xff] %vm321, %v620
    %656 = vst.msk [vmem:[#allocation5 + $0x38] sm:$0xff] %vm321, %v623
    %657 = vst.msk [vmem:[#allocation5 + $0x40] sm:$0xff] %vm321, %v626
    %658 = vst.msk [vmem:[#allocation5 + $0x48] sm:$0xff] %vm321, %v629
    %659 = vst.msk [vmem:[#allocation5 + $0x50] sm:$0xff] %vm321, %v632
    %660 = vst.msk [vmem:[#allocation5 + $0x58] sm:$0xff] %vm321, %v635
    %661 = vst.msk [vmem:[#allocation5 + $0x60] sm:$0xff] %vm321, %v638
    %662 = vst.msk [vmem:[#allocation5 + $0x68] sm:$0xff] %vm321, %v641
    %663 = vst.msk [vmem:[#allocation5 + $0x70] sm:$0xff] %vm321, %v644
    %664 = vst.msk [vmem:[#allocation5 + $0x78] sm:$0xff] %vm321, %v647
    %v665 = vld [vmem:[%s18] sm:$0xff]
    %v666 = vld [vmem:[%s18 + $0x8] sm:$0xff]
    %v667 = vld [vmem:[%s18 + $0x10] sm:$0xff]
    %v668 = vld [vmem:[%s18 + $0x18] sm:$0xff]
    %v669 = vld [vmem:[%s18 + $0x20] sm:$0xff]
    %v670 = vld [vmem:[%s18 + $0x28] sm:$0xff]
    %v671 = vld [vmem:[%s18 + $0x30] sm:$0xff]
    %v672 = vld [vmem:[%s18 + $0x38] sm:$0xff]
    %v673 = vld [vmem:[%s18 + $0x40] sm:$0xff]
    %v674 = vld [vmem:[%s18 + $0x48] sm:$0xff]
    %v675 = vld [vmem:[%s18 + $0x50] sm:$0xff]
    %v676 = vld [vmem:[%s18 + $0x58] sm:$0xff]
    %v677 = vld [vmem:[%s18 + $0x60] sm:$0xff]
    %v678 = vld [vmem:[%s18 + $0x68] sm:$0xff]
    %v679 = vld [vmem:[%s18 + $0x70] sm:$0xff]
    %v680 = vld [vmem:[%s18 + $0x78] sm:$0xff]
    %v681 = vld [vmem:[%s19] sm:$0xff]
    %v682 = vld [vmem:[%s19 + $0x8] sm:$0xff]
    %v683 = vld [vmem:[%s19 + $0x10] sm:$0xff]
    %v684 = vld [vmem:[%s19 + $0x18] sm:$0xff]
    %v685 = vld [vmem:[%s19 + $0x20] sm:$0xff]
    %v686 = vld [vmem:[%s19 + $0x28] sm:$0xff]
    %v687 = vld [vmem:[%s19 + $0x30] sm:$0xff]
    %v688 = vld [vmem:[%s19 + $0x38] sm:$0xff]
    %v689 = vld [vmem:[%s20] sm:$0xff]
    %v690 = vld [vmem:[%s20 + $0x8] sm:$0xff]
    %v691 = vld [vmem:[#allocation3] sm:$0xff]
    %v692 = vld [vmem:[#allocation3 + $0x8] sm:$0xff]
    %v693 = vld [vmem:[#allocation4] sm:$0xff]
    %v694 = vld [vmem:[#allocation4 + $0x8] sm:$0xff]
    %v695 = vld [vmem:[#allocation5] sm:$0xff]
    %v696 = vld [vmem:[#allocation5 + $0x8] sm:$0xff]
    %v697 = vmul.f32 %v691, %v665
    %v698 = vmul.f32 %v692, %v666
    %v699 = vmul.f32 %v691, %v667
    %v700 = vmul.f32 %v692, %v668
    %v701 = vmul.f32 %v691, %v669
    %v702 = vmul.f32 %v692, %v670
    %v703 = vmul.f32 %v691, %v671
    %v704 = vmul.f32 %v692, %v672
    %v705 = vmul.f32 %v691, %v673
    %v706 = vmul.f32 %v692, %v674
    %v707 = vmul.f32 %v691, %v675
    %v708 = vmul.f32 %v692, %v676
    %v709 = vmul.f32 %v691, %v677
    %v710 = vmul.f32 %v692, %v678
    %v711 = vmul.f32 %v691, %v679
    %v712 = vmul.f32 %v692, %v680
    %v714 = vsel %vm321, %v697, 0
    %v717 = vsel %vm321, %v698, 0
    %v720 = vsel %vm321, %v699, 0
    %v723 = vsel %vm321, %v700, 0
    %v726 = vsel %vm321, %v701, 0
    %v729 = vsel %vm321, %v702, 0
    %v732 = vsel %vm321, %v703, 0
    %v735 = vsel %vm321, %v704, 0
    %v738 = vsel %vm321, %v705, 0
    %v741 = vsel %vm321, %v706, 0
    %v744 = vsel %vm321, %v707, 0
    %v747 = vsel %vm321, %v708, 0
    %v750 = vsel %vm321, %v709, 0
    %v753 = vsel %vm321, %v710, 0
    %v756 = vsel %vm321, %v711, 0
    %v759 = vsel %vm321, %v712, 0
    %761 = vmatpush.msra.mxu0 0.0
    %762 = vmatpush.msra.mxu0 0.0
    %763 = vmatpush.msra.mxu0 0.0
    %764 = vmatpush.msra.mxu0 0.0
    %765 = vmatpush.msra.mxu0 0.0
    %766 = vmatpush.msra.mxu0 0.0
    %767 = vmatpush.msra.mxu0 0.0
    %768 = vmatpush.msra.mxu0 0.0
    %769 = vmatpush.msra.mxu0 %v688
    %770 = vmatpush.msra.mxu0 %v687
    %771 = vmatpush.msra.mxu0 %v686
    %772 = vmatpush.msra.mxu0 %v685
    %773 = vmatpush.msra.mxu0 %v684
    %774 = vmatpush.msra.mxu0 %v683
    %775 = vmatpush.msra.mxu0 %v682
    %776 = vmatpush.msra.mxu0 %v681
    %777 = vmatmul.f32.gmra.mxu0 %v714
    %v778 = vpop.f32.mrf.mxu0
    %v779 = vadd.f32 0.0, %v778
    %780 = vmatmul.f32.gmra.mxu0 %v717
    %v781 = vpop.f32.mrf.mxu0
    %v782 = vadd.f32 0.0, %v781
    %783 = vmatmul.f32.gmra.mxu0 %v720
    %v784 = vpop.f32.mrf.mxu0
    %v785 = vadd.f32 0.0, %v784
    %786 = vmatmul.f32.gmra.mxu0 %v723
    %v787 = vpop.f32.mrf.mxu0
    %v788 = vadd.f32 0.0, %v787
    %789 = vmatmul.f32.gmra.mxu0 %v726
    %v790 = vpop.f32.mrf.mxu0
    %v791 = vadd.f32 0.0, %v790
    %792 = vmatmul.f32.gmra.mxu0 %v729
    %v793 = vpop.f32.mrf.mxu0
    %v794 = vadd.f32 0.0, %v793
    %795 = vmatmul.f32.gmra.mxu0 %v732
    %v796 = vpop.f32.mrf.mxu0
    %v797 = vadd.f32 0.0, %v796
    %798 = vmatmul.f32.gmra.mxu0 %v735
    %v799 = vpop.f32.mrf.mxu0
    %v800 = vadd.f32 0.0, %v799
    %801 = vmatmul.f32.gmra.mxu0 %v738
    %v802 = vpop.f32.mrf.mxu0
    %v803 = vadd.f32 0.0, %v802
    %804 = vmatmul.f32.gmra.mxu0 %v741
    %v805 = vpop.f32.mrf.mxu0
    %v806 = vadd.f32 0.0, %v805
    %807 = vmatmul.f32.gmra.mxu0 %v744
    %v808 = vpop.f32.mrf.mxu0
    %v809 = vadd.f32 0.0, %v808
    %810 = vmatmul.f32.gmra.mxu0 %v747
    %v811 = vpop.f32.mrf.mxu0
    %v812 = vadd.f32 0.0, %v811
    %813 = vmatmul.f32.gmra.mxu0 %v750
    %v814 = vpop.f32.mrf.mxu0
    %v815 = vadd.f32 0.0, %v814
    %816 = vmatmul.f32.gmra.mxu0 %v753
    %v817 = vpop.f32.mrf.mxu0
    %v818 = vadd.f32 0.0, %v817
    %819 = vmatmul.f32.gmra.mxu0 %v756
    %v820 = vpop.f32.mrf.mxu0
    %v821 = vadd.f32 0.0, %v820
    %822 = vmatmul.f32.gmra.mxu0 %v759
    %v823 = vpop.f32.mrf.mxu0
    %v824 = vadd.f32 0.0, %v823
    %825 = vdwg.mxu0
    %v826 = vmul.f32 %v693, %v665
    %v827 = vmul.f32 %v694, %v666
    %v828 = vmul.f32 %v693, %v667
    %v829 = vmul.f32 %v694, %v668
    %v830 = vmul.f32 %v693, %v669
    %v831 = vmul.f32 %v694, %v670
    %v832 = vmul.f32 %v693, %v671
    %v833 = vmul.f32 %v694, %v672
    %v834 = vmul.f32 %v693, %v673
    %v835 = vmul.f32 %v694, %v674
    %v836 = vmul.f32 %v693, %v675
    %v837 = vmul.f32 %v694, %v676
    %v838 = vmul.f32 %v693, %v677
    %v839 = vmul.f32 %v694, %v678
    %v840 = vmul.f32 %v693, %v679
    %v841 = vmul.f32 %v694, %v680
    %v843 = vsel %vm321, %v779, 0
    %v846 = vsel %vm321, %v782, 0
    %v849 = vsel %vm321, %v785, 0
    %v852 = vsel %vm321, %v788, 0
    %v855 = vsel %vm321, %v791, 0
    %v858 = vsel %vm321, %v794, 0
    %v861 = vsel %vm321, %v797, 0
    %v864 = vsel %vm321, %v800, 0
    %v867 = vsel %vm321, %v803, 0
    %v870 = vsel %vm321, %v806, 0
    %v873 = vsel %vm321, %v809, 0
    %v876 = vsel %vm321, %v812, 0
    %v879 = vsel %vm321, %v815, 0
    %v882 = vsel %vm321, %v818, 0
    %v885 = vsel %vm321, %v821, 0
    %v888 = vsel %vm321, %v824, 0
    %v891 = vsel %vm321, %v826, 0
    %v894 = vsel %vm321, %v827, 0
    %v897 = vsel %vm321, %v828, 0
    %v900 = vsel %vm321, %v829, 0
    %v903 = vsel %vm321, %v830, 0
    %v906 = vsel %vm321, %v831, 0
    %v909 = vsel %vm321, %v832, 0
    %v912 = vsel %vm321, %v833, 0
    %v915 = vsel %vm321, %v834, 0
    %v918 = vsel %vm321, %v835, 0
    %v921 = vsel %vm321, %v836, 0
    %v924 = vsel %vm321, %v837, 0
    %v927 = vsel %vm321, %v838, 0
    %v930 = vsel %vm321, %v839, 0
    %v933 = vsel %vm321, %v840, 0
    %v936 = vsel %vm321, %v841, 0
    %938 = vmatpush.xpose.msra.mxu0 %v936
    %939 = vmatpush.xpose.msra.mxu0 %v933
    %940 = vmatpush.xpose.msra.mxu0 %v930
    %941 = vmatpush.xpose.msra.mxu0 %v927
    %942 = vmatpush.xpose.msra.mxu0 %v924
    %943 = vmatpush.xpose.msra.mxu0 %v921
    %944 = vmatpush.xpose.msra.mxu0 %v918
    %945 = vmatpush.xpose.msra.mxu0 %v915
    %946 = vmatpush.xpose.msra.mxu0 %v912
    %947 = vmatpush.xpose.msra.mxu0 %v909
    %948 = vmatpush.xpose.msra.mxu0 %v906
    %949 = vmatpush.xpose.msra.mxu0 %v903
    %950 = vmatpush.xpose.msra.mxu0 %v900
    %951 = vmatpush.xpose.msra.mxu0 %v897
    %952 = vmatpush.xpose.msra.mxu0 %v894
    %953 = vmatpush.xpose.msra.mxu0 %v891
    %954 = vmatmul.f32.gmra.mxu0 %v843
    %v955 = vpop.f32.mrf.mxu0
    %v956 = vadd.f32 0.0, %v955
    %957 = vmatmul.f32.gmra.mxu0 %v846
    %v958 = vpop.f32.mrf.mxu0
    %v959 = vadd.f32 0.0, %v958
    %960 = vmatmul.f32.gmra.mxu0 %v849
    %v961 = vpop.f32.mrf.mxu0
    %v962 = vadd.f32 0.0, %v961
    %963 = vmatmul.f32.gmra.mxu0 %v852
    %v964 = vpop.f32.mrf.mxu0
    %v965 = vadd.f32 0.0, %v964
    %966 = vmatmul.f32.gmra.mxu0 %v855
    %v967 = vpop.f32.mrf.mxu0
    %v968 = vadd.f32 0.0, %v967
    %969 = vmatmul.f32.gmra.mxu0 %v858
    %v970 = vpop.f32.mrf.mxu0
    %v971 = vadd.f32 0.0, %v970
    %972 = vmatmul.f32.gmra.mxu0 %v861
    %v973 = vpop.f32.mrf.mxu0
    %v974 = vadd.f32 0.0, %v973
    %975 = vmatmul.f32.gmra.mxu0 %v864
    %v976 = vpop.f32.mrf.mxu0
    %v977 = vadd.f32 0.0, %v976
    %978 = vmatmul.f32.gmra.mxu0 %v867
    %v979 = vpop.f32.mrf.mxu0
    %v980 = vadd.f32 0.0, %v979
    %981 = vmatmul.f32.gmra.mxu0 %v870
    %v982 = vpop.f32.mrf.mxu0
    %v983 = vadd.f32 0.0, %v982
    %984 = vmatmul.f32.gmra.mxu0 %v873
    %v985 = vpop.f32.mrf.mxu0
    %v986 = vadd.f32 0.0, %v985
    %987 = vmatmul.f32.gmra.mxu0 %v876
    %v988 = vpop.f32.mrf.mxu0
    %v989 = vadd.f32 0.0, %v988
    %990 = vmatmul.f32.gmra.mxu0 %v879
    %v991 = vpop.f32.mrf.mxu0
    %v992 = vadd.f32 0.0, %v991
    %993 = vmatmul.f32.gmra.mxu0 %v882
    %v994 = vpop.f32.mrf.mxu0
    %v995 = vadd.f32 0.0, %v994
    %996 = vmatmul.f32.gmra.mxu0 %v885
    %v997 = vpop.f32.mrf.mxu0
    %v998 = vadd.f32 0.0, %v997
    %999 = vmatmul.f32.gmra.mxu0 %v888
    %v1000 = vpop.f32.mrf.mxu0
    %v1001 = vadd.f32 0.0, %v1000
    %1002 = vdwg.mxu0
    %1003 = vmax.xlane.f32.xlu0 %v956
    %v1004 = vpop.xlane.xlu0 %1003
    %1005 = vmax.xlane.f32.xlu0 %v959
    %v1006 = vpop.xlane.xlu0 %1005
    %1007 = vmax.xlane.f32.xlu0 %v962
    %v1008 = vpop.xlane.xlu0 %1007
    %1009 = vmax.xlane.f32.xlu0 %v965
    %v1010 = vpop.xlane.xlu0 %1009
    %1011 = vmax.xlane.f32.xlu0 %v968
    %v1012 = vpop.xlane.xlu0 %1011
    %1013 = vmax.xlane.f32.xlu0 %v971
    %v1014 = vpop.xlane.xlu0 %1013
    %1015 = vmax.xlane.f32.xlu0 %v974
    %v1016 = vpop.xlane.xlu0 %1015
    %1017 = vmax.xlane.f32.xlu0 %v977
    %v1018 = vpop.xlane.xlu0 %1017
    %1019 = vmax.xlane.f32.xlu0 %v980
    %v1020 = vpop.xlane.xlu0 %1019
    %1021 = vmax.xlane.f32.xlu0 %v983
    %v1022 = vpop.xlane.xlu0 %1021
    %1023 = vmax.xlane.f32.xlu0 %v986
    %v1024 = vpop.xlane.xlu0 %1023
    %1025 = vmax.xlane.f32.xlu0 %v989
    %v1026 = vpop.xlane.xlu0 %1025
    %1027 = vmax.xlane.f32.xlu0 %v992
    %v1028 = vpop.xlane.xlu0 %1027
    %1029 = vmax.xlane.f32.xlu0 %v995
    %v1030 = vpop.xlane.xlu0 %1029
    %1031 = vmax.xlane.f32.xlu0 %v998
    %v1032 = vpop.xlane.xlu0 %1031
    %1033 = vmax.xlane.f32.xlu0 %v1001
    %v1034 = vpop.xlane.xlu0 %1033
    %v1035 = vsub.f32 %v956, %v1004
    %v1036 = vsub.f32 %v959, %v1006
    %v1037 = vsub.f32 %v962, %v1008
    %v1038 = vsub.f32 %v965, %v1010
    %v1039 = vsub.f32 %v968, %v1012
    %v1040 = vsub.f32 %v971, %v1014
    %v1041 = vsub.f32 %v974, %v1016
    %v1042 = vsub.f32 %v977, %v1018
    %v1043 = vsub.f32 %v980, %v1020
    %v1044 = vsub.f32 %v983, %v1022
    %v1045 = vsub.f32 %v986, %v1024
    %v1046 = vsub.f32 %v989, %v1026
    %v1047 = vsub.f32 %v992, %v1028
    %v1048 = vsub.f32 %v995, %v1030
    %v1049 = vsub.f32 %v998, %v1032
    %v1050 = vsub.f32 %v1001, %v1034
    %v1051 = vmul.f32 %v1035, 1.442695
    %v1052 = vpow.pop %v1051
    %v1053 = vmul.f32 %v1036, 1.442695
    %v1054 = vpow.pop %v1053
    %v1055 = vmul.f32 %v1037, 1.442695
    %v1056 = vpow.pop %v1055
    %v1057 = vmul.f32 %v1038, 1.442695
    %v1058 = vpow.pop %v1057
    %v1059 = vmul.f32 %v1039, 1.442695
    %v1060 = vpow.pop %v1059
    %v1061 = vmul.f32 %v1040, 1.442695
    %v1062 = vpow.pop %v1061
    %v1063 = vmul.f32 %v1041, 1.442695
    %v1064 = vpow.pop %v1063
    %v1065 = vmul.f32 %v1042, 1.442695
    %v1066 = vpow.pop %v1065
    %v1067 = vmul.f32 %v1043, 1.442695
    %v1068 = vpow.pop %v1067
    %v1069 = vmul.f32 %v1044, 1.442695
    %v1070 = vpow.pop %v1069
    %v1071 = vmul.f32 %v1045, 1.442695
    %v1072 = vpow.pop %v1071
    %v1073 = vmul.f32 %v1046, 1.442695
    %v1074 = vpow.pop %v1073
    %v1075 = vmul.f32 %v1047, 1.442695
    %v1076 = vpow.pop %v1075
    %v1077 = vmul.f32 %v1048, 1.442695
    %v1078 = vpow.pop %v1077
    %v1079 = vmul.f32 %v1049, 1.442695
    %v1080 = vpow.pop %v1079
    %v1081 = vmul.f32 %v1050, 1.442695
    %v1082 = vpow.pop %v1081
    %1083 = vadd.xlane.f32.xlu0 %v1052
    %v1084 = vpop.xlane.xlu0 %1083
    %1085 = vadd.xlane.f32.xlu0 %v1054
    %v1086 = vpop.xlane.xlu0 %1085
    %1087 = vadd.xlane.f32.xlu0 %v1056
    %v1088 = vpop.xlane.xlu0 %1087
    %1089 = vadd.xlane.f32.xlu0 %v1058
    %v1090 = vpop.xlane.xlu0 %1089
    %1091 = vadd.xlane.f32.xlu0 %v1060
    %v1092 = vpop.xlane.xlu0 %1091
    %1093 = vadd.xlane.f32.xlu0 %v1062
    %v1094 = vpop.xlane.xlu0 %1093
    %1095 = vadd.xlane.f32.xlu0 %v1064
    %v1096 = vpop.xlane.xlu0 %1095
    %1097 = vadd.xlane.f32.xlu0 %v1066
    %v1098 = vpop.xlane.xlu0 %1097
    %1099 = vadd.xlane.f32.xlu0 %v1068
    %v1100 = vpop.xlane.xlu0 %1099
    %1101 = vadd.xlane.f32.xlu0 %v1070
    %v1102 = vpop.xlane.xlu0 %1101
    %1103 = vadd.xlane.f32.xlu0 %v1072
    %v1104 = vpop.xlane.xlu0 %1103
    %1105 = vadd.xlane.f32.xlu0 %v1074
    %v1106 = vpop.xlane.xlu0 %1105
    %1107 = vadd.xlane.f32.xlu0 %v1076
    %v1108 = vpop.xlane.xlu0 %1107
    %1109 = vadd.xlane.f32.xlu0 %v1078
    %v1110 = vpop.xlane.xlu0 %1109
    %1111 = vadd.xlane.f32.xlu0 %v1080
    %v1112 = vpop.xlane.xlu0 %1111
    %1113 = vadd.xlane.f32.xlu0 %v1082
    %v1114 = vpop.xlane.xlu0 %1113
    %v1115 = vrcp.pop %v1084
    %v1116 = vmul.f32 %v1084, %v1115
    %v1117 = vsub.f32 1.0, %v1116
    %v1118 = vmul.f32 %v1115, %v1117
    %v1119 = vadd.f32 %v1115, %v1118
    %vm1120 = vweird.f32 %v1084
    %vm1121 = vweird.f32 %v1115
    %vm1122 = vmor %vm1120, %vm1121
    %v1123 = vsel %vm1122, %v1115, %v1119
    %v1124 = vand.u32 2147483647, %v1084
    %vm1125 = vcmp.eq.f32.partialorder %v1124, 8.507059e+37
    %v1126 = vand.u32 %v1084, 2147483648
    %v1127 = vor.u32 1.1754944e-38, %v1126
    %v1128 = vsel %vm1125, %v1127, %v1123
    %v1129 = vmul.f32 %v1052, %v1128
    %v1130 = vrcp.pop %v1086
    %v1131 = vmul.f32 %v1086, %v1130
    %v1132 = vsub.f32 1.0, %v1131
    %v1133 = vmul.f32 %v1130, %v1132
    %v1134 = vadd.f32 %v1130, %v1133
    %vm1135 = vweird.f32 %v1086
    %vm1136 = vweird.f32 %v1130
    %vm1137 = vmor %vm1135, %vm1136
    %v1138 = vsel %vm1137, %v1130, %v1134
    %v1139 = vand.u32 2147483647, %v1086
    %vm1140 = vcmp.eq.f32.partialorder %v1139, 8.507059e+37
    %v1141 = vand.u32 %v1086, 2147483648
    %v1142 = vor.u32 1.1754944e-38, %v1141
    %v1143 = vsel %vm1140, %v1142, %v1138
    %v1144 = vmul.f32 %v1054, %v1143
    %v1145 = vrcp.pop %v1088
    %v1146 = vmul.f32 %v1088, %v1145
    %v1147 = vsub.f32 1.0, %v1146
    %v1148 = vmul.f32 %v1145, %v1147
    %v1149 = vadd.f32 %v1145, %v1148
    %vm1150 = vweird.f32 %v1088
    %vm1151 = vweird.f32 %v1145
    %vm1152 = vmor %vm1150, %vm1151
    %v1153 = vsel %vm1152, %v1145, %v1149
    %v1154 = vand.u32 2147483647, %v1088
    %vm1155 = vcmp.eq.f32.partialorder %v1154, 8.507059e+37
    %v1156 = vand.u32 %v1088, 2147483648
    %v1157 = vor.u32 1.1754944e-38, %v1156
    %v1158 = vsel %vm1155, %v1157, %v1153
    %v1159 = vmul.f32 %v1056, %v1158
    %v1160 = vrcp.pop %v1090
    %v1161 = vmul.f32 %v1090, %v1160
    %v1162 = vsub.f32 1.0, %v1161
    %v1163 = vmul.f32 %v1160, %v1162
    %v1164 = vadd.f32 %v1160, %v1163
    %vm1165 = vweird.f32 %v1090
    %vm1166 = vweird.f32 %v1160
    %vm1167 = vmor %vm1165, %vm1166
    %v1168 = vsel %vm1167, %v1160, %v1164
    %v1169 = vand.u32 2147483647, %v1090
    %vm1170 = vcmp.eq.f32.partialorder %v1169, 8.507059e+37
    %v1171 = vand.u32 %v1090, 2147483648
    %v1172 = vor.u32 1.1754944e-38, %v1171
    %v1173 = vsel %vm1170, %v1172, %v1168
    %v1174 = vmul.f32 %v1058, %v1173
    %v1175 = vrcp.pop %v1092
    %v1176 = vmul.f32 %v1092, %v1175
    %v1177 = vsub.f32 1.0, %v1176
    %v1178 = vmul.f32 %v1175, %v1177
    %v1179 = vadd.f32 %v1175, %v1178
    %vm1180 = vweird.f32 %v1092
    %vm1181 = vweird.f32 %v1175
    %vm1182 = vmor %vm1180, %vm1181
    %v1183 = vsel %vm1182, %v1175, %v1179
    %v1184 = vand.u32 2147483647, %v1092
    %vm1185 = vcmp.eq.f32.partialorder %v1184, 8.507059e+37
    %v1186 = vand.u32 %v1092, 2147483648
    %v1187 = vor.u32 1.1754944e-38, %v1186
    %v1188 = vsel %vm1185, %v1187, %v1183
    %v1189 = vmul.f32 %v1060, %v1188
    %v1190 = vrcp.pop %v1094
    %v1191 = vmul.f32 %v1094, %v1190
    %v1192 = vsub.f32 1.0, %v1191
    %v1193 = vmul.f32 %v1190, %v1192
    %v1194 = vadd.f32 %v1190, %v1193
    %vm1195 = vweird.f32 %v1094
    %vm1196 = vweird.f32 %v1190
    %vm1197 = vmor %vm1195, %vm1196
    %v1198 = vsel %vm1197, %v1190, %v1194
    %v1199 = vand.u32 2147483647, %v1094
    %vm1200 = vcmp.eq.f32.partialorder %v1199, 8.507059e+37
    %v1201 = vand.u32 %v1094, 2147483648
    %v1202 = vor.u32 1.1754944e-38, %v1201
    %v1203 = vsel %vm1200, %v1202, %v1198
    %v1204 = vmul.f32 %v1062, %v1203
    %v1205 = vrcp.pop %v1096
    %v1206 = vmul.f32 %v1096, %v1205
    %v1207 = vsub.f32 1.0, %v1206
    %v1208 = vmul.f32 %v1205, %v1207
    %v1209 = vadd.f32 %v1205, %v1208
    %vm1210 = vweird.f32 %v1096
    %vm1211 = vweird.f32 %v1205
    %vm1212 = vmor %vm1210, %vm1211
    %v1213 = vsel %vm1212, %v1205, %v1209
    %v1214 = vand.u32 2147483647, %v1096
    %vm1215 = vcmp.eq.f32.partialorder %v1214, 8.507059e+37
    %v1216 = vand.u32 %v1096, 2147483648
    %v1217 = vor.u32 1.1754944e-38, %v1216
    %v1218 = vsel %vm1215, %v1217, %v1213
    %v1219 = vmul.f32 %v1064, %v1218
    %v1220 = vrcp.pop %v1098
    %v1221 = vmul.f32 %v1098, %v1220
    %v1222 = vsub.f32 1.0, %v1221
    %v1223 = vmul.f32 %v1220, %v1222
    %v1224 = vadd.f32 %v1220, %v1223
    %vm1225 = vweird.f32 %v1098
    %vm1226 = vweird.f32 %v1220
    %vm1227 = vmor %vm1225, %vm1226
    %v1228 = vsel %vm1227, %v1220, %v1224
    %v1229 = vand.u32 2147483647, %v1098
    %vm1230 = vcmp.eq.f32.partialorder %v1229, 8.507059e+37
    %v1231 = vand.u32 %v1098, 2147483648
    %v1232 = vor.u32 1.1754944e-38, %v1231
    %v1233 = vsel %vm1230, %v1232, %v1228
    %v1234 = vmul.f32 %v1066, %v1233
    %v1235 = vrcp.pop %v1100
    %v1236 = vmul.f32 %v1100, %v1235
    %v1237 = vsub.f32 1.0, %v1236
    %v1238 = vmul.f32 %v1235, %v1237
    %v1239 = vadd.f32 %v1235, %v1238
    %vm1240 = vweird.f32 %v1100
    %vm1241 = vweird.f32 %v1235
    %vm1242 = vmor %vm1240, %vm1241
    %v1243 = vsel %vm1242, %v1235, %v1239
    %v1244 = vand.u32 2147483647, %v1100
    %vm1245 = vcmp.eq.f32.partialorder %v1244, 8.507059e+37
    %v1246 = vand.u32 %v1100, 2147483648
    %v1247 = vor.u32 1.1754944e-38, %v1246
    %v1248 = vsel %vm1245, %v1247, %v1243
    %v1249 = vmul.f32 %v1068, %v1248
    %v1250 = vrcp.pop %v1102
    %v1251 = vmul.f32 %v1102, %v1250
    %v1252 = vsub.f32 1.0, %v1251
    %v1253 = vmul.f32 %v1250, %v1252
    %v1254 = vadd.f32 %v1250, %v1253
    %vm1255 = vweird.f32 %v1102
    %vm1256 = vweird.f32 %v1250
    %vm1257 = vmor %vm1255, %vm1256
    %v1258 = vsel %vm1257, %v1250, %v1254
    %v1259 = vand.u32 2147483647, %v1102
    %vm1260 = vcmp.eq.f32.partialorder %v1259, 8.507059e+37
    %v1261 = vand.u32 %v1102, 2147483648
    %v1262 = vor.u32 1.1754944e-38, %v1261
    %v1263 = vsel %vm1260, %v1262, %v1258
    %v1264 = vmul.f32 %v1070, %v1263
    %v1265 = vrcp.pop %v1104
    %v1266 = vmul.f32 %v1104, %v1265
    %v1267 = vsub.f32 1.0, %v1266
    %v1268 = vmul.f32 %v1265, %v1267
    %v1269 = vadd.f32 %v1265, %v1268
    %vm1270 = vweird.f32 %v1104
    %vm1271 = vweird.f32 %v1265
    %vm1272 = vmor %vm1270, %vm1271
    %v1273 = vsel %vm1272, %v1265, %v1269
    %v1274 = vand.u32 2147483647, %v1104
    %vm1275 = vcmp.eq.f32.partialorder %v1274, 8.507059e+37
    %v1276 = vand.u32 %v1104, 2147483648
    %v1277 = vor.u32 1.1754944e-38, %v1276
    %v1278 = vsel %vm1275, %v1277, %v1273
    %v1279 = vmul.f32 %v1072, %v1278
    %v1280 = vrcp.pop %v1106
    %v1281 = vmul.f32 %v1106, %v1280
    %v1282 = vsub.f32 1.0, %v1281
    %v1283 = vmul.f32 %v1280, %v1282
    %v1284 = vadd.f32 %v1280, %v1283
    %vm1285 = vweird.f32 %v1106
    %vm1286 = vweird.f32 %v1280
    %vm1287 = vmor %vm1285, %vm1286
    %v1288 = vsel %vm1287, %v1280, %v1284
    %v1289 = vand.u32 2147483647, %v1106
    %vm1290 = vcmp.eq.f32.partialorder %v1289, 8.507059e+37
    %v1291 = vand.u32 %v1106, 2147483648
    %v1292 = vor.u32 1.1754944e-38, %v1291
    %v1293 = vsel %vm1290, %v1292, %v1288
    %v1294 = vmul.f32 %v1074, %v1293
    %v1295 = vrcp.pop %v1108
    %v1296 = vmul.f32 %v1108, %v1295
    %v1297 = vsub.f32 1.0, %v1296
    %v1298 = vmul.f32 %v1295, %v1297
    %v1299 = vadd.f32 %v1295, %v1298
    %vm1300 = vweird.f32 %v1108
    %vm1301 = vweird.f32 %v1295
    %vm1302 = vmor %vm1300, %vm1301
    %v1303 = vsel %vm1302, %v1295, %v1299
    %v1304 = vand.u32 2147483647, %v1108
    %vm1305 = vcmp.eq.f32.partialorder %v1304, 8.507059e+37
    %v1306 = vand.u32 %v1108, 2147483648
    %v1307 = vor.u32 1.1754944e-38, %v1306
    %v1308 = vsel %vm1305, %v1307, %v1303
    %v1309 = vmul.f32 %v1076, %v1308
    %v1310 = vrcp.pop %v1110
    %v1311 = vmul.f32 %v1110, %v1310
    %v1312 = vsub.f32 1.0, %v1311
    %v1313 = vmul.f32 %v1310, %v1312
    %v1314 = vadd.f32 %v1310, %v1313
    %vm1315 = vweird.f32 %v1110
    %vm1316 = vweird.f32 %v1310
    %vm1317 = vmor %vm1315, %vm1316
    %v1318 = vsel %vm1317, %v1310, %v1314
    %v1319 = vand.u32 2147483647, %v1110
    %vm1320 = vcmp.eq.f32.partialorder %v1319, 8.507059e+37
    %v1321 = vand.u32 %v1110, 2147483648
    %v1322 = vor.u32 1.1754944e-38, %v1321
    %v1323 = vsel %vm1320, %v1322, %v1318
    %v1324 = vmul.f32 %v1078, %v1323
    %v1325 = vrcp.pop %v1112
    %v1326 = vmul.f32 %v1112, %v1325
    %v1327 = vsub.f32 1.0, %v1326
    %v1328 = vmul.f32 %v1325, %v1327
    %v1329 = vadd.f32 %v1325, %v1328
    %vm1330 = vweird.f32 %v1112
    %vm1331 = vweird.f32 %v1325
    %vm1332 = vmor %vm1330, %vm1331
    %v1333 = vsel %vm1332, %v1325, %v1329
    %v1334 = vand.u32 2147483647, %v1112
    %vm1335 = vcmp.eq.f32.partialorder %v1334, 8.507059e+37
    %v1336 = vand.u32 %v1112, 2147483648
    %v1337 = vor.u32 1.1754944e-38, %v1336
    %v1338 = vsel %vm1335, %v1337, %v1333
    %v1339 = vmul.f32 %v1080, %v1338
    %v1340 = vrcp.pop %v1114
    %v1341 = vmul.f32 %v1114, %v1340
    %v1342 = vsub.f32 1.0, %v1341
    %v1343 = vmul.f32 %v1340, %v1342
    %v1344 = vadd.f32 %v1340, %v1343
    %vm1345 = vweird.f32 %v1114
    %vm1346 = vweird.f32 %v1340
    %vm1347 = vmor %vm1345, %vm1346
    %v1348 = vsel %vm1347, %v1340, %v1344
    %v1349 = vand.u32 2147483647, %v1114
    %vm1350 = vcmp.eq.f32.partialorder %v1349, 8.507059e+37
    %v1351 = vand.u32 %v1114, 2147483648
    %v1352 = vor.u32 1.1754944e-38, %v1351
    %v1353 = vsel %vm1350, %v1352, %v1348
    %v1354 = vmul.f32 %v1082, %v1353
    %v1355 = vmul.f32 %v695, %v665
    %v1356 = vmul.f32 %v696, %v666
    %v1357 = vmul.f32 %v695, %v667
    %v1358 = vmul.f32 %v696, %v668
    %v1359 = vmul.f32 %v695, %v669
    %v1360 = vmul.f32 %v696, %v670
    %v1361 = vmul.f32 %v695, %v671
    %v1362 = vmul.f32 %v696, %v672
    %v1363 = vmul.f32 %v695, %v673
    %v1364 = vmul.f32 %v696, %v674
    %v1365 = vmul.f32 %v695, %v675
    %v1366 = vmul.f32 %v696, %v676
    %v1367 = vmul.f32 %v695, %v677
    %v1368 = vmul.f32 %v696, %v678
    %v1369 = vmul.f32 %v695, %v679
    %v1370 = vmul.f32 %v696, %v680
    %1371 = vmatpush.msra.mxu0 %v1370
    %1372 = vmatpush.msra.mxu0 %v1369
    %1373 = vmatpush.msra.mxu0 %v1368
    %1374 = vmatpush.msra.mxu0 %v1367
    %1375 = vmatpush.msra.mxu0 %v1366
    %1376 = vmatpush.msra.mxu0 %v1365
    %1377 = vmatpush.msra.mxu0 %v1364
    %1378 = vmatpush.msra.mxu0 %v1363
    %1379 = vmatpush.msra.mxu0 %v1362
    %1380 = vmatpush.msra.mxu0 %v1361
    %1381 = vmatpush.msra.mxu0 %v1360
    %1382 = vmatpush.msra.mxu0 %v1359
    %1383 = vmatpush.msra.mxu0 %v1358
    %1384 = vmatpush.msra.mxu0 %v1357
    %1385 = vmatpush.msra.mxu0 %v1356
    %1386 = vmatpush.msra.mxu0 %v1355
    %1387 = vmatmul.f32.gmra.mxu0 %v1129
    %v1388 = vpop.f32.mrf.mxu0
    %v1389 = vadd.f32 0.0, %v1388
    %1390 = vmatmul.f32.gmra.mxu0 %v1144
    %v1391 = vpop.f32.mrf.mxu0
    %v1392 = vadd.f32 0.0, %v1391
    %1393 = vmatmul.f32.gmra.mxu0 %v1159
    %v1394 = vpop.f32.mrf.mxu0
    %v1395 = vadd.f32 0.0, %v1394
    %1396 = vmatmul.f32.gmra.mxu0 %v1174
    %v1397 = vpop.f32.mrf.mxu0
    %v1398 = vadd.f32 0.0, %v1397
    %1399 = vmatmul.f32.gmra.mxu0 %v1189
    %v1400 = vpop.f32.mrf.mxu0
    %v1401 = vadd.f32 0.0, %v1400
    %1402 = vmatmul.f32.gmra.mxu0 %v1204
    %v1403 = vpop.f32.mrf.mxu0
    %v1404 = vadd.f32 0.0, %v1403
    %1405 = vmatmul.f32.gmra.mxu0 %v1219
    %v1406 = vpop.f32.mrf.mxu0
    %v1407 = vadd.f32 0.0, %v1406
    %1408 = vmatmul.f32.gmra.mxu0 %v1234
    %v1409 = vpop.f32.mrf.mxu0
    %v1410 = vadd.f32 0.0, %v1409
    %1411 = vmatmul.f32.gmra.mxu0 %v1249
    %v1412 = vpop.f32.mrf.mxu0
    %v1413 = vadd.f32 0.0, %v1412
    %1414 = vmatmul.f32.gmra.mxu0 %v1264
    %v1415 = vpop.f32.mrf.mxu0
    %v1416 = vadd.f32 0.0, %v1415
    %1417 = vmatmul.f32.gmra.mxu0 %v1279
    %v1418 = vpop.f32.mrf.mxu0
    %v1419 = vadd.f32 0.0, %v1418
    %1420 = vmatmul.f32.gmra.mxu0 %v1294
    %v1421 = vpop.f32.mrf.mxu0
    %v1422 = vadd.f32 0.0, %v1421
    %1423 = vmatmul.f32.gmra.mxu0 %v1309
    %v1424 = vpop.f32.mrf.mxu0
    %v1425 = vadd.f32 0.0, %v1424
    %1426 = vmatmul.f32.gmra.mxu0 %v1324
    %v1427 = vpop.f32.mrf.mxu0
    %v1428 = vadd.f32 0.0, %v1427
    %1429 = vmatmul.f32.gmra.mxu0 %v1339
    %v1430 = vpop.f32.mrf.mxu0
    %v1431 = vadd.f32 0.0, %v1430
    %1432 = vmatmul.f32.gmra.mxu0 %v1354
    %v1433 = vpop.f32.mrf.mxu0
    %v1434 = vadd.f32 0.0, %v1433
    %1435 = vdwg.mxu0
    %v1437 = vsel %vm321, %v1389, 0
    %v1440 = vsel %vm321, %v1392, 0
    %v1443 = vsel %vm321, %v1395, 0
    %v1446 = vsel %vm321, %v1398, 0
    %v1449 = vsel %vm321, %v1401, 0
    %v1452 = vsel %vm321, %v1404, 0
    %v1455 = vsel %vm321, %v1407, 0
    %v1458 = vsel %vm321, %v1410, 0
    %v1461 = vsel %vm321, %v1413, 0
    %v1464 = vsel %vm321, %v1416, 0
    %v1467 = vsel %vm321, %v1419, 0
    %v1470 = vsel %vm321, %v1422, 0
    %v1473 = vsel %vm321, %v1425, 0
    %v1476 = vsel %vm321, %v1428, 0
    %v1479 = vsel %vm321, %v1431, 0
    %v1482 = vsel %vm321, %v1434, 0
    %1484 = vmatpush.msra.mxu0 0.0
    %1485 = vmatpush.msra.mxu0 0.0
    %1486 = vmatpush.msra.mxu0 0.0
    %1487 = vmatpush.msra.mxu0 0.0
    %1488 = vmatpush.msra.mxu0 0.0
    %1489 = vmatpush.msra.mxu0 0.0
    %1490 = vmatpush.msra.mxu0 0.0
    %1491 = vmatpush.msra.mxu0 0.0
    %1492 = vmatpush.msra.mxu0 %v688
    %1493 = vmatpush.msra.mxu0 %v687
    %1494 = vmatpush.msra.mxu0 %v686
    %1495 = vmatpush.msra.mxu0 %v685
    %1496 = vmatpush.msra.mxu0 %v684
    %1497 = vmatpush.msra.mxu0 %v683
    %1498 = vmatpush.msra.mxu0 %v682
    %1499 = vmatpush.msra.mxu0 %v681
    %1500 = vmatmul.f32.gmra.mxu0 %v1437
    %v1501 = vpop.f32.mrf.mxu0
    %v1502 = vadd.f32 0.0, %v1501
    %1503 = vmatmul.f32.gmra.mxu0 %v1440
    %v1504 = vpop.f32.mrf.mxu0
    %v1505 = vadd.f32 0.0, %v1504
    %1506 = vmatmul.f32.gmra.mxu0 %v1443
    %v1507 = vpop.f32.mrf.mxu0
    %v1508 = vadd.f32 0.0, %v1507
    %1509 = vmatmul.f32.gmra.mxu0 %v1446
    %v1510 = vpop.f32.mrf.mxu0
    %v1511 = vadd.f32 0.0, %v1510
    %1512 = vmatmul.f32.gmra.mxu0 %v1449
    %v1513 = vpop.f32.mrf.mxu0
    %v1514 = vadd.f32 0.0, %v1513
    %1515 = vmatmul.f32.gmra.mxu0 %v1452
    %v1516 = vpop.f32.mrf.mxu0
    %v1517 = vadd.f32 0.0, %v1516
    %1518 = vmatmul.f32.gmra.mxu0 %v1455
    %v1519 = vpop.f32.mrf.mxu0
    %v1520 = vadd.f32 0.0, %v1519
    %1521 = vmatmul.f32.gmra.mxu0 %v1458
    %v1522 = vpop.f32.mrf.mxu0
    %v1523 = vadd.f32 0.0, %v1522
    %1524 = vmatmul.f32.gmra.mxu0 %v1461
    %v1525 = vpop.f32.mrf.mxu0
    %v1526 = vadd.f32 0.0, %v1525
    %1527 = vmatmul.f32.gmra.mxu0 %v1464
    %v1528 = vpop.f32.mrf.mxu0
    %v1529 = vadd.f32 0.0, %v1528
    %1530 = vmatmul.f32.gmra.mxu0 %v1467
    %v1531 = vpop.f32.mrf.mxu0
    %v1532 = vadd.f32 0.0, %v1531
    %1533 = vmatmul.f32.gmra.mxu0 %v1470
    %v1534 = vpop.f32.mrf.mxu0
    %v1535 = vadd.f32 0.0, %v1534
    %1536 = vmatmul.f32.gmra.mxu0 %v1473
    %v1537 = vpop.f32.mrf.mxu0
    %v1538 = vadd.f32 0.0, %v1537
    %1539 = vmatmul.f32.gmra.mxu0 %v1476
    %v1540 = vpop.f32.mrf.mxu0
    %v1541 = vadd.f32 0.0, %v1540
    %1542 = vmatmul.f32.gmra.mxu0 %v1479
    %v1543 = vpop.f32.mrf.mxu0
    %v1544 = vadd.f32 0.0, %v1543
    %1545 = vmatmul.f32.gmra.mxu0 %v1482
    %v1546 = vpop.f32.mrf.mxu0
    %v1547 = vadd.f32 0.0, %v1546
    %1548 = vdwg.mxu0
    %v1549 = vmul.f32 %v1502, %v665
    %v1550 = vmul.f32 %v1505, %v666
    %v1551 = vmul.f32 %v1508, %v667
    %v1552 = vmul.f32 %v1511, %v668
    %v1553 = vmul.f32 %v1514, %v669
    %v1554 = vmul.f32 %v1517, %v670
    %v1555 = vmul.f32 %v1520, %v671
    %v1556 = vmul.f32 %v1523, %v672
    %v1557 = vmul.f32 %v1526, %v673
    %v1558 = vmul.f32 %v1529, %v674
    %v1559 = vmul.f32 %v1532, %v675
    %v1560 = vmul.f32 %v1535, %v676
    %v1561 = vmul.f32 %v1538, %v677
    %v1562 = vmul.f32 %v1541, %v678
    %v1563 = vmul.f32 %v1544, %v679
    %v1564 = vmul.f32 %v1547, %v680
    %1565 = vmatpush.msra.mxu0 %v1564
    %1566 = vmatpush.msra.mxu0 %v1563
    %1567 = vmatpush.msra.mxu0 %v1562
    %1568 = vmatpush.msra.mxu0 %v1561
    %1569 = vmatpush.msra.mxu0 %v1560
    %1570 = vmatpush.msra.mxu0 %v1559
    %1571 = vmatpush.msra.mxu0 %v1558
    %1572 = vmatpush.msra.mxu0 %v1557
    %1573 = vmatpush.msra.mxu0 %v1556
    %1574 = vmatpush.msra.mxu0 %v1555
    %1575 = vmatpush.msra.mxu0 %v1554
    %1576 = vmatpush.msra.mxu0 %v1553
    %1577 = vmatpush.msra.mxu0 %v1552
    %1578 = vmatpush.msra.mxu0 %v1551
    %1579 = vmatpush.msra.mxu0 %v1550
    %1580 = vmatpush.msra.mxu0 %v1549
    %1581 = vmatmul.f32.gmra.mxu0 %v689
    %v1582 = vpop.f32.mrf.mxu0
    %v1583 = vadd.f32 0.0, %v1582
    %1584 = vmatmul.f32.gmra.mxu0 %v690
    %v1585 = vpop.f32.mrf.mxu0
    %v1586 = vadd.f32 0.0, %v1585
    %1587 = vdwg.mxu0
    %1588 = vst.msk [vmem:[#allocation6] sm:$0xff] %vm321, %v1583
    %1589 = vst.msk [vmem:[#allocation6 + $0x8] sm:$0xff] %vm321, %v1586
    %v1590 = vld [vmem:[#allocation3 + $0x10] sm:$0xff]
    %v1591 = vld [vmem:[#allocation3 + $0x18] sm:$0xff]
    %v1592 = vld [vmem:[#allocation4 + $0x10] sm:$0xff]
    %v1593 = vld [vmem:[#allocation4 + $0x18] sm:$0xff]
    %v1594 = vld [vmem:[#allocation5 + $0x10] sm:$0xff]
    %v1595 = vld [vmem:[#allocation5 + $0x18] sm:$0xff]
    %v1596 = vmul.f32 %v1590, %v665
    %v1597 = vmul.f32 %v1591, %v666
    %v1598 = vmul.f32 %v1590, %v667
    %v1599 = vmul.f32 %v1591, %v668
    %v1600 = vmul.f32 %v1590, %v669
    %v1601 = vmul.f32 %v1591, %v670
    %v1602 = vmul.f32 %v1590, %v671
    %v1603 = vmul.f32 %v1591, %v672
    %v1604 = vmul.f32 %v1590, %v673
    %v1605 = vmul.f32 %v1591, %v674
    %v1606 = vmul.f32 %v1590, %v675
    %v1607 = vmul.f32 %v1591, %v676
    %v1608 = vmul.f32 %v1590, %v677
    %v1609 = vmul.f32 %v1591, %v678
    %v1610 = vmul.f32 %v1590, %v679
    %v1611 = vmul.f32 %v1591, %v680
    %v1613 = vsel %vm321, %v1596, 0
    %v1616 = vsel %vm321, %v1597, 0
    %v1619 = vsel %vm321, %v1598, 0
    %v1622 = vsel %vm321, %v1599, 0
    %v1625 = vsel %vm321, %v1600, 0
    %v1628 = vsel %vm321, %v1601, 0
    %v1631 = vsel %vm321, %v1602, 0
    %v1634 = vsel %vm321, %v1603, 0
    %v1637 = vsel %vm321, %v1604, 0
    %v1640 = vsel %vm321, %v1605, 0
    %v1643 = vsel %vm321, %v1606, 0
    %v1646 = vsel %vm321, %v1607, 0
    %v1649 = vsel %vm321, %v1608, 0
    %v1652 = vsel %vm321, %v1609, 0
    %v1655 = vsel %vm321, %v1610, 0
    %v1658 = vsel %vm321, %v1611, 0
    %1660 = vmatpush.msra.mxu0 0.0
    %1661 = vmatpush.msra.mxu0 0.0
    %1662 = vmatpush.msra.mxu0 0.0
    %1663 = vmatpush.msra.mxu0 0.0
    %1664 = vmatpush.msra.mxu0 0.0
    %1665 = vmatpush.msra.mxu0 0.0
    %1666 = vmatpush.msra.mxu0 0.0
    %1667 = vmatpush.msra.mxu0 0.0
    %1668 = vmatpush.msra.mxu0 %v688
    %1669 = vmatpush.msra.mxu0 %v687
    %1670 = vmatpush.msra.mxu0 %v686
    %1671 = vmatpush.msra.mxu0 %v685
    %1672 = vmatpush.msra.mxu0 %v684
    %1673 = vmatpush.msra.mxu0 %v683
    %1674 = vmatpush.msra.mxu0 %v682
    %1675 = vmatpush.msra.mxu0 %v681
    %1676 = vmatmul.f32.gmra.mxu0 %v1613
    %v1677 = vpop.f32.mrf.mxu0
    %v1678 = vadd.f32 0.0, %v1677
    %1679 = vmatmul.f32.gmra.mxu0 %v1616
    %v1680 = vpop.f32.mrf.mxu0
    %v1681 = vadd.f32 0.0, %v1680
    %1682 = vmatmul.f32.gmra.mxu0 %v1619
    %v1683 = vpop.f32.mrf.mxu0
    %v1684 = vadd.f32 0.0, %v1683
    %1685 = vmatmul.f32.gmra.mxu0 %v1622
    %v1686 = vpop.f32.mrf.mxu0
    %v1687 = vadd.f32 0.0, %v1686
    %1688 = vmatmul.f32.gmra.mxu0 %v1625
    %v1689 = vpop.f32.mrf.mxu0
    %v1690 = vadd.f32 0.0, %v1689
    %1691 = vmatmul.f32.gmra.mxu0 %v1628
    %v1692 = vpop.f32.mrf.mxu0
    %v1693 = vadd.f32 0.0, %v1692
    %1694 = vmatmul.f32.gmra.mxu0 %v1631
    %v1695 = vpop.f32.mrf.mxu0
    %v1696 = vadd.f32 0.0, %v1695
    %1697 = vmatmul.f32.gmra.mxu0 %v1634
    %v1698 = vpop.f32.mrf.mxu0
    %v1699 = vadd.f32 0.0, %v1698
    %1700 = vmatmul.f32.gmra.mxu0 %v1637
    %v1701 = vpop.f32.mrf.mxu0
    %v1702 = vadd.f32 0.0, %v1701
    %1703 = vmatmul.f32.gmra.mxu0 %v1640
    %v1704 = vpop.f32.mrf.mxu0
    %v1705 = vadd.f32 0.0, %v1704
    %1706 = vmatmul.f32.gmra.mxu0 %v1643
    %v1707 = vpop.f32.mrf.mxu0
    %v1708 = vadd.f32 0.0, %v1707
    %1709 = vmatmul.f32.gmra.mxu0 %v1646
    %v1710 = vpop.f32.mrf.mxu0
    %v1711 = vadd.f32 0.0, %v1710
    %1712 = vmatmul.f32.gmra.mxu0 %v1649
    %v1713 = vpop.f32.mrf.mxu0
    %v1714 = vadd.f32 0.0, %v1713
    %1715 = vmatmul.f32.gmra.mxu0 %v1652
    %v1716 = vpop.f32.mrf.mxu0
    %v1717 = vadd.f32 0.0, %v1716
    %1718 = vmatmul.f32.gmra.mxu0 %v1655
    %v1719 = vpop.f32.mrf.mxu0
    %v1720 = vadd.f32 0.0, %v1719
    %1721 = vmatmul.f32.gmra.mxu0 %v1658
    %v1722 = vpop.f32.mrf.mxu0
    %v1723 = vadd.f32 0.0, %v1722
    %1724 = vdwg.mxu0
    %v1725 = vmul.f32 %v1592, %v665
    %v1726 = vmul.f32 %v1593, %v666
    %v1727 = vmul.f32 %v1592, %v667
    %v1728 = vmul.f32 %v1593, %v668
    %v1729 = vmul.f32 %v1592, %v669
    %v1730 = vmul.f32 %v1593, %v670
    %v1731 = vmul.f32 %v1592, %v671
    %v1732 = vmul.f32 %v1593, %v672
    %v1733 = vmul.f32 %v1592, %v673
    %v1734 = vmul.f32 %v1593, %v674
    %v1735 = vmul.f32 %v1592, %v675
    %v1736 = vmul.f32 %v1593, %v676
    %v1737 = vmul.f32 %v1592, %v677
    %v1738 = vmul.f32 %v1593, %v678
    %v1739 = vmul.f32 %v1592, %v679
    %v1740 = vmul.f32 %v1593, %v680
    %v1742 = vsel %vm321, %v1678, 0
    %v1745 = vsel %vm321, %v1681, 0
    %v1748 = vsel %vm321, %v1684, 0
    %v1751 = vsel %vm321, %v1687, 0
    %v1754 = vsel %vm321, %v1690, 0
    %v1757 = vsel %vm321, %v1693, 0
    %v1760 = vsel %vm321, %v1696, 0
    %v1763 = vsel %vm321, %v1699, 0
    %v1766 = vsel %vm321, %v1702, 0
    %v1769 = vsel %vm321, %v1705, 0
    %v1772 = vsel %vm321, %v1708, 0
    %v1775 = vsel %vm321, %v1711, 0
    %v1778 = vsel %vm321, %v1714, 0
    %v1781 = vsel %vm321, %v1717, 0
    %v1784 = vsel %vm321, %v1720, 0
    %v1787 = vsel %vm321, %v1723, 0
    %v1790 = vsel %vm321, %v1725, 0
    %v1793 = vsel %vm321, %v1726, 0
    %v1796 = vsel %vm321, %v1727, 0
    %v1799 = vsel %vm321, %v1728, 0
    %v1802 = vsel %vm321, %v1729, 0
    %v1805 = vsel %vm321, %v1730, 0
    %v1808 = vsel %vm321, %v1731, 0
    %v1811 = vsel %vm321, %v1732, 0
    %v1814 = vsel %vm321, %v1733, 0
    %v1817 = vsel %vm321, %v1734, 0
    %v1820 = vsel %vm321, %v1735, 0
    %v1823 = vsel %vm321, %v1736, 0
    %v1826 = vsel %vm321, %v1737, 0
    %v1829 = vsel %vm321, %v1738, 0
    %v1832 = vsel %vm321, %v1739, 0
    %v1835 = vsel %vm321, %v1740, 0
    %1837 = vmatpush.xpose.msra.mxu0 %v1835
    %1838 = vmatpush.xpose.msra.mxu0 %v1832
    %1839 = vmatpush.xpose.msra.mxu0 %v1829
    %1840 = vmatpush.xpose.msra.mxu0 %v1826
    %1841 = vmatpush.xpose.msra.mxu0 %v1823
    %1842 = vmatpush.xpose.msra.mxu0 %v1820
    %1843 = vmatpush.xpose.msra.mxu0 %v1817
    %1844 = vmatpush.xpose.msra.mxu0 %v1814
    %1845 = vmatpush.xpose.msra.mxu0 %v1811
    %1846 = vmatpush.xpose.msra.mxu0 %v1808
    %1847 = vmatpush.xpose.msra.mxu0 %v1805
    %1848 = vmatpush.xpose.msra.mxu0 %v1802
    %1849 = vmatpush.xpose.msra.mxu0 %v1799
    %1850 = vmatpush.xpose.msra.mxu0 %v1796
    %1851 = vmatpush.xpose.msra.mxu0 %v1793
    %1852 = vmatpush.xpose.msra.mxu0 %v1790
    %1853 = vmatmul.f32.gmra.mxu0 %v1742
    %v1854 = vpop.f32.mrf.mxu0
    %v1855 = vadd.f32 0.0, %v1854
    %1856 = vmatmul.f32.gmra.mxu0 %v1745
    %v1857 = vpop.f32.mrf.mxu0
    %v1858 = vadd.f32 0.0, %v1857
    %1859 = vmatmul.f32.gmra.mxu0 %v1748
    %v1860 = vpop.f32.mrf.mxu0
    %v1861 = vadd.f32 0.0, %v1860
    %1862 = vmatmul.f32.gmra.mxu0 %v1751
    %v1863 = vpop.f32.mrf.mxu0
    %v1864 = vadd.f32 0.0, %v1863
    %1865 = vmatmul.f32.gmra.mxu0 %v1754
    %v1866 = vpop.f32.mrf.mxu0
    %v1867 = vadd.f32 0.0, %v1866
    %1868 = vmatmul.f32.gmra.mxu0 %v1757
    %v1869 = vpop.f32.mrf.mxu0
    %v1870 = vadd.f32 0.0, %v1869
    %1871 = vmatmul.f32.gmra.mxu0 %v1760
    %v1872 = vpop.f32.mrf.mxu0
    %v1873 = vadd.f32 0.0, %v1872
    %1874 = vmatmul.f32.gmra.mxu0 %v1763
    %v1875 = vpop.f32.mrf.mxu0
    %v1876 = vadd.f32 0.0, %v1875
    %1877 = vmatmul.f32.gmra.mxu0 %v1766
    %v1878 = vpop.f32.mrf.mxu0
    %v1879 = vadd.f32 0.0, %v1878
    %1880 = vmatmul.f32.gmra.mxu0 %v1769
    %v1881 = vpop.f32.mrf.mxu0
    %v1882 = vadd.f32 0.0, %v1881
    %1883 = vmatmul.f32.gmra.mxu0 %v1772
    %v1884 = vpop.f32.mrf.mxu0
    %v1885 = vadd.f32 0.0, %v1884
    %1886 = vmatmul.f32.gmra.mxu0 %v1775
    %v1887 = vpop.f32.mrf.mxu0
    %v1888 = vadd.f32 0.0, %v1887
    %1889 = vmatmul.f32.gmra.mxu0 %v1778
    %v1890 = vpop.f32.mrf.mxu0
    %v1891 = vadd.f32 0.0, %v1890
    %1892 = vmatmul.f32.gmra.mxu0 %v1781
    %v1893 = vpop.f32.mrf.mxu0
    %v1894 = vadd.f32 0.0, %v1893
    %1895 = vmatmul.f32.gmra.mxu0 %v1784
    %v1896 = vpop.f32.mrf.mxu0
    %v1897 = vadd.f32 0.0, %v1896
    %1898 = vmatmul.f32.gmra.mxu0 %v1787
    %v1899 = vpop.f32.mrf.mxu0
    %v1900 = vadd.f32 0.0, %v1899
    %1901 = vdwg.mxu0
    %1902 = vmax.xlane.f32.xlu0 %v1855
    %v1903 = vpop.xlane.xlu0 %1902
    %1904 = vmax.xlane.f32.xlu0 %v1858
    %v1905 = vpop.xlane.xlu0 %1904
    %1906 = vmax.xlane.f32.xlu0 %v1861
    %v1907 = vpop.xlane.xlu0 %1906
    %1908 = vmax.xlane.f32.xlu0 %v1864
    %v1909 = vpop.xlane.xlu0 %1908
    %1910 = vmax.xlane.f32.xlu0 %v1867
    %v1911 = vpop.xlane.xlu0 %1910
    %1912 = vmax.xlane.f32.xlu0 %v1870
    %v1913 = vpop.xlane.xlu0 %1912
    %1914 = vmax.xlane.f32.xlu0 %v1873
    %v1915 = vpop.xlane.xlu0 %1914
    %1916 = vmax.xlane.f32.xlu0 %v1876
    %v1917 = vpop.xlane.xlu0 %1916
    %1918 = vmax.xlane.f32.xlu0 %v1879
    %v1919 = vpop.xlane.xlu0 %1918
    %1920 = vmax.xlane.f32.xlu0 %v1882
    %v1921 = vpop.xlane.xlu0 %1920
    %1922 = vmax.xlane.f32.xlu0 %v1885
    %v1923 = vpop.xlane.xlu0 %1922
    %1924 = vmax.xlane.f32.xlu0 %v1888
    %v1925 = vpop.xlane.xlu0 %1924
    %1926 = vmax.xlane.f32.xlu0 %v1891
    %v1927 = vpop.xlane.xlu0 %1926
    %1928 = vmax.xlane.f32.xlu0 %v1894
    %v1929 = vpop.xlane.xlu0 %1928
    %1930 = vmax.xlane.f32.xlu0 %v1897
    %v1931 = vpop.xlane.xlu0 %1930
    %1932 = vmax.xlane.f32.xlu0 %v1900
    %v1933 = vpop.xlane.xlu0 %1932
    %v1934 = vsub.f32 %v1855, %v1903
    %v1935 = vsub.f32 %v1858, %v1905
    %v1936 = vsub.f32 %v1861, %v1907
    %v1937 = vsub.f32 %v1864, %v1909
    %v1938 = vsub.f32 %v1867, %v1911
    %v1939 = vsub.f32 %v1870, %v1913
    %v1940 = vsub.f32 %v1873, %v1915
    %v1941 = vsub.f32 %v1876, %v1917
    %v1942 = vsub.f32 %v1879, %v1919
    %v1943 = vsub.f32 %v1882, %v1921
    %v1944 = vsub.f32 %v1885, %v1923
    %v1945 = vsub.f32 %v1888, %v1925
    %v1946 = vsub.f32 %v1891, %v1927
    %v1947 = vsub.f32 %v1894, %v1929
    %v1948 = vsub.f32 %v1897, %v1931
    %v1949 = vsub.f32 %v1900, %v1933
    %v1950 = vmul.f32 %v1934, 1.442695
    %v1951 = vpow.pop %v1950
    %v1952 = vmul.f32 %v1935, 1.442695
    %v1953 = vpow.pop %v1952
    %v1954 = vmul.f32 %v1936, 1.442695
    %v1955 = vpow.pop %v1954
    %v1956 = vmul.f32 %v1937, 1.442695
    %v1957 = vpow.pop %v1956
    %v1958 = vmul.f32 %v1938, 1.442695
    %v1959 = vpow.pop %v1958
    %v1960 = vmul.f32 %v1939, 1.442695
    %v1961 = vpow.pop %v1960
    %v1962 = vmul.f32 %v1940, 1.442695
    %v1963 = vpow.pop %v1962
    %v1964 = vmul.f32 %v1941, 1.442695
    %v1965 = vpow.pop %v1964
    %v1966 = vmul.f32 %v1942, 1.442695
    %v1967 = vpow.pop %v1966
    %v1968 = vmul.f32 %v1943, 1.442695
    %v1969 = vpow.pop %v1968
    %v1970 = vmul.f32 %v1944, 1.442695
    %v1971 = vpow.pop %v1970
    %v1972 = vmul.f32 %v1945, 1.442695
    %v1973 = vpow.pop %v1972
    %v1974 = vmul.f32 %v1946, 1.442695
    %v1975 = vpow.pop %v1974
    %v1976 = vmul.f32 %v1947, 1.442695
    %v1977 = vpow.pop %v1976
    %v1978 = vmul.f32 %v1948, 1.442695
    %v1979 = vpow.pop %v1978
    %v1980 = vmul.f32 %v1949, 1.442695
    %v1981 = vpow.pop %v1980
    %1982 = vadd.xlane.f32.xlu0 %v1951
    %v1983 = vpop.xlane.xlu0 %1982
    %1984 = vadd.xlane.f32.xlu0 %v1953
    %v1985 = vpop.xlane.xlu0 %1984
    %1986 = vadd.xlane.f32.xlu0 %v1955
    %v1987 = vpop.xlane.xlu0 %1986
    %1988 = vadd.xlane.f32.xlu0 %v1957
    %v1989 = vpop.xlane.xlu0 %1988
    %1990 = vadd.xlane.f32.xlu0 %v1959
    %v1991 = vpop.xlane.xlu0 %1990
    %1992 = vadd.xlane.f32.xlu0 %v1961
    %v1993 = vpop.xlane.xlu0 %1992
    %1994 = vadd.xlane.f32.xlu0 %v1963
    %v1995 = vpop.xlane.xlu0 %1994
    %1996 = vadd.xlane.f32.xlu0 %v1965
    %v1997 = vpop.xlane.xlu0 %1996
    %1998 = vadd.xlane.f32.xlu0 %v1967
    %v1999 = vpop.xlane.xlu0 %1998
    %2000 = vadd.xlane.f32.xlu0 %v1969
    %v2001 = vpop.xlane.xlu0 %2000
    %2002 = vadd.xlane.f32.xlu0 %v1971
    %v2003 = vpop.xlane.xlu0 %2002
    %2004 = vadd.xlane.f32.xlu0 %v1973
    %v2005 = vpop.xlane.xlu0 %2004
    %2006 = vadd.xlane.f32.xlu0 %v1975
    %v2007 = vpop.xlane.xlu0 %2006
    %2008 = vadd.xlane.f32.xlu0 %v1977
    %v2009 = vpop.xlane.xlu0 %2008
    %2010 = vadd.xlane.f32.xlu0 %v1979
    %v2011 = vpop.xlane.xlu0 %2010
    %2012 = vadd.xlane.f32.xlu0 %v1981
    %v2013 = vpop.xlane.xlu0 %2012
    %v2014 = vrcp.pop %v1983
    %v2015 = vmul.f32 %v1983, %v2014
    %v2016 = vsub.f32 1.0, %v2015
    %v2017 = vmul.f32 %v2014, %v2016
    %v2018 = vadd.f32 %v2014, %v2017
    %vm2019 = vweird.f32 %v1983
    %vm2020 = vweird.f32 %v2014
    %vm2021 = vmor %vm2019, %vm2020
    %v2022 = vsel %vm2021, %v2014, %v2018
    %v2023 = vand.u32 2147483647, %v1983
    %vm2024 = vcmp.eq.f32.partialorder %v2023, 8.507059e+37
    %v2025 = vand.u32 %v1983, 2147483648
    %v2026 = vor.u32 1.1754944e-38, %v2025
    %v2027 = vsel %vm2024, %v2026, %v2022
    %v2028 = vmul.f32 %v1951, %v2027
    %v2029 = vrcp.pop %v1985
    %v2030 = vmul.f32 %v1985, %v2029
    %v2031 = vsub.f32 1.0, %v2030
    %v2032 = vmul.f32 %v2029, %v2031
    %v2033 = vadd.f32 %v2029, %v2032
    %vm2034 = vweird.f32 %v1985
    %vm2035 = vweird.f32 %v2029
    %vm2036 = vmor %vm2034, %vm2035
    %v2037 = vsel %vm2036, %v2029, %v2033
    %v2038 = vand.u32 2147483647, %v1985
    %vm2039 = vcmp.eq.f32.partialorder %v2038, 8.507059e+37
    %v2040 = vand.u32 %v1985, 2147483648
    %v2041 = vor.u32 1.1754944e-38, %v2040
    %v2042 = vsel %vm2039, %v2041, %v2037
    %v2043 = vmul.f32 %v1953, %v2042
    %v2044 = vrcp.pop %v1987
    %v2045 = vmul.f32 %v1987, %v2044
    %v2046 = vsub.f32 1.0, %v2045
    %v2047 = vmul.f32 %v2044, %v2046
    %v2048 = vadd.f32 %v2044, %v2047
    %vm2049 = vweird.f32 %v1987
    %vm2050 = vweird.f32 %v2044
    %vm2051 = vmor %vm2049, %vm2050
    %v2052 = vsel %vm2051, %v2044, %v2048
    %v2053 = vand.u32 2147483647, %v1987
    %vm2054 = vcmp.eq.f32.partialorder %v2053, 8.507059e+37
    %v2055 = vand.u32 %v1987, 2147483648
    %v2056 = vor.u32 1.1754944e-38, %v2055
    %v2057 = vsel %vm2054, %v2056, %v2052
    %v2058 = vmul.f32 %v1955, %v2057
    %v2059 = vrcp.pop %v1989
    %v2060 = vmul.f32 %v1989, %v2059
    %v2061 = vsub.f32 1.0, %v2060
    %v2062 = vmul.f32 %v2059, %v2061
    %v2063 = vadd.f32 %v2059, %v2062
    %vm2064 = vweird.f32 %v1989
    %vm2065 = vweird.f32 %v2059
    %vm2066 = vmor %vm2064, %vm2065
    %v2067 = vsel %vm2066, %v2059, %v2063
    %v2068 = vand.u32 2147483647, %v1989
    %vm2069 = vcmp.eq.f32.partialorder %v2068, 8.507059e+37
    %v2070 = vand.u32 %v1989, 2147483648
    %v2071 = vor.u32 1.1754944e-38, %v2070
    %v2072 = vsel %vm2069, %v2071, %v2067
    %v2073 = vmul.f32 %v1957, %v2072
    %v2074 = vrcp.pop %v1991
    %v2075 = vmul.f32 %v1991, %v2074
    %v2076 = vsub.f32 1.0, %v2075
    %v2077 = vmul.f32 %v2074, %v2076
    %v2078 = vadd.f32 %v2074, %v2077
    %vm2079 = vweird.f32 %v1991
    %vm2080 = vweird.f32 %v2074
    %vm2081 = vmor %vm2079, %vm2080
    %v2082 = vsel %vm2081, %v2074, %v2078
    %v2083 = vand.u32 2147483647, %v1991
    %vm2084 = vcmp.eq.f32.partialorder %v2083, 8.507059e+37
    %v2085 = vand.u32 %v1991, 2147483648
    %v2086 = vor.u32 1.1754944e-38, %v2085
    %v2087 = vsel %vm2084, %v2086, %v2082
    %v2088 = vmul.f32 %v1959, %v2087
    %v2089 = vrcp.pop %v1993
    %v2090 = vmul.f32 %v1993, %v2089
    %v2091 = vsub.f32 1.0, %v2090
    %v2092 = vmul.f32 %v2089, %v2091
    %v2093 = vadd.f32 %v2089, %v2092
    %vm2094 = vweird.f32 %v1993
    %vm2095 = vweird.f32 %v2089
    %vm2096 = vmor %vm2094, %vm2095
    %v2097 = vsel %vm2096, %v2089, %v2093
    %v2098 = vand.u32 2147483647, %v1993
    %vm2099 = vcmp.eq.f32.partialorder %v2098, 8.507059e+37
    %v2100 = vand.u32 %v1993, 2147483648
    %v2101 = vor.u32 1.1754944e-38, %v2100
    %v2102 = vsel %vm2099, %v2101, %v2097
    %v2103 = vmul.f32 %v1961, %v2102
    %v2104 = vrcp.pop %v1995
    %v2105 = vmul.f32 %v1995, %v2104
    %v2106 = vsub.f32 1.0, %v2105
    %v2107 = vmul.f32 %v2104, %v2106
    %v2108 = vadd.f32 %v2104, %v2107
    %vm2109 = vweird.f32 %v1995
    %vm2110 = vweird.f32 %v2104
    %vm2111 = vmor %vm2109, %vm2110
    %v2112 = vsel %vm2111, %v2104, %v2108
    %v2113 = vand.u32 2147483647, %v1995
    %vm2114 = vcmp.eq.f32.partialorder %v2113, 8.507059e+37
    %v2115 = vand.u32 %v1995, 2147483648
    %v2116 = vor.u32 1.1754944e-38, %v2115
    %v2117 = vsel %vm2114, %v2116, %v2112
    %v2118 = vmul.f32 %v1963, %v2117
    %v2119 = vrcp.pop %v1997
    %v2120 = vmul.f32 %v1997, %v2119
    %v2121 = vsub.f32 1.0, %v2120
    %v2122 = vmul.f32 %v2119, %v2121
    %v2123 = vadd.f32 %v2119, %v2122
    %vm2124 = vweird.f32 %v1997
    %vm2125 = vweird.f32 %v2119
    %vm2126 = vmor %vm2124, %vm2125
    %v2127 = vsel %vm2126, %v2119, %v2123
    %v2128 = vand.u32 2147483647, %v1997
    %vm2129 = vcmp.eq.f32.partialorder %v2128, 8.507059e+37
    %v2130 = vand.u32 %v1997, 2147483648
    %v2131 = vor.u32 1.1754944e-38, %v2130
    %v2132 = vsel %vm2129, %v2131, %v2127
    %v2133 = vmul.f32 %v1965, %v2132
    %v2134 = vrcp.pop %v1999
    %v2135 = vmul.f32 %v1999, %v2134
    %v2136 = vsub.f32 1.0, %v2135
    %v2137 = vmul.f32 %v2134, %v2136
    %v2138 = vadd.f32 %v2134, %v2137
    %vm2139 = vweird.f32 %v1999
    %vm2140 = vweird.f32 %v2134
    %vm2141 = vmor %vm2139, %vm2140
    %v2142 = vsel %vm2141, %v2134, %v2138
    %v2143 = vand.u32 2147483647, %v1999
    %vm2144 = vcmp.eq.f32.partialorder %v2143, 8.507059e+37
    %v2145 = vand.u32 %v1999, 2147483648
    %v2146 = vor.u32 1.1754944e-38, %v2145
    %v2147 = vsel %vm2144, %v2146, %v2142
    %v2148 = vmul.f32 %v1967, %v2147
    %v2149 = vrcp.pop %v2001
    %v2150 = vmul.f32 %v2001, %v2149
    %v2151 = vsub.f32 1.0, %v2150
    %v2152 = vmul.f32 %v2149, %v2151
    %v2153 = vadd.f32 %v2149, %v2152
    %vm2154 = vweird.f32 %v2001
    %vm2155 = vweird.f32 %v2149
    %vm2156 = vmor %vm2154, %vm2155
    %v2157 = vsel %vm2156, %v2149, %v2153
    %v2158 = vand.u32 2147483647, %v2001
    %vm2159 = vcmp.eq.f32.partialorder %v2158, 8.507059e+37
    %v2160 = vand.u32 %v2001, 2147483648
    %v2161 = vor.u32 1.1754944e-38, %v2160
    %v2162 = vsel %vm2159, %v2161, %v2157
    %v2163 = vmul.f32 %v1969, %v2162
    %v2164 = vrcp.pop %v2003
    %v2165 = vmul.f32 %v2003, %v2164
    %v2166 = vsub.f32 1.0, %v2165
    %v2167 = vmul.f32 %v2164, %v2166
    %v2168 = vadd.f32 %v2164, %v2167
    %vm2169 = vweird.f32 %v2003
    %vm2170 = vweird.f32 %v2164
    %vm2171 = vmor %vm2169, %vm2170
    %v2172 = vsel %vm2171, %v2164, %v2168
    %v2173 = vand.u32 2147483647, %v2003
    %vm2174 = vcmp.eq.f32.partialorder %v2173, 8.507059e+37
    %v2175 = vand.u32 %v2003, 2147483648
    %v2176 = vor.u32 1.1754944e-38, %v2175
    %v2177 = vsel %vm2174, %v2176, %v2172
    %v2178 = vmul.f32 %v1971, %v2177
    %v2179 = vrcp.pop %v2005
    %v2180 = vmul.f32 %v2005, %v2179
    %v2181 = vsub.f32 1.0, %v2180
    %v2182 = vmul.f32 %v2179, %v2181
    %v2183 = vadd.f32 %v2179, %v2182
    %vm2184 = vweird.f32 %v2005
    %vm2185 = vweird.f32 %v2179
    %vm2186 = vmor %vm2184, %vm2185
    %v2187 = vsel %vm2186, %v2179, %v2183
    %v2188 = vand.u32 2147483647, %v2005
    %vm2189 = vcmp.eq.f32.partialorder %v2188, 8.507059e+37
    %v2190 = vand.u32 %v2005, 2147483648
    %v2191 = vor.u32 1.1754944e-38, %v2190
    %v2192 = vsel %vm2189, %v2191, %v2187
    %v2193 = vmul.f32 %v1973, %v2192
    %v2194 = vrcp.pop %v2007
    %v2195 = vmul.f32 %v2007, %v2194
    %v2196 = vsub.f32 1.0, %v2195
    %v2197 = vmul.f32 %v2194, %v2196
    %v2198 = vadd.f32 %v2194, %v2197
    %vm2199 = vweird.f32 %v2007
    %vm2200 = vweird.f32 %v2194
    %vm2201 = vmor %vm2199, %vm2200
    %v2202 = vsel %vm2201, %v2194, %v2198
    %v2203 = vand.u32 2147483647, %v2007
    %vm2204 = vcmp.eq.f32.partialorder %v2203, 8.507059e+37
    %v2205 = vand.u32 %v2007, 2147483648
    %v2206 = vor.u32 1.1754944e-38, %v2205
    %v2207 = vsel %vm2204, %v2206, %v2202
    %v2208 = vmul.f32 %v1975, %v2207
    %v2209 = vrcp.pop %v2009
    %v2210 = vmul.f32 %v2009, %v2209
    %v2211 = vsub.f32 1.0, %v2210
    %v2212 = vmul.f32 %v2209, %v2211
    %v2213 = vadd.f32 %v2209, %v2212
    %vm2214 = vweird.f32 %v2009
    %vm2215 = vweird.f32 %v2209
    %vm2216 = vmor %vm2214, %vm2215
    %v2217 = vsel %vm2216, %v2209, %v2213
    %v2218 = vand.u32 2147483647, %v2009
    %vm2219 = vcmp.eq.f32.partialorder %v2218, 8.507059e+37
    %v2220 = vand.u32 %v2009, 2147483648
    %v2221 = vor.u32 1.1754944e-38, %v2220
    %v2222 = vsel %vm2219, %v2221, %v2217
    %v2223 = vmul.f32 %v1977, %v2222
    %v2224 = vrcp.pop %v2011
    %v2225 = vmul.f32 %v2011, %v2224
    %v2226 = vsub.f32 1.0, %v2225
    %v2227 = vmul.f32 %v2224, %v2226
    %v2228 = vadd.f32 %v2224, %v2227
    %vm2229 = vweird.f32 %v2011
    %vm2230 = vweird.f32 %v2224
    %vm2231 = vmor %vm2229, %vm2230
    %v2232 = vsel %vm2231, %v2224, %v2228
    %v2233 = vand.u32 2147483647, %v2011
    %vm2234 = vcmp.eq.f32.partialorder %v2233, 8.507059e+37
    %v2235 = vand.u32 %v2011, 2147483648
    %v2236 = vor.u32 1.1754944e-38, %v2235
    %v2237 = vsel %vm2234, %v2236, %v2232
    %v2238 = vmul.f32 %v1979, %v2237
    %v2239 = vrcp.pop %v2013
    %v2240 = vmul.f32 %v2013, %v2239
    %v2241 = vsub.f32 1.0, %v2240
    %v2242 = vmul.f32 %v2239, %v2241
    %v2243 = vadd.f32 %v2239, %v2242
    %vm2244 = vweird.f32 %v2013
    %vm2245 = vweird.f32 %v2239
    %vm2246 = vmor %vm2244, %vm2245
    %v2247 = vsel %vm2246, %v2239, %v2243
    %v2248 = vand.u32 2147483647, %v2013
    %vm2249 = vcmp.eq.f32.partialorder %v2248, 8.507059e+37
    %v2250 = vand.u32 %v2013, 2147483648
    %v2251 = vor.u32 1.1754944e-38, %v2250
    %v2252 = vsel %vm2249, %v2251, %v2247
    %v2253 = vmul.f32 %v1981, %v2252
    %v2254 = vmul.f32 %v1594, %v665
    %v2255 = vmul.f32 %v1595, %v666
    %v2256 = vmul.f32 %v1594, %v667
    %v2257 = vmul.f32 %v1595, %v668
    %v2258 = vmul.f32 %v1594, %v669
    %v2259 = vmul.f32 %v1595, %v670
    %v2260 = vmul.f32 %v1594, %v671
    %v2261 = vmul.f32 %v1595, %v672
    %v2262 = vmul.f32 %v1594, %v673
    %v2263 = vmul.f32 %v1595, %v674
    %v2264 = vmul.f32 %v1594, %v675
    %v2265 = vmul.f32 %v1595, %v676
    %v2266 = vmul.f32 %v1594, %v677
    %v2267 = vmul.f32 %v1595, %v678
    %v2268 = vmul.f32 %v1594, %v679
    %v2269 = vmul.f32 %v1595, %v680
    %2270 = vmatpush.msra.mxu0 %v2269
    %2271 = vmatpush.msra.mxu0 %v2268
    %2272 = vmatpush.msra.mxu0 %v2267
    %2273 = vmatpush.msra.mxu0 %v2266
    %2274 = vmatpush.msra.mxu0 %v2265
    %2275 = vmatpush.msra.mxu0 %v2264
    %2276 = vmatpush.msra.mxu0 %v2263
    %2277 = vmatpush.msra.mxu0 %v2262
    %2278 = vmatpush.msra.mxu0 %v2261
    %2279 = vmatpush.msra.mxu0 %v2260
    %2280 = vmatpush.msra.mxu0 %v2259
    %2281 = vmatpush.msra.mxu0 %v2258
    %2282 = vmatpush.msra.mxu0 %v2257
    %2283 = vmatpush.msra.mxu0 %v2256
    %2284 = vmatpush.msra.mxu0 %v2255
    %2285 = vmatpush.msra.mxu0 %v2254
    %2286 = vmatmul.f32.gmra.mxu0 %v2028
    %v2287 = vpop.f32.mrf.mxu0
    %v2288 = vadd.f32 0.0, %v2287
    %2289 = vmatmul.f32.gmra.mxu0 %v2043
    %v2290 = vpop.f32.mrf.mxu0
    %v2291 = vadd.f32 0.0, %v2290
    %2292 = vmatmul.f32.gmra.mxu0 %v2058
    %v2293 = vpop.f32.mrf.mxu0
    %v2294 = vadd.f32 0.0, %v2293
    %2295 = vmatmul.f32.gmra.mxu0 %v2073
    %v2296 = vpop.f32.mrf.mxu0
    %v2297 = vadd.f32 0.0, %v2296
    %2298 = vmatmul.f32.gmra.mxu0 %v2088
    %v2299 = vpop.f32.mrf.mxu0
    %v2300 = vadd.f32 0.0, %v2299
    %2301 = vmatmul.f32.gmra.mxu0 %v2103
    %v2302 = vpop.f32.mrf.mxu0
    %v2303 = vadd.f32 0.0, %v2302
    %2304 = vmatmul.f32.gmra.mxu0 %v2118
    %v2305 = vpop.f32.mrf.mxu0
    %v2306 = vadd.f32 0.0, %v2305
    %2307 = vmatmul.f32.gmra.mxu0 %v2133
    %v2308 = vpop.f32.mrf.mxu0
    %v2309 = vadd.f32 0.0, %v2308
    %2310 = vmatmul.f32.gmra.mxu0 %v2148
    %v2311 = vpop.f32.mrf.mxu0
    %v2312 = vadd.f32 0.0, %v2311
    %2313 = vmatmul.f32.gmra.mxu0 %v2163
    %v2314 = vpop.f32.mrf.mxu0
    %v2315 = vadd.f32 0.0, %v2314
    %2316 = vmatmul.f32.gmra.mxu0 %v2178
    %v2317 = vpop.f32.mrf.mxu0
    %v2318 = vadd.f32 0.0, %v2317
    %2319 = vmatmul.f32.gmra.mxu0 %v2193
    %v2320 = vpop.f32.mrf.mxu0
    %v2321 = vadd.f32 0.0, %v2320
    %2322 = vmatmul.f32.gmra.mxu0 %v2208
    %v2323 = vpop.f32.mrf.mxu0
    %v2324 = vadd.f32 0.0, %v2323
    %2325 = vmatmul.f32.gmra.mxu0 %v2223
    %v2326 = vpop.f32.mrf.mxu0
    %v2327 = vadd.f32 0.0, %v2326
    %2328 = vmatmul.f32.gmra.mxu0 %v2238
    %v2329 = vpop.f32.mrf.mxu0
    %v2330 = vadd.f32 0.0, %v2329
    %2331 = vmatmul.f32.gmra.mxu0 %v2253
    %v2332 = vpop.f32.mrf.mxu0
    %v2333 = vadd.f32 0.0, %v2332
    %2334 = vdwg.mxu0
    %v2336 = vsel %vm321, %v2288, 0
    %v2339 = vsel %vm321, %v2291, 0
    %v2342 = vsel %vm321, %v2294, 0
    %v2345 = vsel %vm321, %v2297, 0
    %v2348 = vsel %vm321, %v2300, 0
    %v2351 = vsel %vm321, %v2303, 0
    %v2354 = vsel %vm321, %v2306, 0
    %v2357 = vsel %vm321, %v2309, 0
    %v2360 = vsel %vm321, %v2312, 0
    %v2363 = vsel %vm321, %v2315, 0
    %v2366 = vsel %vm321, %v2318, 0
    %v2369 = vsel %vm321, %v2321, 0
    %v2372 = vsel %vm321, %v2324, 0
    %v2375 = vsel %vm321, %v2327, 0
    %v2378 = vsel %vm321, %v2330, 0
    %v2381 = vsel %vm321, %v2333, 0
    %2383 = vmatpush.msra.mxu0 0.0
    %2384 = vmatpush.msra.mxu0 0.0
    %2385 = vmatpush.msra.mxu0 0.0
    %2386 = vmatpush.msra.mxu0 0.0
    %2387 = vmatpush.msra.mxu0 0.0
    %2388 = vmatpush.msra.mxu0 0.0
    %2389 = vmatpush.msra.mxu0 0.0
    %2390 = vmatpush.msra.mxu0 0.0
    %2391 = vmatpush.msra.mxu0 %v688
    %2392 = vmatpush.msra.mxu0 %v687
    %2393 = vmatpush.msra.mxu0 %v686
    %2394 = vmatpush.msra.mxu0 %v685
    %2395 = vmatpush.msra.mxu0 %v684
    %2396 = vmatpush.msra.mxu0 %v683
    %2397 = vmatpush.msra.mxu0 %v682
    %2398 = vmatpush.msra.mxu0 %v681
    %2399 = vmatmul.f32.gmra.mxu0 %v2336
    %v2400 = vpop.f32.mrf.mxu0
    %v2401 = vadd.f32 0.0, %v2400
    %2402 = vmatmul.f32.gmra.mxu0 %v2339
    %v2403 = vpop.f32.mrf.mxu0
    %v2404 = vadd.f32 0.0, %v2403
    %2405 = vmatmul.f32.gmra.mxu0 %v2342
    %v2406 = vpop.f32.mrf.mxu0
    %v2407 = vadd.f32 0.0, %v2406
    %2408 = vmatmul.f32.gmra.mxu0 %v2345
    %v2409 = vpop.f32.mrf.mxu0
    %v2410 = vadd.f32 0.0, %v2409
    %2411 = vmatmul.f32.gmra.mxu0 %v2348
    %v2412 = vpop.f32.mrf.mxu0
    %v2413 = vadd.f32 0.0, %v2412
    %2414 = vmatmul.f32.gmra.mxu0 %v2351
    %v2415 = vpop.f32.mrf.mxu0
    %v2416 = vadd.f32 0.0, %v2415
    %2417 = vmatmul.f32.gmra.mxu0 %v2354
    %v2418 = vpop.f32.mrf.mxu0
    %v2419 = vadd.f32 0.0, %v2418
    %2420 = vmatmul.f32.gmra.mxu0 %v2357
    %v2421 = vpop.f32.mrf.mxu0
    %v2422 = vadd.f32 0.0, %v2421
    %2423 = vmatmul.f32.gmra.mxu0 %v2360
    %v2424 = vpop.f32.mrf.mxu0
    %v2425 = vadd.f32 0.0, %v2424
    %2426 = vmatmul.f32.gmra.mxu0 %v2363
    %v2427 = vpop.f32.mrf.mxu0
    %v2428 = vadd.f32 0.0, %v2427
    %2429 = vmatmul.f32.gmra.mxu0 %v2366
    %v2430 = vpop.f32.mrf.mxu0
    %v2431 = vadd.f32 0.0, %v2430
    %2432 = vmatmul.f32.gmra.mxu0 %v2369
    %v2433 = vpop.f32.mrf.mxu0
    %v2434 = vadd.f32 0.0, %v2433
    %2435 = vmatmul.f32.gmra.mxu0 %v2372
    %v2436 = vpop.f32.mrf.mxu0
    %v2437 = vadd.f32 0.0, %v2436
    %2438 = vmatmul.f32.gmra.mxu0 %v2375
    %v2439 = vpop.f32.mrf.mxu0
    %v2440 = vadd.f32 0.0, %v2439
    %2441 = vmatmul.f32.gmra.mxu0 %v2378
    %v2442 = vpop.f32.mrf.mxu0
    %v2443 = vadd.f32 0.0, %v2442
    %2444 = vmatmul.f32.gmra.mxu0 %v2381
    %v2445 = vpop.f32.mrf.mxu0
    %v2446 = vadd.f32 0.0, %v2445
    %2447 = vdwg.mxu0
    %v2448 = vmul.f32 %v2401, %v665
    %v2449 = vmul.f32 %v2404, %v666
    %v2450 = vmul.f32 %v2407, %v667
    %v2451 = vmul.f32 %v2410, %v668
    %v2452 = vmul.f32 %v2413, %v669
    %v2453 = vmul.f32 %v2416, %v670
    %v2454 = vmul.f32 %v2419, %v671
    %v2455 = vmul.f32 %v2422, %v672
    %v2456 = vmul.f32 %v2425, %v673
    %v2457 = vmul.f32 %v2428, %v674
    %v2458 = vmul.f32 %v2431, %v675
    %v2459 = vmul.f32 %v2434, %v676
    %v2460 = vmul.f32 %v2437, %v677
    %v2461 = vmul.f32 %v2440, %v678
    %v2462 = vmul.f32 %v2443, %v679
    %v2463 = vmul.f32 %v2446, %v680
    %2464 = vmatpush.msra.mxu0 %v2463
    %2465 = vmatpush.msra.mxu0 %v2462
    %2466 = vmatpush.msra.mxu0 %v2461
    %2467 = vmatpush.msra.mxu0 %v2460
    %2468 = vmatpush.msra.mxu0 %v2459
    %2469 = vmatpush.msra.mxu0 %v2458
    %2470 = vmatpush.msra.mxu0 %v2457
    %2471 = vmatpush.msra.mxu0 %v2456
    %2472 = vmatpush.msra.mxu0 %v2455
    %2473 = vmatpush.msra.mxu0 %v2454
    %2474 = vmatpush.msra.mxu0 %v2453
    %2475 = vmatpush.msra.mxu0 %v2452
    %2476 = vmatpush.msra.mxu0 %v2451
    %2477 = vmatpush.msra.mxu0 %v2450
    %2478 = vmatpush.msra.mxu0 %v2449
    %2479 = vmatpush.msra.mxu0 %v2448
    %2480 = vmatmul.f32.gmra.mxu0 %v689
    %v2481 = vpop.f32.mrf.mxu0
    %v2482 = vadd.f32 0.0, %v2481
    %2483 = vmatmul.f32.gmra.mxu0 %v690
    %v2484 = vpop.f32.mrf.mxu0
    %v2485 = vadd.f32 0.0, %v2484
    %2486 = vdwg.mxu0
    %2487 = vst.msk [vmem:[#allocation6 + $0x10] sm:$0xff] %vm321, %v2482
    %2488 = vst.msk [vmem:[#allocation6 + $0x18] sm:$0xff] %vm321, %v2485
    %v2489 = vld [vmem:[#allocation3 + $0x20] sm:$0xff]
    %v2490 = vld [vmem:[#allocation3 + $0x28] sm:$0xff]
    %v2491 = vld [vmem:[#allocation4 + $0x20] sm:$0xff]
    %v2492 = vld [vmem:[#allocation4 + $0x28] sm:$0xff]
    %v2493 = vld [vmem:[#allocation5 + $0x20] sm:$0xff]
    %v2494 = vld [vmem:[#allocation5 + $0x28] sm:$0xff]
    %v2495 = vmul.f32 %v2489, %v665
    %v2496 = vmul.f32 %v2490, %v666
    %v2497 = vmul.f32 %v2489, %v667
    %v2498 = vmul.f32 %v2490, %v668
    %v2499 = vmul.f32 %v2489, %v669
    %v2500 = vmul.f32 %v2490, %v670
    %v2501 = vmul.f32 %v2489, %v671
    %v2502 = vmul.f32 %v2490, %v672
    %v2503 = vmul.f32 %v2489, %v673
    %v2504 = vmul.f32 %v2490, %v674
    %v2505 = vmul.f32 %v2489, %v675
    %v2506 = vmul.f32 %v2490, %v676
    %v2507 = vmul.f32 %v2489, %v677
    %v2508 = vmul.f32 %v2490, %v678
    %v2509 = vmul.f32 %v2489, %v679
    %v2510 = vmul.f32 %v2490, %v680
    %v2512 = vsel %vm321, %v2495, 0
    %v2515 = vsel %vm321, %v2496, 0
    %v2518 = vsel %vm321, %v2497, 0
    %v2521 = vsel %vm321, %v2498, 0
    %v2524 = vsel %vm321, %v2499, 0
    %v2527 = vsel %vm321, %v2500, 0
    %v2530 = vsel %vm321, %v2501, 0
    %v2533 = vsel %vm321, %v2502, 0
    %v2536 = vsel %vm321, %v2503, 0
    %v2539 = vsel %vm321, %v2504, 0
    %v2542 = vsel %vm321, %v2505, 0
    %v2545 = vsel %vm321, %v2506, 0
    %v2548 = vsel %vm321, %v2507, 0
    %v2551 = vsel %vm321, %v2508, 0
    %v2554 = vsel %vm321, %v2509, 0
    %v2557 = vsel %vm321, %v2510, 0
    %2559 = vmatpush.msra.mxu0 0.0
    %2560 = vmatpush.msra.mxu0 0.0
    %2561 = vmatpush.msra.mxu0 0.0
    %2562 = vmatpush.msra.mxu0 0.0
    %2563 = vmatpush.msra.mxu0 0.0
    %2564 = vmatpush.msra.mxu0 0.0
    %2565 = vmatpush.msra.mxu0 0.0
    %2566 = vmatpush.msra.mxu0 0.0
    %2567 = vmatpush.msra.mxu0 %v688
    %2568 = vmatpush.msra.mxu0 %v687
    %2569 = vmatpush.msra.mxu0 %v686
    %2570 = vmatpush.msra.mxu0 %v685
    %2571 = vmatpush.msra.mxu0 %v684
    %2572 = vmatpush.msra.mxu0 %v683
    %2573 = vmatpush.msra.mxu0 %v682
    %2574 = vmatpush.msra.mxu0 %v681
    %2575 = vmatmul.f32.gmra.mxu0 %v2512
    %v2576 = vpop.f32.mrf.mxu0
    %v2577 = vadd.f32 0.0, %v2576
    %2578 = vmatmul.f32.gmra.mxu0 %v2515
    %v2579 = vpop.f32.mrf.mxu0
    %v2580 = vadd.f32 0.0, %v2579
    %2581 = vmatmul.f32.gmra.mxu0 %v2518
    %v2582 = vpop.f32.mrf.mxu0
    %v2583 = vadd.f32 0.0, %v2582
    %2584 = vmatmul.f32.gmra.mxu0 %v2521
    %v2585 = vpop.f32.mrf.mxu0
    %v2586 = vadd.f32 0.0, %v2585
    %2587 = vmatmul.f32.gmra.mxu0 %v2524
    %v2588 = vpop.f32.mrf.mxu0
    %v2589 = vadd.f32 0.0, %v2588
    %2590 = vmatmul.f32.gmra.mxu0 %v2527
    %v2591 = vpop.f32.mrf.mxu0
    %v2592 = vadd.f32 0.0, %v2591
    %2593 = vmatmul.f32.gmra.mxu0 %v2530
    %v2594 = vpop.f32.mrf.mxu0
    %v2595 = vadd.f32 0.0, %v2594
    %2596 = vmatmul.f32.gmra.mxu0 %v2533
    %v2597 = vpop.f32.mrf.mxu0
    %v2598 = vadd.f32 0.0, %v2597
    %2599 = vmatmul.f32.gmra.mxu0 %v2536
    %v2600 = vpop.f32.mrf.mxu0
    %v2601 = vadd.f32 0.0, %v2600
    %2602 = vmatmul.f32.gmra.mxu0 %v2539
    %v2603 = vpop.f32.mrf.mxu0
    %v2604 = vadd.f32 0.0, %v2603
    %2605 = vmatmul.f32.gmra.mxu0 %v2542
    %v2606 = vpop.f32.mrf.mxu0
    %v2607 = vadd.f32 0.0, %v2606
    %2608 = vmatmul.f32.gmra.mxu0 %v2545
    %v2609 = vpop.f32.mrf.mxu0
    %v2610 = vadd.f32 0.0, %v2609
    %2611 = vmatmul.f32.gmra.mxu0 %v2548
    %v2612 = vpop.f32.mrf.mxu0
    %v2613 = vadd.f32 0.0, %v2612
    %2614 = vmatmul.f32.gmra.mxu0 %v2551
    %v2615 = vpop.f32.mrf.mxu0
    %v2616 = vadd.f32 0.0, %v2615
    %2617 = vmatmul.f32.gmra.mxu0 %v2554
    %v2618 = vpop.f32.mrf.mxu0
    %v2619 = vadd.f32 0.0, %v2618
    %2620 = vmatmul.f32.gmra.mxu0 %v2557
    %v2621 = vpop.f32.mrf.mxu0
    %v2622 = vadd.f32 0.0, %v2621
    %2623 = vdwg.mxu0
    %v2624 = vmul.f32 %v2491, %v665
    %v2625 = vmul.f32 %v2492, %v666
    %v2626 = vmul.f32 %v2491, %v667
    %v2627 = vmul.f32 %v2492, %v668
    %v2628 = vmul.f32 %v2491, %v669
    %v2629 = vmul.f32 %v2492, %v670
    %v2630 = vmul.f32 %v2491, %v671
    %v2631 = vmul.f32 %v2492, %v672
    %v2632 = vmul.f32 %v2491, %v673
    %v2633 = vmul.f32 %v2492, %v674
    %v2634 = vmul.f32 %v2491, %v675
    %v2635 = vmul.f32 %v2492, %v676
    %v2636 = vmul.f32 %v2491, %v677
    %v2637 = vmul.f32 %v2492, %v678
    %v2638 = vmul.f32 %v2491, %v679
    %v2639 = vmul.f32 %v2492, %v680
    %v2641 = vsel %vm321, %v2577, 0
    %v2644 = vsel %vm321, %v2580, 0
    %v2647 = vsel %vm321, %v2583, 0
    %v2650 = vsel %vm321, %v2586, 0
    %v2653 = vsel %vm321, %v2589, 0
    %v2656 = vsel %vm321, %v2592, 0
    %v2659 = vsel %vm321, %v2595, 0
    %v2662 = vsel %vm321, %v2598, 0
    %v2665 = vsel %vm321, %v2601, 0
    %v2668 = vsel %vm321, %v2604, 0
    %v2671 = vsel %vm321, %v2607, 0
    %v2674 = vsel %vm321, %v2610, 0
    %v2677 = vsel %vm321, %v2613, 0
    %v2680 = vsel %vm321, %v2616, 0
    %v2683 = vsel %vm321, %v2619, 0
    %v2686 = vsel %vm321, %v2622, 0
    %v2689 = vsel %vm321, %v2624, 0
    %v2692 = vsel %vm321, %v2625, 0
    %v2695 = vsel %vm321, %v2626, 0
    %v2698 = vsel %vm321, %v2627, 0
    %v2701 = vsel %vm321, %v2628, 0
    %v2704 = vsel %vm321, %v2629, 0
    %v2707 = vsel %vm321, %v2630, 0
    %v2710 = vsel %vm321, %v2631, 0
    %v2713 = vsel %vm321, %v2632, 0
    %v2716 = vsel %vm321, %v2633, 0
    %v2719 = vsel %vm321, %v2634, 0
    %v2722 = vsel %vm321, %v2635, 0
    %v2725 = vsel %vm321, %v2636, 0
    %v2728 = vsel %vm321, %v2637, 0
    %v2731 = vsel %vm321, %v2638, 0
    %v2734 = vsel %vm321, %v2639, 0
    %2736 = vmatpush.xpose.msra.mxu0 %v2734
    %2737 = vmatpush.xpose.msra.mxu0 %v2731
    %2738 = vmatpush.xpose.msra.mxu0 %v2728
    %2739 = vmatpush.xpose.msra.mxu0 %v2725
    %2740 = vmatpush.xpose.msra.mxu0 %v2722
    %2741 = vmatpush.xpose.msra.mxu0 %v2719
    %2742 = vmatpush.xpose.msra.mxu0 %v2716
    %2743 = vmatpush.xpose.msra.mxu0 %v2713
    %2744 = vmatpush.xpose.msra.mxu0 %v2710
    %2745 = vmatpush.xpose.msra.mxu0 %v2707
    %2746 = vmatpush.xpose.msra.mxu0 %v2704
    %2747 = vmatpush.xpose.msra.mxu0 %v2701
    %2748 = vmatpush.xpose.msra.mxu0 %v2698
    %2749 = vmatpush.xpose.msra.mxu0 %v2695
    %2750 = vmatpush.xpose.msra.mxu0 %v2692
    %2751 = vmatpush.xpose.msra.mxu0 %v2689
    %2752 = vmatmul.f32.gmra.mxu0 %v2641
    %v2753 = vpop.f32.mrf.mxu0
    %v2754 = vadd.f32 0.0, %v2753
    %2755 = vmatmul.f32.gmra.mxu0 %v2644
    %v2756 = vpop.f32.mrf.mxu0
    %v2757 = vadd.f32 0.0, %v2756
    %2758 = vmatmul.f32.gmra.mxu0 %v2647
    %v2759 = vpop.f32.mrf.mxu0
    %v2760 = vadd.f32 0.0, %v2759
    %2761 = vmatmul.f32.gmra.mxu0 %v2650
    %v2762 = vpop.f32.mrf.mxu0
    %v2763 = vadd.f32 0.0, %v2762
    %2764 = vmatmul.f32.gmra.mxu0 %v2653
    %v2765 = vpop.f32.mrf.mxu0
    %v2766 = vadd.f32 0.0, %v2765
    %2767 = vmatmul.f32.gmra.mxu0 %v2656
    %v2768 = vpop.f32.mrf.mxu0
    %v2769 = vadd.f32 0.0, %v2768
    %2770 = vmatmul.f32.gmra.mxu0 %v2659
    %v2771 = vpop.f32.mrf.mxu0
    %v2772 = vadd.f32 0.0, %v2771
    %2773 = vmatmul.f32.gmra.mxu0 %v2662
    %v2774 = vpop.f32.mrf.mxu0
    %v2775 = vadd.f32 0.0, %v2774
    %2776 = vmatmul.f32.gmra.mxu0 %v2665
    %v2777 = vpop.f32.mrf.mxu0
    %v2778 = vadd.f32 0.0, %v2777
    %2779 = vmatmul.f32.gmra.mxu0 %v2668
    %v2780 = vpop.f32.mrf.mxu0
    %v2781 = vadd.f32 0.0, %v2780
    %2782 = vmatmul.f32.gmra.mxu0 %v2671
    %v2783 = vpop.f32.mrf.mxu0
    %v2784 = vadd.f32 0.0, %v2783
    %2785 = vmatmul.f32.gmra.mxu0 %v2674
    %v2786 = vpop.f32.mrf.mxu0
    %v2787 = vadd.f32 0.0, %v2786
    %2788 = vmatmul.f32.gmra.mxu0 %v2677
    %v2789 = vpop.f32.mrf.mxu0
    %v2790 = vadd.f32 0.0, %v2789
    %2791 = vmatmul.f32.gmra.mxu0 %v2680
    %v2792 = vpop.f32.mrf.mxu0
    %v2793 = vadd.f32 0.0, %v2792
    %2794 = vmatmul.f32.gmra.mxu0 %v2683
    %v2795 = vpop.f32.mrf.mxu0
    %v2796 = vadd.f32 0.0, %v2795
    %2797 = vmatmul.f32.gmra.mxu0 %v2686
    %v2798 = vpop.f32.mrf.mxu0
    %v2799 = vadd.f32 0.0, %v2798
    %2800 = vdwg.mxu0
    %2801 = vmax.xlane.f32.xlu0 %v2754
    %v2802 = vpop.xlane.xlu0 %2801
    %2803 = vmax.xlane.f32.xlu0 %v2757
    %v2804 = vpop.xlane.xlu0 %2803
    %2805 = vmax.xlane.f32.xlu0 %v2760
    %v2806 = vpop.xlane.xlu0 %2805
    %2807 = vmax.xlane.f32.xlu0 %v2763
    %v2808 = vpop.xlane.xlu0 %2807
    %2809 = vmax.xlane.f32.xlu0 %v2766
    %v2810 = vpop.xlane.xlu0 %2809
    %2811 = vmax.xlane.f32.xlu0 %v2769
    %v2812 = vpop.xlane.xlu0 %2811
    %2813 = vmax.xlane.f32.xlu0 %v2772
    %v2814 = vpop.xlane.xlu0 %2813
    %2815 = vmax.xlane.f32.xlu0 %v2775
    %v2816 = vpop.xlane.xlu0 %2815
    %2817 = vmax.xlane.f32.xlu0 %v2778
    %v2818 = vpop.xlane.xlu0 %2817
    %2819 = vmax.xlane.f32.xlu0 %v2781
    %v2820 = vpop.xlane.xlu0 %2819
    %2821 = vmax.xlane.f32.xlu0 %v2784
    %v2822 = vpop.xlane.xlu0 %2821
    %2823 = vmax.xlane.f32.xlu0 %v2787
    %v2824 = vpop.xlane.xlu0 %2823
    %2825 = vmax.xlane.f32.xlu0 %v2790
    %v2826 = vpop.xlane.xlu0 %2825
    %2827 = vmax.xlane.f32.xlu0 %v2793
    %v2828 = vpop.xlane.xlu0 %2827
    %2829 = vmax.xlane.f32.xlu0 %v2796
    %v2830 = vpop.xlane.xlu0 %2829
    %2831 = vmax.xlane.f32.xlu0 %v2799
    %v2832 = vpop.xlane.xlu0 %2831
    %v2833 = vsub.f32 %v2754, %v2802
    %v2834 = vsub.f32 %v2757, %v2804
    %v2835 = vsub.f32 %v2760, %v2806
    %v2836 = vsub.f32 %v2763, %v2808
    %v2837 = vsub.f32 %v2766, %v2810
    %v2838 = vsub.f32 %v2769, %v2812
    %v2839 = vsub.f32 %v2772, %v2814
    %v2840 = vsub.f32 %v2775, %v2816
    %v2841 = vsub.f32 %v2778, %v2818
    %v2842 = vsub.f32 %v2781, %v2820
    %v2843 = vsub.f32 %v2784, %v2822
    %v2844 = vsub.f32 %v2787, %v2824
    %v2845 = vsub.f32 %v2790, %v2826
    %v2846 = vsub.f32 %v2793, %v2828
    %v2847 = vsub.f32 %v2796, %v2830
    %v2848 = vsub.f32 %v2799, %v2832
    %v2849 = vmul.f32 %v2833, 1.442695
    %v2850 = vpow.pop %v2849
    %v2851 = vmul.f32 %v2834, 1.442695
    %v2852 = vpow.pop %v2851
    %v2853 = vmul.f32 %v2835, 1.442695
    %v2854 = vpow.pop %v2853
    %v2855 = vmul.f32 %v2836, 1.442695
    %v2856 = vpow.pop %v2855
    %v2857 = vmul.f32 %v2837, 1.442695
    %v2858 = vpow.pop %v2857
    %v2859 = vmul.f32 %v2838, 1.442695
    %v2860 = vpow.pop %v2859
    %v2861 = vmul.f32 %v2839, 1.442695
    %v2862 = vpow.pop %v2861
    %v2863 = vmul.f32 %v2840, 1.442695
    %v2864 = vpow.pop %v2863
    %v2865 = vmul.f32 %v2841, 1.442695
    %v2866 = vpow.pop %v2865
    %v2867 = vmul.f32 %v2842, 1.442695
    %v2868 = vpow.pop %v2867
    %v2869 = vmul.f32 %v2843, 1.442695
    %v2870 = vpow.pop %v2869
    %v2871 = vmul.f32 %v2844, 1.442695
    %v2872 = vpow.pop %v2871
    %v2873 = vmul.f32 %v2845, 1.442695
    %v2874 = vpow.pop %v2873
    %v2875 = vmul.f32 %v2846, 1.442695
    %v2876 = vpow.pop %v2875
    %v2877 = vmul.f32 %v2847, 1.442695
    %v2878 = vpow.pop %v2877
    %v2879 = vmul.f32 %v2848, 1.442695
    %v2880 = vpow.pop %v2879
    %2881 = vadd.xlane.f32.xlu0 %v2850
    %v2882 = vpop.xlane.xlu0 %2881
    %2883 = vadd.xlane.f32.xlu0 %v2852
    %v2884 = vpop.xlane.xlu0 %2883
    %2885 = vadd.xlane.f32.xlu0 %v2854
    %v2886 = vpop.xlane.xlu0 %2885
    %2887 = vadd.xlane.f32.xlu0 %v2856
    %v2888 = vpop.xlane.xlu0 %2887
    %2889 = vadd.xlane.f32.xlu0 %v2858
    %v2890 = vpop.xlane.xlu0 %2889
    %2891 = vadd.xlane.f32.xlu0 %v2860
    %v2892 = vpop.xlane.xlu0 %2891
    %2893 = vadd.xlane.f32.xlu0 %v2862
    %v2894 = vpop.xlane.xlu0 %2893
    %2895 = vadd.xlane.f32.xlu0 %v2864
    %v2896 = vpop.xlane.xlu0 %2895
    %2897 = vadd.xlane.f32.xlu0 %v2866
    %v2898 = vpop.xlane.xlu0 %2897
    %2899 = vadd.xlane.f32.xlu0 %v2868
    %v2900 = vpop.xlane.xlu0 %2899
    %2901 = vadd.xlane.f32.xlu0 %v2870
    %v2902 = vpop.xlane.xlu0 %2901
    %2903 = vadd.xlane.f32.xlu0 %v2872
    %v2904 = vpop.xlane.xlu0 %2903
    %2905 = vadd.xlane.f32.xlu0 %v2874
    %v2906 = vpop.xlane.xlu0 %2905
    %2907 = vadd.xlane.f32.xlu0 %v2876
    %v2908 = vpop.xlane.xlu0 %2907
    %2909 = vadd.xlane.f32.xlu0 %v2878
    %v2910 = vpop.xlane.xlu0 %2909
    %2911 = vadd.xlane.f32.xlu0 %v2880
    %v2912 = vpop.xlane.xlu0 %2911
    %v2913 = vrcp.pop %v2882
    %v2914 = vmul.f32 %v2882, %v2913
    %v2915 = vsub.f32 1.0, %v2914
    %v2916 = vmul.f32 %v2913, %v2915
    %v2917 = vadd.f32 %v2913, %v2916
    %vm2918 = vweird.f32 %v2882
    %vm2919 = vweird.f32 %v2913
    %vm2920 = vmor %vm2918, %vm2919
    %v2921 = vsel %vm2920, %v2913, %v2917
    %v2922 = vand.u32 2147483647, %v2882
    %vm2923 = vcmp.eq.f32.partialorder %v2922, 8.507059e+37
    %v2924 = vand.u32 %v2882, 2147483648
    %v2925 = vor.u32 1.1754944e-38, %v2924
    %v2926 = vsel %vm2923, %v2925, %v2921
    %v2927 = vmul.f32 %v2850, %v2926
    %v2928 = vrcp.pop %v2884
    %v2929 = vmul.f32 %v2884, %v2928
    %v2930 = vsub.f32 1.0, %v2929
    %v2931 = vmul.f32 %v2928, %v2930
    %v2932 = vadd.f32 %v2928, %v2931
    %vm2933 = vweird.f32 %v2884
    %vm2934 = vweird.f32 %v2928
    %vm2935 = vmor %vm2933, %vm2934
    %v2936 = vsel %vm2935, %v2928, %v2932
    %v2937 = vand.u32 2147483647, %v2884
    %vm2938 = vcmp.eq.f32.partialorder %v2937, 8.507059e+37
    %v2939 = vand.u32 %v2884, 2147483648
    %v2940 = vor.u32 1.1754944e-38, %v2939
    %v2941 = vsel %vm2938, %v2940, %v2936
    %v2942 = vmul.f32 %v2852, %v2941
    %v2943 = vrcp.pop %v2886
    %v2944 = vmul.f32 %v2886, %v2943
    %v2945 = vsub.f32 1.0, %v2944
    %v2946 = vmul.f32 %v2943, %v2945
    %v2947 = vadd.f32 %v2943, %v2946
    %vm2948 = vweird.f32 %v2886
    %vm2949 = vweird.f32 %v2943
    %vm2950 = vmor %vm2948, %vm2949
    %v2951 = vsel %vm2950, %v2943, %v2947
    %v2952 = vand.u32 2147483647, %v2886
    %vm2953 = vcmp.eq.f32.partialorder %v2952, 8.507059e+37
    %v2954 = vand.u32 %v2886, 2147483648
    %v2955 = vor.u32 1.1754944e-38, %v2954
    %v2956 = vsel %vm2953, %v2955, %v2951
    %v2957 = vmul.f32 %v2854, %v2956
    %v2958 = vrcp.pop %v2888
    %v2959 = vmul.f32 %v2888, %v2958
    %v2960 = vsub.f32 1.0, %v2959
    %v2961 = vmul.f32 %v2958, %v2960
    %v2962 = vadd.f32 %v2958, %v2961
    %vm2963 = vweird.f32 %v2888
    %vm2964 = vweird.f32 %v2958
    %vm2965 = vmor %vm2963, %vm2964
    %v2966 = vsel %vm2965, %v2958, %v2962
    %v2967 = vand.u32 2147483647, %v2888
    %vm2968 = vcmp.eq.f32.partialorder %v2967, 8.507059e+37
    %v2969 = vand.u32 %v2888, 2147483648
    %v2970 = vor.u32 1.1754944e-38, %v2969
    %v2971 = vsel %vm2968, %v2970, %v2966
    %v2972 = vmul.f32 %v2856, %v2971
    %v2973 = vrcp.pop %v2890
    %v2974 = vmul.f32 %v2890, %v2973
    %v2975 = vsub.f32 1.0, %v2974
    %v2976 = vmul.f32 %v2973, %v2975
    %v2977 = vadd.f32 %v2973, %v2976
    %vm2978 = vweird.f32 %v2890
    %vm2979 = vweird.f32 %v2973
    %vm2980 = vmor %vm2978, %vm2979
    %v2981 = vsel %vm2980, %v2973, %v2977
    %v2982 = vand.u32 2147483647, %v2890
    %vm2983 = vcmp.eq.f32.partialorder %v2982, 8.507059e+37
    %v2984 = vand.u32 %v2890, 2147483648
    %v2985 = vor.u32 1.1754944e-38, %v2984
    %v2986 = vsel %vm2983, %v2985, %v2981
    %v2987 = vmul.f32 %v2858, %v2986
    %v2988 = vrcp.pop %v2892
    %v2989 = vmul.f32 %v2892, %v2988
    %v2990 = vsub.f32 1.0, %v2989
    %v2991 = vmul.f32 %v2988, %v2990
    %v2992 = vadd.f32 %v2988, %v2991
    %vm2993 = vweird.f32 %v2892
    %vm2994 = vweird.f32 %v2988
    %vm2995 = vmor %vm2993, %vm2994
    %v2996 = vsel %vm2995, %v2988, %v2992
    %v2997 = vand.u32 2147483647, %v2892
    %vm2998 = vcmp.eq.f32.partialorder %v2997, 8.507059e+37
    %v2999 = vand.u32 %v2892, 2147483648
    %v3000 = vor.u32 1.1754944e-38, %v2999
    %v3001 = vsel %vm2998, %v3000, %v2996
    %v3002 = vmul.f32 %v2860, %v3001
    %v3003 = vrcp.pop %v2894
    %v3004 = vmul.f32 %v2894, %v3003
    %v3005 = vsub.f32 1.0, %v3004
    %v3006 = vmul.f32 %v3003, %v3005
    %v3007 = vadd.f32 %v3003, %v3006
    %vm3008 = vweird.f32 %v2894
    %vm3009 = vweird.f32 %v3003
    %vm3010 = vmor %vm3008, %vm3009
    %v3011 = vsel %vm3010, %v3003, %v3007
    %v3012 = vand.u32 2147483647, %v2894
    %vm3013 = vcmp.eq.f32.partialorder %v3012, 8.507059e+37
    %v3014 = vand.u32 %v2894, 2147483648
    %v3015 = vor.u32 1.1754944e-38, %v3014
    %v3016 = vsel %vm3013, %v3015, %v3011
    %v3017 = vmul.f32 %v2862, %v3016
    %v3018 = vrcp.pop %v2896
    %v3019 = vmul.f32 %v2896, %v3018
    %v3020 = vsub.f32 1.0, %v3019
    %v3021 = vmul.f32 %v3018, %v3020
    %v3022 = vadd.f32 %v3018, %v3021
    %vm3023 = vweird.f32 %v2896
    %vm3024 = vweird.f32 %v3018
    %vm3025 = vmor %vm3023, %vm3024
    %v3026 = vsel %vm3025, %v3018, %v3022
    %v3027 = vand.u32 2147483647, %v2896
    %vm3028 = vcmp.eq.f32.partialorder %v3027, 8.507059e+37
    %v3029 = vand.u32 %v2896, 2147483648
    %v3030 = vor.u32 1.1754944e-38, %v3029
    %v3031 = vsel %vm3028, %v3030, %v3026
    %v3032 = vmul.f32 %v2864, %v3031
    %v3033 = vrcp.pop %v2898
    %v3034 = vmul.f32 %v2898, %v3033
    %v3035 = vsub.f32 1.0, %v3034
    %v3036 = vmul.f32 %v3033, %v3035
    %v3037 = vadd.f32 %v3033, %v3036
    %vm3038 = vweird.f32 %v2898
    %vm3039 = vweird.f32 %v3033
    %vm3040 = vmor %vm3038, %vm3039
    %v3041 = vsel %vm3040, %v3033, %v3037
    %v3042 = vand.u32 2147483647, %v2898
    %vm3043 = vcmp.eq.f32.partialorder %v3042, 8.507059e+37
    %v3044 = vand.u32 %v2898, 2147483648
    %v3045 = vor.u32 1.1754944e-38, %v3044
    %v3046 = vsel %vm3043, %v3045, %v3041
    %v3047 = vmul.f32 %v2866, %v3046
    %v3048 = vrcp.pop %v2900
    %v3049 = vmul.f32 %v2900, %v3048
    %v3050 = vsub.f32 1.0, %v3049
    %v3051 = vmul.f32 %v3048, %v3050
    %v3052 = vadd.f32 %v3048, %v3051
    %vm3053 = vweird.f32 %v2900
    %vm3054 = vweird.f32 %v3048
    %vm3055 = vmor %vm3053, %vm3054
    %v3056 = vsel %vm3055, %v3048, %v3052
    %v3057 = vand.u32 2147483647, %v2900
    %vm3058 = vcmp.eq.f32.partialorder %v3057, 8.507059e+37
    %v3059 = vand.u32 %v2900, 2147483648
    %v3060 = vor.u32 1.1754944e-38, %v3059
    %v3061 = vsel %vm3058, %v3060, %v3056
    %v3062 = vmul.f32 %v2868, %v3061
    %v3063 = vrcp.pop %v2902
    %v3064 = vmul.f32 %v2902, %v3063
    %v3065 = vsub.f32 1.0, %v3064
    %v3066 = vmul.f32 %v3063, %v3065
    %v3067 = vadd.f32 %v3063, %v3066
    %vm3068 = vweird.f32 %v2902
    %vm3069 = vweird.f32 %v3063
    %vm3070 = vmor %vm3068, %vm3069
    %v3071 = vsel %vm3070, %v3063, %v3067
    %v3072 = vand.u32 2147483647, %v2902
    %vm3073 = vcmp.eq.f32.partialorder %v3072, 8.507059e+37
    %v3074 = vand.u32 %v2902, 2147483648
    %v3075 = vor.u32 1.1754944e-38, %v3074
    %v3076 = vsel %vm3073, %v3075, %v3071
    %v3077 = vmul.f32 %v2870, %v3076
    %v3078 = vrcp.pop %v2904
    %v3079 = vmul.f32 %v2904, %v3078
    %v3080 = vsub.f32 1.0, %v3079
    %v3081 = vmul.f32 %v3078, %v3080
    %v3082 = vadd.f32 %v3078, %v3081
    %vm3083 = vweird.f32 %v2904
    %vm3084 = vweird.f32 %v3078
    %vm3085 = vmor %vm3083, %vm3084
    %v3086 = vsel %vm3085, %v3078, %v3082
    %v3087 = vand.u32 2147483647, %v2904
    %vm3088 = vcmp.eq.f32.partialorder %v3087, 8.507059e+37
    %v3089 = vand.u32 %v2904, 2147483648
    %v3090 = vor.u32 1.1754944e-38, %v3089
    %v3091 = vsel %vm3088, %v3090, %v3086
    %v3092 = vmul.f32 %v2872, %v3091
    %v3093 = vrcp.pop %v2906
    %v3094 = vmul.f32 %v2906, %v3093
    %v3095 = vsub.f32 1.0, %v3094
    %v3096 = vmul.f32 %v3093, %v3095
    %v3097 = vadd.f32 %v3093, %v3096
    %vm3098 = vweird.f32 %v2906
    %vm3099 = vweird.f32 %v3093
    %vm3100 = vmor %vm3098, %vm3099
    %v3101 = vsel %vm3100, %v3093, %v3097
    %v3102 = vand.u32 2147483647, %v2906
    %vm3103 = vcmp.eq.f32.partialorder %v3102, 8.507059e+37
    %v3104 = vand.u32 %v2906, 2147483648
    %v3105 = vor.u32 1.1754944e-38, %v3104
    %v3106 = vsel %vm3103, %v3105, %v3101
    %v3107 = vmul.f32 %v2874, %v3106
    %v3108 = vrcp.pop %v2908
    %v3109 = vmul.f32 %v2908, %v3108
    %v3110 = vsub.f32 1.0, %v3109
    %v3111 = vmul.f32 %v3108, %v3110
    %v3112 = vadd.f32 %v3108, %v3111
    %vm3113 = vweird.f32 %v2908
    %vm3114 = vweird.f32 %v3108
    %vm3115 = vmor %vm3113, %vm3114
    %v3116 = vsel %vm3115, %v3108, %v3112
    %v3117 = vand.u32 2147483647, %v2908
    %vm3118 = vcmp.eq.f32.partialorder %v3117, 8.507059e+37
    %v3119 = vand.u32 %v2908, 2147483648
    %v3120 = vor.u32 1.1754944e-38, %v3119
    %v3121 = vsel %vm3118, %v3120, %v3116
    %v3122 = vmul.f32 %v2876, %v3121
    %v3123 = vrcp.pop %v2910
    %v3124 = vmul.f32 %v2910, %v3123
    %v3125 = vsub.f32 1.0, %v3124
    %v3126 = vmul.f32 %v3123, %v3125
    %v3127 = vadd.f32 %v3123, %v3126
    %vm3128 = vweird.f32 %v2910
    %vm3129 = vweird.f32 %v3123
    %vm3130 = vmor %vm3128, %vm3129
    %v3131 = vsel %vm3130, %v3123, %v3127
    %v3132 = vand.u32 2147483647, %v2910
    %vm3133 = vcmp.eq.f32.partialorder %v3132, 8.507059e+37
    %v3134 = vand.u32 %v2910, 2147483648
    %v3135 = vor.u32 1.1754944e-38, %v3134
    %v3136 = vsel %vm3133, %v3135, %v3131
    %v3137 = vmul.f32 %v2878, %v3136
    %v3138 = vrcp.pop %v2912
    %v3139 = vmul.f32 %v2912, %v3138
    %v3140 = vsub.f32 1.0, %v3139
    %v3141 = vmul.f32 %v3138, %v3140
    %v3142 = vadd.f32 %v3138, %v3141
    %vm3143 = vweird.f32 %v2912
    %vm3144 = vweird.f32 %v3138
    %vm3145 = vmor %vm3143, %vm3144
    %v3146 = vsel %vm3145, %v3138, %v3142
    %v3147 = vand.u32 2147483647, %v2912
    %vm3148 = vcmp.eq.f32.partialorder %v3147, 8.507059e+37
    %v3149 = vand.u32 %v2912, 2147483648
    %v3150 = vor.u32 1.1754944e-38, %v3149
    %v3151 = vsel %vm3148, %v3150, %v3146
    %v3152 = vmul.f32 %v2880, %v3151
    %v3153 = vmul.f32 %v2493, %v665
    %v3154 = vmul.f32 %v2494, %v666
    %v3155 = vmul.f32 %v2493, %v667
    %v3156 = vmul.f32 %v2494, %v668
    %v3157 = vmul.f32 %v2493, %v669
    %v3158 = vmul.f32 %v2494, %v670
    %v3159 = vmul.f32 %v2493, %v671
    %v3160 = vmul.f32 %v2494, %v672
    %v3161 = vmul.f32 %v2493, %v673
    %v3162 = vmul.f32 %v2494, %v674
    %v3163 = vmul.f32 %v2493, %v675
    %v3164 = vmul.f32 %v2494, %v676
    %v3165 = vmul.f32 %v2493, %v677
    %v3166 = vmul.f32 %v2494, %v678
    %v3167 = vmul.f32 %v2493, %v679
    %v3168 = vmul.f32 %v2494, %v680
    %3169 = vmatpush.msra.mxu0 %v3168
    %3170 = vmatpush.msra.mxu0 %v3167
    %3171 = vmatpush.msra.mxu0 %v3166
    %3172 = vmatpush.msra.mxu0 %v3165
    %3173 = vmatpush.msra.mxu0 %v3164
    %3174 = vmatpush.msra.mxu0 %v3163
    %3175 = vmatpush.msra.mxu0 %v3162
    %3176 = vmatpush.msra.mxu0 %v3161
    %3177 = vmatpush.msra.mxu0 %v3160
    %3178 = vmatpush.msra.mxu0 %v3159
    %3179 = vmatpush.msra.mxu0 %v3158
    %3180 = vmatpush.msra.mxu0 %v3157
    %3181 = vmatpush.msra.mxu0 %v3156
    %3182 = vmatpush.msra.mxu0 %v3155
    %3183 = vmatpush.msra.mxu0 %v3154
    %3184 = vmatpush.msra.mxu0 %v3153
    %3185 = vmatmul.f32.gmra.mxu0 %v2927
    %v3186 = vpop.f32.mrf.mxu0
    %v3187 = vadd.f32 0.0, %v3186
    %3188 = vmatmul.f32.gmra.mxu0 %v2942
    %v3189 = vpop.f32.mrf.mxu0
    %v3190 = vadd.f32 0.0, %v3189
    %3191 = vmatmul.f32.gmra.mxu0 %v2957
    %v3192 = vpop.f32.mrf.mxu0
    %v3193 = vadd.f32 0.0, %v3192
    %3194 = vmatmul.f32.gmra.mxu0 %v2972
    %v3195 = vpop.f32.mrf.mxu0
    %v3196 = vadd.f32 0.0, %v3195
    %3197 = vmatmul.f32.gmra.mxu0 %v2987
    %v3198 = vpop.f32.mrf.mxu0
    %v3199 = vadd.f32 0.0, %v3198
    %3200 = vmatmul.f32.gmra.mxu0 %v3002
    %v3201 = vpop.f32.mrf.mxu0
    %v3202 = vadd.f32 0.0, %v3201
    %3203 = vmatmul.f32.gmra.mxu0 %v3017
    %v3204 = vpop.f32.mrf.mxu0
    %v3205 = vadd.f32 0.0, %v3204
    %3206 = vmatmul.f32.gmra.mxu0 %v3032
    %v3207 = vpop.f32.mrf.mxu0
    %v3208 = vadd.f32 0.0, %v3207
    %3209 = vmatmul.f32.gmra.mxu0 %v3047
    %v3210 = vpop.f32.mrf.mxu0
    %v3211 = vadd.f32 0.0, %v3210
    %3212 = vmatmul.f32.gmra.mxu0 %v3062
    %v3213 = vpop.f32.mrf.mxu0
    %v3214 = vadd.f32 0.0, %v3213
    %3215 = vmatmul.f32.gmra.mxu0 %v3077
    %v3216 = vpop.f32.mrf.mxu0
    %v3217 = vadd.f32 0.0, %v3216
    %3218 = vmatmul.f32.gmra.mxu0 %v3092
    %v3219 = vpop.f32.mrf.mxu0
    %v3220 = vadd.f32 0.0, %v3219
    %3221 = vmatmul.f32.gmra.mxu0 %v3107
    %v3222 = vpop.f32.mrf.mxu0
    %v3223 = vadd.f32 0.0, %v3222
    %3224 = vmatmul.f32.gmra.mxu0 %v3122
    %v3225 = vpop.f32.mrf.mxu0
    %v3226 = vadd.f32 0.0, %v3225
    %3227 = vmatmul.f32.gmra.mxu0 %v3137
    %v3228 = vpop.f32.mrf.mxu0
    %v3229 = vadd.f32 0.0, %v3228
    %3230 = vmatmul.f32.gmra.mxu0 %v3152
    %v3231 = vpop.f32.mrf.mxu0
    %v3232 = vadd.f32 0.0, %v3231
    %3233 = vdwg.mxu0
    %v3235 = vsel %vm321, %v3187, 0
    %v3238 = vsel %vm321, %v3190, 0
    %v3241 = vsel %vm321, %v3193, 0
    %v3244 = vsel %vm321, %v3196, 0
    %v3247 = vsel %vm321, %v3199, 0
    %v3250 = vsel %vm321, %v3202, 0
    %v3253 = vsel %vm321, %v3205, 0
    %v3256 = vsel %vm321, %v3208, 0
    %v3259 = vsel %vm321, %v3211, 0
    %v3262 = vsel %vm321, %v3214, 0
    %v3265 = vsel %vm321, %v3217, 0
    %v3268 = vsel %vm321, %v3220, 0
    %v3271 = vsel %vm321, %v3223, 0
    %v3274 = vsel %vm321, %v3226, 0
    %v3277 = vsel %vm321, %v3229, 0
    %v3280 = vsel %vm321, %v3232, 0
    %3282 = vmatpush.msra.mxu0 0.0
    %3283 = vmatpush.msra.mxu0 0.0
    %3284 = vmatpush.msra.mxu0 0.0
    %3285 = vmatpush.msra.mxu0 0.0
    %3286 = vmatpush.msra.mxu0 0.0
    %3287 = vmatpush.msra.mxu0 0.0
    %3288 = vmatpush.msra.mxu0 0.0
    %3289 = vmatpush.msra.mxu0 0.0
    %3290 = vmatpush.msra.mxu0 %v688
    %3291 = vmatpush.msra.mxu0 %v687
    %3292 = vmatpush.msra.mxu0 %v686
    %3293 = vmatpush.msra.mxu0 %v685
    %3294 = vmatpush.msra.mxu0 %v684
    %3295 = vmatpush.msra.mxu0 %v683
    %3296 = vmatpush.msra.mxu0 %v682
    %3297 = vmatpush.msra.mxu0 %v681
    %3298 = vmatmul.f32.gmra.mxu0 %v3235
    %v3299 = vpop.f32.mrf.mxu0
    %v3300 = vadd.f32 0.0, %v3299
    %3301 = vmatmul.f32.gmra.mxu0 %v3238
    %v3302 = vpop.f32.mrf.mxu0
    %v3303 = vadd.f32 0.0, %v3302
    %3304 = vmatmul.f32.gmra.mxu0 %v3241
    %v3305 = vpop.f32.mrf.mxu0
    %v3306 = vadd.f32 0.0, %v3305
    %3307 = vmatmul.f32.gmra.mxu0 %v3244
    %v3308 = vpop.f32.mrf.mxu0
    %v3309 = vadd.f32 0.0, %v3308
    %3310 = vmatmul.f32.gmra.mxu0 %v3247
    %v3311 = vpop.f32.mrf.mxu0
    %v3312 = vadd.f32 0.0, %v3311
    %3313 = vmatmul.f32.gmra.mxu0 %v3250
    %v3314 = vpop.f32.mrf.mxu0
    %v3315 = vadd.f32 0.0, %v3314
    %3316 = vmatmul.f32.gmra.mxu0 %v3253
    %v3317 = vpop.f32.mrf.mxu0
    %v3318 = vadd.f32 0.0, %v3317
    %3319 = vmatmul.f32.gmra.mxu0 %v3256
    %v3320 = vpop.f32.mrf.mxu0
    %v3321 = vadd.f32 0.0, %v3320
    %3322 = vmatmul.f32.gmra.mxu0 %v3259
    %v3323 = vpop.f32.mrf.mxu0
    %v3324 = vadd.f32 0.0, %v3323
    %3325 = vmatmul.f32.gmra.mxu0 %v3262
    %v3326 = vpop.f32.mrf.mxu0
    %v3327 = vadd.f32 0.0, %v3326
    %3328 = vmatmul.f32.gmra.mxu0 %v3265
    %v3329 = vpop.f32.mrf.mxu0
    %v3330 = vadd.f32 0.0, %v3329
    %3331 = vmatmul.f32.gmra.mxu0 %v3268
    %v3332 = vpop.f32.mrf.mxu0
    %v3333 = vadd.f32 0.0, %v3332
    %3334 = vmatmul.f32.gmra.mxu0 %v3271
    %v3335 = vpop.f32.mrf.mxu0
    %v3336 = vadd.f32 0.0, %v3335
    %3337 = vmatmul.f32.gmra.mxu0 %v3274
    %v3338 = vpop.f32.mrf.mxu0
    %v3339 = vadd.f32 0.0, %v3338
    %3340 = vmatmul.f32.gmra.mxu0 %v3277
    %v3341 = vpop.f32.mrf.mxu0
    %v3342 = vadd.f32 0.0, %v3341
    %3343 = vmatmul.f32.gmra.mxu0 %v3280
    %v3344 = vpop.f32.mrf.mxu0
    %v3345 = vadd.f32 0.0, %v3344
    %3346 = vdwg.mxu0
    %v3347 = vmul.f32 %v3300, %v665
    %v3348 = vmul.f32 %v3303, %v666
    %v3349 = vmul.f32 %v3306, %v667
    %v3350 = vmul.f32 %v3309, %v668
    %v3351 = vmul.f32 %v3312, %v669
    %v3352 = vmul.f32 %v3315, %v670
    %v3353 = vmul.f32 %v3318, %v671
    %v3354 = vmul.f32 %v3321, %v672
    %v3355 = vmul.f32 %v3324, %v673
    %v3356 = vmul.f32 %v3327, %v674
    %v3357 = vmul.f32 %v3330, %v675
    %v3358 = vmul.f32 %v3333, %v676
    %v3359 = vmul.f32 %v3336, %v677
    %v3360 = vmul.f32 %v3339, %v678
    %v3361 = vmul.f32 %v3342, %v679
    %v3362 = vmul.f32 %v3345, %v680
    %3363 = vmatpush.msra.mxu0 %v3362
    %3364 = vmatpush.msra.mxu0 %v3361
    %3365 = vmatpush.msra.mxu0 %v3360
    %3366 = vmatpush.msra.mxu0 %v3359
    %3367 = vmatpush.msra.mxu0 %v3358
    %3368 = vmatpush.msra.mxu0 %v3357
    %3369 = vmatpush.msra.mxu0 %v3356
    %3370 = vmatpush.msra.mxu0 %v3355
    %3371 = vmatpush.msra.mxu0 %v3354
    %3372 = vmatpush.msra.mxu0 %v3353
    %3373 = vmatpush.msra.mxu0 %v3352
    %3374 = vmatpush.msra.mxu0 %v3351
    %3375 = vmatpush.msra.mxu0 %v3350
    %3376 = vmatpush.msra.mxu0 %v3349
    %3377 = vmatpush.msra.mxu0 %v3348
    %3378 = vmatpush.msra.mxu0 %v3347
    %3379 = vmatmul.f32.gmra.mxu0 %v689
    %v3380 = vpop.f32.mrf.mxu0
    %v3381 = vadd.f32 0.0, %v3380
    %3382 = vmatmul.f32.gmra.mxu0 %v690
    %v3383 = vpop.f32.mrf.mxu0
    %v3384 = vadd.f32 0.0, %v3383
    %3385 = vdwg.mxu0
    %3386 = vst.msk [vmem:[#allocation6 + $0x20] sm:$0xff] %vm321, %v3381
    %3387 = vst.msk [vmem:[#allocation6 + $0x28] sm:$0xff] %vm321, %v3384
    %v3388 = vld [vmem:[#allocation3 + $0x30] sm:$0xff]
    %v3389 = vld [vmem:[#allocation3 + $0x38] sm:$0xff]
    %v3390 = vld [vmem:[#allocation4 + $0x30] sm:$0xff]
    %v3391 = vld [vmem:[#allocation4 + $0x38] sm:$0xff]
    %v3392 = vld [vmem:[#allocation5 + $0x30] sm:$0xff]
    %v3393 = vld [vmem:[#allocation5 + $0x38] sm:$0xff]
    %v3394 = vmul.f32 %v3388, %v665
    %v3395 = vmul.f32 %v3389, %v666
    %v3396 = vmul.f32 %v3388, %v667
    %v3397 = vmul.f32 %v3389, %v668
    %v3398 = vmul.f32 %v3388, %v669
    %v3399 = vmul.f32 %v3389, %v670
    %v3400 = vmul.f32 %v3388, %v671
    %v3401 = vmul.f32 %v3389, %v672
    %v3402 = vmul.f32 %v3388, %v673
    %v3403 = vmul.f32 %v3389, %v674
    %v3404 = vmul.f32 %v3388, %v675
    %v3405 = vmul.f32 %v3389, %v676
    %v3406 = vmul.f32 %v3388, %v677
    %v3407 = vmul.f32 %v3389, %v678
    %v3408 = vmul.f32 %v3388, %v679
    %v3409 = vmul.f32 %v3389, %v680
    %v3411 = vsel %vm321, %v3394, 0
    %v3414 = vsel %vm321, %v3395, 0
    %v3417 = vsel %vm321, %v3396, 0
    %v3420 = vsel %vm321, %v3397, 0
    %v3423 = vsel %vm321, %v3398, 0
    %v3426 = vsel %vm321, %v3399, 0
    %v3429 = vsel %vm321, %v3400, 0
    %v3432 = vsel %vm321, %v3401, 0
    %v3435 = vsel %vm321, %v3402, 0
    %v3438 = vsel %vm321, %v3403, 0
    %v3441 = vsel %vm321, %v3404, 0
    %v3444 = vsel %vm321, %v3405, 0
    %v3447 = vsel %vm321, %v3406, 0
    %v3450 = vsel %vm321, %v3407, 0
    %v3453 = vsel %vm321, %v3408, 0
    %v3456 = vsel %vm321, %v3409, 0
    %3458 = vmatpush.msra.mxu0 0.0
    %3459 = vmatpush.msra.mxu0 0.0
    %3460 = vmatpush.msra.mxu0 0.0
    %3461 = vmatpush.msra.mxu0 0.0
    %3462 = vmatpush.msra.mxu0 0.0
    %3463 = vmatpush.msra.mxu0 0.0
    %3464 = vmatpush.msra.mxu0 0.0
    %3465 = vmatpush.msra.mxu0 0.0
    %3466 = vmatpush.msra.mxu0 %v688
    %3467 = vmatpush.msra.mxu0 %v687
    %3468 = vmatpush.msra.mxu0 %v686
    %3469 = vmatpush.msra.mxu0 %v685
    %3470 = vmatpush.msra.mxu0 %v684
    %3471 = vmatpush.msra.mxu0 %v683
    %3472 = vmatpush.msra.mxu0 %v682
    %3473 = vmatpush.msra.mxu0 %v681
    %3474 = vmatmul.f32.gmra.mxu0 %v3411
    %v3475 = vpop.f32.mrf.mxu0
    %v3476 = vadd.f32 0.0, %v3475
    %3477 = vmatmul.f32.gmra.mxu0 %v3414
    %v3478 = vpop.f32.mrf.mxu0
    %v3479 = vadd.f32 0.0, %v3478
    %3480 = vmatmul.f32.gmra.mxu0 %v3417
    %v3481 = vpop.f32.mrf.mxu0
    %v3482 = vadd.f32 0.0, %v3481
    %3483 = vmatmul.f32.gmra.mxu0 %v3420
    %v3484 = vpop.f32.mrf.mxu0
    %v3485 = vadd.f32 0.0, %v3484
    %3486 = vmatmul.f32.gmra.mxu0 %v3423
    %v3487 = vpop.f32.mrf.mxu0
    %v3488 = vadd.f32 0.0, %v3487
    %3489 = vmatmul.f32.gmra.mxu0 %v3426
    %v3490 = vpop.f32.mrf.mxu0
    %v3491 = vadd.f32 0.0, %v3490
    %3492 = vmatmul.f32.gmra.mxu0 %v3429
    %v3493 = vpop.f32.mrf.mxu0
    %v3494 = vadd.f32 0.0, %v3493
    %3495 = vmatmul.f32.gmra.mxu0 %v3432
    %v3496 = vpop.f32.mrf.mxu0
    %v3497 = vadd.f32 0.0, %v3496
    %3498 = vmatmul.f32.gmra.mxu0 %v3435
    %v3499 = vpop.f32.mrf.mxu0
    %v3500 = vadd.f32 0.0, %v3499
    %3501 = vmatmul.f32.gmra.mxu0 %v3438
    %v3502 = vpop.f32.mrf.mxu0
    %v3503 = vadd.f32 0.0, %v3502
    %3504 = vmatmul.f32.gmra.mxu0 %v3441
    %v3505 = vpop.f32.mrf.mxu0
    %v3506 = vadd.f32 0.0, %v3505
    %3507 = vmatmul.f32.gmra.mxu0 %v3444
    %v3508 = vpop.f32.mrf.mxu0
    %v3509 = vadd.f32 0.0, %v3508
    %3510 = vmatmul.f32.gmra.mxu0 %v3447
    %v3511 = vpop.f32.mrf.mxu0
    %v3512 = vadd.f32 0.0, %v3511
    %3513 = vmatmul.f32.gmra.mxu0 %v3450
    %v3514 = vpop.f32.mrf.mxu0
    %v3515 = vadd.f32 0.0, %v3514
    %3516 = vmatmul.f32.gmra.mxu0 %v3453
    %v3517 = vpop.f32.mrf.mxu0
    %v3518 = vadd.f32 0.0, %v3517
    %3519 = vmatmul.f32.gmra.mxu0 %v3456
    %v3520 = vpop.f32.mrf.mxu0
    %v3521 = vadd.f32 0.0, %v3520
    %3522 = vdwg.mxu0
    %v3523 = vmul.f32 %v3390, %v665
    %v3524 = vmul.f32 %v3391, %v666
    %v3525 = vmul.f32 %v3390, %v667
    %v3526 = vmul.f32 %v3391, %v668
    %v3527 = vmul.f32 %v3390, %v669
    %v3528 = vmul.f32 %v3391, %v670
    %v3529 = vmul.f32 %v3390, %v671
    %v3530 = vmul.f32 %v3391, %v672
    %v3531 = vmul.f32 %v3390, %v673
    %v3532 = vmul.f32 %v3391, %v674
    %v3533 = vmul.f32 %v3390, %v675
    %v3534 = vmul.f32 %v3391, %v676
    %v3535 = vmul.f32 %v3390, %v677
    %v3536 = vmul.f32 %v3391, %v678
    %v3537 = vmul.f32 %v3390, %v679
    %v3538 = vmul.f32 %v3391, %v680
    %v3540 = vsel %vm321, %v3476, 0
    %v3543 = vsel %vm321, %v3479, 0
    %v3546 = vsel %vm321, %v3482, 0
    %v3549 = vsel %vm321, %v3485, 0
    %v3552 = vsel %vm321, %v3488, 0
    %v3555 = vsel %vm321, %v3491, 0
    %v3558 = vsel %vm321, %v3494, 0
    %v3561 = vsel %vm321, %v3497, 0
    %v3564 = vsel %vm321, %v3500, 0
    %v3567 = vsel %vm321, %v3503, 0
    %v3570 = vsel %vm321, %v3506, 0
    %v3573 = vsel %vm321, %v3509, 0
    %v3576 = vsel %vm321, %v3512, 0
    %v3579 = vsel %vm321, %v3515, 0
    %v3582 = vsel %vm321, %v3518, 0
    %v3585 = vsel %vm321, %v3521, 0
    %v3588 = vsel %vm321, %v3523, 0
    %v3591 = vsel %vm321, %v3524, 0
    %v3594 = vsel %vm321, %v3525, 0
    %v3597 = vsel %vm321, %v3526, 0
    %v3600 = vsel %vm321, %v3527, 0
    %v3603 = vsel %vm321, %v3528, 0
    %v3606 = vsel %vm321, %v3529, 0
    %v3609 = vsel %vm321, %v3530, 0
    %v3612 = vsel %vm321, %v3531, 0
    %v3615 = vsel %vm321, %v3532, 0
    %v3618 = vsel %vm321, %v3533, 0
    %v3621 = vsel %vm321, %v3534, 0
    %v3624 = vsel %vm321, %v3535, 0
    %v3627 = vsel %vm321, %v3536, 0
    %v3630 = vsel %vm321, %v3537, 0
    %v3633 = vsel %vm321, %v3538, 0
    %3635 = vmatpush.xpose.msra.mxu0 %v3633
    %3636 = vmatpush.xpose.msra.mxu0 %v3630
    %3637 = vmatpush.xpose.msra.mxu0 %v3627
    %3638 = vmatpush.xpose.msra.mxu0 %v3624
    %3639 = vmatpush.xpose.msra.mxu0 %v3621
    %3640 = vmatpush.xpose.msra.mxu0 %v3618
    %3641 = vmatpush.xpose.msra.mxu0 %v3615
    %3642 = vmatpush.xpose.msra.mxu0 %v3612
    %3643 = vmatpush.xpose.msra.mxu0 %v3609
    %3644 = vmatpush.xpose.msra.mxu0 %v3606
    %3645 = vmatpush.xpose.msra.mxu0 %v3603
    %3646 = vmatpush.xpose.msra.mxu0 %v3600
    %3647 = vmatpush.xpose.msra.mxu0 %v3597
    %3648 = vmatpush.xpose.msra.mxu0 %v3594
    %3649 = vmatpush.xpose.msra.mxu0 %v3591
    %3650 = vmatpush.xpose.msra.mxu0 %v3588
    %3651 = vmatmul.f32.gmra.mxu0 %v3540
    %v3652 = vpop.f32.mrf.mxu0
    %v3653 = vadd.f32 0.0, %v3652
    %3654 = vmatmul.f32.gmra.mxu0 %v3543
    %v3655 = vpop.f32.mrf.mxu0
    %v3656 = vadd.f32 0.0, %v3655
    %3657 = vmatmul.f32.gmra.mxu0 %v3546
    %v3658 = vpop.f32.mrf.mxu0
    %v3659 = vadd.f32 0.0, %v3658
    %3660 = vmatmul.f32.gmra.mxu0 %v3549
    %v3661 = vpop.f32.mrf.mxu0
    %v3662 = vadd.f32 0.0, %v3661
    %3663 = vmatmul.f32.gmra.mxu0 %v3552
    %v3664 = vpop.f32.mrf.mxu0
    %v3665 = vadd.f32 0.0, %v3664
    %3666 = vmatmul.f32.gmra.mxu0 %v3555
    %v3667 = vpop.f32.mrf.mxu0
    %v3668 = vadd.f32 0.0, %v3667
    %3669 = vmatmul.f32.gmra.mxu0 %v3558
    %v3670 = vpop.f32.mrf.mxu0
    %v3671 = vadd.f32 0.0, %v3670
    %3672 = vmatmul.f32.gmra.mxu0 %v3561
    %v3673 = vpop.f32.mrf.mxu0
    %v3674 = vadd.f32 0.0, %v3673
    %3675 = vmatmul.f32.gmra.mxu0 %v3564
    %v3676 = vpop.f32.mrf.mxu0
    %v3677 = vadd.f32 0.0, %v3676
    %3678 = vmatmul.f32.gmra.mxu0 %v3567
    %v3679 = vpop.f32.mrf.mxu0
    %v3680 = vadd.f32 0.0, %v3679
    %3681 = vmatmul.f32.gmra.mxu0 %v3570
    %v3682 = vpop.f32.mrf.mxu0
    %v3683 = vadd.f32 0.0, %v3682
    %3684 = vmatmul.f32.gmra.mxu0 %v3573
    %v3685 = vpop.f32.mrf.mxu0
    %v3686 = vadd.f32 0.0, %v3685
    %3687 = vmatmul.f32.gmra.mxu0 %v3576
    %v3688 = vpop.f32.mrf.mxu0
    %v3689 = vadd.f32 0.0, %v3688
    %3690 = vmatmul.f32.gmra.mxu0 %v3579
    %v3691 = vpop.f32.mrf.mxu0
    %v3692 = vadd.f32 0.0, %v3691
    %3693 = vmatmul.f32.gmra.mxu0 %v3582
    %v3694 = vpop.f32.mrf.mxu0
    %v3695 = vadd.f32 0.0, %v3694
    %3696 = vmatmul.f32.gmra.mxu0 %v3585
    %v3697 = vpop.f32.mrf.mxu0
    %v3698 = vadd.f32 0.0, %v3697
    %3699 = vdwg.mxu0
    %3700 = vmax.xlane.f32.xlu0 %v3653
    %v3701 = vpop.xlane.xlu0 %3700
    %3702 = vmax.xlane.f32.xlu0 %v3656
    %v3703 = vpop.xlane.xlu0 %3702
    %3704 = vmax.xlane.f32.xlu0 %v3659
    %v3705 = vpop.xlane.xlu0 %3704
    %3706 = vmax.xlane.f32.xlu0 %v3662
    %v3707 = vpop.xlane.xlu0 %3706
    %3708 = vmax.xlane.f32.xlu0 %v3665
    %v3709 = vpop.xlane.xlu0 %3708
    %3710 = vmax.xlane.f32.xlu0 %v3668
    %v3711 = vpop.xlane.xlu0 %3710
    %3712 = vmax.xlane.f32.xlu0 %v3671
    %v3713 = vpop.xlane.xlu0 %3712
    %3714 = vmax.xlane.f32.xlu0 %v3674
    %v3715 = vpop.xlane.xlu0 %3714
    %3716 = vmax.xlane.f32.xlu0 %v3677
    %v3717 = vpop.xlane.xlu0 %3716
    %3718 = vmax.xlane.f32.xlu0 %v3680
    %v3719 = vpop.xlane.xlu0 %3718
    %3720 = vmax.xlane.f32.xlu0 %v3683
    %v3721 = vpop.xlane.xlu0 %3720
    %3722 = vmax.xlane.f32.xlu0 %v3686
    %v3723 = vpop.xlane.xlu0 %3722
    %3724 = vmax.xlane.f32.xlu0 %v3689
    %v3725 = vpop.xlane.xlu0 %3724
    %3726 = vmax.xlane.f32.xlu0 %v3692
    %v3727 = vpop.xlane.xlu0 %3726
    %3728 = vmax.xlane.f32.xlu0 %v3695
    %v3729 = vpop.xlane.xlu0 %3728
    %3730 = vmax.xlane.f32.xlu0 %v3698
    %v3731 = vpop.xlane.xlu0 %3730
    %v3732 = vsub.f32 %v3653, %v3701
    %v3733 = vsub.f32 %v3656, %v3703
    %v3734 = vsub.f32 %v3659, %v3705
    %v3735 = vsub.f32 %v3662, %v3707
    %v3736 = vsub.f32 %v3665, %v3709
    %v3737 = vsub.f32 %v3668, %v3711
    %v3738 = vsub.f32 %v3671, %v3713
    %v3739 = vsub.f32 %v3674, %v3715
    %v3740 = vsub.f32 %v3677, %v3717
    %v3741 = vsub.f32 %v3680, %v3719
    %v3742 = vsub.f32 %v3683, %v3721
    %v3743 = vsub.f32 %v3686, %v3723
    %v3744 = vsub.f32 %v3689, %v3725
    %v3745 = vsub.f32 %v3692, %v3727
    %v3746 = vsub.f32 %v3695, %v3729
    %v3747 = vsub.f32 %v3698, %v3731
    %v3748 = vmul.f32 %v3732, 1.442695
    %v3749 = vpow.pop %v3748
    %v3750 = vmul.f32 %v3733, 1.442695
    %v3751 = vpow.pop %v3750
    %v3752 = vmul.f32 %v3734, 1.442695
    %v3753 = vpow.pop %v3752
    %v3754 = vmul.f32 %v3735, 1.442695
    %v3755 = vpow.pop %v3754
    %v3756 = vmul.f32 %v3736, 1.442695
    %v3757 = vpow.pop %v3756
    %v3758 = vmul.f32 %v3737, 1.442695
    %v3759 = vpow.pop %v3758
    %v3760 = vmul.f32 %v3738, 1.442695
    %v3761 = vpow.pop %v3760
    %v3762 = vmul.f32 %v3739, 1.442695
    %v3763 = vpow.pop %v3762
    %v3764 = vmul.f32 %v3740, 1.442695
    %v3765 = vpow.pop %v3764
    %v3766 = vmul.f32 %v3741, 1.442695
    %v3767 = vpow.pop %v3766
    %v3768 = vmul.f32 %v3742, 1.442695
    %v3769 = vpow.pop %v3768
    %v3770 = vmul.f32 %v3743, 1.442695
    %v3771 = vpow.pop %v3770
    %v3772 = vmul.f32 %v3744, 1.442695
    %v3773 = vpow.pop %v3772
    %v3774 = vmul.f32 %v3745, 1.442695
    %v3775 = vpow.pop %v3774
    %v3776 = vmul.f32 %v3746, 1.442695
    %v3777 = vpow.pop %v3776
    %v3778 = vmul.f32 %v3747, 1.442695
    %v3779 = vpow.pop %v3778
    %3780 = vadd.xlane.f32.xlu0 %v3749
    %v3781 = vpop.xlane.xlu0 %3780
    %3782 = vadd.xlane.f32.xlu0 %v3751
    %v3783 = vpop.xlane.xlu0 %3782
    %3784 = vadd.xlane.f32.xlu0 %v3753
    %v3785 = vpop.xlane.xlu0 %3784
    %3786 = vadd.xlane.f32.xlu0 %v3755
    %v3787 = vpop.xlane.xlu0 %3786
    %3788 = vadd.xlane.f32.xlu0 %v3757
    %v3789 = vpop.xlane.xlu0 %3788
    %3790 = vadd.xlane.f32.xlu0 %v3759
    %v3791 = vpop.xlane.xlu0 %3790
    %3792 = vadd.xlane.f32.xlu0 %v3761
    %v3793 = vpop.xlane.xlu0 %3792
    %3794 = vadd.xlane.f32.xlu0 %v3763
    %v3795 = vpop.xlane.xlu0 %3794
    %3796 = vadd.xlane.f32.xlu0 %v3765
    %v3797 = vpop.xlane.xlu0 %3796
    %3798 = vadd.xlane.f32.xlu0 %v3767
    %v3799 = vpop.xlane.xlu0 %3798
    %3800 = vadd.xlane.f32.xlu0 %v3769
    %v3801 = vpop.xlane.xlu0 %3800
    %3802 = vadd.xlane.f32.xlu0 %v3771
    %v3803 = vpop.xlane.xlu0 %3802
    %3804 = vadd.xlane.f32.xlu0 %v3773
    %v3805 = vpop.xlane.xlu0 %3804
    %3806 = vadd.xlane.f32.xlu0 %v3775
    %v3807 = vpop.xlane.xlu0 %3806
    %3808 = vadd.xlane.f32.xlu0 %v3777
    %v3809 = vpop.xlane.xlu0 %3808
    %3810 = vadd.xlane.f32.xlu0 %v3779
    %v3811 = vpop.xlane.xlu0 %3810
    %v3812 = vrcp.pop %v3781
    %v3813 = vmul.f32 %v3781, %v3812
    %v3814 = vsub.f32 1.0, %v3813
    %v3815 = vmul.f32 %v3812, %v3814
    %v3816 = vadd.f32 %v3812, %v3815
    %vm3817 = vweird.f32 %v3781
    %vm3818 = vweird.f32 %v3812
    %vm3819 = vmor %vm3817, %vm3818
    %v3820 = vsel %vm3819, %v3812, %v3816
    %v3821 = vand.u32 2147483647, %v3781
    %vm3822 = vcmp.eq.f32.partialorder %v3821, 8.507059e+37
    %v3823 = vand.u32 %v3781, 2147483648
    %v3824 = vor.u32 1.1754944e-38, %v3823
    %v3825 = vsel %vm3822, %v3824, %v3820
    %v3826 = vmul.f32 %v3749, %v3825
    %v3827 = vrcp.pop %v3783
    %v3828 = vmul.f32 %v3783, %v3827
    %v3829 = vsub.f32 1.0, %v3828
    %v3830 = vmul.f32 %v3827, %v3829
    %v3831 = vadd.f32 %v3827, %v3830
    %vm3832 = vweird.f32 %v3783
    %vm3833 = vweird.f32 %v3827
    %vm3834 = vmor %vm3832, %vm3833
    %v3835 = vsel %vm3834, %v3827, %v3831
    %v3836 = vand.u32 2147483647, %v3783
    %vm3837 = vcmp.eq.f32.partialorder %v3836, 8.507059e+37
    %v3838 = vand.u32 %v3783, 2147483648
    %v3839 = vor.u32 1.1754944e-38, %v3838
    %v3840 = vsel %vm3837, %v3839, %v3835
    %v3841 = vmul.f32 %v3751, %v3840
    %v3842 = vrcp.pop %v3785
    %v3843 = vmul.f32 %v3785, %v3842
    %v3844 = vsub.f32 1.0, %v3843
    %v3845 = vmul.f32 %v3842, %v3844
    %v3846 = vadd.f32 %v3842, %v3845
    %vm3847 = vweird.f32 %v3785
    %vm3848 = vweird.f32 %v3842
    %vm3849 = vmor %vm3847, %vm3848
    %v3850 = vsel %vm3849, %v3842, %v3846
    %v3851 = vand.u32 2147483647, %v3785
    %vm3852 = vcmp.eq.f32.partialorder %v3851, 8.507059e+37
    %v3853 = vand.u32 %v3785, 2147483648
    %v3854 = vor.u32 1.1754944e-38, %v3853
    %v3855 = vsel %vm3852, %v3854, %v3850
    %v3856 = vmul.f32 %v3753, %v3855
    %v3857 = vrcp.pop %v3787
    %v3858 = vmul.f32 %v3787, %v3857
    %v3859 = vsub.f32 1.0, %v3858
    %v3860 = vmul.f32 %v3857, %v3859
    %v3861 = vadd.f32 %v3857, %v3860
    %vm3862 = vweird.f32 %v3787
    %vm3863 = vweird.f32 %v3857
    %vm3864 = vmor %vm3862, %vm3863
    %v3865 = vsel %vm3864, %v3857, %v3861
    %v3866 = vand.u32 2147483647, %v3787
    %vm3867 = vcmp.eq.f32.partialorder %v3866, 8.507059e+37
    %v3868 = vand.u32 %v3787, 2147483648
    %v3869 = vor.u32 1.1754944e-38, %v3868
    %v3870 = vsel %vm3867, %v3869, %v3865
    %v3871 = vmul.f32 %v3755, %v3870
    %v3872 = vrcp.pop %v3789
    %v3873 = vmul.f32 %v3789, %v3872
    %v3874 = vsub.f32 1.0, %v3873
    %v3875 = vmul.f32 %v3872, %v3874
    %v3876 = vadd.f32 %v3872, %v3875
    %vm3877 = vweird.f32 %v3789
    %vm3878 = vweird.f32 %v3872
    %vm3879 = vmor %vm3877, %vm3878
    %v3880 = vsel %vm3879, %v3872, %v3876
    %v3881 = vand.u32 2147483647, %v3789
    %vm3882 = vcmp.eq.f32.partialorder %v3881, 8.507059e+37
    %v3883 = vand.u32 %v3789, 2147483648
    %v3884 = vor.u32 1.1754944e-38, %v3883
    %v3885 = vsel %vm3882, %v3884, %v3880
    %v3886 = vmul.f32 %v3757, %v3885
    %v3887 = vrcp.pop %v3791
    %v3888 = vmul.f32 %v3791, %v3887
    %v3889 = vsub.f32 1.0, %v3888
    %v3890 = vmul.f32 %v3887, %v3889
    %v3891 = vadd.f32 %v3887, %v3890
    %vm3892 = vweird.f32 %v3791
    %vm3893 = vweird.f32 %v3887
    %vm3894 = vmor %vm3892, %vm3893
    %v3895 = vsel %vm3894, %v3887, %v3891
    %v3896 = vand.u32 2147483647, %v3791
    %vm3897 = vcmp.eq.f32.partialorder %v3896, 8.507059e+37
    %v3898 = vand.u32 %v3791, 2147483648
    %v3899 = vor.u32 1.1754944e-38, %v3898
    %v3900 = vsel %vm3897, %v3899, %v3895
    %v3901 = vmul.f32 %v3759, %v3900
    %v3902 = vrcp.pop %v3793
    %v3903 = vmul.f32 %v3793, %v3902
    %v3904 = vsub.f32 1.0, %v3903
    %v3905 = vmul.f32 %v3902, %v3904
    %v3906 = vadd.f32 %v3902, %v3905
    %vm3907 = vweird.f32 %v3793
    %vm3908 = vweird.f32 %v3902
    %vm3909 = vmor %vm3907, %vm3908
    %v3910 = vsel %vm3909, %v3902, %v3906
    %v3911 = vand.u32 2147483647, %v3793
    %vm3912 = vcmp.eq.f32.partialorder %v3911, 8.507059e+37
    %v3913 = vand.u32 %v3793, 2147483648
    %v3914 = vor.u32 1.1754944e-38, %v3913
    %v3915 = vsel %vm3912, %v3914, %v3910
    %v3916 = vmul.f32 %v3761, %v3915
    %v3917 = vrcp.pop %v3795
    %v3918 = vmul.f32 %v3795, %v3917
    %v3919 = vsub.f32 1.0, %v3918
    %v3920 = vmul.f32 %v3917, %v3919
    %v3921 = vadd.f32 %v3917, %v3920
    %vm3922 = vweird.f32 %v3795
    %vm3923 = vweird.f32 %v3917
    %vm3924 = vmor %vm3922, %vm3923
    %v3925 = vsel %vm3924, %v3917, %v3921
    %v3926 = vand.u32 2147483647, %v3795
    %vm3927 = vcmp.eq.f32.partialorder %v3926, 8.507059e+37
    %v3928 = vand.u32 %v3795, 2147483648
    %v3929 = vor.u32 1.1754944e-38, %v3928
    %v3930 = vsel %vm3927, %v3929, %v3925
    %v3931 = vmul.f32 %v3763, %v3930
    %v3932 = vrcp.pop %v3797
    %v3933 = vmul.f32 %v3797, %v3932
    %v3934 = vsub.f32 1.0, %v3933
    %v3935 = vmul.f32 %v3932, %v3934
    %v3936 = vadd.f32 %v3932, %v3935
    %vm3937 = vweird.f32 %v3797
    %vm3938 = vweird.f32 %v3932
    %vm3939 = vmor %vm3937, %vm3938
    %v3940 = vsel %vm3939, %v3932, %v3936
    %v3941 = vand.u32 2147483647, %v3797
    %vm3942 = vcmp.eq.f32.partialorder %v3941, 8.507059e+37
    %v3943 = vand.u32 %v3797, 2147483648
    %v3944 = vor.u32 1.1754944e-38, %v3943
    %v3945 = vsel %vm3942, %v3944, %v3940
    %v3946 = vmul.f32 %v3765, %v3945
    %v3947 = vrcp.pop %v3799
    %v3948 = vmul.f32 %v3799, %v3947
    %v3949 = vsub.f32 1.0, %v3948
    %v3950 = vmul.f32 %v3947, %v3949
    %v3951 = vadd.f32 %v3947, %v3950
    %vm3952 = vweird.f32 %v3799
    %vm3953 = vweird.f32 %v3947
    %vm3954 = vmor %vm3952, %vm3953
    %v3955 = vsel %vm3954, %v3947, %v3951
    %v3956 = vand.u32 2147483647, %v3799
    %vm3957 = vcmp.eq.f32.partialorder %v3956, 8.507059e+37
    %v3958 = vand.u32 %v3799, 2147483648
    %v3959 = vor.u32 1.1754944e-38, %v3958
    %v3960 = vsel %vm3957, %v3959, %v3955
    %v3961 = vmul.f32 %v3767, %v3960
    %v3962 = vrcp.pop %v3801
    %v3963 = vmul.f32 %v3801, %v3962
    %v3964 = vsub.f32 1.0, %v3963
    %v3965 = vmul.f32 %v3962, %v3964
    %v3966 = vadd.f32 %v3962, %v3965
    %vm3967 = vweird.f32 %v3801
    %vm3968 = vweird.f32 %v3962
    %vm3969 = vmor %vm3967, %vm3968
    %v3970 = vsel %vm3969, %v3962, %v3966
    %v3971 = vand.u32 2147483647, %v3801
    %vm3972 = vcmp.eq.f32.partialorder %v3971, 8.507059e+37
    %v3973 = vand.u32 %v3801, 2147483648
    %v3974 = vor.u32 1.1754944e-38, %v3973
    %v3975 = vsel %vm3972, %v3974, %v3970
    %v3976 = vmul.f32 %v3769, %v3975
    %v3977 = vrcp.pop %v3803
    %v3978 = vmul.f32 %v3803, %v3977
    %v3979 = vsub.f32 1.0, %v3978
    %v3980 = vmul.f32 %v3977, %v3979
    %v3981 = vadd.f32 %v3977, %v3980
    %vm3982 = vweird.f32 %v3803
    %vm3983 = vweird.f32 %v3977
    %vm3984 = vmor %vm3982, %vm3983
    %v3985 = vsel %vm3984, %v3977, %v3981
    %v3986 = vand.u32 2147483647, %v3803
    %vm3987 = vcmp.eq.f32.partialorder %v3986, 8.507059e+37
    %v3988 = vand.u32 %v3803, 2147483648
    %v3989 = vor.u32 1.1754944e-38, %v3988
    %v3990 = vsel %vm3987, %v3989, %v3985
    %v3991 = vmul.f32 %v3771, %v3990
    %v3992 = vrcp.pop %v3805
    %v3993 = vmul.f32 %v3805, %v3992
    %v3994 = vsub.f32 1.0, %v3993
    %v3995 = vmul.f32 %v3992, %v3994
    %v3996 = vadd.f32 %v3992, %v3995
    %vm3997 = vweird.f32 %v3805
    %vm3998 = vweird.f32 %v3992
    %vm3999 = vmor %vm3997, %vm3998
    %v4000 = vsel %vm3999, %v3992, %v3996
    %v4001 = vand.u32 2147483647, %v3805
    %vm4002 = vcmp.eq.f32.partialorder %v4001, 8.507059e+37
    %v4003 = vand.u32 %v3805, 2147483648
    %v4004 = vor.u32 1.1754944e-38, %v4003
    %v4005 = vsel %vm4002, %v4004, %v4000
    %v4006 = vmul.f32 %v3773, %v4005
    %v4007 = vrcp.pop %v3807
    %v4008 = vmul.f32 %v3807, %v4007
    %v4009 = vsub.f32 1.0, %v4008
    %v4010 = vmul.f32 %v4007, %v4009
    %v4011 = vadd.f32 %v4007, %v4010
    %vm4012 = vweird.f32 %v3807
    %vm4013 = vweird.f32 %v4007
    %vm4014 = vmor %vm4012, %vm4013
    %v4015 = vsel %vm4014, %v4007, %v4011
    %v4016 = vand.u32 2147483647, %v3807
    %vm4017 = vcmp.eq.f32.partialorder %v4016, 8.507059e+37
    %v4018 = vand.u32 %v3807, 2147483648
    %v4019 = vor.u32 1.1754944e-38, %v4018
    %v4020 = vsel %vm4017, %v4019, %v4015
    %v4021 = vmul.f32 %v3775, %v4020
    %v4022 = vrcp.pop %v3809
    %v4023 = vmul.f32 %v3809, %v4022
    %v4024 = vsub.f32 1.0, %v4023
    %v4025 = vmul.f32 %v4022, %v4024
    %v4026 = vadd.f32 %v4022, %v4025
    %vm4027 = vweird.f32 %v3809
    %vm4028 = vweird.f32 %v4022
    %vm4029 = vmor %vm4027, %vm4028
    %v4030 = vsel %vm4029, %v4022, %v4026
    %v4031 = vand.u32 2147483647, %v3809
    %vm4032 = vcmp.eq.f32.partialorder %v4031, 8.507059e+37
    %v4033 = vand.u32 %v3809, 2147483648
    %v4034 = vor.u32 1.1754944e-38, %v4033
    %v4035 = vsel %vm4032, %v4034, %v4030
    %v4036 = vmul.f32 %v3777, %v4035
    %v4037 = vrcp.pop %v3811
    %v4038 = vmul.f32 %v3811, %v4037
    %v4039 = vsub.f32 1.0, %v4038
    %v4040 = vmul.f32 %v4037, %v4039
    %v4041 = vadd.f32 %v4037, %v4040
    %vm4042 = vweird.f32 %v3811
    %vm4043 = vweird.f32 %v4037
    %vm4044 = vmor %vm4042, %vm4043
    %v4045 = vsel %vm4044, %v4037, %v4041
    %v4046 = vand.u32 2147483647, %v3811
    %vm4047 = vcmp.eq.f32.partialorder %v4046, 8.507059e+37
    %v4048 = vand.u32 %v3811, 2147483648
    %v4049 = vor.u32 1.1754944e-38, %v4048
    %v4050 = vsel %vm4047, %v4049, %v4045
    %v4051 = vmul.f32 %v3779, %v4050
    %v4052 = vmul.f32 %v3392, %v665
    %v4053 = vmul.f32 %v3393, %v666
    %v4054 = vmul.f32 %v3392, %v667
    %v4055 = vmul.f32 %v3393, %v668
    %v4056 = vmul.f32 %v3392, %v669
    %v4057 = vmul.f32 %v3393, %v670
    %v4058 = vmul.f32 %v3392, %v671
    %v4059 = vmul.f32 %v3393, %v672
    %v4060 = vmul.f32 %v3392, %v673
    %v4061 = vmul.f32 %v3393, %v674
    %v4062 = vmul.f32 %v3392, %v675
    %v4063 = vmul.f32 %v3393, %v676
    %v4064 = vmul.f32 %v3392, %v677
    %v4065 = vmul.f32 %v3393, %v678
    %v4066 = vmul.f32 %v3392, %v679
    %v4067 = vmul.f32 %v3393, %v680
    %4068 = vmatpush.msra.mxu0 %v4067
    %4069 = vmatpush.msra.mxu0 %v4066
    %4070 = vmatpush.msra.mxu0 %v4065
    %4071 = vmatpush.msra.mxu0 %v4064
    %4072 = vmatpush.msra.mxu0 %v4063
    %4073 = vmatpush.msra.mxu0 %v4062
    %4074 = vmatpush.msra.mxu0 %v4061
    %4075 = vmatpush.msra.mxu0 %v4060
    %4076 = vmatpush.msra.mxu0 %v4059
    %4077 = vmatpush.msra.mxu0 %v4058
    %4078 = vmatpush.msra.mxu0 %v4057
    %4079 = vmatpush.msra.mxu0 %v4056
    %4080 = vmatpush.msra.mxu0 %v4055
    %4081 = vmatpush.msra.mxu0 %v4054
    %4082 = vmatpush.msra.mxu0 %v4053
    %4083 = vmatpush.msra.mxu0 %v4052
    %4084 = vmatmul.f32.gmra.mxu0 %v3826
    %v4085 = vpop.f32.mrf.mxu0
    %v4086 = vadd.f32 0.0, %v4085
    %4087 = vmatmul.f32.gmra.mxu0 %v3841
    %v4088 = vpop.f32.mrf.mxu0
    %v4089 = vadd.f32 0.0, %v4088
    %4090 = vmatmul.f32.gmra.mxu0 %v3856
    %v4091 = vpop.f32.mrf.mxu0
    %v4092 = vadd.f32 0.0, %v4091
    %4093 = vmatmul.f32.gmra.mxu0 %v3871
    %v4094 = vpop.f32.mrf.mxu0
    %v4095 = vadd.f32 0.0, %v4094
    %4096 = vmatmul.f32.gmra.mxu0 %v3886
    %v4097 = vpop.f32.mrf.mxu0
    %v4098 = vadd.f32 0.0, %v4097
    %4099 = vmatmul.f32.gmra.mxu0 %v3901
    %v4100 = vpop.f32.mrf.mxu0
    %v4101 = vadd.f32 0.0, %v4100
    %4102 = vmatmul.f32.gmra.mxu0 %v3916
    %v4103 = vpop.f32.mrf.mxu0
    %v4104 = vadd.f32 0.0, %v4103
    %4105 = vmatmul.f32.gmra.mxu0 %v3931
    %v4106 = vpop.f32.mrf.mxu0
    %v4107 = vadd.f32 0.0, %v4106
    %4108 = vmatmul.f32.gmra.mxu0 %v3946
    %v4109 = vpop.f32.mrf.mxu0
    %v4110 = vadd.f32 0.0, %v4109
    %4111 = vmatmul.f32.gmra.mxu0 %v3961
    %v4112 = vpop.f32.mrf.mxu0
    %v4113 = vadd.f32 0.0, %v4112
    %4114 = vmatmul.f32.gmra.mxu0 %v3976
    %v4115 = vpop.f32.mrf.mxu0
    %v4116 = vadd.f32 0.0, %v4115
    %4117 = vmatmul.f32.gmra.mxu0 %v3991
    %v4118 = vpop.f32.mrf.mxu0
    %v4119 = vadd.f32 0.0, %v4118
    %4120 = vmatmul.f32.gmra.mxu0 %v4006
    %v4121 = vpop.f32.mrf.mxu0
    %v4122 = vadd.f32 0.0, %v4121
    %4123 = vmatmul.f32.gmra.mxu0 %v4021
    %v4124 = vpop.f32.mrf.mxu0
    %v4125 = vadd.f32 0.0, %v4124
    %4126 = vmatmul.f32.gmra.mxu0 %v4036
    %v4127 = vpop.f32.mrf.mxu0
    %v4128 = vadd.f32 0.0, %v4127
    %4129 = vmatmul.f32.gmra.mxu0 %v4051
    %v4130 = vpop.f32.mrf.mxu0
    %v4131 = vadd.f32 0.0, %v4130
    %4132 = vdwg.mxu0
    %v4134 = vsel %vm321, %v4086, 0
    %v4137 = vsel %vm321, %v4089, 0
    %v4140 = vsel %vm321, %v4092, 0
    %v4143 = vsel %vm321, %v4095, 0
    %v4146 = vsel %vm321, %v4098, 0
    %v4149 = vsel %vm321, %v4101, 0
    %v4152 = vsel %vm321, %v4104, 0
    %v4155 = vsel %vm321, %v4107, 0
    %v4158 = vsel %vm321, %v4110, 0
    %v4161 = vsel %vm321, %v4113, 0
    %v4164 = vsel %vm321, %v4116, 0
    %v4167 = vsel %vm321, %v4119, 0
    %v4170 = vsel %vm321, %v4122, 0
    %v4173 = vsel %vm321, %v4125, 0
    %v4176 = vsel %vm321, %v4128, 0
    %v4179 = vsel %vm321, %v4131, 0
    %4181 = vmatpush.msra.mxu0 0.0
    %4182 = vmatpush.msra.mxu0 0.0
    %4183 = vmatpush.msra.mxu0 0.0
    %4184 = vmatpush.msra.mxu0 0.0
    %4185 = vmatpush.msra.mxu0 0.0
    %4186 = vmatpush.msra.mxu0 0.0
    %4187 = vmatpush.msra.mxu0 0.0
    %4188 = vmatpush.msra.mxu0 0.0
    %4189 = vmatpush.msra.mxu0 %v688
    %4190 = vmatpush.msra.mxu0 %v687
    %4191 = vmatpush.msra.mxu0 %v686
    %4192 = vmatpush.msra.mxu0 %v685
    %4193 = vmatpush.msra.mxu0 %v684
    %4194 = vmatpush.msra.mxu0 %v683
    %4195 = vmatpush.msra.mxu0 %v682
    %4196 = vmatpush.msra.mxu0 %v681
    %4197 = vmatmul.f32.gmra.mxu0 %v4134
    %v4198 = vpop.f32.mrf.mxu0
    %v4199 = vadd.f32 0.0, %v4198
    %4200 = vmatmul.f32.gmra.mxu0 %v4137
    %v4201 = vpop.f32.mrf.mxu0
    %v4202 = vadd.f32 0.0, %v4201
    %4203 = vmatmul.f32.gmra.mxu0 %v4140
    %v4204 = vpop.f32.mrf.mxu0
    %v4205 = vadd.f32 0.0, %v4204
    %4206 = vmatmul.f32.gmra.mxu0 %v4143
    %v4207 = vpop.f32.mrf.mxu0
    %v4208 = vadd.f32 0.0, %v4207
    %4209 = vmatmul.f32.gmra.mxu0 %v4146
    %v4210 = vpop.f32.mrf.mxu0
    %v4211 = vadd.f32 0.0, %v4210
    %4212 = vmatmul.f32.gmra.mxu0 %v4149
    %v4213 = vpop.f32.mrf.mxu0
    %v4214 = vadd.f32 0.0, %v4213
    %4215 = vmatmul.f32.gmra.mxu0 %v4152
    %v4216 = vpop.f32.mrf.mxu0
    %v4217 = vadd.f32 0.0, %v4216
    %4218 = vmatmul.f32.gmra.mxu0 %v4155
    %v4219 = vpop.f32.mrf.mxu0
    %v4220 = vadd.f32 0.0, %v4219
    %4221 = vmatmul.f32.gmra.mxu0 %v4158
    %v4222 = vpop.f32.mrf.mxu0
    %v4223 = vadd.f32 0.0, %v4222
    %4224 = vmatmul.f32.gmra.mxu0 %v4161
    %v4225 = vpop.f32.mrf.mxu0
    %v4226 = vadd.f32 0.0, %v4225
    %4227 = vmatmul.f32.gmra.mxu0 %v4164
    %v4228 = vpop.f32.mrf.mxu0
    %v4229 = vadd.f32 0.0, %v4228
    %4230 = vmatmul.f32.gmra.mxu0 %v4167
    %v4231 = vpop.f32.mrf.mxu0
    %v4232 = vadd.f32 0.0, %v4231
    %4233 = vmatmul.f32.gmra.mxu0 %v4170
    %v4234 = vpop.f32.mrf.mxu0
    %v4235 = vadd.f32 0.0, %v4234
    %4236 = vmatmul.f32.gmra.mxu0 %v4173
    %v4237 = vpop.f32.mrf.mxu0
    %v4238 = vadd.f32 0.0, %v4237
    %4239 = vmatmul.f32.gmra.mxu0 %v4176
    %v4240 = vpop.f32.mrf.mxu0
    %v4241 = vadd.f32 0.0, %v4240
    %4242 = vmatmul.f32.gmra.mxu0 %v4179
    %v4243 = vpop.f32.mrf.mxu0
    %v4244 = vadd.f32 0.0, %v4243
    %4245 = vdwg.mxu0
    %v4246 = vmul.f32 %v4199, %v665
    %v4247 = vmul.f32 %v4202, %v666
    %v4248 = vmul.f32 %v4205, %v667
    %v4249 = vmul.f32 %v4208, %v668
    %v4250 = vmul.f32 %v4211, %v669
    %v4251 = vmul.f32 %v4214, %v670
    %v4252 = vmul.f32 %v4217, %v671
    %v4253 = vmul.f32 %v4220, %v672
    %v4254 = vmul.f32 %v4223, %v673
    %v4255 = vmul.f32 %v4226, %v674
    %v4256 = vmul.f32 %v4229, %v675
    %v4257 = vmul.f32 %v4232, %v676
    %v4258 = vmul.f32 %v4235, %v677
    %v4259 = vmul.f32 %v4238, %v678
    %v4260 = vmul.f32 %v4241, %v679
    %v4261 = vmul.f32 %v4244, %v680
    %4262 = vmatpush.msra.mxu0 %v4261
    %4263 = vmatpush.msra.mxu0 %v4260
    %4264 = vmatpush.msra.mxu0 %v4259
    %4265 = vmatpush.msra.mxu0 %v4258
    %4266 = vmatpush.msra.mxu0 %v4257
    %4267 = vmatpush.msra.mxu0 %v4256
    %4268 = vmatpush.msra.mxu0 %v4255
    %4269 = vmatpush.msra.mxu0 %v4254
    %4270 = vmatpush.msra.mxu0 %v4253
    %4271 = vmatpush.msra.mxu0 %v4252
    %4272 = vmatpush.msra.mxu0 %v4251
    %4273 = vmatpush.msra.mxu0 %v4250
    %4274 = vmatpush.msra.mxu0 %v4249
    %4275 = vmatpush.msra.mxu0 %v4248
    %4276 = vmatpush.msra.mxu0 %v4247
    %4277 = vmatpush.msra.mxu0 %v4246
    %4278 = vmatmul.f32.gmra.mxu0 %v689
    %v4279 = vpop.f32.mrf.mxu0
    %v4280 = vadd.f32 0.0, %v4279
    %4281 = vmatmul.f32.gmra.mxu0 %v690
    %v4282 = vpop.f32.mrf.mxu0
    %v4283 = vadd.f32 0.0, %v4282
    %4284 = vdwg.mxu0
    %4285 = vst.msk [vmem:[#allocation6 + $0x30] sm:$0xff] %vm321, %v4280
    %4286 = vst.msk [vmem:[#allocation6 + $0x38] sm:$0xff] %vm321, %v4283
    %v4287 = vld [vmem:[#allocation3 + $0x40] sm:$0xff]
    %v4288 = vld [vmem:[#allocation3 + $0x48] sm:$0xff]
    %v4289 = vld [vmem:[#allocation4 + $0x40] sm:$0xff]
    %v4290 = vld [vmem:[#allocation4 + $0x48] sm:$0xff]
    %v4291 = vld [vmem:[#allocation5 + $0x40] sm:$0xff]
    %v4292 = vld [vmem:[#allocation5 + $0x48] sm:$0xff]
    %v4293 = vmul.f32 %v4287, %v665
    %v4294 = vmul.f32 %v4288, %v666
    %v4295 = vmul.f32 %v4287, %v667
    %v4296 = vmul.f32 %v4288, %v668
    %v4297 = vmul.f32 %v4287, %v669
    %v4298 = vmul.f32 %v4288, %v670
    %v4299 = vmul.f32 %v4287, %v671
    %v4300 = vmul.f32 %v4288, %v672
    %v4301 = vmul.f32 %v4287, %v673
    %v4302 = vmul.f32 %v4288, %v674
    %v4303 = vmul.f32 %v4287, %v675
    %v4304 = vmul.f32 %v4288, %v676
    %v4305 = vmul.f32 %v4287, %v677
    %v4306 = vmul.f32 %v4288, %v678
    %v4307 = vmul.f32 %v4287, %v679
    %v4308 = vmul.f32 %v4288, %v680
    %v4310 = vsel %vm321, %v4293, 0
    %v4313 = vsel %vm321, %v4294, 0
    %v4316 = vsel %vm321, %v4295, 0
    %v4319 = vsel %vm321, %v4296, 0
    %v4322 = vsel %vm321, %v4297, 0
    %v4325 = vsel %vm321, %v4298, 0
    %v4328 = vsel %vm321, %v4299, 0
    %v4331 = vsel %vm321, %v4300, 0
    %v4334 = vsel %vm321, %v4301, 0
    %v4337 = vsel %vm321, %v4302, 0
    %v4340 = vsel %vm321, %v4303, 0
    %v4343 = vsel %vm321, %v4304, 0
    %v4346 = vsel %vm321, %v4305, 0
    %v4349 = vsel %vm321, %v4306, 0
    %v4352 = vsel %vm321, %v4307, 0
    %v4355 = vsel %vm321, %v4308, 0
    %4357 = vmatpush.msra.mxu0 0.0
    %4358 = vmatpush.msra.mxu0 0.0
    %4359 = vmatpush.msra.mxu0 0.0
    %4360 = vmatpush.msra.mxu0 0.0
    %4361 = vmatpush.msra.mxu0 0.0
    %4362 = vmatpush.msra.mxu0 0.0
    %4363 = vmatpush.msra.mxu0 0.0
    %4364 = vmatpush.msra.mxu0 0.0
    %4365 = vmatpush.msra.mxu0 %v688
    %4366 = vmatpush.msra.mxu0 %v687
    %4367 = vmatpush.msra.mxu0 %v686
    %4368 = vmatpush.msra.mxu0 %v685
    %4369 = vmatpush.msra.mxu0 %v684
    %4370 = vmatpush.msra.mxu0 %v683
    %4371 = vmatpush.msra.mxu0 %v682
    %4372 = vmatpush.msra.mxu0 %v681
    %4373 = vmatmul.f32.gmra.mxu0 %v4310
    %v4374 = vpop.f32.mrf.mxu0
    %v4375 = vadd.f32 0.0, %v4374
    %4376 = vmatmul.f32.gmra.mxu0 %v4313
    %v4377 = vpop.f32.mrf.mxu0
    %v4378 = vadd.f32 0.0, %v4377
    %4379 = vmatmul.f32.gmra.mxu0 %v4316
    %v4380 = vpop.f32.mrf.mxu0
    %v4381 = vadd.f32 0.0, %v4380
    %4382 = vmatmul.f32.gmra.mxu0 %v4319
    %v4383 = vpop.f32.mrf.mxu0
    %v4384 = vadd.f32 0.0, %v4383
    %4385 = vmatmul.f32.gmra.mxu0 %v4322
    %v4386 = vpop.f32.mrf.mxu0
    %v4387 = vadd.f32 0.0, %v4386
    %4388 = vmatmul.f32.gmra.mxu0 %v4325
    %v4389 = vpop.f32.mrf.mxu0
    %v4390 = vadd.f32 0.0, %v4389
    %4391 = vmatmul.f32.gmra.mxu0 %v4328
    %v4392 = vpop.f32.mrf.mxu0
    %v4393 = vadd.f32 0.0, %v4392
    %4394 = vmatmul.f32.gmra.mxu0 %v4331
    %v4395 = vpop.f32.mrf.mxu0
    %v4396 = vadd.f32 0.0, %v4395
    %4397 = vmatmul.f32.gmra.mxu0 %v4334
    %v4398 = vpop.f32.mrf.mxu0
    %v4399 = vadd.f32 0.0, %v4398
    %4400 = vmatmul.f32.gmra.mxu0 %v4337
    %v4401 = vpop.f32.mrf.mxu0
    %v4402 = vadd.f32 0.0, %v4401
    %4403 = vmatmul.f32.gmra.mxu0 %v4340
    %v4404 = vpop.f32.mrf.mxu0
    %v4405 = vadd.f32 0.0, %v4404
    %4406 = vmatmul.f32.gmra.mxu0 %v4343
    %v4407 = vpop.f32.mrf.mxu0
    %v4408 = vadd.f32 0.0, %v4407
    %4409 = vmatmul.f32.gmra.mxu0 %v4346
    %v4410 = vpop.f32.mrf.mxu0
    %v4411 = vadd.f32 0.0, %v4410
    %4412 = vmatmul.f32.gmra.mxu0 %v4349
    %v4413 = vpop.f32.mrf.mxu0
    %v4414 = vadd.f32 0.0, %v4413
    %4415 = vmatmul.f32.gmra.mxu0 %v4352
    %v4416 = vpop.f32.mrf.mxu0
    %v4417 = vadd.f32 0.0, %v4416
    %4418 = vmatmul.f32.gmra.mxu0 %v4355
    %v4419 = vpop.f32.mrf.mxu0
    %v4420 = vadd.f32 0.0, %v4419
    %4421 = vdwg.mxu0
    %v4422 = vmul.f32 %v4289, %v665
    %v4423 = vmul.f32 %v4290, %v666
    %v4424 = vmul.f32 %v4289, %v667
    %v4425 = vmul.f32 %v4290, %v668
    %v4426 = vmul.f32 %v4289, %v669
    %v4427 = vmul.f32 %v4290, %v670
    %v4428 = vmul.f32 %v4289, %v671
    %v4429 = vmul.f32 %v4290, %v672
    %v4430 = vmul.f32 %v4289, %v673
    %v4431 = vmul.f32 %v4290, %v674
    %v4432 = vmul.f32 %v4289, %v675
    %v4433 = vmul.f32 %v4290, %v676
    %v4434 = vmul.f32 %v4289, %v677
    %v4435 = vmul.f32 %v4290, %v678
    %v4436 = vmul.f32 %v4289, %v679
    %v4437 = vmul.f32 %v4290, %v680
    %v4439 = vsel %vm321, %v4375, 0
    %v4442 = vsel %vm321, %v4378, 0
    %v4445 = vsel %vm321, %v4381, 0
    %v4448 = vsel %vm321, %v4384, 0
    %v4451 = vsel %vm321, %v4387, 0
    %v4454 = vsel %vm321, %v4390, 0
    %v4457 = vsel %vm321, %v4393, 0
    %v4460 = vsel %vm321, %v4396, 0
    %v4463 = vsel %vm321, %v4399, 0
    %v4466 = vsel %vm321, %v4402, 0
    %v4469 = vsel %vm321, %v4405, 0
    %v4472 = vsel %vm321, %v4408, 0
    %v4475 = vsel %vm321, %v4411, 0
    %v4478 = vsel %vm321, %v4414, 0
    %v4481 = vsel %vm321, %v4417, 0
    %v4484 = vsel %vm321, %v4420, 0
    %v4487 = vsel %vm321, %v4422, 0
    %v4490 = vsel %vm321, %v4423, 0
    %v4493 = vsel %vm321, %v4424, 0
    %v4496 = vsel %vm321, %v4425, 0
    %v4499 = vsel %vm321, %v4426, 0
    %v4502 = vsel %vm321, %v4427, 0
    %v4505 = vsel %vm321, %v4428, 0
    %v4508 = vsel %vm321, %v4429, 0
    %v4511 = vsel %vm321, %v4430, 0
    %v4514 = vsel %vm321, %v4431, 0
    %v4517 = vsel %vm321, %v4432, 0
    %v4520 = vsel %vm321, %v4433, 0
    %v4523 = vsel %vm321, %v4434, 0
    %v4526 = vsel %vm321, %v4435, 0
    %v4529 = vsel %vm321, %v4436, 0
    %v4532 = vsel %vm321, %v4437, 0
    %4534 = vmatpush.xpose.msra.mxu0 %v4532
    %4535 = vmatpush.xpose.msra.mxu0 %v4529
    %4536 = vmatpush.xpose.msra.mxu0 %v4526
    %4537 = vmatpush.xpose.msra.mxu0 %v4523
    %4538 = vmatpush.xpose.msra.mxu0 %v4520
    %4539 = vmatpush.xpose.msra.mxu0 %v4517
    %4540 = vmatpush.xpose.msra.mxu0 %v4514
    %4541 = vmatpush.xpose.msra.mxu0 %v4511
    %4542 = vmatpush.xpose.msra.mxu0 %v4508
    %4543 = vmatpush.xpose.msra.mxu0 %v4505
    %4544 = vmatpush.xpose.msra.mxu0 %v4502
    %4545 = vmatpush.xpose.msra.mxu0 %v4499
    %4546 = vmatpush.xpose.msra.mxu0 %v4496
    %4547 = vmatpush.xpose.msra.mxu0 %v4493
    %4548 = vmatpush.xpose.msra.mxu0 %v4490
    %4549 = vmatpush.xpose.msra.mxu0 %v4487
    %4550 = vmatmul.f32.gmra.mxu0 %v4439
    %v4551 = vpop.f32.mrf.mxu0
    %v4552 = vadd.f32 0.0, %v4551
    %4553 = vmatmul.f32.gmra.mxu0 %v4442
    %v4554 = vpop.f32.mrf.mxu0
    %v4555 = vadd.f32 0.0, %v4554
    %4556 = vmatmul.f32.gmra.mxu0 %v4445
    %v4557 = vpop.f32.mrf.mxu0
    %v4558 = vadd.f32 0.0, %v4557
    %4559 = vmatmul.f32.gmra.mxu0 %v4448
    %v4560 = vpop.f32.mrf.mxu0
    %v4561 = vadd.f32 0.0, %v4560
    %4562 = vmatmul.f32.gmra.mxu0 %v4451
    %v4563 = vpop.f32.mrf.mxu0
    %v4564 = vadd.f32 0.0, %v4563
    %4565 = vmatmul.f32.gmra.mxu0 %v4454
    %v4566 = vpop.f32.mrf.mxu0
    %v4567 = vadd.f32 0.0, %v4566
    %4568 = vmatmul.f32.gmra.mxu0 %v4457
    %v4569 = vpop.f32.mrf.mxu0
    %v4570 = vadd.f32 0.0, %v4569
    %4571 = vmatmul.f32.gmra.mxu0 %v4460
    %v4572 = vpop.f32.mrf.mxu0
    %v4573 = vadd.f32 0.0, %v4572
    %4574 = vmatmul.f32.gmra.mxu0 %v4463
    %v4575 = vpop.f32.mrf.mxu0
    %v4576 = vadd.f32 0.0, %v4575
    %4577 = vmatmul.f32.gmra.mxu0 %v4466
    %v4578 = vpop.f32.mrf.mxu0
    %v4579 = vadd.f32 0.0, %v4578
    %4580 = vmatmul.f32.gmra.mxu0 %v4469
    %v4581 = vpop.f32.mrf.mxu0
    %v4582 = vadd.f32 0.0, %v4581
    %4583 = vmatmul.f32.gmra.mxu0 %v4472
    %v4584 = vpop.f32.mrf.mxu0
    %v4585 = vadd.f32 0.0, %v4584
    %4586 = vmatmul.f32.gmra.mxu0 %v4475
    %v4587 = vpop.f32.mrf.mxu0
    %v4588 = vadd.f32 0.0, %v4587
    %4589 = vmatmul.f32.gmra.mxu0 %v4478
    %v4590 = vpop.f32.mrf.mxu0
    %v4591 = vadd.f32 0.0, %v4590
    %4592 = vmatmul.f32.gmra.mxu0 %v4481
    %v4593 = vpop.f32.mrf.mxu0
    %v4594 = vadd.f32 0.0, %v4593
    %4595 = vmatmul.f32.gmra.mxu0 %v4484
    %v4596 = vpop.f32.mrf.mxu0
    %v4597 = vadd.f32 0.0, %v4596
    %4598 = vdwg.mxu0
    %4599 = vmax.xlane.f32.xlu0 %v4552
    %v4600 = vpop.xlane.xlu0 %4599
    %4601 = vmax.xlane.f32.xlu0 %v4555
    %v4602 = vpop.xlane.xlu0 %4601
    %4603 = vmax.xlane.f32.xlu0 %v4558
    %v4604 = vpop.xlane.xlu0 %4603
    %4605 = vmax.xlane.f32.xlu0 %v4561
    %v4606 = vpop.xlane.xlu0 %4605
    %4607 = vmax.xlane.f32.xlu0 %v4564
    %v4608 = vpop.xlane.xlu0 %4607
    %4609 = vmax.xlane.f32.xlu0 %v4567
    %v4610 = vpop.xlane.xlu0 %4609
    %4611 = vmax.xlane.f32.xlu0 %v4570
    %v4612 = vpop.xlane.xlu0 %4611
    %4613 = vmax.xlane.f32.xlu0 %v4573
    %v4614 = vpop.xlane.xlu0 %4613
    %4615 = vmax.xlane.f32.xlu0 %v4576
    %v4616 = vpop.xlane.xlu0 %4615
    %4617 = vmax.xlane.f32.xlu0 %v4579
    %v4618 = vpop.xlane.xlu0 %4617
    %4619 = vmax.xlane.f32.xlu0 %v4582
    %v4620 = vpop.xlane.xlu0 %4619
    %4621 = vmax.xlane.f32.xlu0 %v4585
    %v4622 = vpop.xlane.xlu0 %4621
    %4623 = vmax.xlane.f32.xlu0 %v4588
    %v4624 = vpop.xlane.xlu0 %4623
    %4625 = vmax.xlane.f32.xlu0 %v4591
    %v4626 = vpop.xlane.xlu0 %4625
    %4627 = vmax.xlane.f32.xlu0 %v4594
    %v4628 = vpop.xlane.xlu0 %4627
    %4629 = vmax.xlane.f32.xlu0 %v4597
    %v4630 = vpop.xlane.xlu0 %4629
    %v4631 = vsub.f32 %v4552, %v4600
    %v4632 = vsub.f32 %v4555, %v4602
    %v4633 = vsub.f32 %v4558, %v4604
    %v4634 = vsub.f32 %v4561, %v4606
    %v4635 = vsub.f32 %v4564, %v4608
    %v4636 = vsub.f32 %v4567, %v4610
    %v4637 = vsub.f32 %v4570, %v4612
    %v4638 = vsub.f32 %v4573, %v4614
    %v4639 = vsub.f32 %v4576, %v4616
    %v4640 = vsub.f32 %v4579, %v4618
    %v4641 = vsub.f32 %v4582, %v4620
    %v4642 = vsub.f32 %v4585, %v4622
    %v4643 = vsub.f32 %v4588, %v4624
    %v4644 = vsub.f32 %v4591, %v4626
    %v4645 = vsub.f32 %v4594, %v4628
    %v4646 = vsub.f32 %v4597, %v4630
    %v4647 = vmul.f32 %v4631, 1.442695
    %v4648 = vpow.pop %v4647
    %v4649 = vmul.f32 %v4632, 1.442695
    %v4650 = vpow.pop %v4649
    %v4651 = vmul.f32 %v4633, 1.442695
    %v4652 = vpow.pop %v4651
    %v4653 = vmul.f32 %v4634, 1.442695
    %v4654 = vpow.pop %v4653
    %v4655 = vmul.f32 %v4635, 1.442695
    %v4656 = vpow.pop %v4655
    %v4657 = vmul.f32 %v4636, 1.442695
    %v4658 = vpow.pop %v4657
    %v4659 = vmul.f32 %v4637, 1.442695
    %v4660 = vpow.pop %v4659
    %v4661 = vmul.f32 %v4638, 1.442695
    %v4662 = vpow.pop %v4661
    %v4663 = vmul.f32 %v4639, 1.442695
    %v4664 = vpow.pop %v4663
    %v4665 = vmul.f32 %v4640, 1.442695
    %v4666 = vpow.pop %v4665
    %v4667 = vmul.f32 %v4641, 1.442695
    %v4668 = vpow.pop %v4667
    %v4669 = vmul.f32 %v4642, 1.442695
    %v4670 = vpow.pop %v4669
    %v4671 = vmul.f32 %v4643, 1.442695
    %v4672 = vpow.pop %v4671
    %v4673 = vmul.f32 %v4644, 1.442695
    %v4674 = vpow.pop %v4673
    %v4675 = vmul.f32 %v4645, 1.442695
    %v4676 = vpow.pop %v4675
    %v4677 = vmul.f32 %v4646, 1.442695
    %v4678 = vpow.pop %v4677
    %4679 = vadd.xlane.f32.xlu0 %v4648
    %v4680 = vpop.xlane.xlu0 %4679
    %4681 = vadd.xlane.f32.xlu0 %v4650
    %v4682 = vpop.xlane.xlu0 %4681
    %4683 = vadd.xlane.f32.xlu0 %v4652
    %v4684 = vpop.xlane.xlu0 %4683
    %4685 = vadd.xlane.f32.xlu0 %v4654
    %v4686 = vpop.xlane.xlu0 %4685
    %4687 = vadd.xlane.f32.xlu0 %v4656
    %v4688 = vpop.xlane.xlu0 %4687
    %4689 = vadd.xlane.f32.xlu0 %v4658
    %v4690 = vpop.xlane.xlu0 %4689
    %4691 = vadd.xlane.f32.xlu0 %v4660
    %v4692 = vpop.xlane.xlu0 %4691
    %4693 = vadd.xlane.f32.xlu0 %v4662
    %v4694 = vpop.xlane.xlu0 %4693
    %4695 = vadd.xlane.f32.xlu0 %v4664
    %v4696 = vpop.xlane.xlu0 %4695
    %4697 = vadd.xlane.f32.xlu0 %v4666
    %v4698 = vpop.xlane.xlu0 %4697
    %4699 = vadd.xlane.f32.xlu0 %v4668
    %v4700 = vpop.xlane.xlu0 %4699
    %4701 = vadd.xlane.f32.xlu0 %v4670
    %v4702 = vpop.xlane.xlu0 %4701
    %4703 = vadd.xlane.f32.xlu0 %v4672
    %v4704 = vpop.xlane.xlu0 %4703
    %4705 = vadd.xlane.f32.xlu0 %v4674
    %v4706 = vpop.xlane.xlu0 %4705
    %4707 = vadd.xlane.f32.xlu0 %v4676
    %v4708 = vpop.xlane.xlu0 %4707
    %4709 = vadd.xlane.f32.xlu0 %v4678
    %v4710 = vpop.xlane.xlu0 %4709
    %v4711 = vrcp.pop %v4680
    %v4712 = vmul.f32 %v4680, %v4711
    %v4713 = vsub.f32 1.0, %v4712
    %v4714 = vmul.f32 %v4711, %v4713
    %v4715 = vadd.f32 %v4711, %v4714
    %vm4716 = vweird.f32 %v4680
    %vm4717 = vweird.f32 %v4711
    %vm4718 = vmor %vm4716, %vm4717
    %v4719 = vsel %vm4718, %v4711, %v4715
    %v4720 = vand.u32 2147483647, %v4680
    %vm4721 = vcmp.eq.f32.partialorder %v4720, 8.507059e+37
    %v4722 = vand.u32 %v4680, 2147483648
    %v4723 = vor.u32 1.1754944e-38, %v4722
    %v4724 = vsel %vm4721, %v4723, %v4719
    %v4725 = vmul.f32 %v4648, %v4724
    %v4726 = vrcp.pop %v4682
    %v4727 = vmul.f32 %v4682, %v4726
    %v4728 = vsub.f32 1.0, %v4727
    %v4729 = vmul.f32 %v4726, %v4728
    %v4730 = vadd.f32 %v4726, %v4729
    %vm4731 = vweird.f32 %v4682
    %vm4732 = vweird.f32 %v4726
    %vm4733 = vmor %vm4731, %vm4732
    %v4734 = vsel %vm4733, %v4726, %v4730
    %v4735 = vand.u32 2147483647, %v4682
    %vm4736 = vcmp.eq.f32.partialorder %v4735, 8.507059e+37
    %v4737 = vand.u32 %v4682, 2147483648
    %v4738 = vor.u32 1.1754944e-38, %v4737
    %v4739 = vsel %vm4736, %v4738, %v4734
    %v4740 = vmul.f32 %v4650, %v4739
    %v4741 = vrcp.pop %v4684
    %v4742 = vmul.f32 %v4684, %v4741
    %v4743 = vsub.f32 1.0, %v4742
    %v4744 = vmul.f32 %v4741, %v4743
    %v4745 = vadd.f32 %v4741, %v4744
    %vm4746 = vweird.f32 %v4684
    %vm4747 = vweird.f32 %v4741
    %vm4748 = vmor %vm4746, %vm4747
    %v4749 = vsel %vm4748, %v4741, %v4745
    %v4750 = vand.u32 2147483647, %v4684
    %vm4751 = vcmp.eq.f32.partialorder %v4750, 8.507059e+37
    %v4752 = vand.u32 %v4684, 2147483648
    %v4753 = vor.u32 1.1754944e-38, %v4752
    %v4754 = vsel %vm4751, %v4753, %v4749
    %v4755 = vmul.f32 %v4652, %v4754
    %v4756 = vrcp.pop %v4686
    %v4757 = vmul.f32 %v4686, %v4756
    %v4758 = vsub.f32 1.0, %v4757
    %v4759 = vmul.f32 %v4756, %v4758
    %v4760 = vadd.f32 %v4756, %v4759
    %vm4761 = vweird.f32 %v4686
    %vm4762 = vweird.f32 %v4756
    %vm4763 = vmor %vm4761, %vm4762
    %v4764 = vsel %vm4763, %v4756, %v4760
    %v4765 = vand.u32 2147483647, %v4686
    %vm4766 = vcmp.eq.f32.partialorder %v4765, 8.507059e+37
    %v4767 = vand.u32 %v4686, 2147483648
    %v4768 = vor.u32 1.1754944e-38, %v4767
    %v4769 = vsel %vm4766, %v4768, %v4764
    %v4770 = vmul.f32 %v4654, %v4769
    %v4771 = vrcp.pop %v4688
    %v4772 = vmul.f32 %v4688, %v4771
    %v4773 = vsub.f32 1.0, %v4772
    %v4774 = vmul.f32 %v4771, %v4773
    %v4775 = vadd.f32 %v4771, %v4774
    %vm4776 = vweird.f32 %v4688
    %vm4777 = vweird.f32 %v4771
    %vm4778 = vmor %vm4776, %vm4777
    %v4779 = vsel %vm4778, %v4771, %v4775
    %v4780 = vand.u32 2147483647, %v4688
    %vm4781 = vcmp.eq.f32.partialorder %v4780, 8.507059e+37
    %v4782 = vand.u32 %v4688, 2147483648
    %v4783 = vor.u32 1.1754944e-38, %v4782
    %v4784 = vsel %vm4781, %v4783, %v4779
    %v4785 = vmul.f32 %v4656, %v4784
    %v4786 = vrcp.pop %v4690
    %v4787 = vmul.f32 %v4690, %v4786
    %v4788 = vsub.f32 1.0, %v4787
    %v4789 = vmul.f32 %v4786, %v4788
    %v4790 = vadd.f32 %v4786, %v4789
    %vm4791 = vweird.f32 %v4690
    %vm4792 = vweird.f32 %v4786
    %vm4793 = vmor %vm4791, %vm4792
    %v4794 = vsel %vm4793, %v4786, %v4790
    %v4795 = vand.u32 2147483647, %v4690
    %vm4796 = vcmp.eq.f32.partialorder %v4795, 8.507059e+37
    %v4797 = vand.u32 %v4690, 2147483648
    %v4798 = vor.u32 1.1754944e-38, %v4797
    %v4799 = vsel %vm4796, %v4798, %v4794
    %v4800 = vmul.f32 %v4658, %v4799
    %v4801 = vrcp.pop %v4692
    %v4802 = vmul.f32 %v4692, %v4801
    %v4803 = vsub.f32 1.0, %v4802
    %v4804 = vmul.f32 %v4801, %v4803
    %v4805 = vadd.f32 %v4801, %v4804
    %vm4806 = vweird.f32 %v4692
    %vm4807 = vweird.f32 %v4801
    %vm4808 = vmor %vm4806, %vm4807
    %v4809 = vsel %vm4808, %v4801, %v4805
    %v4810 = vand.u32 2147483647, %v4692
    %vm4811 = vcmp.eq.f32.partialorder %v4810, 8.507059e+37
    %v4812 = vand.u32 %v4692, 2147483648
    %v4813 = vor.u32 1.1754944e-38, %v4812
    %v4814 = vsel %vm4811, %v4813, %v4809
    %v4815 = vmul.f32 %v4660, %v4814
    %v4816 = vrcp.pop %v4694
    %v4817 = vmul.f32 %v4694, %v4816
    %v4818 = vsub.f32 1.0, %v4817
    %v4819 = vmul.f32 %v4816, %v4818
    %v4820 = vadd.f32 %v4816, %v4819
    %vm4821 = vweird.f32 %v4694
    %vm4822 = vweird.f32 %v4816
    %vm4823 = vmor %vm4821, %vm4822
    %v4824 = vsel %vm4823, %v4816, %v4820
    %v4825 = vand.u32 2147483647, %v4694
    %vm4826 = vcmp.eq.f32.partialorder %v4825, 8.507059e+37
    %v4827 = vand.u32 %v4694, 2147483648
    %v4828 = vor.u32 1.1754944e-38, %v4827
    %v4829 = vsel %vm4826, %v4828, %v4824
    %v4830 = vmul.f32 %v4662, %v4829
    %v4831 = vrcp.pop %v4696
    %v4832 = vmul.f32 %v4696, %v4831
    %v4833 = vsub.f32 1.0, %v4832
    %v4834 = vmul.f32 %v4831, %v4833
    %v4835 = vadd.f32 %v4831, %v4834
    %vm4836 = vweird.f32 %v4696
    %vm4837 = vweird.f32 %v4831
    %vm4838 = vmor %vm4836, %vm4837
    %v4839 = vsel %vm4838, %v4831, %v4835
    %v4840 = vand.u32 2147483647, %v4696
    %vm4841 = vcmp.eq.f32.partialorder %v4840, 8.507059e+37
    %v4842 = vand.u32 %v4696, 2147483648
    %v4843 = vor.u32 1.1754944e-38, %v4842
    %v4844 = vsel %vm4841, %v4843, %v4839
    %v4845 = vmul.f32 %v4664, %v4844
    %v4846 = vrcp.pop %v4698
    %v4847 = vmul.f32 %v4698, %v4846
    %v4848 = vsub.f32 1.0, %v4847
    %v4849 = vmul.f32 %v4846, %v4848
    %v4850 = vadd.f32 %v4846, %v4849
    %vm4851 = vweird.f32 %v4698
    %vm4852 = vweird.f32 %v4846
    %vm4853 = vmor %vm4851, %vm4852
    %v4854 = vsel %vm4853, %v4846, %v4850
    %v4855 = vand.u32 2147483647, %v4698
    %vm4856 = vcmp.eq.f32.partialorder %v4855, 8.507059e+37
    %v4857 = vand.u32 %v4698, 2147483648
    %v4858 = vor.u32 1.1754944e-38, %v4857
    %v4859 = vsel %vm4856, %v4858, %v4854
    %v4860 = vmul.f32 %v4666, %v4859
    %v4861 = vrcp.pop %v4700
    %v4862 = vmul.f32 %v4700, %v4861
    %v4863 = vsub.f32 1.0, %v4862
    %v4864 = vmul.f32 %v4861, %v4863
    %v4865 = vadd.f32 %v4861, %v4864
    %vm4866 = vweird.f32 %v4700
    %vm4867 = vweird.f32 %v4861
    %vm4868 = vmor %vm4866, %vm4867
    %v4869 = vsel %vm4868, %v4861, %v4865
    %v4870 = vand.u32 2147483647, %v4700
    %vm4871 = vcmp.eq.f32.partialorder %v4870, 8.507059e+37
    %v4872 = vand.u32 %v4700, 2147483648
    %v4873 = vor.u32 1.1754944e-38, %v4872
    %v4874 = vsel %vm4871, %v4873, %v4869
    %v4875 = vmul.f32 %v4668, %v4874
    %v4876 = vrcp.pop %v4702
    %v4877 = vmul.f32 %v4702, %v4876
    %v4878 = vsub.f32 1.0, %v4877
    %v4879 = vmul.f32 %v4876, %v4878
    %v4880 = vadd.f32 %v4876, %v4879
    %vm4881 = vweird.f32 %v4702
    %vm4882 = vweird.f32 %v4876
    %vm4883 = vmor %vm4881, %vm4882
    %v4884 = vsel %vm4883, %v4876, %v4880
    %v4885 = vand.u32 2147483647, %v4702
    %vm4886 = vcmp.eq.f32.partialorder %v4885, 8.507059e+37
    %v4887 = vand.u32 %v4702, 2147483648
    %v4888 = vor.u32 1.1754944e-38, %v4887
    %v4889 = vsel %vm4886, %v4888, %v4884
    %v4890 = vmul.f32 %v4670, %v4889
    %v4891 = vrcp.pop %v4704
    %v4892 = vmul.f32 %v4704, %v4891
    %v4893 = vsub.f32 1.0, %v4892
    %v4894 = vmul.f32 %v4891, %v4893
    %v4895 = vadd.f32 %v4891, %v4894
    %vm4896 = vweird.f32 %v4704
    %vm4897 = vweird.f32 %v4891
    %vm4898 = vmor %vm4896, %vm4897
    %v4899 = vsel %vm4898, %v4891, %v4895
    %v4900 = vand.u32 2147483647, %v4704
    %vm4901 = vcmp.eq.f32.partialorder %v4900, 8.507059e+37
    %v4902 = vand.u32 %v4704, 2147483648
    %v4903 = vor.u32 1.1754944e-38, %v4902
    %v4904 = vsel %vm4901, %v4903, %v4899
    %v4905 = vmul.f32 %v4672, %v4904
    %v4906 = vrcp.pop %v4706
    %v4907 = vmul.f32 %v4706, %v4906
    %v4908 = vsub.f32 1.0, %v4907
    %v4909 = vmul.f32 %v4906, %v4908
    %v4910 = vadd.f32 %v4906, %v4909
    %vm4911 = vweird.f32 %v4706
    %vm4912 = vweird.f32 %v4906
    %vm4913 = vmor %vm4911, %vm4912
    %v4914 = vsel %vm4913, %v4906, %v4910
    %v4915 = vand.u32 2147483647, %v4706
    %vm4916 = vcmp.eq.f32.partialorder %v4915, 8.507059e+37
    %v4917 = vand.u32 %v4706, 2147483648
    %v4918 = vor.u32 1.1754944e-38, %v4917
    %v4919 = vsel %vm4916, %v4918, %v4914
    %v4920 = vmul.f32 %v4674, %v4919
    %v4921 = vrcp.pop %v4708
    %v4922 = vmul.f32 %v4708, %v4921
    %v4923 = vsub.f32 1.0, %v4922
    %v4924 = vmul.f32 %v4921, %v4923
    %v4925 = vadd.f32 %v4921, %v4924
    %vm4926 = vweird.f32 %v4708
    %vm4927 = vweird.f32 %v4921
    %vm4928 = vmor %vm4926, %vm4927
    %v4929 = vsel %vm4928, %v4921, %v4925
    %v4930 = vand.u32 2147483647, %v4708
    %vm4931 = vcmp.eq.f32.partialorder %v4930, 8.507059e+37
    %v4932 = vand.u32 %v4708, 2147483648
    %v4933 = vor.u32 1.1754944e-38, %v4932
    %v4934 = vsel %vm4931, %v4933, %v4929
    %v4935 = vmul.f32 %v4676, %v4934
    %v4936 = vrcp.pop %v4710
    %v4937 = vmul.f32 %v4710, %v4936
    %v4938 = vsub.f32 1.0, %v4937
    %v4939 = vmul.f32 %v4936, %v4938
    %v4940 = vadd.f32 %v4936, %v4939
    %vm4941 = vweird.f32 %v4710
    %vm4942 = vweird.f32 %v4936
    %vm4943 = vmor %vm4941, %vm4942
    %v4944 = vsel %vm4943, %v4936, %v4940
    %v4945 = vand.u32 2147483647, %v4710
    %vm4946 = vcmp.eq.f32.partialorder %v4945, 8.507059e+37
    %v4947 = vand.u32 %v4710, 2147483648
    %v4948 = vor.u32 1.1754944e-38, %v4947
    %v4949 = vsel %vm4946, %v4948, %v4944
    %v4950 = vmul.f32 %v4678, %v4949
    %v4951 = vmul.f32 %v4291, %v665
    %v4952 = vmul.f32 %v4292, %v666
    %v4953 = vmul.f32 %v4291, %v667
    %v4954 = vmul.f32 %v4292, %v668
    %v4955 = vmul.f32 %v4291, %v669
    %v4956 = vmul.f32 %v4292, %v670
    %v4957 = vmul.f32 %v4291, %v671
    %v4958 = vmul.f32 %v4292, %v672
    %v4959 = vmul.f32 %v4291, %v673
    %v4960 = vmul.f32 %v4292, %v674
    %v4961 = vmul.f32 %v4291, %v675
    %v4962 = vmul.f32 %v4292, %v676
    %v4963 = vmul.f32 %v4291, %v677
    %v4964 = vmul.f32 %v4292, %v678
    %v4965 = vmul.f32 %v4291, %v679
    %v4966 = vmul.f32 %v4292, %v680
    %4967 = vmatpush.msra.mxu0 %v4966
    %4968 = vmatpush.msra.mxu0 %v4965
    %4969 = vmatpush.msra.mxu0 %v4964
    %4970 = vmatpush.msra.mxu0 %v4963
    %4971 = vmatpush.msra.mxu0 %v4962
    %4972 = vmatpush.msra.mxu0 %v4961
    %4973 = vmatpush.msra.mxu0 %v4960
    %4974 = vmatpush.msra.mxu0 %v4959
    %4975 = vmatpush.msra.mxu0 %v4958
    %4976 = vmatpush.msra.mxu0 %v4957
    %4977 = vmatpush.msra.mxu0 %v4956
    %4978 = vmatpush.msra.mxu0 %v4955
    %4979 = vmatpush.msra.mxu0 %v4954
    %4980 = vmatpush.msra.mxu0 %v4953
    %4981 = vmatpush.msra.mxu0 %v4952
    %4982 = vmatpush.msra.mxu0 %v4951
    %4983 = vmatmul.f32.gmra.mxu0 %v4725
    %v4984 = vpop.f32.mrf.mxu0
    %v4985 = vadd.f32 0.0, %v4984
    %4986 = vmatmul.f32.gmra.mxu0 %v4740
    %v4987 = vpop.f32.mrf.mxu0
    %v4988 = vadd.f32 0.0, %v4987
    %4989 = vmatmul.f32.gmra.mxu0 %v4755
    %v4990 = vpop.f32.mrf.mxu0
    %v4991 = vadd.f32 0.0, %v4990
    %4992 = vmatmul.f32.gmra.mxu0 %v4770
    %v4993 = vpop.f32.mrf.mxu0
    %v4994 = vadd.f32 0.0, %v4993
    %4995 = vmatmul.f32.gmra.mxu0 %v4785
    %v4996 = vpop.f32.mrf.mxu0
    %v4997 = vadd.f32 0.0, %v4996
    %4998 = vmatmul.f32.gmra.mxu0 %v4800
    %v4999 = vpop.f32.mrf.mxu0
    %v5000 = vadd.f32 0.0, %v4999
    %5001 = vmatmul.f32.gmra.mxu0 %v4815
    %v5002 = vpop.f32.mrf.mxu0
    %v5003 = vadd.f32 0.0, %v5002
    %5004 = vmatmul.f32.gmra.mxu0 %v4830
    %v5005 = vpop.f32.mrf.mxu0
    %v5006 = vadd.f32 0.0, %v5005
    %5007 = vmatmul.f32.gmra.mxu0 %v4845
    %v5008 = vpop.f32.mrf.mxu0
    %v5009 = vadd.f32 0.0, %v5008
    %5010 = vmatmul.f32.gmra.mxu0 %v4860
    %v5011 = vpop.f32.mrf.mxu0
    %v5012 = vadd.f32 0.0, %v5011
    %5013 = vmatmul.f32.gmra.mxu0 %v4875
    %v5014 = vpop.f32.mrf.mxu0
    %v5015 = vadd.f32 0.0, %v5014
    %5016 = vmatmul.f32.gmra.mxu0 %v4890
    %v5017 = vpop.f32.mrf.mxu0
    %v5018 = vadd.f32 0.0, %v5017
    %5019 = vmatmul.f32.gmra.mxu0 %v4905
    %v5020 = vpop.f32.mrf.mxu0
    %v5021 = vadd.f32 0.0, %v5020
    %5022 = vmatmul.f32.gmra.mxu0 %v4920
    %v5023 = vpop.f32.mrf.mxu0
    %v5024 = vadd.f32 0.0, %v5023
    %5025 = vmatmul.f32.gmra.mxu0 %v4935
    %v5026 = vpop.f32.mrf.mxu0
    %v5027 = vadd.f32 0.0, %v5026
    %5028 = vmatmul.f32.gmra.mxu0 %v4950
    %v5029 = vpop.f32.mrf.mxu0
    %v5030 = vadd.f32 0.0, %v5029
    %5031 = vdwg.mxu0
    %v5033 = vsel %vm321, %v4985, 0
    %v5036 = vsel %vm321, %v4988, 0
    %v5039 = vsel %vm321, %v4991, 0
    %v5042 = vsel %vm321, %v4994, 0
    %v5045 = vsel %vm321, %v4997, 0
    %v5048 = vsel %vm321, %v5000, 0
    %v5051 = vsel %vm321, %v5003, 0
    %v5054 = vsel %vm321, %v5006, 0
    %v5057 = vsel %vm321, %v5009, 0
    %v5060 = vsel %vm321, %v5012, 0
    %v5063 = vsel %vm321, %v5015, 0
    %v5066 = vsel %vm321, %v5018, 0
    %v5069 = vsel %vm321, %v5021, 0
    %v5072 = vsel %vm321, %v5024, 0
    %v5075 = vsel %vm321, %v5027, 0
    %v5078 = vsel %vm321, %v5030, 0
    %5080 = vmatpush.msra.mxu0 0.0
    %5081 = vmatpush.msra.mxu0 0.0
    %5082 = vmatpush.msra.mxu0 0.0
    %5083 = vmatpush.msra.mxu0 0.0
    %5084 = vmatpush.msra.mxu0 0.0
    %5085 = vmatpush.msra.mxu0 0.0
    %5086 = vmatpush.msra.mxu0 0.0
    %5087 = vmatpush.msra.mxu0 0.0
    %5088 = vmatpush.msra.mxu0 %v688
    %5089 = vmatpush.msra.mxu0 %v687
    %5090 = vmatpush.msra.mxu0 %v686
    %5091 = vmatpush.msra.mxu0 %v685
    %5092 = vmatpush.msra.mxu0 %v684
    %5093 = vmatpush.msra.mxu0 %v683
    %5094 = vmatpush.msra.mxu0 %v682
    %5095 = vmatpush.msra.mxu0 %v681
    %5096 = vmatmul.f32.gmra.mxu0 %v5033
    %v5097 = vpop.f32.mrf.mxu0
    %v5098 = vadd.f32 0.0, %v5097
    %5099 = vmatmul.f32.gmra.mxu0 %v5036
    %v5100 = vpop.f32.mrf.mxu0
    %v5101 = vadd.f32 0.0, %v5100
    %5102 = vmatmul.f32.gmra.mxu0 %v5039
    %v5103 = vpop.f32.mrf.mxu0
    %v5104 = vadd.f32 0.0, %v5103
    %5105 = vmatmul.f32.gmra.mxu0 %v5042
    %v5106 = vpop.f32.mrf.mxu0
    %v5107 = vadd.f32 0.0, %v5106
    %5108 = vmatmul.f32.gmra.mxu0 %v5045
    %v5109 = vpop.f32.mrf.mxu0
    %v5110 = vadd.f32 0.0, %v5109
    %5111 = vmatmul.f32.gmra.mxu0 %v5048
    %v5112 = vpop.f32.mrf.mxu0
    %v5113 = vadd.f32 0.0, %v5112
    %5114 = vmatmul.f32.gmra.mxu0 %v5051
    %v5115 = vpop.f32.mrf.mxu0
    %v5116 = vadd.f32 0.0, %v5115
    %5117 = vmatmul.f32.gmra.mxu0 %v5054
    %v5118 = vpop.f32.mrf.mxu0
    %v5119 = vadd.f32 0.0, %v5118
    %5120 = vmatmul.f32.gmra.mxu0 %v5057
    %v5121 = vpop.f32.mrf.mxu0
    %v5122 = vadd.f32 0.0, %v5121
    %5123 = vmatmul.f32.gmra.mxu0 %v5060
    %v5124 = vpop.f32.mrf.mxu0
    %v5125 = vadd.f32 0.0, %v5124
    %5126 = vmatmul.f32.gmra.mxu0 %v5063
    %v5127 = vpop.f32.mrf.mxu0
    %v5128 = vadd.f32 0.0, %v5127
    %5129 = vmatmul.f32.gmra.mxu0 %v5066
    %v5130 = vpop.f32.mrf.mxu0
    %v5131 = vadd.f32 0.0, %v5130
    %5132 = vmatmul.f32.gmra.mxu0 %v5069
    %v5133 = vpop.f32.mrf.mxu0
    %v5134 = vadd.f32 0.0, %v5133
    %5135 = vmatmul.f32.gmra.mxu0 %v5072
    %v5136 = vpop.f32.mrf.mxu0
    %v5137 = vadd.f32 0.0, %v5136
    %5138 = vmatmul.f32.gmra.mxu0 %v5075
    %v5139 = vpop.f32.mrf.mxu0
    %v5140 = vadd.f32 0.0, %v5139
    %5141 = vmatmul.f32.gmra.mxu0 %v5078
    %v5142 = vpop.f32.mrf.mxu0
    %v5143 = vadd.f32 0.0, %v5142
    %5144 = vdwg.mxu0
    %v5145 = vmul.f32 %v5098, %v665
    %v5146 = vmul.f32 %v5101, %v666
    %v5147 = vmul.f32 %v5104, %v667
    %v5148 = vmul.f32 %v5107, %v668
    %v5149 = vmul.f32 %v5110, %v669
    %v5150 = vmul.f32 %v5113, %v670
    %v5151 = vmul.f32 %v5116, %v671
    %v5152 = vmul.f32 %v5119, %v672
    %v5153 = vmul.f32 %v5122, %v673
    %v5154 = vmul.f32 %v5125, %v674
    %v5155 = vmul.f32 %v5128, %v675
    %v5156 = vmul.f32 %v5131, %v676
    %v5157 = vmul.f32 %v5134, %v677
    %v5158 = vmul.f32 %v5137, %v678
    %v5159 = vmul.f32 %v5140, %v679
    %v5160 = vmul.f32 %v5143, %v680
    %5161 = vmatpush.msra.mxu0 %v5160
    %5162 = vmatpush.msra.mxu0 %v5159
    %5163 = vmatpush.msra.mxu0 %v5158
    %5164 = vmatpush.msra.mxu0 %v5157
    %5165 = vmatpush.msra.mxu0 %v5156
    %5166 = vmatpush.msra.mxu0 %v5155
    %5167 = vmatpush.msra.mxu0 %v5154
    %5168 = vmatpush.msra.mxu0 %v5153
    %5169 = vmatpush.msra.mxu0 %v5152
    %5170 = vmatpush.msra.mxu0 %v5151
    %5171 = vmatpush.msra.mxu0 %v5150
    %5172 = vmatpush.msra.mxu0 %v5149
    %5173 = vmatpush.msra.mxu0 %v5148
    %5174 = vmatpush.msra.mxu0 %v5147
    %5175 = vmatpush.msra.mxu0 %v5146
    %5176 = vmatpush.msra.mxu0 %v5145
    %5177 = vmatmul.f32.gmra.mxu0 %v689
    %v5178 = vpop.f32.mrf.mxu0
    %v5179 = vadd.f32 0.0, %v5178
    %5180 = vmatmul.f32.gmra.mxu0 %v690
    %v5181 = vpop.f32.mrf.mxu0
    %v5182 = vadd.f32 0.0, %v5181
    %5183 = vdwg.mxu0
    %5184 = vst.msk [vmem:[#allocation6 + $0x40] sm:$0xff] %vm321, %v5179
    %5185 = vst.msk [vmem:[#allocation6 + $0x48] sm:$0xff] %vm321, %v5182
    %v5186 = vld [vmem:[#allocation3 + $0x50] sm:$0xff]
    %v5187 = vld [vmem:[#allocation3 + $0x58] sm:$0xff]
    %v5188 = vld [vmem:[#allocation4 + $0x50] sm:$0xff]
    %v5189 = vld [vmem:[#allocation4 + $0x58] sm:$0xff]
    %v5190 = vld [vmem:[#allocation5 + $0x50] sm:$0xff]
    %v5191 = vld [vmem:[#allocation5 + $0x58] sm:$0xff]
    %v5192 = vmul.f32 %v5186, %v665
    %v5193 = vmul.f32 %v5187, %v666
    %v5194 = vmul.f32 %v5186, %v667
    %v5195 = vmul.f32 %v5187, %v668
    %v5196 = vmul.f32 %v5186, %v669
    %v5197 = vmul.f32 %v5187, %v670
    %v5198 = vmul.f32 %v5186, %v671
    %v5199 = vmul.f32 %v5187, %v672
    %v5200 = vmul.f32 %v5186, %v673
    %v5201 = vmul.f32 %v5187, %v674
    %v5202 = vmul.f32 %v5186, %v675
    %v5203 = vmul.f32 %v5187, %v676
    %v5204 = vmul.f32 %v5186, %v677
    %v5205 = vmul.f32 %v5187, %v678
    %v5206 = vmul.f32 %v5186, %v679
    %v5207 = vmul.f32 %v5187, %v680
    %v5209 = vsel %vm321, %v5192, 0
    %v5212 = vsel %vm321, %v5193, 0
    %v5215 = vsel %vm321, %v5194, 0
    %v5218 = vsel %vm321, %v5195, 0
    %v5221 = vsel %vm321, %v5196, 0
    %v5224 = vsel %vm321, %v5197, 0
    %v5227 = vsel %vm321, %v5198, 0
    %v5230 = vsel %vm321, %v5199, 0
    %v5233 = vsel %vm321, %v5200, 0
    %v5236 = vsel %vm321, %v5201, 0
    %v5239 = vsel %vm321, %v5202, 0
    %v5242 = vsel %vm321, %v5203, 0
    %v5245 = vsel %vm321, %v5204, 0
    %v5248 = vsel %vm321, %v5205, 0
    %v5251 = vsel %vm321, %v5206, 0
    %v5254 = vsel %vm321, %v5207, 0
    %5256 = vmatpush.msra.mxu0 0.0
    %5257 = vmatpush.msra.mxu0 0.0
    %5258 = vmatpush.msra.mxu0 0.0
    %5259 = vmatpush.msra.mxu0 0.0
    %5260 = vmatpush.msra.mxu0 0.0
    %5261 = vmatpush.msra.mxu0 0.0
    %5262 = vmatpush.msra.mxu0 0.0
    %5263 = vmatpush.msra.mxu0 0.0
    %5264 = vmatpush.msra.mxu0 %v688
    %5265 = vmatpush.msra.mxu0 %v687
    %5266 = vmatpush.msra.mxu0 %v686
    %5267 = vmatpush.msra.mxu0 %v685
    %5268 = vmatpush.msra.mxu0 %v684
    %5269 = vmatpush.msra.mxu0 %v683
    %5270 = vmatpush.msra.mxu0 %v682
    %5271 = vmatpush.msra.mxu0 %v681
    %5272 = vmatmul.f32.gmra.mxu0 %v5209
    %v5273 = vpop.f32.mrf.mxu0
    %v5274 = vadd.f32 0.0, %v5273
    %5275 = vmatmul.f32.gmra.mxu0 %v5212
    %v5276 = vpop.f32.mrf.mxu0
    %v5277 = vadd.f32 0.0, %v5276
    %5278 = vmatmul.f32.gmra.mxu0 %v5215
    %v5279 = vpop.f32.mrf.mxu0
    %v5280 = vadd.f32 0.0, %v5279
    %5281 = vmatmul.f32.gmra.mxu0 %v5218
    %v5282 = vpop.f32.mrf.mxu0
    %v5283 = vadd.f32 0.0, %v5282
    %5284 = vmatmul.f32.gmra.mxu0 %v5221
    %v5285 = vpop.f32.mrf.mxu0
    %v5286 = vadd.f32 0.0, %v5285
    %5287 = vmatmul.f32.gmra.mxu0 %v5224
    %v5288 = vpop.f32.mrf.mxu0
    %v5289 = vadd.f32 0.0, %v5288
    %5290 = vmatmul.f32.gmra.mxu0 %v5227
    %v5291 = vpop.f32.mrf.mxu0
    %v5292 = vadd.f32 0.0, %v5291
    %5293 = vmatmul.f32.gmra.mxu0 %v5230
    %v5294 = vpop.f32.mrf.mxu0
    %v5295 = vadd.f32 0.0, %v5294
    %5296 = vmatmul.f32.gmra.mxu0 %v5233
    %v5297 = vpop.f32.mrf.mxu0
    %v5298 = vadd.f32 0.0, %v5297
    %5299 = vmatmul.f32.gmra.mxu0 %v5236
    %v5300 = vpop.f32.mrf.mxu0
    %v5301 = vadd.f32 0.0, %v5300
    %5302 = vmatmul.f32.gmra.mxu0 %v5239
    %v5303 = vpop.f32.mrf.mxu0
    %v5304 = vadd.f32 0.0, %v5303
    %5305 = vmatmul.f32.gmra.mxu0 %v5242
    %v5306 = vpop.f32.mrf.mxu0
    %v5307 = vadd.f32 0.0, %v5306
    %5308 = vmatmul.f32.gmra.mxu0 %v5245
    %v5309 = vpop.f32.mrf.mxu0
    %v5310 = vadd.f32 0.0, %v5309
    %5311 = vmatmul.f32.gmra.mxu0 %v5248
    %v5312 = vpop.f32.mrf.mxu0
    %v5313 = vadd.f32 0.0, %v5312
    %5314 = vmatmul.f32.gmra.mxu0 %v5251
    %v5315 = vpop.f32.mrf.mxu0
    %v5316 = vadd.f32 0.0, %v5315
    %5317 = vmatmul.f32.gmra.mxu0 %v5254
    %v5318 = vpop.f32.mrf.mxu0
    %v5319 = vadd.f32 0.0, %v5318
    %5320 = vdwg.mxu0
    %v5321 = vmul.f32 %v5188, %v665
    %v5322 = vmul.f32 %v5189, %v666
    %v5323 = vmul.f32 %v5188, %v667
    %v5324 = vmul.f32 %v5189, %v668
    %v5325 = vmul.f32 %v5188, %v669
    %v5326 = vmul.f32 %v5189, %v670
    %v5327 = vmul.f32 %v5188, %v671
    %v5328 = vmul.f32 %v5189, %v672
    %v5329 = vmul.f32 %v5188, %v673
    %v5330 = vmul.f32 %v5189, %v674
    %v5331 = vmul.f32 %v5188, %v675
    %v5332 = vmul.f32 %v5189, %v676
    %v5333 = vmul.f32 %v5188, %v677
    %v5334 = vmul.f32 %v5189, %v678
    %v5335 = vmul.f32 %v5188, %v679
    %v5336 = vmul.f32 %v5189, %v680
    %v5338 = vsel %vm321, %v5274, 0
    %v5341 = vsel %vm321, %v5277, 0
    %v5344 = vsel %vm321, %v5280, 0
    %v5347 = vsel %vm321, %v5283, 0
    %v5350 = vsel %vm321, %v5286, 0
    %v5353 = vsel %vm321, %v5289, 0
    %v5356 = vsel %vm321, %v5292, 0
    %v5359 = vsel %vm321, %v5295, 0
    %v5362 = vsel %vm321, %v5298, 0
    %v5365 = vsel %vm321, %v5301, 0
    %v5368 = vsel %vm321, %v5304, 0
    %v5371 = vsel %vm321, %v5307, 0
    %v5374 = vsel %vm321, %v5310, 0
    %v5377 = vsel %vm321, %v5313, 0
    %v5380 = vsel %vm321, %v5316, 0
    %v5383 = vsel %vm321, %v5319, 0
    %v5386 = vsel %vm321, %v5321, 0
    %v5389 = vsel %vm321, %v5322, 0
    %v5392 = vsel %vm321, %v5323, 0
    %v5395 = vsel %vm321, %v5324, 0
    %v5398 = vsel %vm321, %v5325, 0
    %v5401 = vsel %vm321, %v5326, 0
    %v5404 = vsel %vm321, %v5327, 0
    %v5407 = vsel %vm321, %v5328, 0
    %v5410 = vsel %vm321, %v5329, 0
    %v5413 = vsel %vm321, %v5330, 0
    %v5416 = vsel %vm321, %v5331, 0
    %v5419 = vsel %vm321, %v5332, 0
    %v5422 = vsel %vm321, %v5333, 0
    %v5425 = vsel %vm321, %v5334, 0
    %v5428 = vsel %vm321, %v5335, 0
    %v5431 = vsel %vm321, %v5336, 0
    %5433 = vmatpush.xpose.msra.mxu0 %v5431
    %5434 = vmatpush.xpose.msra.mxu0 %v5428
    %5435 = vmatpush.xpose.msra.mxu0 %v5425
    %5436 = vmatpush.xpose.msra.mxu0 %v5422
    %5437 = vmatpush.xpose.msra.mxu0 %v5419
    %5438 = vmatpush.xpose.msra.mxu0 %v5416
    %5439 = vmatpush.xpose.msra.mxu0 %v5413
    %5440 = vmatpush.xpose.msra.mxu0 %v5410
    %5441 = vmatpush.xpose.msra.mxu0 %v5407
    %5442 = vmatpush.xpose.msra.mxu0 %v5404
    %5443 = vmatpush.xpose.msra.mxu0 %v5401
    %5444 = vmatpush.xpose.msra.mxu0 %v5398
    %5445 = vmatpush.xpose.msra.mxu0 %v5395
    %5446 = vmatpush.xpose.msra.mxu0 %v5392
    %5447 = vmatpush.xpose.msra.mxu0 %v5389
    %5448 = vmatpush.xpose.msra.mxu0 %v5386
    %5449 = vmatmul.f32.gmra.mxu0 %v5338
    %v5450 = vpop.f32.mrf.mxu0
    %v5451 = vadd.f32 0.0, %v5450
    %5452 = vmatmul.f32.gmra.mxu0 %v5341
    %v5453 = vpop.f32.mrf.mxu0
    %v5454 = vadd.f32 0.0, %v5453
    %5455 = vmatmul.f32.gmra.mxu0 %v5344
    %v5456 = vpop.f32.mrf.mxu0
    %v5457 = vadd.f32 0.0, %v5456
    %5458 = vmatmul.f32.gmra.mxu0 %v5347
    %v5459 = vpop.f32.mrf.mxu0
    %v5460 = vadd.f32 0.0, %v5459
    %5461 = vmatmul.f32.gmra.mxu0 %v5350
    %v5462 = vpop.f32.mrf.mxu0
    %v5463 = vadd.f32 0.0, %v5462
    %5464 = vmatmul.f32.gmra.mxu0 %v5353
    %v5465 = vpop.f32.mrf.mxu0
    %v5466 = vadd.f32 0.0, %v5465
    %5467 = vmatmul.f32.gmra.mxu0 %v5356
    %v5468 = vpop.f32.mrf.mxu0
    %v5469 = vadd.f32 0.0, %v5468
    %5470 = vmatmul.f32.gmra.mxu0 %v5359
    %v5471 = vpop.f32.mrf.mxu0
    %v5472 = vadd.f32 0.0, %v5471
    %5473 = vmatmul.f32.gmra.mxu0 %v5362
    %v5474 = vpop.f32.mrf.mxu0
    %v5475 = vadd.f32 0.0, %v5474
    %5476 = vmatmul.f32.gmra.mxu0 %v5365
    %v5477 = vpop.f32.mrf.mxu0
    %v5478 = vadd.f32 0.0, %v5477
    %5479 = vmatmul.f32.gmra.mxu0 %v5368
    %v5480 = vpop.f32.mrf.mxu0
    %v5481 = vadd.f32 0.0, %v5480
    %5482 = vmatmul.f32.gmra.mxu0 %v5371
    %v5483 = vpop.f32.mrf.mxu0
    %v5484 = vadd.f32 0.0, %v5483
    %5485 = vmatmul.f32.gmra.mxu0 %v5374
    %v5486 = vpop.f32.mrf.mxu0
    %v5487 = vadd.f32 0.0, %v5486
    %5488 = vmatmul.f32.gmra.mxu0 %v5377
    %v5489 = vpop.f32.mrf.mxu0
    %v5490 = vadd.f32 0.0, %v5489
    %5491 = vmatmul.f32.gmra.mxu0 %v5380
    %v5492 = vpop.f32.mrf.mxu0
    %v5493 = vadd.f32 0.0, %v5492
    %5494 = vmatmul.f32.gmra.mxu0 %v5383
    %v5495 = vpop.f32.mrf.mxu0
    %v5496 = vadd.f32 0.0, %v5495
    %5497 = vdwg.mxu0
    %5498 = vmax.xlane.f32.xlu0 %v5451
    %v5499 = vpop.xlane.xlu0 %5498
    %5500 = vmax.xlane.f32.xlu0 %v5454
    %v5501 = vpop.xlane.xlu0 %5500
    %5502 = vmax.xlane.f32.xlu0 %v5457
    %v5503 = vpop.xlane.xlu0 %5502
    %5504 = vmax.xlane.f32.xlu0 %v5460
    %v5505 = vpop.xlane.xlu0 %5504
    %5506 = vmax.xlane.f32.xlu0 %v5463
    %v5507 = vpop.xlane.xlu0 %5506
    %5508 = vmax.xlane.f32.xlu0 %v5466
    %v5509 = vpop.xlane.xlu0 %5508
    %5510 = vmax.xlane.f32.xlu0 %v5469
    %v5511 = vpop.xlane.xlu0 %5510
    %5512 = vmax.xlane.f32.xlu0 %v5472
    %v5513 = vpop.xlane.xlu0 %5512
    %5514 = vmax.xlane.f32.xlu0 %v5475
    %v5515 = vpop.xlane.xlu0 %5514
    %5516 = vmax.xlane.f32.xlu0 %v5478
    %v5517 = vpop.xlane.xlu0 %5516
    %5518 = vmax.xlane.f32.xlu0 %v5481
    %v5519 = vpop.xlane.xlu0 %5518
    %5520 = vmax.xlane.f32.xlu0 %v5484
    %v5521 = vpop.xlane.xlu0 %5520
    %5522 = vmax.xlane.f32.xlu0 %v5487
    %v5523 = vpop.xlane.xlu0 %5522
    %5524 = vmax.xlane.f32.xlu0 %v5490
    %v5525 = vpop.xlane.xlu0 %5524
    %5526 = vmax.xlane.f32.xlu0 %v5493
    %v5527 = vpop.xlane.xlu0 %5526
    %5528 = vmax.xlane.f32.xlu0 %v5496
    %v5529 = vpop.xlane.xlu0 %5528
    %v5530 = vsub.f32 %v5451, %v5499
    %v5531 = vsub.f32 %v5454, %v5501
    %v5532 = vsub.f32 %v5457, %v5503
    %v5533 = vsub.f32 %v5460, %v5505
    %v5534 = vsub.f32 %v5463, %v5507
    %v5535 = vsub.f32 %v5466, %v5509
    %v5536 = vsub.f32 %v5469, %v5511
    %v5537 = vsub.f32 %v5472, %v5513
    %v5538 = vsub.f32 %v5475, %v5515
    %v5539 = vsub.f32 %v5478, %v5517
    %v5540 = vsub.f32 %v5481, %v5519
    %v5541 = vsub.f32 %v5484, %v5521
    %v5542 = vsub.f32 %v5487, %v5523
    %v5543 = vsub.f32 %v5490, %v5525
    %v5544 = vsub.f32 %v5493, %v5527
    %v5545 = vsub.f32 %v5496, %v5529
    %v5546 = vmul.f32 %v5530, 1.442695
    %v5547 = vpow.pop %v5546
    %v5548 = vmul.f32 %v5531, 1.442695
    %v5549 = vpow.pop %v5548
    %v5550 = vmul.f32 %v5532, 1.442695
    %v5551 = vpow.pop %v5550
    %v5552 = vmul.f32 %v5533, 1.442695
    %v5553 = vpow.pop %v5552
    %v5554 = vmul.f32 %v5534, 1.442695
    %v5555 = vpow.pop %v5554
    %v5556 = vmul.f32 %v5535, 1.442695
    %v5557 = vpow.pop %v5556
    %v5558 = vmul.f32 %v5536, 1.442695
    %v5559 = vpow.pop %v5558
    %v5560 = vmul.f32 %v5537, 1.442695
    %v5561 = vpow.pop %v5560
    %v5562 = vmul.f32 %v5538, 1.442695
    %v5563 = vpow.pop %v5562
    %v5564 = vmul.f32 %v5539, 1.442695
    %v5565 = vpow.pop %v5564
    %v5566 = vmul.f32 %v5540, 1.442695
    %v5567 = vpow.pop %v5566
    %v5568 = vmul.f32 %v5541, 1.442695
    %v5569 = vpow.pop %v5568
    %v5570 = vmul.f32 %v5542, 1.442695
    %v5571 = vpow.pop %v5570
    %v5572 = vmul.f32 %v5543, 1.442695
    %v5573 = vpow.pop %v5572
    %v5574 = vmul.f32 %v5544, 1.442695
    %v5575 = vpow.pop %v5574
    %v5576 = vmul.f32 %v5545, 1.442695
    %v5577 = vpow.pop %v5576
    %5578 = vadd.xlane.f32.xlu0 %v5547
    %v5579 = vpop.xlane.xlu0 %5578
    %5580 = vadd.xlane.f32.xlu0 %v5549
    %v5581 = vpop.xlane.xlu0 %5580
    %5582 = vadd.xlane.f32.xlu0 %v5551
    %v5583 = vpop.xlane.xlu0 %5582
    %5584 = vadd.xlane.f32.xlu0 %v5553
    %v5585 = vpop.xlane.xlu0 %5584
    %5586 = vadd.xlane.f32.xlu0 %v5555
    %v5587 = vpop.xlane.xlu0 %5586
    %5588 = vadd.xlane.f32.xlu0 %v5557
    %v5589 = vpop.xlane.xlu0 %5588
    %5590 = vadd.xlane.f32.xlu0 %v5559
    %v5591 = vpop.xlane.xlu0 %5590
    %5592 = vadd.xlane.f32.xlu0 %v5561
    %v5593 = vpop.xlane.xlu0 %5592
    %5594 = vadd.xlane.f32.xlu0 %v5563
    %v5595 = vpop.xlane.xlu0 %5594
    %5596 = vadd.xlane.f32.xlu0 %v5565
    %v5597 = vpop.xlane.xlu0 %5596
    %5598 = vadd.xlane.f32.xlu0 %v5567
    %v5599 = vpop.xlane.xlu0 %5598
    %5600 = vadd.xlane.f32.xlu0 %v5569
    %v5601 = vpop.xlane.xlu0 %5600
    %5602 = vadd.xlane.f32.xlu0 %v5571
    %v5603 = vpop.xlane.xlu0 %5602
    %5604 = vadd.xlane.f32.xlu0 %v5573
    %v5605 = vpop.xlane.xlu0 %5604
    %5606 = vadd.xlane.f32.xlu0 %v5575
    %v5607 = vpop.xlane.xlu0 %5606
    %5608 = vadd.xlane.f32.xlu0 %v5577
    %v5609 = vpop.xlane.xlu0 %5608
    %v5610 = vrcp.pop %v5579
    %v5611 = vmul.f32 %v5579, %v5610
    %v5612 = vsub.f32 1.0, %v5611
    %v5613 = vmul.f32 %v5610, %v5612
    %v5614 = vadd.f32 %v5610, %v5613
    %vm5615 = vweird.f32 %v5579
    %vm5616 = vweird.f32 %v5610
    %vm5617 = vmor %vm5615, %vm5616
    %v5618 = vsel %vm5617, %v5610, %v5614
    %v5619 = vand.u32 2147483647, %v5579
    %vm5620 = vcmp.eq.f32.partialorder %v5619, 8.507059e+37
    %v5621 = vand.u32 %v5579, 2147483648
    %v5622 = vor.u32 1.1754944e-38, %v5621
    %v5623 = vsel %vm5620, %v5622, %v5618
    %v5624 = vmul.f32 %v5547, %v5623
    %v5625 = vrcp.pop %v5581
    %v5626 = vmul.f32 %v5581, %v5625
    %v5627 = vsub.f32 1.0, %v5626
    %v5628 = vmul.f32 %v5625, %v5627
    %v5629 = vadd.f32 %v5625, %v5628
    %vm5630 = vweird.f32 %v5581
    %vm5631 = vweird.f32 %v5625
    %vm5632 = vmor %vm5630, %vm5631
    %v5633 = vsel %vm5632, %v5625, %v5629
    %v5634 = vand.u32 2147483647, %v5581
    %vm5635 = vcmp.eq.f32.partialorder %v5634, 8.507059e+37
    %v5636 = vand.u32 %v5581, 2147483648
    %v5637 = vor.u32 1.1754944e-38, %v5636
    %v5638 = vsel %vm5635, %v5637, %v5633
    %v5639 = vmul.f32 %v5549, %v5638
    %v5640 = vrcp.pop %v5583
    %v5641 = vmul.f32 %v5583, %v5640
    %v5642 = vsub.f32 1.0, %v5641
    %v5643 = vmul.f32 %v5640, %v5642
    %v5644 = vadd.f32 %v5640, %v5643
    %vm5645 = vweird.f32 %v5583
    %vm5646 = vweird.f32 %v5640
    %vm5647 = vmor %vm5645, %vm5646
    %v5648 = vsel %vm5647, %v5640, %v5644
    %v5649 = vand.u32 2147483647, %v5583
    %vm5650 = vcmp.eq.f32.partialorder %v5649, 8.507059e+37
    %v5651 = vand.u32 %v5583, 2147483648
    %v5652 = vor.u32 1.1754944e-38, %v5651
    %v5653 = vsel %vm5650, %v5652, %v5648
    %v5654 = vmul.f32 %v5551, %v5653
    %v5655 = vrcp.pop %v5585
    %v5656 = vmul.f32 %v5585, %v5655
    %v5657 = vsub.f32 1.0, %v5656
    %v5658 = vmul.f32 %v5655, %v5657
    %v5659 = vadd.f32 %v5655, %v5658
    %vm5660 = vweird.f32 %v5585
    %vm5661 = vweird.f32 %v5655
    %vm5662 = vmor %vm5660, %vm5661
    %v5663 = vsel %vm5662, %v5655, %v5659
    %v5664 = vand.u32 2147483647, %v5585
    %vm5665 = vcmp.eq.f32.partialorder %v5664, 8.507059e+37
    %v5666 = vand.u32 %v5585, 2147483648
    %v5667 = vor.u32 1.1754944e-38, %v5666
    %v5668 = vsel %vm5665, %v5667, %v5663
    %v5669 = vmul.f32 %v5553, %v5668
    %v5670 = vrcp.pop %v5587
    %v5671 = vmul.f32 %v5587, %v5670
    %v5672 = vsub.f32 1.0, %v5671
    %v5673 = vmul.f32 %v5670, %v5672
    %v5674 = vadd.f32 %v5670, %v5673
    %vm5675 = vweird.f32 %v5587
    %vm5676 = vweird.f32 %v5670
    %vm5677 = vmor %vm5675, %vm5676
    %v5678 = vsel %vm5677, %v5670, %v5674
    %v5679 = vand.u32 2147483647, %v5587
    %vm5680 = vcmp.eq.f32.partialorder %v5679, 8.507059e+37
    %v5681 = vand.u32 %v5587, 2147483648
    %v5682 = vor.u32 1.1754944e-38, %v5681
    %v5683 = vsel %vm5680, %v5682, %v5678
    %v5684 = vmul.f32 %v5555, %v5683
    %v5685 = vrcp.pop %v5589
    %v5686 = vmul.f32 %v5589, %v5685
    %v5687 = vsub.f32 1.0, %v5686
    %v5688 = vmul.f32 %v5685, %v5687
    %v5689 = vadd.f32 %v5685, %v5688
    %vm5690 = vweird.f32 %v5589
    %vm5691 = vweird.f32 %v5685
    %vm5692 = vmor %vm5690, %vm5691
    %v5693 = vsel %vm5692, %v5685, %v5689
    %v5694 = vand.u32 2147483647, %v5589
    %vm5695 = vcmp.eq.f32.partialorder %v5694, 8.507059e+37
    %v5696 = vand.u32 %v5589, 2147483648
    %v5697 = vor.u32 1.1754944e-38, %v5696
    %v5698 = vsel %vm5695, %v5697, %v5693
    %v5699 = vmul.f32 %v5557, %v5698
    %v5700 = vrcp.pop %v5591
    %v5701 = vmul.f32 %v5591, %v5700
    %v5702 = vsub.f32 1.0, %v5701
    %v5703 = vmul.f32 %v5700, %v5702
    %v5704 = vadd.f32 %v5700, %v5703
    %vm5705 = vweird.f32 %v5591
    %vm5706 = vweird.f32 %v5700
    %vm5707 = vmor %vm5705, %vm5706
    %v5708 = vsel %vm5707, %v5700, %v5704
    %v5709 = vand.u32 2147483647, %v5591
    %vm5710 = vcmp.eq.f32.partialorder %v5709, 8.507059e+37
    %v5711 = vand.u32 %v5591, 2147483648
    %v5712 = vor.u32 1.1754944e-38, %v5711
    %v5713 = vsel %vm5710, %v5712, %v5708
    %v5714 = vmul.f32 %v5559, %v5713
    %v5715 = vrcp.pop %v5593
    %v5716 = vmul.f32 %v5593, %v5715
    %v5717 = vsub.f32 1.0, %v5716
    %v5718 = vmul.f32 %v5715, %v5717
    %v5719 = vadd.f32 %v5715, %v5718
    %vm5720 = vweird.f32 %v5593
    %vm5721 = vweird.f32 %v5715
    %vm5722 = vmor %vm5720, %vm5721
    %v5723 = vsel %vm5722, %v5715, %v5719
    %v5724 = vand.u32 2147483647, %v5593
    %vm5725 = vcmp.eq.f32.partialorder %v5724, 8.507059e+37
    %v5726 = vand.u32 %v5593, 2147483648
    %v5727 = vor.u32 1.1754944e-38, %v5726
    %v5728 = vsel %vm5725, %v5727, %v5723
    %v5729 = vmul.f32 %v5561, %v5728
    %v5730 = vrcp.pop %v5595
    %v5731 = vmul.f32 %v5595, %v5730
    %v5732 = vsub.f32 1.0, %v5731
    %v5733 = vmul.f32 %v5730, %v5732
    %v5734 = vadd.f32 %v5730, %v5733
    %vm5735 = vweird.f32 %v5595
    %vm5736 = vweird.f32 %v5730
    %vm5737 = vmor %vm5735, %vm5736
    %v5738 = vsel %vm5737, %v5730, %v5734
    %v5739 = vand.u32 2147483647, %v5595
    %vm5740 = vcmp.eq.f32.partialorder %v5739, 8.507059e+37
    %v5741 = vand.u32 %v5595, 2147483648
    %v5742 = vor.u32 1.1754944e-38, %v5741
    %v5743 = vsel %vm5740, %v5742, %v5738
    %v5744 = vmul.f32 %v5563, %v5743
    %v5745 = vrcp.pop %v5597
    %v5746 = vmul.f32 %v5597, %v5745
    %v5747 = vsub.f32 1.0, %v5746
    %v5748 = vmul.f32 %v5745, %v5747
    %v5749 = vadd.f32 %v5745, %v5748
    %vm5750 = vweird.f32 %v5597
    %vm5751 = vweird.f32 %v5745
    %vm5752 = vmor %vm5750, %vm5751
    %v5753 = vsel %vm5752, %v5745, %v5749
    %v5754 = vand.u32 2147483647, %v5597
    %vm5755 = vcmp.eq.f32.partialorder %v5754, 8.507059e+37
    %v5756 = vand.u32 %v5597, 2147483648
    %v5757 = vor.u32 1.1754944e-38, %v5756
    %v5758 = vsel %vm5755, %v5757, %v5753
    %v5759 = vmul.f32 %v5565, %v5758
    %v5760 = vrcp.pop %v5599
    %v5761 = vmul.f32 %v5599, %v5760
    %v5762 = vsub.f32 1.0, %v5761
    %v5763 = vmul.f32 %v5760, %v5762
    %v5764 = vadd.f32 %v5760, %v5763
    %vm5765 = vweird.f32 %v5599
    %vm5766 = vweird.f32 %v5760
    %vm5767 = vmor %vm5765, %vm5766
    %v5768 = vsel %vm5767, %v5760, %v5764
    %v5769 = vand.u32 2147483647, %v5599
    %vm5770 = vcmp.eq.f32.partialorder %v5769, 8.507059e+37
    %v5771 = vand.u32 %v5599, 2147483648
    %v5772 = vor.u32 1.1754944e-38, %v5771
    %v5773 = vsel %vm5770, %v5772, %v5768
    %v5774 = vmul.f32 %v5567, %v5773
    %v5775 = vrcp.pop %v5601
    %v5776 = vmul.f32 %v5601, %v5775
    %v5777 = vsub.f32 1.0, %v5776
    %v5778 = vmul.f32 %v5775, %v5777
    %v5779 = vadd.f32 %v5775, %v5778
    %vm5780 = vweird.f32 %v5601
    %vm5781 = vweird.f32 %v5775
    %vm5782 = vmor %vm5780, %vm5781
    %v5783 = vsel %vm5782, %v5775, %v5779
    %v5784 = vand.u32 2147483647, %v5601
    %vm5785 = vcmp.eq.f32.partialorder %v5784, 8.507059e+37
    %v5786 = vand.u32 %v5601, 2147483648
    %v5787 = vor.u32 1.1754944e-38, %v5786
    %v5788 = vsel %vm5785, %v5787, %v5783
    %v5789 = vmul.f32 %v5569, %v5788
    %v5790 = vrcp.pop %v5603
    %v5791 = vmul.f32 %v5603, %v5790
    %v5792 = vsub.f32 1.0, %v5791
    %v5793 = vmul.f32 %v5790, %v5792
    %v5794 = vadd.f32 %v5790, %v5793
    %vm5795 = vweird.f32 %v5603
    %vm5796 = vweird.f32 %v5790
    %vm5797 = vmor %vm5795, %vm5796
    %v5798 = vsel %vm5797, %v5790, %v5794
    %v5799 = vand.u32 2147483647, %v5603
    %vm5800 = vcmp.eq.f32.partialorder %v5799, 8.507059e+37
    %v5801 = vand.u32 %v5603, 2147483648
    %v5802 = vor.u32 1.1754944e-38, %v5801
    %v5803 = vsel %vm5800, %v5802, %v5798
    %v5804 = vmul.f32 %v5571, %v5803
    %v5805 = vrcp.pop %v5605
    %v5806 = vmul.f32 %v5605, %v5805
    %v5807 = vsub.f32 1.0, %v5806
    %v5808 = vmul.f32 %v5805, %v5807
    %v5809 = vadd.f32 %v5805, %v5808
    %vm5810 = vweird.f32 %v5605
    %vm5811 = vweird.f32 %v5805
    %vm5812 = vmor %vm5810, %vm5811
    %v5813 = vsel %vm5812, %v5805, %v5809
    %v5814 = vand.u32 2147483647, %v5605
    %vm5815 = vcmp.eq.f32.partialorder %v5814, 8.507059e+37
    %v5816 = vand.u32 %v5605, 2147483648
    %v5817 = vor.u32 1.1754944e-38, %v5816
    %v5818 = vsel %vm5815, %v5817, %v5813
    %v5819 = vmul.f32 %v5573, %v5818
    %v5820 = vrcp.pop %v5607
    %v5821 = vmul.f32 %v5607, %v5820
    %v5822 = vsub.f32 1.0, %v5821
    %v5823 = vmul.f32 %v5820, %v5822
    %v5824 = vadd.f32 %v5820, %v5823
    %vm5825 = vweird.f32 %v5607
    %vm5826 = vweird.f32 %v5820
    %vm5827 = vmor %vm5825, %vm5826
    %v5828 = vsel %vm5827, %v5820, %v5824
    %v5829 = vand.u32 2147483647, %v5607
    %vm5830 = vcmp.eq.f32.partialorder %v5829, 8.507059e+37
    %v5831 = vand.u32 %v5607, 2147483648
    %v5832 = vor.u32 1.1754944e-38, %v5831
    %v5833 = vsel %vm5830, %v5832, %v5828
    %v5834 = vmul.f32 %v5575, %v5833
    %v5835 = vrcp.pop %v5609
    %v5836 = vmul.f32 %v5609, %v5835
    %v5837 = vsub.f32 1.0, %v5836
    %v5838 = vmul.f32 %v5835, %v5837
    %v5839 = vadd.f32 %v5835, %v5838
    %vm5840 = vweird.f32 %v5609
    %vm5841 = vweird.f32 %v5835
    %vm5842 = vmor %vm5840, %vm5841
    %v5843 = vsel %vm5842, %v5835, %v5839
    %v5844 = vand.u32 2147483647, %v5609
    %vm5845 = vcmp.eq.f32.partialorder %v5844, 8.507059e+37
    %v5846 = vand.u32 %v5609, 2147483648
    %v5847 = vor.u32 1.1754944e-38, %v5846
    %v5848 = vsel %vm5845, %v5847, %v5843
    %v5849 = vmul.f32 %v5577, %v5848
    %v5850 = vmul.f32 %v5190, %v665
    %v5851 = vmul.f32 %v5191, %v666
    %v5852 = vmul.f32 %v5190, %v667
    %v5853 = vmul.f32 %v5191, %v668
    %v5854 = vmul.f32 %v5190, %v669
    %v5855 = vmul.f32 %v5191, %v670
    %v5856 = vmul.f32 %v5190, %v671
    %v5857 = vmul.f32 %v5191, %v672
    %v5858 = vmul.f32 %v5190, %v673
    %v5859 = vmul.f32 %v5191, %v674
    %v5860 = vmul.f32 %v5190, %v675
    %v5861 = vmul.f32 %v5191, %v676
    %v5862 = vmul.f32 %v5190, %v677
    %v5863 = vmul.f32 %v5191, %v678
    %v5864 = vmul.f32 %v5190, %v679
    %v5865 = vmul.f32 %v5191, %v680
    %5866 = vmatpush.msra.mxu0 %v5865
    %5867 = vmatpush.msra.mxu0 %v5864
    %5868 = vmatpush.msra.mxu0 %v5863
    %5869 = vmatpush.msra.mxu0 %v5862
    %5870 = vmatpush.msra.mxu0 %v5861
    %5871 = vmatpush.msra.mxu0 %v5860
    %5872 = vmatpush.msra.mxu0 %v5859
    %5873 = vmatpush.msra.mxu0 %v5858
    %5874 = vmatpush.msra.mxu0 %v5857
    %5875 = vmatpush.msra.mxu0 %v5856
    %5876 = vmatpush.msra.mxu0 %v5855
    %5877 = vmatpush.msra.mxu0 %v5854
    %5878 = vmatpush.msra.mxu0 %v5853
    %5879 = vmatpush.msra.mxu0 %v5852
    %5880 = vmatpush.msra.mxu0 %v5851
    %5881 = vmatpush.msra.mxu0 %v5850
    %5882 = vmatmul.f32.gmra.mxu0 %v5624
    %v5883 = vpop.f32.mrf.mxu0
    %v5884 = vadd.f32 0.0, %v5883
    %5885 = vmatmul.f32.gmra.mxu0 %v5639
    %v5886 = vpop.f32.mrf.mxu0
    %v5887 = vadd.f32 0.0, %v5886
    %5888 = vmatmul.f32.gmra.mxu0 %v5654
    %v5889 = vpop.f32.mrf.mxu0
    %v5890 = vadd.f32 0.0, %v5889
    %5891 = vmatmul.f32.gmra.mxu0 %v5669
    %v5892 = vpop.f32.mrf.mxu0
    %v5893 = vadd.f32 0.0, %v5892
    %5894 = vmatmul.f32.gmra.mxu0 %v5684
    %v5895 = vpop.f32.mrf.mxu0
    %v5896 = vadd.f32 0.0, %v5895
    %5897 = vmatmul.f32.gmra.mxu0 %v5699
    %v5898 = vpop.f32.mrf.mxu0
    %v5899 = vadd.f32 0.0, %v5898
    %5900 = vmatmul.f32.gmra.mxu0 %v5714
    %v5901 = vpop.f32.mrf.mxu0
    %v5902 = vadd.f32 0.0, %v5901
    %5903 = vmatmul.f32.gmra.mxu0 %v5729
    %v5904 = vpop.f32.mrf.mxu0
    %v5905 = vadd.f32 0.0, %v5904
    %5906 = vmatmul.f32.gmra.mxu0 %v5744
    %v5907 = vpop.f32.mrf.mxu0
    %v5908 = vadd.f32 0.0, %v5907
    %5909 = vmatmul.f32.gmra.mxu0 %v5759
    %v5910 = vpop.f32.mrf.mxu0
    %v5911 = vadd.f32 0.0, %v5910
    %5912 = vmatmul.f32.gmra.mxu0 %v5774
    %v5913 = vpop.f32.mrf.mxu0
    %v5914 = vadd.f32 0.0, %v5913
    %5915 = vmatmul.f32.gmra.mxu0 %v5789
    %v5916 = vpop.f32.mrf.mxu0
    %v5917 = vadd.f32 0.0, %v5916
    %5918 = vmatmul.f32.gmra.mxu0 %v5804
    %v5919 = vpop.f32.mrf.mxu0
    %v5920 = vadd.f32 0.0, %v5919
    %5921 = vmatmul.f32.gmra.mxu0 %v5819
    %v5922 = vpop.f32.mrf.mxu0
    %v5923 = vadd.f32 0.0, %v5922
    %5924 = vmatmul.f32.gmra.mxu0 %v5834
    %v5925 = vpop.f32.mrf.mxu0
    %v5926 = vadd.f32 0.0, %v5925
    %5927 = vmatmul.f32.gmra.mxu0 %v5849
    %v5928 = vpop.f32.mrf.mxu0
    %v5929 = vadd.f32 0.0, %v5928
    %5930 = vdwg.mxu0
    %v5932 = vsel %vm321, %v5884, 0
    %v5935 = vsel %vm321, %v5887, 0
    %v5938 = vsel %vm321, %v5890, 0
    %v5941 = vsel %vm321, %v5893, 0
    %v5944 = vsel %vm321, %v5896, 0
    %v5947 = vsel %vm321, %v5899, 0
    %v5950 = vsel %vm321, %v5902, 0
    %v5953 = vsel %vm321, %v5905, 0
    %v5956 = vsel %vm321, %v5908, 0
    %v5959 = vsel %vm321, %v5911, 0
    %v5962 = vsel %vm321, %v5914, 0
    %v5965 = vsel %vm321, %v5917, 0
    %v5968 = vsel %vm321, %v5920, 0
    %v5971 = vsel %vm321, %v5923, 0
    %v5974 = vsel %vm321, %v5926, 0
    %v5977 = vsel %vm321, %v5929, 0
    %5979 = vmatpush.msra.mxu0 0.0
    %5980 = vmatpush.msra.mxu0 0.0
    %5981 = vmatpush.msra.mxu0 0.0
    %5982 = vmatpush.msra.mxu0 0.0
    %5983 = vmatpush.msra.mxu0 0.0
    %5984 = vmatpush.msra.mxu0 0.0
    %5985 = vmatpush.msra.mxu0 0.0
    %5986 = vmatpush.msra.mxu0 0.0
    %5987 = vmatpush.msra.mxu0 %v688
    %5988 = vmatpush.msra.mxu0 %v687
    %5989 = vmatpush.msra.mxu0 %v686
    %5990 = vmatpush.msra.mxu0 %v685
    %5991 = vmatpush.msra.mxu0 %v684
    %5992 = vmatpush.msra.mxu0 %v683
    %5993 = vmatpush.msra.mxu0 %v682
    %5994 = vmatpush.msra.mxu0 %v681
    %5995 = vmatmul.f32.gmra.mxu0 %v5932
    %v5996 = vpop.f32.mrf.mxu0
    %v5997 = vadd.f32 0.0, %v5996
    %5998 = vmatmul.f32.gmra.mxu0 %v5935
    %v5999 = vpop.f32.mrf.mxu0
    %v6000 = vadd.f32 0.0, %v5999
    %6001 = vmatmul.f32.gmra.mxu0 %v5938
    %v6002 = vpop.f32.mrf.mxu0
    %v6003 = vadd.f32 0.0, %v6002
    %6004 = vmatmul.f32.gmra.mxu0 %v5941
    %v6005 = vpop.f32.mrf.mxu0
    %v6006 = vadd.f32 0.0, %v6005
    %6007 = vmatmul.f32.gmra.mxu0 %v5944
    %v6008 = vpop.f32.mrf.mxu0
    %v6009 = vadd.f32 0.0, %v6008
    %6010 = vmatmul.f32.gmra.mxu0 %v5947
    %v6011 = vpop.f32.mrf.mxu0
    %v6012 = vadd.f32 0.0, %v6011
    %6013 = vmatmul.f32.gmra.mxu0 %v5950
    %v6014 = vpop.f32.mrf.mxu0
    %v6015 = vadd.f32 0.0, %v6014
    %6016 = vmatmul.f32.gmra.mxu0 %v5953
    %v6017 = vpop.f32.mrf.mxu0
    %v6018 = vadd.f32 0.0, %v6017
    %6019 = vmatmul.f32.gmra.mxu0 %v5956
    %v6020 = vpop.f32.mrf.mxu0
    %v6021 = vadd.f32 0.0, %v6020
    %6022 = vmatmul.f32.gmra.mxu0 %v5959
    %v6023 = vpop.f32.mrf.mxu0
    %v6024 = vadd.f32 0.0, %v6023
    %6025 = vmatmul.f32.gmra.mxu0 %v5962
    %v6026 = vpop.f32.mrf.mxu0
    %v6027 = vadd.f32 0.0, %v6026
    %6028 = vmatmul.f32.gmra.mxu0 %v5965
    %v6029 = vpop.f32.mrf.mxu0
    %v6030 = vadd.f32 0.0, %v6029
    %6031 = vmatmul.f32.gmra.mxu0 %v5968
    %v6032 = vpop.f32.mrf.mxu0
    %v6033 = vadd.f32 0.0, %v6032
    %6034 = vmatmul.f32.gmra.mxu0 %v5971
    %v6035 = vpop.f32.mrf.mxu0
    %v6036 = vadd.f32 0.0, %v6035
    %6037 = vmatmul.f32.gmra.mxu0 %v5974
    %v6038 = vpop.f32.mrf.mxu0
    %v6039 = vadd.f32 0.0, %v6038
    %6040 = vmatmul.f32.gmra.mxu0 %v5977
    %v6041 = vpop.f32.mrf.mxu0
    %v6042 = vadd.f32 0.0, %v6041
    %6043 = vdwg.mxu0
    %v6044 = vmul.f32 %v5997, %v665
    %v6045 = vmul.f32 %v6000, %v666
    %v6046 = vmul.f32 %v6003, %v667
    %v6047 = vmul.f32 %v6006, %v668
    %v6048 = vmul.f32 %v6009, %v669
    %v6049 = vmul.f32 %v6012, %v670
    %v6050 = vmul.f32 %v6015, %v671
    %v6051 = vmul.f32 %v6018, %v672
    %v6052 = vmul.f32 %v6021, %v673
    %v6053 = vmul.f32 %v6024, %v674
    %v6054 = vmul.f32 %v6027, %v675
    %v6055 = vmul.f32 %v6030, %v676
    %v6056 = vmul.f32 %v6033, %v677
    %v6057 = vmul.f32 %v6036, %v678
    %v6058 = vmul.f32 %v6039, %v679
    %v6059 = vmul.f32 %v6042, %v680
    %6060 = vmatpush.msra.mxu0 %v6059
    %6061 = vmatpush.msra.mxu0 %v6058
    %6062 = vmatpush.msra.mxu0 %v6057
    %6063 = vmatpush.msra.mxu0 %v6056
    %6064 = vmatpush.msra.mxu0 %v6055
    %6065 = vmatpush.msra.mxu0 %v6054
    %6066 = vmatpush.msra.mxu0 %v6053
    %6067 = vmatpush.msra.mxu0 %v6052
    %6068 = vmatpush.msra.mxu0 %v6051
    %6069 = vmatpush.msra.mxu0 %v6050
    %6070 = vmatpush.msra.mxu0 %v6049
    %6071 = vmatpush.msra.mxu0 %v6048
    %6072 = vmatpush.msra.mxu0 %v6047
    %6073 = vmatpush.msra.mxu0 %v6046
    %6074 = vmatpush.msra.mxu0 %v6045
    %6075 = vmatpush.msra.mxu0 %v6044
    %6076 = vmatmul.f32.gmra.mxu0 %v689
    %v6077 = vpop.f32.mrf.mxu0
    %v6078 = vadd.f32 0.0, %v6077
    %6079 = vmatmul.f32.gmra.mxu0 %v690
    %v6080 = vpop.f32.mrf.mxu0
    %v6081 = vadd.f32 0.0, %v6080
    %6082 = vdwg.mxu0
    %6083 = vst.msk [vmem:[#allocation6 + $0x50] sm:$0xff] %vm321, %v6078
    %6084 = vst.msk [vmem:[#allocation6 + $0x58] sm:$0xff] %vm321, %v6081
    %v6085 = vld [vmem:[#allocation3 + $0x60] sm:$0xff]
    %v6086 = vld [vmem:[#allocation3 + $0x68] sm:$0xff]
    %v6087 = vld [vmem:[#allocation4 + $0x60] sm:$0xff]
    %v6088 = vld [vmem:[#allocation4 + $0x68] sm:$0xff]
    %v6089 = vld [vmem:[#allocation5 + $0x60] sm:$0xff]
    %v6090 = vld [vmem:[#allocation5 + $0x68] sm:$0xff]
    %v6091 = vmul.f32 %v6085, %v665
    %v6092 = vmul.f32 %v6086, %v666
    %v6093 = vmul.f32 %v6085, %v667
    %v6094 = vmul.f32 %v6086, %v668
    %v6095 = vmul.f32 %v6085, %v669
    %v6096 = vmul.f32 %v6086, %v670
    %v6097 = vmul.f32 %v6085, %v671
    %v6098 = vmul.f32 %v6086, %v672
    %v6099 = vmul.f32 %v6085, %v673
    %v6100 = vmul.f32 %v6086, %v674
    %v6101 = vmul.f32 %v6085, %v675
    %v6102 = vmul.f32 %v6086, %v676
    %v6103 = vmul.f32 %v6085, %v677
    %v6104 = vmul.f32 %v6086, %v678
    %v6105 = vmul.f32 %v6085, %v679
    %v6106 = vmul.f32 %v6086, %v680
    %v6108 = vsel %vm321, %v6091, 0
    %v6111 = vsel %vm321, %v6092, 0
    %v6114 = vsel %vm321, %v6093, 0
    %v6117 = vsel %vm321, %v6094, 0
    %v6120 = vsel %vm321, %v6095, 0
    %v6123 = vsel %vm321, %v6096, 0
    %v6126 = vsel %vm321, %v6097, 0
    %v6129 = vsel %vm321, %v6098, 0
    %v6132 = vsel %vm321, %v6099, 0
    %v6135 = vsel %vm321, %v6100, 0
    %v6138 = vsel %vm321, %v6101, 0
    %v6141 = vsel %vm321, %v6102, 0
    %v6144 = vsel %vm321, %v6103, 0
    %v6147 = vsel %vm321, %v6104, 0
    %v6150 = vsel %vm321, %v6105, 0
    %v6153 = vsel %vm321, %v6106, 0
    %6155 = vmatpush.msra.mxu0 0.0
    %6156 = vmatpush.msra.mxu0 0.0
    %6157 = vmatpush.msra.mxu0 0.0
    %6158 = vmatpush.msra.mxu0 0.0
    %6159 = vmatpush.msra.mxu0 0.0
    %6160 = vmatpush.msra.mxu0 0.0
    %6161 = vmatpush.msra.mxu0 0.0
    %6162 = vmatpush.msra.mxu0 0.0
    %6163 = vmatpush.msra.mxu0 %v688
    %6164 = vmatpush.msra.mxu0 %v687
    %6165 = vmatpush.msra.mxu0 %v686
    %6166 = vmatpush.msra.mxu0 %v685
    %6167 = vmatpush.msra.mxu0 %v684
    %6168 = vmatpush.msra.mxu0 %v683
    %6169 = vmatpush.msra.mxu0 %v682
    %6170 = vmatpush.msra.mxu0 %v681
    %6171 = vmatmul.f32.gmra.mxu0 %v6108
    %v6172 = vpop.f32.mrf.mxu0
    %v6173 = vadd.f32 0.0, %v6172
    %6174 = vmatmul.f32.gmra.mxu0 %v6111
    %v6175 = vpop.f32.mrf.mxu0
    %v6176 = vadd.f32 0.0, %v6175
    %6177 = vmatmul.f32.gmra.mxu0 %v6114
    %v6178 = vpop.f32.mrf.mxu0
    %v6179 = vadd.f32 0.0, %v6178
    %6180 = vmatmul.f32.gmra.mxu0 %v6117
    %v6181 = vpop.f32.mrf.mxu0
    %v6182 = vadd.f32 0.0, %v6181
    %6183 = vmatmul.f32.gmra.mxu0 %v6120
    %v6184 = vpop.f32.mrf.mxu0
    %v6185 = vadd.f32 0.0, %v6184
    %6186 = vmatmul.f32.gmra.mxu0 %v6123
    %v6187 = vpop.f32.mrf.mxu0
    %v6188 = vadd.f32 0.0, %v6187
    %6189 = vmatmul.f32.gmra.mxu0 %v6126
    %v6190 = vpop.f32.mrf.mxu0
    %v6191 = vadd.f32 0.0, %v6190
    %6192 = vmatmul.f32.gmra.mxu0 %v6129
    %v6193 = vpop.f32.mrf.mxu0
    %v6194 = vadd.f32 0.0, %v6193
    %6195 = vmatmul.f32.gmra.mxu0 %v6132
    %v6196 = vpop.f32.mrf.mxu0
    %v6197 = vadd.f32 0.0, %v6196
    %6198 = vmatmul.f32.gmra.mxu0 %v6135
    %v6199 = vpop.f32.mrf.mxu0
    %v6200 = vadd.f32 0.0, %v6199
    %6201 = vmatmul.f32.gmra.mxu0 %v6138
    %v6202 = vpop.f32.mrf.mxu0
    %v6203 = vadd.f32 0.0, %v6202
    %6204 = vmatmul.f32.gmra.mxu0 %v6141
    %v6205 = vpop.f32.mrf.mxu0
    %v6206 = vadd.f32 0.0, %v6205
    %6207 = vmatmul.f32.gmra.mxu0 %v6144
    %v6208 = vpop.f32.mrf.mxu0
    %v6209 = vadd.f32 0.0, %v6208
    %6210 = vmatmul.f32.gmra.mxu0 %v6147
    %v6211 = vpop.f32.mrf.mxu0
    %v6212 = vadd.f32 0.0, %v6211
    %6213 = vmatmul.f32.gmra.mxu0 %v6150
    %v6214 = vpop.f32.mrf.mxu0
    %v6215 = vadd.f32 0.0, %v6214
    %6216 = vmatmul.f32.gmra.mxu0 %v6153
    %v6217 = vpop.f32.mrf.mxu0
    %v6218 = vadd.f32 0.0, %v6217
    %6219 = vdwg.mxu0
    %v6220 = vmul.f32 %v6087, %v665
    %v6221 = vmul.f32 %v6088, %v666
    %v6222 = vmul.f32 %v6087, %v667
    %v6223 = vmul.f32 %v6088, %v668
    %v6224 = vmul.f32 %v6087, %v669
    %v6225 = vmul.f32 %v6088, %v670
    %v6226 = vmul.f32 %v6087, %v671
    %v6227 = vmul.f32 %v6088, %v672
    %v6228 = vmul.f32 %v6087, %v673
    %v6229 = vmul.f32 %v6088, %v674
    %v6230 = vmul.f32 %v6087, %v675
    %v6231 = vmul.f32 %v6088, %v676
    %v6232 = vmul.f32 %v6087, %v677
    %v6233 = vmul.f32 %v6088, %v678
    %v6234 = vmul.f32 %v6087, %v679
    %v6235 = vmul.f32 %v6088, %v680
    %v6237 = vsel %vm321, %v6173, 0
    %v6240 = vsel %vm321, %v6176, 0
    %v6243 = vsel %vm321, %v6179, 0
    %v6246 = vsel %vm321, %v6182, 0
    %v6249 = vsel %vm321, %v6185, 0
    %v6252 = vsel %vm321, %v6188, 0
    %v6255 = vsel %vm321, %v6191, 0
    %v6258 = vsel %vm321, %v6194, 0
    %v6261 = vsel %vm321, %v6197, 0
    %v6264 = vsel %vm321, %v6200, 0
    %v6267 = vsel %vm321, %v6203, 0
    %v6270 = vsel %vm321, %v6206, 0
    %v6273 = vsel %vm321, %v6209, 0
    %v6276 = vsel %vm321, %v6212, 0
    %v6279 = vsel %vm321, %v6215, 0
    %v6282 = vsel %vm321, %v6218, 0
    %v6285 = vsel %vm321, %v6220, 0
    %v6288 = vsel %vm321, %v6221, 0
    %v6291 = vsel %vm321, %v6222, 0
    %v6294 = vsel %vm321, %v6223, 0
    %v6297 = vsel %vm321, %v6224, 0
    %v6300 = vsel %vm321, %v6225, 0
    %v6303 = vsel %vm321, %v6226, 0
    %v6306 = vsel %vm321, %v6227, 0
    %v6309 = vsel %vm321, %v6228, 0
    %v6312 = vsel %vm321, %v6229, 0
    %v6315 = vsel %vm321, %v6230, 0
    %v6318 = vsel %vm321, %v6231, 0
    %v6321 = vsel %vm321, %v6232, 0
    %v6324 = vsel %vm321, %v6233, 0
    %v6327 = vsel %vm321, %v6234, 0
    %v6330 = vsel %vm321, %v6235, 0
    %6332 = vmatpush.xpose.msra.mxu0 %v6330
    %6333 = vmatpush.xpose.msra.mxu0 %v6327
    %6334 = vmatpush.xpose.msra.mxu0 %v6324
    %6335 = vmatpush.xpose.msra.mxu0 %v6321
    %6336 = vmatpush.xpose.msra.mxu0 %v6318
    %6337 = vmatpush.xpose.msra.mxu0 %v6315
    %6338 = vmatpush.xpose.msra.mxu0 %v6312
    %6339 = vmatpush.xpose.msra.mxu0 %v6309
    %6340 = vmatpush.xpose.msra.mxu0 %v6306
    %6341 = vmatpush.xpose.msra.mxu0 %v6303
    %6342 = vmatpush.xpose.msra.mxu0 %v6300
    %6343 = vmatpush.xpose.msra.mxu0 %v6297
    %6344 = vmatpush.xpose.msra.mxu0 %v6294
    %6345 = vmatpush.xpose.msra.mxu0 %v6291
    %6346 = vmatpush.xpose.msra.mxu0 %v6288
    %6347 = vmatpush.xpose.msra.mxu0 %v6285
    %6348 = vmatmul.f32.gmra.mxu0 %v6237
    %v6349 = vpop.f32.mrf.mxu0
    %v6350 = vadd.f32 0.0, %v6349
    %6351 = vmatmul.f32.gmra.mxu0 %v6240
    %v6352 = vpop.f32.mrf.mxu0
    %v6353 = vadd.f32 0.0, %v6352
    %6354 = vmatmul.f32.gmra.mxu0 %v6243
    %v6355 = vpop.f32.mrf.mxu0
    %v6356 = vadd.f32 0.0, %v6355
    %6357 = vmatmul.f32.gmra.mxu0 %v6246
    %v6358 = vpop.f32.mrf.mxu0
    %v6359 = vadd.f32 0.0, %v6358
    %6360 = vmatmul.f32.gmra.mxu0 %v6249
    %v6361 = vpop.f32.mrf.mxu0
    %v6362 = vadd.f32 0.0, %v6361
    %6363 = vmatmul.f32.gmra.mxu0 %v6252
    %v6364 = vpop.f32.mrf.mxu0
    %v6365 = vadd.f32 0.0, %v6364
    %6366 = vmatmul.f32.gmra.mxu0 %v6255
    %v6367 = vpop.f32.mrf.mxu0
    %v6368 = vadd.f32 0.0, %v6367
    %6369 = vmatmul.f32.gmra.mxu0 %v6258
    %v6370 = vpop.f32.mrf.mxu0
    %v6371 = vadd.f32 0.0, %v6370
    %6372 = vmatmul.f32.gmra.mxu0 %v6261
    %v6373 = vpop.f32.mrf.mxu0
    %v6374 = vadd.f32 0.0, %v6373
    %6375 = vmatmul.f32.gmra.mxu0 %v6264
    %v6376 = vpop.f32.mrf.mxu0
    %v6377 = vadd.f32 0.0, %v6376
    %6378 = vmatmul.f32.gmra.mxu0 %v6267
    %v6379 = vpop.f32.mrf.mxu0
    %v6380 = vadd.f32 0.0, %v6379
    %6381 = vmatmul.f32.gmra.mxu0 %v6270
    %v6382 = vpop.f32.mrf.mxu0
    %v6383 = vadd.f32 0.0, %v6382
    %6384 = vmatmul.f32.gmra.mxu0 %v6273
    %v6385 = vpop.f32.mrf.mxu0
    %v6386 = vadd.f32 0.0, %v6385
    %6387 = vmatmul.f32.gmra.mxu0 %v6276
    %v6388 = vpop.f32.mrf.mxu0
    %v6389 = vadd.f32 0.0, %v6388
    %6390 = vmatmul.f32.gmra.mxu0 %v6279
    %v6391 = vpop.f32.mrf.mxu0
    %v6392 = vadd.f32 0.0, %v6391
    %6393 = vmatmul.f32.gmra.mxu0 %v6282
    %v6394 = vpop.f32.mrf.mxu0
    %v6395 = vadd.f32 0.0, %v6394
    %6396 = vdwg.mxu0
    %6397 = vmax.xlane.f32.xlu0 %v6350
    %v6398 = vpop.xlane.xlu0 %6397
    %6399 = vmax.xlane.f32.xlu0 %v6353
    %v6400 = vpop.xlane.xlu0 %6399
    %6401 = vmax.xlane.f32.xlu0 %v6356
    %v6402 = vpop.xlane.xlu0 %6401
    %6403 = vmax.xlane.f32.xlu0 %v6359
    %v6404 = vpop.xlane.xlu0 %6403
    %6405 = vmax.xlane.f32.xlu0 %v6362
    %v6406 = vpop.xlane.xlu0 %6405
    %6407 = vmax.xlane.f32.xlu0 %v6365
    %v6408 = vpop.xlane.xlu0 %6407
    %6409 = vmax.xlane.f32.xlu0 %v6368
    %v6410 = vpop.xlane.xlu0 %6409
    %6411 = vmax.xlane.f32.xlu0 %v6371
    %v6412 = vpop.xlane.xlu0 %6411
    %6413 = vmax.xlane.f32.xlu0 %v6374
    %v6414 = vpop.xlane.xlu0 %6413
    %6415 = vmax.xlane.f32.xlu0 %v6377
    %v6416 = vpop.xlane.xlu0 %6415
    %6417 = vmax.xlane.f32.xlu0 %v6380
    %v6418 = vpop.xlane.xlu0 %6417
    %6419 = vmax.xlane.f32.xlu0 %v6383
    %v6420 = vpop.xlane.xlu0 %6419
    %6421 = vmax.xlane.f32.xlu0 %v6386
    %v6422 = vpop.xlane.xlu0 %6421
    %6423 = vmax.xlane.f32.xlu0 %v6389
    %v6424 = vpop.xlane.xlu0 %6423
    %6425 = vmax.xlane.f32.xlu0 %v6392
    %v6426 = vpop.xlane.xlu0 %6425
    %6427 = vmax.xlane.f32.xlu0 %v6395
    %v6428 = vpop.xlane.xlu0 %6427
    %v6429 = vsub.f32 %v6350, %v6398
    %v6430 = vsub.f32 %v6353, %v6400
    %v6431 = vsub.f32 %v6356, %v6402
    %v6432 = vsub.f32 %v6359, %v6404
    %v6433 = vsub.f32 %v6362, %v6406
    %v6434 = vsub.f32 %v6365, %v6408
    %v6435 = vsub.f32 %v6368, %v6410
    %v6436 = vsub.f32 %v6371, %v6412
    %v6437 = vsub.f32 %v6374, %v6414
    %v6438 = vsub.f32 %v6377, %v6416
    %v6439 = vsub.f32 %v6380, %v6418
    %v6440 = vsub.f32 %v6383, %v6420
    %v6441 = vsub.f32 %v6386, %v6422
    %v6442 = vsub.f32 %v6389, %v6424
    %v6443 = vsub.f32 %v6392, %v6426
    %v6444 = vsub.f32 %v6395, %v6428
    %v6445 = vmul.f32 %v6429, 1.442695
    %v6446 = vpow.pop %v6445
    %v6447 = vmul.f32 %v6430, 1.442695
    %v6448 = vpow.pop %v6447
    %v6449 = vmul.f32 %v6431, 1.442695
    %v6450 = vpow.pop %v6449
    %v6451 = vmul.f32 %v6432, 1.442695
    %v6452 = vpow.pop %v6451
    %v6453 = vmul.f32 %v6433, 1.442695
    %v6454 = vpow.pop %v6453
    %v6455 = vmul.f32 %v6434, 1.442695
    %v6456 = vpow.pop %v6455
    %v6457 = vmul.f32 %v6435, 1.442695
    %v6458 = vpow.pop %v6457
    %v6459 = vmul.f32 %v6436, 1.442695
    %v6460 = vpow.pop %v6459
    %v6461 = vmul.f32 %v6437, 1.442695
    %v6462 = vpow.pop %v6461
    %v6463 = vmul.f32 %v6438, 1.442695
    %v6464 = vpow.pop %v6463
    %v6465 = vmul.f32 %v6439, 1.442695
    %v6466 = vpow.pop %v6465
    %v6467 = vmul.f32 %v6440, 1.442695
    %v6468 = vpow.pop %v6467
    %v6469 = vmul.f32 %v6441, 1.442695
    %v6470 = vpow.pop %v6469
    %v6471 = vmul.f32 %v6442, 1.442695
    %v6472 = vpow.pop %v6471
    %v6473 = vmul.f32 %v6443, 1.442695
    %v6474 = vpow.pop %v6473
    %v6475 = vmul.f32 %v6444, 1.442695
    %v6476 = vpow.pop %v6475
    %6477 = vadd.xlane.f32.xlu0 %v6446
    %v6478 = vpop.xlane.xlu0 %6477
    %6479 = vadd.xlane.f32.xlu0 %v6448
    %v6480 = vpop.xlane.xlu0 %6479
    %6481 = vadd.xlane.f32.xlu0 %v6450
    %v6482 = vpop.xlane.xlu0 %6481
    %6483 = vadd.xlane.f32.xlu0 %v6452
    %v6484 = vpop.xlane.xlu0 %6483
    %6485 = vadd.xlane.f32.xlu0 %v6454
    %v6486 = vpop.xlane.xlu0 %6485
    %6487 = vadd.xlane.f32.xlu0 %v6456
    %v6488 = vpop.xlane.xlu0 %6487
    %6489 = vadd.xlane.f32.xlu0 %v6458
    %v6490 = vpop.xlane.xlu0 %6489
    %6491 = vadd.xlane.f32.xlu0 %v6460
    %v6492 = vpop.xlane.xlu0 %6491
    %6493 = vadd.xlane.f32.xlu0 %v6462
    %v6494 = vpop.xlane.xlu0 %6493
    %6495 = vadd.xlane.f32.xlu0 %v6464
    %v6496 = vpop.xlane.xlu0 %6495
    %6497 = vadd.xlane.f32.xlu0 %v6466
    %v6498 = vpop.xlane.xlu0 %6497
    %6499 = vadd.xlane.f32.xlu0 %v6468
    %v6500 = vpop.xlane.xlu0 %6499
    %6501 = vadd.xlane.f32.xlu0 %v6470
    %v6502 = vpop.xlane.xlu0 %6501
    %6503 = vadd.xlane.f32.xlu0 %v6472
    %v6504 = vpop.xlane.xlu0 %6503
    %6505 = vadd.xlane.f32.xlu0 %v6474
    %v6506 = vpop.xlane.xlu0 %6505
    %6507 = vadd.xlane.f32.xlu0 %v6476
    %v6508 = vpop.xlane.xlu0 %6507
    %v6509 = vrcp.pop %v6478
    %v6510 = vmul.f32 %v6478, %v6509
    %v6511 = vsub.f32 1.0, %v6510
    %v6512 = vmul.f32 %v6509, %v6511
    %v6513 = vadd.f32 %v6509, %v6512
    %vm6514 = vweird.f32 %v6478
    %vm6515 = vweird.f32 %v6509
    %vm6516 = vmor %vm6514, %vm6515
    %v6517 = vsel %vm6516, %v6509, %v6513
    %v6518 = vand.u32 2147483647, %v6478
    %vm6519 = vcmp.eq.f32.partialorder %v6518, 8.507059e+37
    %v6520 = vand.u32 %v6478, 2147483648
    %v6521 = vor.u32 1.1754944e-38, %v6520
    %v6522 = vsel %vm6519, %v6521, %v6517
    %v6523 = vmul.f32 %v6446, %v6522
    %v6524 = vrcp.pop %v6480
    %v6525 = vmul.f32 %v6480, %v6524
    %v6526 = vsub.f32 1.0, %v6525
    %v6527 = vmul.f32 %v6524, %v6526
    %v6528 = vadd.f32 %v6524, %v6527
    %vm6529 = vweird.f32 %v6480
    %vm6530 = vweird.f32 %v6524
    %vm6531 = vmor %vm6529, %vm6530
    %v6532 = vsel %vm6531, %v6524, %v6528
    %v6533 = vand.u32 2147483647, %v6480
    %vm6534 = vcmp.eq.f32.partialorder %v6533, 8.507059e+37
    %v6535 = vand.u32 %v6480, 2147483648
    %v6536 = vor.u32 1.1754944e-38, %v6535
    %v6537 = vsel %vm6534, %v6536, %v6532
    %v6538 = vmul.f32 %v6448, %v6537
    %v6539 = vrcp.pop %v6482
    %v6540 = vmul.f32 %v6482, %v6539
    %v6541 = vsub.f32 1.0, %v6540
    %v6542 = vmul.f32 %v6539, %v6541
    %v6543 = vadd.f32 %v6539, %v6542
    %vm6544 = vweird.f32 %v6482
    %vm6545 = vweird.f32 %v6539
    %vm6546 = vmor %vm6544, %vm6545
    %v6547 = vsel %vm6546, %v6539, %v6543
    %v6548 = vand.u32 2147483647, %v6482
    %vm6549 = vcmp.eq.f32.partialorder %v6548, 8.507059e+37
    %v6550 = vand.u32 %v6482, 2147483648
    %v6551 = vor.u32 1.1754944e-38, %v6550
    %v6552 = vsel %vm6549, %v6551, %v6547
    %v6553 = vmul.f32 %v6450, %v6552
    %v6554 = vrcp.pop %v6484
    %v6555 = vmul.f32 %v6484, %v6554
    %v6556 = vsub.f32 1.0, %v6555
    %v6557 = vmul.f32 %v6554, %v6556
    %v6558 = vadd.f32 %v6554, %v6557
    %vm6559 = vweird.f32 %v6484
    %vm6560 = vweird.f32 %v6554
    %vm6561 = vmor %vm6559, %vm6560
    %v6562 = vsel %vm6561, %v6554, %v6558
    %v6563 = vand.u32 2147483647, %v6484
    %vm6564 = vcmp.eq.f32.partialorder %v6563, 8.507059e+37
    %v6565 = vand.u32 %v6484, 2147483648
    %v6566 = vor.u32 1.1754944e-38, %v6565
    %v6567 = vsel %vm6564, %v6566, %v6562
    %v6568 = vmul.f32 %v6452, %v6567
    %v6569 = vrcp.pop %v6486
    %v6570 = vmul.f32 %v6486, %v6569
    %v6571 = vsub.f32 1.0, %v6570
    %v6572 = vmul.f32 %v6569, %v6571
    %v6573 = vadd.f32 %v6569, %v6572
    %vm6574 = vweird.f32 %v6486
    %vm6575 = vweird.f32 %v6569
    %vm6576 = vmor %vm6574, %vm6575
    %v6577 = vsel %vm6576, %v6569, %v6573
    %v6578 = vand.u32 2147483647, %v6486
    %vm6579 = vcmp.eq.f32.partialorder %v6578, 8.507059e+37
    %v6580 = vand.u32 %v6486, 2147483648
    %v6581 = vor.u32 1.1754944e-38, %v6580
    %v6582 = vsel %vm6579, %v6581, %v6577
    %v6583 = vmul.f32 %v6454, %v6582
    %v6584 = vrcp.pop %v6488
    %v6585 = vmul.f32 %v6488, %v6584
    %v6586 = vsub.f32 1.0, %v6585
    %v6587 = vmul.f32 %v6584, %v6586
    %v6588 = vadd.f32 %v6584, %v6587
    %vm6589 = vweird.f32 %v6488
    %vm6590 = vweird.f32 %v6584
    %vm6591 = vmor %vm6589, %vm6590
    %v6592 = vsel %vm6591, %v6584, %v6588
    %v6593 = vand.u32 2147483647, %v6488
    %vm6594 = vcmp.eq.f32.partialorder %v6593, 8.507059e+37
    %v6595 = vand.u32 %v6488, 2147483648
    %v6596 = vor.u32 1.1754944e-38, %v6595
    %v6597 = vsel %vm6594, %v6596, %v6592
    %v6598 = vmul.f32 %v6456, %v6597
    %v6599 = vrcp.pop %v6490
    %v6600 = vmul.f32 %v6490, %v6599
    %v6601 = vsub.f32 1.0, %v6600
    %v6602 = vmul.f32 %v6599, %v6601
    %v6603 = vadd.f32 %v6599, %v6602
    %vm6604 = vweird.f32 %v6490
    %vm6605 = vweird.f32 %v6599
    %vm6606 = vmor %vm6604, %vm6605
    %v6607 = vsel %vm6606, %v6599, %v6603
    %v6608 = vand.u32 2147483647, %v6490
    %vm6609 = vcmp.eq.f32.partialorder %v6608, 8.507059e+37
    %v6610 = vand.u32 %v6490, 2147483648
    %v6611 = vor.u32 1.1754944e-38, %v6610
    %v6612 = vsel %vm6609, %v6611, %v6607
    %v6613 = vmul.f32 %v6458, %v6612
    %v6614 = vrcp.pop %v6492
    %v6615 = vmul.f32 %v6492, %v6614
    %v6616 = vsub.f32 1.0, %v6615
    %v6617 = vmul.f32 %v6614, %v6616
    %v6618 = vadd.f32 %v6614, %v6617
    %vm6619 = vweird.f32 %v6492
    %vm6620 = vweird.f32 %v6614
    %vm6621 = vmor %vm6619, %vm6620
    %v6622 = vsel %vm6621, %v6614, %v6618
    %v6623 = vand.u32 2147483647, %v6492
    %vm6624 = vcmp.eq.f32.partialorder %v6623, 8.507059e+37
    %v6625 = vand.u32 %v6492, 2147483648
    %v6626 = vor.u32 1.1754944e-38, %v6625
    %v6627 = vsel %vm6624, %v6626, %v6622
    %v6628 = vmul.f32 %v6460, %v6627
    %v6629 = vrcp.pop %v6494
    %v6630 = vmul.f32 %v6494, %v6629
    %v6631 = vsub.f32 1.0, %v6630
    %v6632 = vmul.f32 %v6629, %v6631
    %v6633 = vadd.f32 %v6629, %v6632
    %vm6634 = vweird.f32 %v6494
    %vm6635 = vweird.f32 %v6629
    %vm6636 = vmor %vm6634, %vm6635
    %v6637 = vsel %vm6636, %v6629, %v6633
    %v6638 = vand.u32 2147483647, %v6494
    %vm6639 = vcmp.eq.f32.partialorder %v6638, 8.507059e+37
    %v6640 = vand.u32 %v6494, 2147483648
    %v6641 = vor.u32 1.1754944e-38, %v6640
    %v6642 = vsel %vm6639, %v6641, %v6637
    %v6643 = vmul.f32 %v6462, %v6642
    %v6644 = vrcp.pop %v6496
    %v6645 = vmul.f32 %v6496, %v6644
    %v6646 = vsub.f32 1.0, %v6645
    %v6647 = vmul.f32 %v6644, %v6646
    %v6648 = vadd.f32 %v6644, %v6647
    %vm6649 = vweird.f32 %v6496
    %vm6650 = vweird.f32 %v6644
    %vm6651 = vmor %vm6649, %vm6650
    %v6652 = vsel %vm6651, %v6644, %v6648
    %v6653 = vand.u32 2147483647, %v6496
    %vm6654 = vcmp.eq.f32.partialorder %v6653, 8.507059e+37
    %v6655 = vand.u32 %v6496, 2147483648
    %v6656 = vor.u32 1.1754944e-38, %v6655
    %v6657 = vsel %vm6654, %v6656, %v6652
    %v6658 = vmul.f32 %v6464, %v6657
    %v6659 = vrcp.pop %v6498
    %v6660 = vmul.f32 %v6498, %v6659
    %v6661 = vsub.f32 1.0, %v6660
    %v6662 = vmul.f32 %v6659, %v6661
    %v6663 = vadd.f32 %v6659, %v6662
    %vm6664 = vweird.f32 %v6498
    %vm6665 = vweird.f32 %v6659
    %vm6666 = vmor %vm6664, %vm6665
    %v6667 = vsel %vm6666, %v6659, %v6663
    %v6668 = vand.u32 2147483647, %v6498
    %vm6669 = vcmp.eq.f32.partialorder %v6668, 8.507059e+37
    %v6670 = vand.u32 %v6498, 2147483648
    %v6671 = vor.u32 1.1754944e-38, %v6670
    %v6672 = vsel %vm6669, %v6671, %v6667
    %v6673 = vmul.f32 %v6466, %v6672
    %v6674 = vrcp.pop %v6500
    %v6675 = vmul.f32 %v6500, %v6674
    %v6676 = vsub.f32 1.0, %v6675
    %v6677 = vmul.f32 %v6674, %v6676
    %v6678 = vadd.f32 %v6674, %v6677
    %vm6679 = vweird.f32 %v6500
    %vm6680 = vweird.f32 %v6674
    %vm6681 = vmor %vm6679, %vm6680
    %v6682 = vsel %vm6681, %v6674, %v6678
    %v6683 = vand.u32 2147483647, %v6500
    %vm6684 = vcmp.eq.f32.partialorder %v6683, 8.507059e+37
    %v6685 = vand.u32 %v6500, 2147483648
    %v6686 = vor.u32 1.1754944e-38, %v6685
    %v6687 = vsel %vm6684, %v6686, %v6682
    %v6688 = vmul.f32 %v6468, %v6687
    %v6689 = vrcp.pop %v6502
    %v6690 = vmul.f32 %v6502, %v6689
    %v6691 = vsub.f32 1.0, %v6690
    %v6692 = vmul.f32 %v6689, %v6691
    %v6693 = vadd.f32 %v6689, %v6692
    %vm6694 = vweird.f32 %v6502
    %vm6695 = vweird.f32 %v6689
    %vm6696 = vmor %vm6694, %vm6695
    %v6697 = vsel %vm6696, %v6689, %v6693
    %v6698 = vand.u32 2147483647, %v6502
    %vm6699 = vcmp.eq.f32.partialorder %v6698, 8.507059e+37
    %v6700 = vand.u32 %v6502, 2147483648
    %v6701 = vor.u32 1.1754944e-38, %v6700
    %v6702 = vsel %vm6699, %v6701, %v6697
    %v6703 = vmul.f32 %v6470, %v6702
    %v6704 = vrcp.pop %v6504
    %v6705 = vmul.f32 %v6504, %v6704
    %v6706 = vsub.f32 1.0, %v6705
    %v6707 = vmul.f32 %v6704, %v6706
    %v6708 = vadd.f32 %v6704, %v6707
    %vm6709 = vweird.f32 %v6504
    %vm6710 = vweird.f32 %v6704
    %vm6711 = vmor %vm6709, %vm6710
    %v6712 = vsel %vm6711, %v6704, %v6708
    %v6713 = vand.u32 2147483647, %v6504
    %vm6714 = vcmp.eq.f32.partialorder %v6713, 8.507059e+37
    %v6715 = vand.u32 %v6504, 2147483648
    %v6716 = vor.u32 1.1754944e-38, %v6715
    %v6717 = vsel %vm6714, %v6716, %v6712
    %v6718 = vmul.f32 %v6472, %v6717
    %v6719 = vrcp.pop %v6506
    %v6720 = vmul.f32 %v6506, %v6719
    %v6721 = vsub.f32 1.0, %v6720
    %v6722 = vmul.f32 %v6719, %v6721
    %v6723 = vadd.f32 %v6719, %v6722
    %vm6724 = vweird.f32 %v6506
    %vm6725 = vweird.f32 %v6719
    %vm6726 = vmor %vm6724, %vm6725
    %v6727 = vsel %vm6726, %v6719, %v6723
    %v6728 = vand.u32 2147483647, %v6506
    %vm6729 = vcmp.eq.f32.partialorder %v6728, 8.507059e+37
    %v6730 = vand.u32 %v6506, 2147483648
    %v6731 = vor.u32 1.1754944e-38, %v6730
    %v6732 = vsel %vm6729, %v6731, %v6727
    %v6733 = vmul.f32 %v6474, %v6732
    %v6734 = vrcp.pop %v6508
    %v6735 = vmul.f32 %v6508, %v6734
    %v6736 = vsub.f32 1.0, %v6735
    %v6737 = vmul.f32 %v6734, %v6736
    %v6738 = vadd.f32 %v6734, %v6737
    %vm6739 = vweird.f32 %v6508
    %vm6740 = vweird.f32 %v6734
    %vm6741 = vmor %vm6739, %vm6740
    %v6742 = vsel %vm6741, %v6734, %v6738
    %v6743 = vand.u32 2147483647, %v6508
    %vm6744 = vcmp.eq.f32.partialorder %v6743, 8.507059e+37
    %v6745 = vand.u32 %v6508, 2147483648
    %v6746 = vor.u32 1.1754944e-38, %v6745
    %v6747 = vsel %vm6744, %v6746, %v6742
    %v6748 = vmul.f32 %v6476, %v6747
    %v6749 = vmul.f32 %v6089, %v665
    %v6750 = vmul.f32 %v6090, %v666
    %v6751 = vmul.f32 %v6089, %v667
    %v6752 = vmul.f32 %v6090, %v668
    %v6753 = vmul.f32 %v6089, %v669
    %v6754 = vmul.f32 %v6090, %v670
    %v6755 = vmul.f32 %v6089, %v671
    %v6756 = vmul.f32 %v6090, %v672
    %v6757 = vmul.f32 %v6089, %v673
    %v6758 = vmul.f32 %v6090, %v674
    %v6759 = vmul.f32 %v6089, %v675
    %v6760 = vmul.f32 %v6090, %v676
    %v6761 = vmul.f32 %v6089, %v677
    %v6762 = vmul.f32 %v6090, %v678
    %v6763 = vmul.f32 %v6089, %v679
    %v6764 = vmul.f32 %v6090, %v680
    %6765 = vmatpush.msra.mxu0 %v6764
    %6766 = vmatpush.msra.mxu0 %v6763
    %6767 = vmatpush.msra.mxu0 %v6762
    %6768 = vmatpush.msra.mxu0 %v6761
    %6769 = vmatpush.msra.mxu0 %v6760
    %6770 = vmatpush.msra.mxu0 %v6759
    %6771 = vmatpush.msra.mxu0 %v6758
    %6772 = vmatpush.msra.mxu0 %v6757
    %6773 = vmatpush.msra.mxu0 %v6756
    %6774 = vmatpush.msra.mxu0 %v6755
    %6775 = vmatpush.msra.mxu0 %v6754
    %6776 = vmatpush.msra.mxu0 %v6753
    %6777 = vmatpush.msra.mxu0 %v6752
    %6778 = vmatpush.msra.mxu0 %v6751
    %6779 = vmatpush.msra.mxu0 %v6750
    %6780 = vmatpush.msra.mxu0 %v6749
    %6781 = vmatmul.f32.gmra.mxu0 %v6523
    %v6782 = vpop.f32.mrf.mxu0
    %v6783 = vadd.f32 0.0, %v6782
    %6784 = vmatmul.f32.gmra.mxu0 %v6538
    %v6785 = vpop.f32.mrf.mxu0
    %v6786 = vadd.f32 0.0, %v6785
    %6787 = vmatmul.f32.gmra.mxu0 %v6553
    %v6788 = vpop.f32.mrf.mxu0
    %v6789 = vadd.f32 0.0, %v6788
    %6790 = vmatmul.f32.gmra.mxu0 %v6568
    %v6791 = vpop.f32.mrf.mxu0
    %v6792 = vadd.f32 0.0, %v6791
    %6793 = vmatmul.f32.gmra.mxu0 %v6583
    %v6794 = vpop.f32.mrf.mxu0
    %v6795 = vadd.f32 0.0, %v6794
    %6796 = vmatmul.f32.gmra.mxu0 %v6598
    %v6797 = vpop.f32.mrf.mxu0
    %v6798 = vadd.f32 0.0, %v6797
    %6799 = vmatmul.f32.gmra.mxu0 %v6613
    %v6800 = vpop.f32.mrf.mxu0
    %v6801 = vadd.f32 0.0, %v6800
    %6802 = vmatmul.f32.gmra.mxu0 %v6628
    %v6803 = vpop.f32.mrf.mxu0
    %v6804 = vadd.f32 0.0, %v6803
    %6805 = vmatmul.f32.gmra.mxu0 %v6643
    %v6806 = vpop.f32.mrf.mxu0
    %v6807 = vadd.f32 0.0, %v6806
    %6808 = vmatmul.f32.gmra.mxu0 %v6658
    %v6809 = vpop.f32.mrf.mxu0
    %v6810 = vadd.f32 0.0, %v6809
    %6811 = vmatmul.f32.gmra.mxu0 %v6673
    %v6812 = vpop.f32.mrf.mxu0
    %v6813 = vadd.f32 0.0, %v6812
    %6814 = vmatmul.f32.gmra.mxu0 %v6688
    %v6815 = vpop.f32.mrf.mxu0
    %v6816 = vadd.f32 0.0, %v6815
    %6817 = vmatmul.f32.gmra.mxu0 %v6703
    %v6818 = vpop.f32.mrf.mxu0
    %v6819 = vadd.f32 0.0, %v6818
    %6820 = vmatmul.f32.gmra.mxu0 %v6718
    %v6821 = vpop.f32.mrf.mxu0
    %v6822 = vadd.f32 0.0, %v6821
    %6823 = vmatmul.f32.gmra.mxu0 %v6733
    %v6824 = vpop.f32.mrf.mxu0
    %v6825 = vadd.f32 0.0, %v6824
    %6826 = vmatmul.f32.gmra.mxu0 %v6748
    %v6827 = vpop.f32.mrf.mxu0
    %v6828 = vadd.f32 0.0, %v6827
    %6829 = vdwg.mxu0
    %v6831 = vsel %vm321, %v6783, 0
    %v6834 = vsel %vm321, %v6786, 0
    %v6837 = vsel %vm321, %v6789, 0
    %v6840 = vsel %vm321, %v6792, 0
    %v6843 = vsel %vm321, %v6795, 0
    %v6846 = vsel %vm321, %v6798, 0
    %v6849 = vsel %vm321, %v6801, 0
    %v6852 = vsel %vm321, %v6804, 0
    %v6855 = vsel %vm321, %v6807, 0
    %v6858 = vsel %vm321, %v6810, 0
    %v6861 = vsel %vm321, %v6813, 0
    %v6864 = vsel %vm321, %v6816, 0
    %v6867 = vsel %vm321, %v6819, 0
    %v6870 = vsel %vm321, %v6822, 0
    %v6873 = vsel %vm321, %v6825, 0
    %v6876 = vsel %vm321, %v6828, 0
    %6878 = vmatpush.msra.mxu0 0.0
    %6879 = vmatpush.msra.mxu0 0.0
    %6880 = vmatpush.msra.mxu0 0.0
    %6881 = vmatpush.msra.mxu0 0.0
    %6882 = vmatpush.msra.mxu0 0.0
    %6883 = vmatpush.msra.mxu0 0.0
    %6884 = vmatpush.msra.mxu0 0.0
    %6885 = vmatpush.msra.mxu0 0.0
    %6886 = vmatpush.msra.mxu0 %v688
    %6887 = vmatpush.msra.mxu0 %v687
    %6888 = vmatpush.msra.mxu0 %v686
    %6889 = vmatpush.msra.mxu0 %v685
    %6890 = vmatpush.msra.mxu0 %v684
    %6891 = vmatpush.msra.mxu0 %v683
    %6892 = vmatpush.msra.mxu0 %v682
    %6893 = vmatpush.msra.mxu0 %v681
    %6894 = vmatmul.f32.gmra.mxu0 %v6831
    %v6895 = vpop.f32.mrf.mxu0
    %v6896 = vadd.f32 0.0, %v6895
    %6897 = vmatmul.f32.gmra.mxu0 %v6834
    %v6898 = vpop.f32.mrf.mxu0
    %v6899 = vadd.f32 0.0, %v6898
    %6900 = vmatmul.f32.gmra.mxu0 %v6837
    %v6901 = vpop.f32.mrf.mxu0
    %v6902 = vadd.f32 0.0, %v6901
    %6903 = vmatmul.f32.gmra.mxu0 %v6840
    %v6904 = vpop.f32.mrf.mxu0
    %v6905 = vadd.f32 0.0, %v6904
    %6906 = vmatmul.f32.gmra.mxu0 %v6843
    %v6907 = vpop.f32.mrf.mxu0
    %v6908 = vadd.f32 0.0, %v6907
    %6909 = vmatmul.f32.gmra.mxu0 %v6846
    %v6910 = vpop.f32.mrf.mxu0
    %v6911 = vadd.f32 0.0, %v6910
    %6912 = vmatmul.f32.gmra.mxu0 %v6849
    %v6913 = vpop.f32.mrf.mxu0
    %v6914 = vadd.f32 0.0, %v6913
    %6915 = vmatmul.f32.gmra.mxu0 %v6852
    %v6916 = vpop.f32.mrf.mxu0
    %v6917 = vadd.f32 0.0, %v6916
    %6918 = vmatmul.f32.gmra.mxu0 %v6855
    %v6919 = vpop.f32.mrf.mxu0
    %v6920 = vadd.f32 0.0, %v6919
    %6921 = vmatmul.f32.gmra.mxu0 %v6858
    %v6922 = vpop.f32.mrf.mxu0
    %v6923 = vadd.f32 0.0, %v6922
    %6924 = vmatmul.f32.gmra.mxu0 %v6861
    %v6925 = vpop.f32.mrf.mxu0
    %v6926 = vadd.f32 0.0, %v6925
    %6927 = vmatmul.f32.gmra.mxu0 %v6864
    %v6928 = vpop.f32.mrf.mxu0
    %v6929 = vadd.f32 0.0, %v6928
    %6930 = vmatmul.f32.gmra.mxu0 %v6867
    %v6931 = vpop.f32.mrf.mxu0
    %v6932 = vadd.f32 0.0, %v6931
    %6933 = vmatmul.f32.gmra.mxu0 %v6870
    %v6934 = vpop.f32.mrf.mxu0
    %v6935 = vadd.f32 0.0, %v6934
    %6936 = vmatmul.f32.gmra.mxu0 %v6873
    %v6937 = vpop.f32.mrf.mxu0
    %v6938 = vadd.f32 0.0, %v6937
    %6939 = vmatmul.f32.gmra.mxu0 %v6876
    %v6940 = vpop.f32.mrf.mxu0
    %v6941 = vadd.f32 0.0, %v6940
    %6942 = vdwg.mxu0
    %v6943 = vmul.f32 %v6896, %v665
    %v6944 = vmul.f32 %v6899, %v666
    %v6945 = vmul.f32 %v6902, %v667
    %v6946 = vmul.f32 %v6905, %v668
    %v6947 = vmul.f32 %v6908, %v669
    %v6948 = vmul.f32 %v6911, %v670
    %v6949 = vmul.f32 %v6914, %v671
    %v6950 = vmul.f32 %v6917, %v672
    %v6951 = vmul.f32 %v6920, %v673
    %v6952 = vmul.f32 %v6923, %v674
    %v6953 = vmul.f32 %v6926, %v675
    %v6954 = vmul.f32 %v6929, %v676
    %v6955 = vmul.f32 %v6932, %v677
    %v6956 = vmul.f32 %v6935, %v678
    %v6957 = vmul.f32 %v6938, %v679
    %v6958 = vmul.f32 %v6941, %v680
    %6959 = vmatpush.msra.mxu0 %v6958
    %6960 = vmatpush.msra.mxu0 %v6957
    %6961 = vmatpush.msra.mxu0 %v6956
    %6962 = vmatpush.msra.mxu0 %v6955
    %6963 = vmatpush.msra.mxu0 %v6954
    %6964 = vmatpush.msra.mxu0 %v6953
    %6965 = vmatpush.msra.mxu0 %v6952
    %6966 = vmatpush.msra.mxu0 %v6951
    %6967 = vmatpush.msra.mxu0 %v6950
    %6968 = vmatpush.msra.mxu0 %v6949
    %6969 = vmatpush.msra.mxu0 %v6948
    %6970 = vmatpush.msra.mxu0 %v6947
    %6971 = vmatpush.msra.mxu0 %v6946
    %6972 = vmatpush.msra.mxu0 %v6945
    %6973 = vmatpush.msra.mxu0 %v6944
    %6974 = vmatpush.msra.mxu0 %v6943
    %6975 = vmatmul.f32.gmra.mxu0 %v689
    %v6976 = vpop.f32.mrf.mxu0
    %v6977 = vadd.f32 0.0, %v6976
    %6978 = vmatmul.f32.gmra.mxu0 %v690
    %v6979 = vpop.f32.mrf.mxu0
    %v6980 = vadd.f32 0.0, %v6979
    %6981 = vdwg.mxu0
    %6982 = vst.msk [vmem:[#allocation6 + $0x60] sm:$0xff] %vm321, %v6977
    %6983 = vst.msk [vmem:[#allocation6 + $0x68] sm:$0xff] %vm321, %v6980
    %v6984 = vld [vmem:[#allocation3 + $0x70] sm:$0xff]
    %v6985 = vld [vmem:[#allocation3 + $0x78] sm:$0xff]
    %v6986 = vld [vmem:[#allocation4 + $0x70] sm:$0xff]
    %v6987 = vld [vmem:[#allocation4 + $0x78] sm:$0xff]
    %v6988 = vld [vmem:[#allocation5 + $0x70] sm:$0xff]
    %v6989 = vld [vmem:[#allocation5 + $0x78] sm:$0xff]
    %v6990 = vmul.f32 %v6984, %v665
    %v6991 = vmul.f32 %v6985, %v666
    %v6992 = vmul.f32 %v6984, %v667
    %v6993 = vmul.f32 %v6985, %v668
    %v6994 = vmul.f32 %v6984, %v669
    %v6995 = vmul.f32 %v6985, %v670
    %v6996 = vmul.f32 %v6984, %v671
    %v6997 = vmul.f32 %v6985, %v672
    %v6998 = vmul.f32 %v6984, %v673
    %v6999 = vmul.f32 %v6985, %v674
    %v7000 = vmul.f32 %v6984, %v675
    %v7001 = vmul.f32 %v6985, %v676
    %v7002 = vmul.f32 %v6984, %v677
    %v7003 = vmul.f32 %v6985, %v678
    %v7004 = vmul.f32 %v6984, %v679
    %v7005 = vmul.f32 %v6985, %v680
    %v7007 = vsel %vm321, %v6990, 0
    %v7010 = vsel %vm321, %v6991, 0
    %v7013 = vsel %vm321, %v6992, 0
    %v7016 = vsel %vm321, %v6993, 0
    %v7019 = vsel %vm321, %v6994, 0
    %v7022 = vsel %vm321, %v6995, 0
    %v7025 = vsel %vm321, %v6996, 0
    %v7028 = vsel %vm321, %v6997, 0
    %v7031 = vsel %vm321, %v6998, 0
    %v7034 = vsel %vm321, %v6999, 0
    %v7037 = vsel %vm321, %v7000, 0
    %v7040 = vsel %vm321, %v7001, 0
    %v7043 = vsel %vm321, %v7002, 0
    %v7046 = vsel %vm321, %v7003, 0
    %v7049 = vsel %vm321, %v7004, 0
    %v7052 = vsel %vm321, %v7005, 0
    %7054 = vmatpush.msra.mxu0 0.0
    %7055 = vmatpush.msra.mxu0 0.0
    %7056 = vmatpush.msra.mxu0 0.0
    %7057 = vmatpush.msra.mxu0 0.0
    %7058 = vmatpush.msra.mxu0 0.0
    %7059 = vmatpush.msra.mxu0 0.0
    %7060 = vmatpush.msra.mxu0 0.0
    %7061 = vmatpush.msra.mxu0 0.0
    %7062 = vmatpush.msra.mxu0 %v688
    %7063 = vmatpush.msra.mxu0 %v687
    %7064 = vmatpush.msra.mxu0 %v686
    %7065 = vmatpush.msra.mxu0 %v685
    %7066 = vmatpush.msra.mxu0 %v684
    %7067 = vmatpush.msra.mxu0 %v683
    %7068 = vmatpush.msra.mxu0 %v682
    %7069 = vmatpush.msra.mxu0 %v681
    %7070 = vmatmul.f32.gmra.mxu0 %v7007
    %v7071 = vpop.f32.mrf.mxu0
    %v7072 = vadd.f32 0.0, %v7071
    %7073 = vmatmul.f32.gmra.mxu0 %v7010
    %v7074 = vpop.f32.mrf.mxu0
    %v7075 = vadd.f32 0.0, %v7074
    %7076 = vmatmul.f32.gmra.mxu0 %v7013
    %v7077 = vpop.f32.mrf.mxu0
    %v7078 = vadd.f32 0.0, %v7077
    %7079 = vmatmul.f32.gmra.mxu0 %v7016
    %v7080 = vpop.f32.mrf.mxu0
    %v7081 = vadd.f32 0.0, %v7080
    %7082 = vmatmul.f32.gmra.mxu0 %v7019
    %v7083 = vpop.f32.mrf.mxu0
    %v7084 = vadd.f32 0.0, %v7083
    %7085 = vmatmul.f32.gmra.mxu0 %v7022
    %v7086 = vpop.f32.mrf.mxu0
    %v7087 = vadd.f32 0.0, %v7086
    %7088 = vmatmul.f32.gmra.mxu0 %v7025
    %v7089 = vpop.f32.mrf.mxu0
    %v7090 = vadd.f32 0.0, %v7089
    %7091 = vmatmul.f32.gmra.mxu0 %v7028
    %v7092 = vpop.f32.mrf.mxu0
    %v7093 = vadd.f32 0.0, %v7092
    %7094 = vmatmul.f32.gmra.mxu0 %v7031
    %v7095 = vpop.f32.mrf.mxu0
    %v7096 = vadd.f32 0.0, %v7095
    %7097 = vmatmul.f32.gmra.mxu0 %v7034
    %v7098 = vpop.f32.mrf.mxu0
    %v7099 = vadd.f32 0.0, %v7098
    %7100 = vmatmul.f32.gmra.mxu0 %v7037
    %v7101 = vpop.f32.mrf.mxu0
    %v7102 = vadd.f32 0.0, %v7101
    %7103 = vmatmul.f32.gmra.mxu0 %v7040
    %v7104 = vpop.f32.mrf.mxu0
    %v7105 = vadd.f32 0.0, %v7104
    %7106 = vmatmul.f32.gmra.mxu0 %v7043
    %v7107 = vpop.f32.mrf.mxu0
    %v7108 = vadd.f32 0.0, %v7107
    %7109 = vmatmul.f32.gmra.mxu0 %v7046
    %v7110 = vpop.f32.mrf.mxu0
    %v7111 = vadd.f32 0.0, %v7110
    %7112 = vmatmul.f32.gmra.mxu0 %v7049
    %v7113 = vpop.f32.mrf.mxu0
    %v7114 = vadd.f32 0.0, %v7113
    %7115 = vmatmul.f32.gmra.mxu0 %v7052
    %v7116 = vpop.f32.mrf.mxu0
    %v7117 = vadd.f32 0.0, %v7116
    %7118 = vdwg.mxu0
    %v7119 = vmul.f32 %v6986, %v665
    %v7120 = vmul.f32 %v6987, %v666
    %v7121 = vmul.f32 %v6986, %v667
    %v7122 = vmul.f32 %v6987, %v668
    %v7123 = vmul.f32 %v6986, %v669
    %v7124 = vmul.f32 %v6987, %v670
    %v7125 = vmul.f32 %v6986, %v671
    %v7126 = vmul.f32 %v6987, %v672
    %v7127 = vmul.f32 %v6986, %v673
    %v7128 = vmul.f32 %v6987, %v674
    %v7129 = vmul.f32 %v6986, %v675
    %v7130 = vmul.f32 %v6987, %v676
    %v7131 = vmul.f32 %v6986, %v677
    %v7132 = vmul.f32 %v6987, %v678
    %v7133 = vmul.f32 %v6986, %v679
    %v7134 = vmul.f32 %v6987, %v680
    %v7136 = vsel %vm321, %v7072, 0
    %v7139 = vsel %vm321, %v7075, 0
    %v7142 = vsel %vm321, %v7078, 0
    %v7145 = vsel %vm321, %v7081, 0
    %v7148 = vsel %vm321, %v7084, 0
    %v7151 = vsel %vm321, %v7087, 0
    %v7154 = vsel %vm321, %v7090, 0
    %v7157 = vsel %vm321, %v7093, 0
    %v7160 = vsel %vm321, %v7096, 0
    %v7163 = vsel %vm321, %v7099, 0
    %v7166 = vsel %vm321, %v7102, 0
    %v7169 = vsel %vm321, %v7105, 0
    %v7172 = vsel %vm321, %v7108, 0
    %v7175 = vsel %vm321, %v7111, 0
    %v7178 = vsel %vm321, %v7114, 0
    %v7181 = vsel %vm321, %v7117, 0
    %v7184 = vsel %vm321, %v7119, 0
    %v7187 = vsel %vm321, %v7120, 0
    %v7190 = vsel %vm321, %v7121, 0
    %v7193 = vsel %vm321, %v7122, 0
    %v7196 = vsel %vm321, %v7123, 0
    %v7199 = vsel %vm321, %v7124, 0
    %v7202 = vsel %vm321, %v7125, 0
    %v7205 = vsel %vm321, %v7126, 0
    %v7208 = vsel %vm321, %v7127, 0
    %v7211 = vsel %vm321, %v7128, 0
    %v7214 = vsel %vm321, %v7129, 0
    %v7217 = vsel %vm321, %v7130, 0
    %v7220 = vsel %vm321, %v7131, 0
    %v7223 = vsel %vm321, %v7132, 0
    %v7226 = vsel %vm321, %v7133, 0
    %v7229 = vsel %vm321, %v7134, 0
    %7231 = vmatpush.xpose.msra.mxu0 %v7229
    %7232 = vmatpush.xpose.msra.mxu0 %v7226
    %7233 = vmatpush.xpose.msra.mxu0 %v7223
    %7234 = vmatpush.xpose.msra.mxu0 %v7220
    %7235 = vmatpush.xpose.msra.mxu0 %v7217
    %7236 = vmatpush.xpose.msra.mxu0 %v7214
    %7237 = vmatpush.xpose.msra.mxu0 %v7211
    %7238 = vmatpush.xpose.msra.mxu0 %v7208
    %7239 = vmatpush.xpose.msra.mxu0 %v7205
    %7240 = vmatpush.xpose.msra.mxu0 %v7202
    %7241 = vmatpush.xpose.msra.mxu0 %v7199
    %7242 = vmatpush.xpose.msra.mxu0 %v7196
    %7243 = vmatpush.xpose.msra.mxu0 %v7193
    %7244 = vmatpush.xpose.msra.mxu0 %v7190
    %7245 = vmatpush.xpose.msra.mxu0 %v7187
    %7246 = vmatpush.xpose.msra.mxu0 %v7184
    %7247 = vmatmul.f32.gmra.mxu0 %v7136
    %v7248 = vpop.f32.mrf.mxu0
    %v7249 = vadd.f32 0.0, %v7248
    %7250 = vmatmul.f32.gmra.mxu0 %v7139
    %v7251 = vpop.f32.mrf.mxu0
    %v7252 = vadd.f32 0.0, %v7251
    %7253 = vmatmul.f32.gmra.mxu0 %v7142
    %v7254 = vpop.f32.mrf.mxu0
    %v7255 = vadd.f32 0.0, %v7254
    %7256 = vmatmul.f32.gmra.mxu0 %v7145
    %v7257 = vpop.f32.mrf.mxu0
    %v7258 = vadd.f32 0.0, %v7257
    %7259 = vmatmul.f32.gmra.mxu0 %v7148
    %v7260 = vpop.f32.mrf.mxu0
    %v7261 = vadd.f32 0.0, %v7260
    %7262 = vmatmul.f32.gmra.mxu0 %v7151
    %v7263 = vpop.f32.mrf.mxu0
    %v7264 = vadd.f32 0.0, %v7263
    %7265 = vmatmul.f32.gmra.mxu0 %v7154
    %v7266 = vpop.f32.mrf.mxu0
    %v7267 = vadd.f32 0.0, %v7266
    %7268 = vmatmul.f32.gmra.mxu0 %v7157
    %v7269 = vpop.f32.mrf.mxu0
    %v7270 = vadd.f32 0.0, %v7269
    %7271 = vmatmul.f32.gmra.mxu0 %v7160
    %v7272 = vpop.f32.mrf.mxu0
    %v7273 = vadd.f32 0.0, %v7272
    %7274 = vmatmul.f32.gmra.mxu0 %v7163
    %v7275 = vpop.f32.mrf.mxu0
    %v7276 = vadd.f32 0.0, %v7275
    %7277 = vmatmul.f32.gmra.mxu0 %v7166
    %v7278 = vpop.f32.mrf.mxu0
    %v7279 = vadd.f32 0.0, %v7278
    %7280 = vmatmul.f32.gmra.mxu0 %v7169
    %v7281 = vpop.f32.mrf.mxu0
    %v7282 = vadd.f32 0.0, %v7281
    %7283 = vmatmul.f32.gmra.mxu0 %v7172
    %v7284 = vpop.f32.mrf.mxu0
    %v7285 = vadd.f32 0.0, %v7284
    %7286 = vmatmul.f32.gmra.mxu0 %v7175
    %v7287 = vpop.f32.mrf.mxu0
    %v7288 = vadd.f32 0.0, %v7287
    %7289 = vmatmul.f32.gmra.mxu0 %v7178
    %v7290 = vpop.f32.mrf.mxu0
    %v7291 = vadd.f32 0.0, %v7290
    %7292 = vmatmul.f32.gmra.mxu0 %v7181
    %v7293 = vpop.f32.mrf.mxu0
    %v7294 = vadd.f32 0.0, %v7293
    %7295 = vdwg.mxu0
    %7296 = vmax.xlane.f32.xlu0 %v7249
    %v7297 = vpop.xlane.xlu0 %7296
    %7298 = vmax.xlane.f32.xlu0 %v7252
    %v7299 = vpop.xlane.xlu0 %7298
    %7300 = vmax.xlane.f32.xlu0 %v7255
    %v7301 = vpop.xlane.xlu0 %7300
    %7302 = vmax.xlane.f32.xlu0 %v7258
    %v7303 = vpop.xlane.xlu0 %7302
    %7304 = vmax.xlane.f32.xlu0 %v7261
    %v7305 = vpop.xlane.xlu0 %7304
    %7306 = vmax.xlane.f32.xlu0 %v7264
    %v7307 = vpop.xlane.xlu0 %7306
    %7308 = vmax.xlane.f32.xlu0 %v7267
    %v7309 = vpop.xlane.xlu0 %7308
    %7310 = vmax.xlane.f32.xlu0 %v7270
    %v7311 = vpop.xlane.xlu0 %7310
    %7312 = vmax.xlane.f32.xlu0 %v7273
    %v7313 = vpop.xlane.xlu0 %7312
    %7314 = vmax.xlane.f32.xlu0 %v7276
    %v7315 = vpop.xlane.xlu0 %7314
    %7316 = vmax.xlane.f32.xlu0 %v7279
    %v7317 = vpop.xlane.xlu0 %7316
    %7318 = vmax.xlane.f32.xlu0 %v7282
    %v7319 = vpop.xlane.xlu0 %7318
    %7320 = vmax.xlane.f32.xlu0 %v7285
    %v7321 = vpop.xlane.xlu0 %7320
    %7322 = vmax.xlane.f32.xlu0 %v7288
    %v7323 = vpop.xlane.xlu0 %7322
    %7324 = vmax.xlane.f32.xlu0 %v7291
    %v7325 = vpop.xlane.xlu0 %7324
    %7326 = vmax.xlane.f32.xlu0 %v7294
    %v7327 = vpop.xlane.xlu0 %7326
    %v7328 = vsub.f32 %v7249, %v7297
    %v7329 = vsub.f32 %v7252, %v7299
    %v7330 = vsub.f32 %v7255, %v7301
    %v7331 = vsub.f32 %v7258, %v7303
    %v7332 = vsub.f32 %v7261, %v7305
    %v7333 = vsub.f32 %v7264, %v7307
    %v7334 = vsub.f32 %v7267, %v7309
    %v7335 = vsub.f32 %v7270, %v7311
    %v7336 = vsub.f32 %v7273, %v7313
    %v7337 = vsub.f32 %v7276, %v7315
    %v7338 = vsub.f32 %v7279, %v7317
    %v7339 = vsub.f32 %v7282, %v7319
    %v7340 = vsub.f32 %v7285, %v7321
    %v7341 = vsub.f32 %v7288, %v7323
    %v7342 = vsub.f32 %v7291, %v7325
    %v7343 = vsub.f32 %v7294, %v7327
    %v7344 = vmul.f32 %v7328, 1.442695
    %v7345 = vpow.pop %v7344
    %v7346 = vmul.f32 %v7329, 1.442695
    %v7347 = vpow.pop %v7346
    %v7348 = vmul.f32 %v7330, 1.442695
    %v7349 = vpow.pop %v7348
    %v7350 = vmul.f32 %v7331, 1.442695
    %v7351 = vpow.pop %v7350
    %v7352 = vmul.f32 %v7332, 1.442695
    %v7353 = vpow.pop %v7352
    %v7354 = vmul.f32 %v7333, 1.442695
    %v7355 = vpow.pop %v7354
    %v7356 = vmul.f32 %v7334, 1.442695
    %v7357 = vpow.pop %v7356
    %v7358 = vmul.f32 %v7335, 1.442695
    %v7359 = vpow.pop %v7358
    %v7360 = vmul.f32 %v7336, 1.442695
    %v7361 = vpow.pop %v7360
    %v7362 = vmul.f32 %v7337, 1.442695
    %v7363 = vpow.pop %v7362
    %v7364 = vmul.f32 %v7338, 1.442695
    %v7365 = vpow.pop %v7364
    %v7366 = vmul.f32 %v7339, 1.442695
    %v7367 = vpow.pop %v7366
    %v7368 = vmul.f32 %v7340, 1.442695
    %v7369 = vpow.pop %v7368
    %v7370 = vmul.f32 %v7341, 1.442695
    %v7371 = vpow.pop %v7370
    %v7372 = vmul.f32 %v7342, 1.442695
    %v7373 = vpow.pop %v7372
    %v7374 = vmul.f32 %v7343, 1.442695
    %v7375 = vpow.pop %v7374
    %7376 = vadd.xlane.f32.xlu0 %v7345
    %v7377 = vpop.xlane.xlu0 %7376
    %7378 = vadd.xlane.f32.xlu0 %v7347
    %v7379 = vpop.xlane.xlu0 %7378
    %7380 = vadd.xlane.f32.xlu0 %v7349
    %v7381 = vpop.xlane.xlu0 %7380
    %7382 = vadd.xlane.f32.xlu0 %v7351
    %v7383 = vpop.xlane.xlu0 %7382
    %7384 = vadd.xlane.f32.xlu0 %v7353
    %v7385 = vpop.xlane.xlu0 %7384
    %7386 = vadd.xlane.f32.xlu0 %v7355
    %v7387 = vpop.xlane.xlu0 %7386
    %7388 = vadd.xlane.f32.xlu0 %v7357
    %v7389 = vpop.xlane.xlu0 %7388
    %7390 = vadd.xlane.f32.xlu0 %v7359
    %v7391 = vpop.xlane.xlu0 %7390
    %7392 = vadd.xlane.f32.xlu0 %v7361
    %v7393 = vpop.xlane.xlu0 %7392
    %7394 = vadd.xlane.f32.xlu0 %v7363
    %v7395 = vpop.xlane.xlu0 %7394
    %7396 = vadd.xlane.f32.xlu0 %v7365
    %v7397 = vpop.xlane.xlu0 %7396
    %7398 = vadd.xlane.f32.xlu0 %v7367
    %v7399 = vpop.xlane.xlu0 %7398
    %7400 = vadd.xlane.f32.xlu0 %v7369
    %v7401 = vpop.xlane.xlu0 %7400
    %7402 = vadd.xlane.f32.xlu0 %v7371
    %v7403 = vpop.xlane.xlu0 %7402
    %7404 = vadd.xlane.f32.xlu0 %v7373
    %v7405 = vpop.xlane.xlu0 %7404
    %7406 = vadd.xlane.f32.xlu0 %v7375
    %v7407 = vpop.xlane.xlu0 %7406
    %v7408 = vrcp.pop %v7377
    %v7409 = vmul.f32 %v7377, %v7408
    %v7410 = vsub.f32 1.0, %v7409
    %v7411 = vmul.f32 %v7408, %v7410
    %v7412 = vadd.f32 %v7408, %v7411
    %vm7413 = vweird.f32 %v7377
    %vm7414 = vweird.f32 %v7408
    %vm7415 = vmor %vm7413, %vm7414
    %v7416 = vsel %vm7415, %v7408, %v7412
    %v7417 = vand.u32 2147483647, %v7377
    %vm7418 = vcmp.eq.f32.partialorder %v7417, 8.507059e+37
    %v7419 = vand.u32 %v7377, 2147483648
    %v7420 = vor.u32 1.1754944e-38, %v7419
    %v7421 = vsel %vm7418, %v7420, %v7416
    %v7422 = vmul.f32 %v7345, %v7421
    %v7423 = vrcp.pop %v7379
    %v7424 = vmul.f32 %v7379, %v7423
    %v7425 = vsub.f32 1.0, %v7424
    %v7426 = vmul.f32 %v7423, %v7425
    %v7427 = vadd.f32 %v7423, %v7426
    %vm7428 = vweird.f32 %v7379
    %vm7429 = vweird.f32 %v7423
    %vm7430 = vmor %vm7428, %vm7429
    %v7431 = vsel %vm7430, %v7423, %v7427
    %v7432 = vand.u32 2147483647, %v7379
    %vm7433 = vcmp.eq.f32.partialorder %v7432, 8.507059e+37
    %v7434 = vand.u32 %v7379, 2147483648
    %v7435 = vor.u32 1.1754944e-38, %v7434
    %v7436 = vsel %vm7433, %v7435, %v7431
    %v7437 = vmul.f32 %v7347, %v7436
    %v7438 = vrcp.pop %v7381
    %v7439 = vmul.f32 %v7381, %v7438
    %v7440 = vsub.f32 1.0, %v7439
    %v7441 = vmul.f32 %v7438, %v7440
    %v7442 = vadd.f32 %v7438, %v7441
    %vm7443 = vweird.f32 %v7381
    %vm7444 = vweird.f32 %v7438
    %vm7445 = vmor %vm7443, %vm7444
    %v7446 = vsel %vm7445, %v7438, %v7442
    %v7447 = vand.u32 2147483647, %v7381
    %vm7448 = vcmp.eq.f32.partialorder %v7447, 8.507059e+37
    %v7449 = vand.u32 %v7381, 2147483648
    %v7450 = vor.u32 1.1754944e-38, %v7449
    %v7451 = vsel %vm7448, %v7450, %v7446
    %v7452 = vmul.f32 %v7349, %v7451
    %v7453 = vrcp.pop %v7383
    %v7454 = vmul.f32 %v7383, %v7453
    %v7455 = vsub.f32 1.0, %v7454
    %v7456 = vmul.f32 %v7453, %v7455
    %v7457 = vadd.f32 %v7453, %v7456
    %vm7458 = vweird.f32 %v7383
    %vm7459 = vweird.f32 %v7453
    %vm7460 = vmor %vm7458, %vm7459
    %v7461 = vsel %vm7460, %v7453, %v7457
    %v7462 = vand.u32 2147483647, %v7383
    %vm7463 = vcmp.eq.f32.partialorder %v7462, 8.507059e+37
    %v7464 = vand.u32 %v7383, 2147483648
    %v7465 = vor.u32 1.1754944e-38, %v7464
    %v7466 = vsel %vm7463, %v7465, %v7461
    %v7467 = vmul.f32 %v7351, %v7466
    %v7468 = vrcp.pop %v7385
    %v7469 = vmul.f32 %v7385, %v7468
    %v7470 = vsub.f32 1.0, %v7469
    %v7471 = vmul.f32 %v7468, %v7470
    %v7472 = vadd.f32 %v7468, %v7471
    %vm7473 = vweird.f32 %v7385
    %vm7474 = vweird.f32 %v7468
    %vm7475 = vmor %vm7473, %vm7474
    %v7476 = vsel %vm7475, %v7468, %v7472
    %v7477 = vand.u32 2147483647, %v7385
    %vm7478 = vcmp.eq.f32.partialorder %v7477, 8.507059e+37
    %v7479 = vand.u32 %v7385, 2147483648
    %v7480 = vor.u32 1.1754944e-38, %v7479
    %v7481 = vsel %vm7478, %v7480, %v7476
    %v7482 = vmul.f32 %v7353, %v7481
    %v7483 = vrcp.pop %v7387
    %v7484 = vmul.f32 %v7387, %v7483
    %v7485 = vsub.f32 1.0, %v7484
    %v7486 = vmul.f32 %v7483, %v7485
    %v7487 = vadd.f32 %v7483, %v7486
    %vm7488 = vweird.f32 %v7387
    %vm7489 = vweird.f32 %v7483
    %vm7490 = vmor %vm7488, %vm7489
    %v7491 = vsel %vm7490, %v7483, %v7487
    %v7492 = vand.u32 2147483647, %v7387
    %vm7493 = vcmp.eq.f32.partialorder %v7492, 8.507059e+37
    %v7494 = vand.u32 %v7387, 2147483648
    %v7495 = vor.u32 1.1754944e-38, %v7494
    %v7496 = vsel %vm7493, %v7495, %v7491
    %v7497 = vmul.f32 %v7355, %v7496
    %v7498 = vrcp.pop %v7389
    %v7499 = vmul.f32 %v7389, %v7498
    %v7500 = vsub.f32 1.0, %v7499
    %v7501 = vmul.f32 %v7498, %v7500
    %v7502 = vadd.f32 %v7498, %v7501
    %vm7503 = vweird.f32 %v7389
    %vm7504 = vweird.f32 %v7498
    %vm7505 = vmor %vm7503, %vm7504
    %v7506 = vsel %vm7505, %v7498, %v7502
    %v7507 = vand.u32 2147483647, %v7389
    %vm7508 = vcmp.eq.f32.partialorder %v7507, 8.507059e+37
    %v7509 = vand.u32 %v7389, 2147483648
    %v7510 = vor.u32 1.1754944e-38, %v7509
    %v7511 = vsel %vm7508, %v7510, %v7506
    %v7512 = vmul.f32 %v7357, %v7511
    %v7513 = vrcp.pop %v7391
    %v7514 = vmul.f32 %v7391, %v7513
    %v7515 = vsub.f32 1.0, %v7514
    %v7516 = vmul.f32 %v7513, %v7515
    %v7517 = vadd.f32 %v7513, %v7516
    %vm7518 = vweird.f32 %v7391
    %vm7519 = vweird.f32 %v7513
    %vm7520 = vmor %vm7518, %vm7519
    %v7521 = vsel %vm7520, %v7513, %v7517
    %v7522 = vand.u32 2147483647, %v7391
    %vm7523 = vcmp.eq.f32.partialorder %v7522, 8.507059e+37
    %v7524 = vand.u32 %v7391, 2147483648
    %v7525 = vor.u32 1.1754944e-38, %v7524
    %v7526 = vsel %vm7523, %v7525, %v7521
    %v7527 = vmul.f32 %v7359, %v7526
    %v7528 = vrcp.pop %v7393
    %v7529 = vmul.f32 %v7393, %v7528
    %v7530 = vsub.f32 1.0, %v7529
    %v7531 = vmul.f32 %v7528, %v7530
    %v7532 = vadd.f32 %v7528, %v7531
    %vm7533 = vweird.f32 %v7393
    %vm7534 = vweird.f32 %v7528
    %vm7535 = vmor %vm7533, %vm7534
    %v7536 = vsel %vm7535, %v7528, %v7532
    %v7537 = vand.u32 2147483647, %v7393
    %vm7538 = vcmp.eq.f32.partialorder %v7537, 8.507059e+37
    %v7539 = vand.u32 %v7393, 2147483648
    %v7540 = vor.u32 1.1754944e-38, %v7539
    %v7541 = vsel %vm7538, %v7540, %v7536
    %v7542 = vmul.f32 %v7361, %v7541
    %v7543 = vrcp.pop %v7395
    %v7544 = vmul.f32 %v7395, %v7543
    %v7545 = vsub.f32 1.0, %v7544
    %v7546 = vmul.f32 %v7543, %v7545
    %v7547 = vadd.f32 %v7543, %v7546
    %vm7548 = vweird.f32 %v7395
    %vm7549 = vweird.f32 %v7543
    %vm7550 = vmor %vm7548, %vm7549
    %v7551 = vsel %vm7550, %v7543, %v7547
    %v7552 = vand.u32 2147483647, %v7395
    %vm7553 = vcmp.eq.f32.partialorder %v7552, 8.507059e+37
    %v7554 = vand.u32 %v7395, 2147483648
    %v7555 = vor.u32 1.1754944e-38, %v7554
    %v7556 = vsel %vm7553, %v7555, %v7551
    %v7557 = vmul.f32 %v7363, %v7556
    %v7558 = vrcp.pop %v7397
    %v7559 = vmul.f32 %v7397, %v7558
    %v7560 = vsub.f32 1.0, %v7559
    %v7561 = vmul.f32 %v7558, %v7560
    %v7562 = vadd.f32 %v7558, %v7561
    %vm7563 = vweird.f32 %v7397
    %vm7564 = vweird.f32 %v7558
    %vm7565 = vmor %vm7563, %vm7564
    %v7566 = vsel %vm7565, %v7558, %v7562
    %v7567 = vand.u32 2147483647, %v7397
    %vm7568 = vcmp.eq.f32.partialorder %v7567, 8.507059e+37
    %v7569 = vand.u32 %v7397, 2147483648
    %v7570 = vor.u32 1.1754944e-38, %v7569
    %v7571 = vsel %vm7568, %v7570, %v7566
    %v7572 = vmul.f32 %v7365, %v7571
    %v7573 = vrcp.pop %v7399
    %v7574 = vmul.f32 %v7399, %v7573
    %v7575 = vsub.f32 1.0, %v7574
    %v7576 = vmul.f32 %v7573, %v7575
    %v7577 = vadd.f32 %v7573, %v7576
    %vm7578 = vweird.f32 %v7399
    %vm7579 = vweird.f32 %v7573
    %vm7580 = vmor %vm7578, %vm7579
    %v7581 = vsel %vm7580, %v7573, %v7577
    %v7582 = vand.u32 2147483647, %v7399
    %vm7583 = vcmp.eq.f32.partialorder %v7582, 8.507059e+37
    %v7584 = vand.u32 %v7399, 2147483648
    %v7585 = vor.u32 1.1754944e-38, %v7584
    %v7586 = vsel %vm7583, %v7585, %v7581
    %v7587 = vmul.f32 %v7367, %v7586
    %v7588 = vrcp.pop %v7401
    %v7589 = vmul.f32 %v7401, %v7588
    %v7590 = vsub.f32 1.0, %v7589
    %v7591 = vmul.f32 %v7588, %v7590
    %v7592 = vadd.f32 %v7588, %v7591
    %vm7593 = vweird.f32 %v7401
    %vm7594 = vweird.f32 %v7588
    %vm7595 = vmor %vm7593, %vm7594
    %v7596 = vsel %vm7595, %v7588, %v7592
    %v7597 = vand.u32 2147483647, %v7401
    %vm7598 = vcmp.eq.f32.partialorder %v7597, 8.507059e+37
    %v7599 = vand.u32 %v7401, 2147483648
    %v7600 = vor.u32 1.1754944e-38, %v7599
    %v7601 = vsel %vm7598, %v7600, %v7596
    %v7602 = vmul.f32 %v7369, %v7601
    %v7603 = vrcp.pop %v7403
    %v7604 = vmul.f32 %v7403, %v7603
    %v7605 = vsub.f32 1.0, %v7604
    %v7606 = vmul.f32 %v7603, %v7605
    %v7607 = vadd.f32 %v7603, %v7606
    %vm7608 = vweird.f32 %v7403
    %vm7609 = vweird.f32 %v7603
    %vm7610 = vmor %vm7608, %vm7609
    %v7611 = vsel %vm7610, %v7603, %v7607
    %v7612 = vand.u32 2147483647, %v7403
    %vm7613 = vcmp.eq.f32.partialorder %v7612, 8.507059e+37
    %v7614 = vand.u32 %v7403, 2147483648
    %v7615 = vor.u32 1.1754944e-38, %v7614
    %v7616 = vsel %vm7613, %v7615, %v7611
    %v7617 = vmul.f32 %v7371, %v7616
    %v7618 = vrcp.pop %v7405
    %v7619 = vmul.f32 %v7405, %v7618
    %v7620 = vsub.f32 1.0, %v7619
    %v7621 = vmul.f32 %v7618, %v7620
    %v7622 = vadd.f32 %v7618, %v7621
    %vm7623 = vweird.f32 %v7405
    %vm7624 = vweird.f32 %v7618
    %vm7625 = vmor %vm7623, %vm7624
    %v7626 = vsel %vm7625, %v7618, %v7622
    %v7627 = vand.u32 2147483647, %v7405
    %vm7628 = vcmp.eq.f32.partialorder %v7627, 8.507059e+37
    %v7629 = vand.u32 %v7405, 2147483648
    %v7630 = vor.u32 1.1754944e-38, %v7629
    %v7631 = vsel %vm7628, %v7630, %v7626
    %v7632 = vmul.f32 %v7373, %v7631
    %v7633 = vrcp.pop %v7407
    %v7634 = vmul.f32 %v7407, %v7633
    %v7635 = vsub.f32 1.0, %v7634
    %v7636 = vmul.f32 %v7633, %v7635
    %v7637 = vadd.f32 %v7633, %v7636
    %vm7638 = vweird.f32 %v7407
    %vm7639 = vweird.f32 %v7633
    %vm7640 = vmor %vm7638, %vm7639
    %v7641 = vsel %vm7640, %v7633, %v7637
    %v7642 = vand.u32 2147483647, %v7407
    %vm7643 = vcmp.eq.f32.partialorder %v7642, 8.507059e+37
    %v7644 = vand.u32 %v7407, 2147483648
    %v7645 = vor.u32 1.1754944e-38, %v7644
    %v7646 = vsel %vm7643, %v7645, %v7641
    %v7647 = vmul.f32 %v7375, %v7646
    %v7648 = vmul.f32 %v6988, %v665
    %v7649 = vmul.f32 %v6989, %v666
    %v7650 = vmul.f32 %v6988, %v667
    %v7651 = vmul.f32 %v6989, %v668
    %v7652 = vmul.f32 %v6988, %v669
    %v7653 = vmul.f32 %v6989, %v670
    %v7654 = vmul.f32 %v6988, %v671
    %v7655 = vmul.f32 %v6989, %v672
    %v7656 = vmul.f32 %v6988, %v673
    %v7657 = vmul.f32 %v6989, %v674
    %v7658 = vmul.f32 %v6988, %v675
    %v7659 = vmul.f32 %v6989, %v676
    %v7660 = vmul.f32 %v6988, %v677
    %v7661 = vmul.f32 %v6989, %v678
    %v7662 = vmul.f32 %v6988, %v679
    %v7663 = vmul.f32 %v6989, %v680
    %7664 = vmatpush.msra.mxu0 %v7663
    %7665 = vmatpush.msra.mxu0 %v7662
    %7666 = vmatpush.msra.mxu0 %v7661
    %7667 = vmatpush.msra.mxu0 %v7660
    %7668 = vmatpush.msra.mxu0 %v7659
    %7669 = vmatpush.msra.mxu0 %v7658
    %7670 = vmatpush.msra.mxu0 %v7657
    %7671 = vmatpush.msra.mxu0 %v7656
    %7672 = vmatpush.msra.mxu0 %v7655
    %7673 = vmatpush.msra.mxu0 %v7654
    %7674 = vmatpush.msra.mxu0 %v7653
    %7675 = vmatpush.msra.mxu0 %v7652
    %7676 = vmatpush.msra.mxu0 %v7651
    %7677 = vmatpush.msra.mxu0 %v7650
    %7678 = vmatpush.msra.mxu0 %v7649
    %7679 = vmatpush.msra.mxu0 %v7648
    %7680 = vmatmul.f32.gmra.mxu0 %v7422
    %v7681 = vpop.f32.mrf.mxu0
    %v7682 = vadd.f32 0.0, %v7681
    %7683 = vmatmul.f32.gmra.mxu0 %v7437
    %v7684 = vpop.f32.mrf.mxu0
    %v7685 = vadd.f32 0.0, %v7684
    %7686 = vmatmul.f32.gmra.mxu0 %v7452
    %v7687 = vpop.f32.mrf.mxu0
    %v7688 = vadd.f32 0.0, %v7687
    %7689 = vmatmul.f32.gmra.mxu0 %v7467
    %v7690 = vpop.f32.mrf.mxu0
    %v7691 = vadd.f32 0.0, %v7690
    %7692 = vmatmul.f32.gmra.mxu0 %v7482
    %v7693 = vpop.f32.mrf.mxu0
    %v7694 = vadd.f32 0.0, %v7693
    %7695 = vmatmul.f32.gmra.mxu0 %v7497
    %v7696 = vpop.f32.mrf.mxu0
    %v7697 = vadd.f32 0.0, %v7696
    %7698 = vmatmul.f32.gmra.mxu0 %v7512
    %v7699 = vpop.f32.mrf.mxu0
    %v7700 = vadd.f32 0.0, %v7699
    %7701 = vmatmul.f32.gmra.mxu0 %v7527
    %v7702 = vpop.f32.mrf.mxu0
    %v7703 = vadd.f32 0.0, %v7702
    %7704 = vmatmul.f32.gmra.mxu0 %v7542
    %v7705 = vpop.f32.mrf.mxu0
    %v7706 = vadd.f32 0.0, %v7705
    %7707 = vmatmul.f32.gmra.mxu0 %v7557
    %v7708 = vpop.f32.mrf.mxu0
    %v7709 = vadd.f32 0.0, %v7708
    %7710 = vmatmul.f32.gmra.mxu0 %v7572
    %v7711 = vpop.f32.mrf.mxu0
    %v7712 = vadd.f32 0.0, %v7711
    %7713 = vmatmul.f32.gmra.mxu0 %v7587
    %v7714 = vpop.f32.mrf.mxu0
    %v7715 = vadd.f32 0.0, %v7714
    %7716 = vmatmul.f32.gmra.mxu0 %v7602
    %v7717 = vpop.f32.mrf.mxu0
    %v7718 = vadd.f32 0.0, %v7717
    %7719 = vmatmul.f32.gmra.mxu0 %v7617
    %v7720 = vpop.f32.mrf.mxu0
    %v7721 = vadd.f32 0.0, %v7720
    %7722 = vmatmul.f32.gmra.mxu0 %v7632
    %v7723 = vpop.f32.mrf.mxu0
    %v7724 = vadd.f32 0.0, %v7723
    %7725 = vmatmul.f32.gmra.mxu0 %v7647
    %v7726 = vpop.f32.mrf.mxu0
    %v7727 = vadd.f32 0.0, %v7726
    %7728 = vdwg.mxu0
    %v7730 = vsel %vm321, %v7682, 0
    %v7733 = vsel %vm321, %v7685, 0
    %v7736 = vsel %vm321, %v7688, 0
    %v7739 = vsel %vm321, %v7691, 0
    %v7742 = vsel %vm321, %v7694, 0
    %v7745 = vsel %vm321, %v7697, 0
    %v7748 = vsel %vm321, %v7700, 0
    %v7751 = vsel %vm321, %v7703, 0
    %v7754 = vsel %vm321, %v7706, 0
    %v7757 = vsel %vm321, %v7709, 0
    %v7760 = vsel %vm321, %v7712, 0
    %v7763 = vsel %vm321, %v7715, 0
    %v7766 = vsel %vm321, %v7718, 0
    %v7769 = vsel %vm321, %v7721, 0
    %v7772 = vsel %vm321, %v7724, 0
    %v7775 = vsel %vm321, %v7727, 0
    %7777 = vmatpush.msra.mxu0 0.0
    %7778 = vmatpush.msra.mxu0 0.0
    %7779 = vmatpush.msra.mxu0 0.0
    %7780 = vmatpush.msra.mxu0 0.0
    %7781 = vmatpush.msra.mxu0 0.0
    %7782 = vmatpush.msra.mxu0 0.0
    %7783 = vmatpush.msra.mxu0 0.0
    %7784 = vmatpush.msra.mxu0 0.0
    %7785 = vmatpush.msra.mxu0 %v688
    %7786 = vmatpush.msra.mxu0 %v687
    %7787 = vmatpush.msra.mxu0 %v686
    %7788 = vmatpush.msra.mxu0 %v685
    %7789 = vmatpush.msra.mxu0 %v684
    %7790 = vmatpush.msra.mxu0 %v683
    %7791 = vmatpush.msra.mxu0 %v682
    %7792 = vmatpush.msra.mxu0 %v681
    %7793 = vmatmul.f32.gmra.mxu0 %v7730
    %v7794 = vpop.f32.mrf.mxu0
    %v7795 = vadd.f32 0.0, %v7794
    %7796 = vmatmul.f32.gmra.mxu0 %v7733
    %v7797 = vpop.f32.mrf.mxu0
    %v7798 = vadd.f32 0.0, %v7797
    %7799 = vmatmul.f32.gmra.mxu0 %v7736
    %v7800 = vpop.f32.mrf.mxu0
    %v7801 = vadd.f32 0.0, %v7800
    %7802 = vmatmul.f32.gmra.mxu0 %v7739
    %v7803 = vpop.f32.mrf.mxu0
    %v7804 = vadd.f32 0.0, %v7803
    %7805 = vmatmul.f32.gmra.mxu0 %v7742
    %v7806 = vpop.f32.mrf.mxu0
    %v7807 = vadd.f32 0.0, %v7806
    %7808 = vmatmul.f32.gmra.mxu0 %v7745
    %v7809 = vpop.f32.mrf.mxu0
    %v7810 = vadd.f32 0.0, %v7809
    %7811 = vmatmul.f32.gmra.mxu0 %v7748
    %v7812 = vpop.f32.mrf.mxu0
    %v7813 = vadd.f32 0.0, %v7812
    %7814 = vmatmul.f32.gmra.mxu0 %v7751
    %v7815 = vpop.f32.mrf.mxu0
    %v7816 = vadd.f32 0.0, %v7815
    %7817 = vmatmul.f32.gmra.mxu0 %v7754
    %v7818 = vpop.f32.mrf.mxu0
    %v7819 = vadd.f32 0.0, %v7818
    %7820 = vmatmul.f32.gmra.mxu0 %v7757
    %v7821 = vpop.f32.mrf.mxu0
    %v7822 = vadd.f32 0.0, %v7821
    %7823 = vmatmul.f32.gmra.mxu0 %v7760
    %v7824 = vpop.f32.mrf.mxu0
    %v7825 = vadd.f32 0.0, %v7824
    %7826 = vmatmul.f32.gmra.mxu0 %v7763
    %v7827 = vpop.f32.mrf.mxu0
    %v7828 = vadd.f32 0.0, %v7827
    %7829 = vmatmul.f32.gmra.mxu0 %v7766
    %v7830 = vpop.f32.mrf.mxu0
    %v7831 = vadd.f32 0.0, %v7830
    %7832 = vmatmul.f32.gmra.mxu0 %v7769
    %v7833 = vpop.f32.mrf.mxu0
    %v7834 = vadd.f32 0.0, %v7833
    %7835 = vmatmul.f32.gmra.mxu0 %v7772
    %v7836 = vpop.f32.mrf.mxu0
    %v7837 = vadd.f32 0.0, %v7836
    %7838 = vmatmul.f32.gmra.mxu0 %v7775
    %v7839 = vpop.f32.mrf.mxu0
    %v7840 = vadd.f32 0.0, %v7839
    %7841 = vdwg.mxu0
    %v7842 = vmul.f32 %v7795, %v665
    %v7843 = vmul.f32 %v7798, %v666
    %v7844 = vmul.f32 %v7801, %v667
    %v7845 = vmul.f32 %v7804, %v668
    %v7846 = vmul.f32 %v7807, %v669
    %v7847 = vmul.f32 %v7810, %v670
    %v7848 = vmul.f32 %v7813, %v671
    %v7849 = vmul.f32 %v7816, %v672
    %v7850 = vmul.f32 %v7819, %v673
    %v7851 = vmul.f32 %v7822, %v674
    %v7852 = vmul.f32 %v7825, %v675
    %v7853 = vmul.f32 %v7828, %v676
    %v7854 = vmul.f32 %v7831, %v677
    %v7855 = vmul.f32 %v7834, %v678
    %v7856 = vmul.f32 %v7837, %v679
    %v7857 = vmul.f32 %v7840, %v680
    %7858 = vmatpush.msra.mxu0 %v7857
    %7859 = vmatpush.msra.mxu0 %v7856
    %7860 = vmatpush.msra.mxu0 %v7855
    %7861 = vmatpush.msra.mxu0 %v7854
    %7862 = vmatpush.msra.mxu0 %v7853
    %7863 = vmatpush.msra.mxu0 %v7852
    %7864 = vmatpush.msra.mxu0 %v7851
    %7865 = vmatpush.msra.mxu0 %v7850
    %7866 = vmatpush.msra.mxu0 %v7849
    %7867 = vmatpush.msra.mxu0 %v7848
    %7868 = vmatpush.msra.mxu0 %v7847
    %7869 = vmatpush.msra.mxu0 %v7846
    %7870 = vmatpush.msra.mxu0 %v7845
    %7871 = vmatpush.msra.mxu0 %v7844
    %7872 = vmatpush.msra.mxu0 %v7843
    %7873 = vmatpush.msra.mxu0 %v7842
    %7874 = vmatmul.f32.gmra.mxu0 %v689
    %v7875 = vpop.f32.mrf.mxu0
    %v7876 = vadd.f32 0.0, %v7875
    %7877 = vmatmul.f32.gmra.mxu0 %v690
    %v7878 = vpop.f32.mrf.mxu0
    %v7879 = vadd.f32 0.0, %v7878
    %7880 = vdwg.mxu0
    %7881 = vst.msk [vmem:[#allocation6 + $0x70] sm:$0xff] %vm321, %v7876
    %7882 = vst.msk [vmem:[#allocation6 + $0x78] sm:$0xff] %vm321, %v7879
    %v7883 = vld [vmem:[#allocation6] sm:$0xff]
    %v7884 = vld [vmem:[#allocation6 + $0x8] sm:$0xff]
    %v7885 = vld [vmem:[#allocation6 + $0x10] sm:$0xff]
    %v7886 = vld [vmem:[#allocation6 + $0x18] sm:$0xff]
    %v7887 = vld [vmem:[#allocation6 + $0x20] sm:$0xff]
    %v7888 = vld [vmem:[#allocation6 + $0x28] sm:$0xff]
    %v7889 = vld [vmem:[#allocation6 + $0x30] sm:$0xff]
    %v7890 = vld [vmem:[#allocation6 + $0x38] sm:$0xff]
    %v7891 = vld [vmem:[#allocation6 + $0x40] sm:$0xff]
    %v7892 = vld [vmem:[#allocation6 + $0x48] sm:$0xff]
    %v7893 = vld [vmem:[#allocation6 + $0x50] sm:$0xff]
    %v7894 = vld [vmem:[#allocation6 + $0x58] sm:$0xff]
    %v7895 = vld [vmem:[#allocation6 + $0x60] sm:$0xff]
    %v7896 = vld [vmem:[#allocation6 + $0x68] sm:$0xff]
    %v7897 = vld [vmem:[#allocation6 + $0x70] sm:$0xff]
    %v7898 = vld [vmem:[#allocation6 + $0x78] sm:$0xff]
    %v7899 = vld [vmem:[%s10] sm:$0xff]
    %v7900 = vld [vmem:[%s10 + $0x8] sm:$0xff]
    %v7901 = vld [vmem:[%s10 + $0x10] sm:$0xff]
    %v7902 = vld [vmem:[%s10 + $0x18] sm:$0xff]
    %v7903 = vld [vmem:[%s10 + $0x20] sm:$0xff]
    %v7904 = vld [vmem:[%s10 + $0x28] sm:$0xff]
    %v7905 = vld [vmem:[%s10 + $0x30] sm:$0xff]
    %v7906 = vld [vmem:[%s10 + $0x38] sm:$0xff]
    %v7907 = vld [vmem:[%s11] sm:$0x1]
    %v7909 = vperm.slane %v7907, 0
    %v7912 = vsel %vm321, %v7883, 0
    %v7915 = vsel %vm321, %v7884, 0
    %v7918 = vsel %vm321, %v7885, 0
    %v7921 = vsel %vm321, %v7886, 0
    %v7924 = vsel %vm321, %v7887, 0
    %v7927 = vsel %vm321, %v7888, 0
    %v7930 = vsel %vm321, %v7889, 0
    %v7933 = vsel %vm321, %v7890, 0
    %v7936 = vsel %vm321, %v7891, 0
    %v7939 = vsel %vm321, %v7892, 0
    %v7942 = vsel %vm321, %v7893, 0
    %v7945 = vsel %vm321, %v7894, 0
    %v7948 = vsel %vm321, %v7895, 0
    %v7951 = vsel %vm321, %v7896, 0
    %v7954 = vsel %vm321, %v7897, 0
    %v7957 = vsel %vm321, %v7898, 0
    %7959 = vmatpush.msra.mxu0 0.0
    %7960 = vmatpush.msra.mxu0 0.0
    %7961 = vmatpush.msra.mxu0 0.0
    %7962 = vmatpush.msra.mxu0 0.0
    %7963 = vmatpush.msra.mxu0 0.0
    %7964 = vmatpush.msra.mxu0 0.0
    %7965 = vmatpush.msra.mxu0 0.0
    %7966 = vmatpush.msra.mxu0 0.0
    %7967 = vmatpush.msra.mxu0 %v7906
    %7968 = vmatpush.msra.mxu0 %v7905
    %7969 = vmatpush.msra.mxu0 %v7904
    %7970 = vmatpush.msra.mxu0 %v7903
    %7971 = vmatpush.msra.mxu0 %v7902
    %7972 = vmatpush.msra.mxu0 %v7901
    %7973 = vmatpush.msra.mxu0 %v7900
    %7974 = vmatpush.msra.mxu0 %v7899
    %7975 = vmatmul.f32.gmra.mxu0 %v7912
    %v7976 = vpop.f32.mrf.mxu0
    %v7977 = vadd.f32 %v7909, %v7976
    %7978 = vmatmul.f32.gmra.mxu0 %v7915
    %v7979 = vpop.f32.mrf.mxu0
    %v7980 = vadd.f32 %v7909, %v7979
    %7981 = vmatmul.f32.gmra.mxu0 %v7918
    %v7982 = vpop.f32.mrf.mxu0
    %v7983 = vadd.f32 %v7909, %v7982
    %7984 = vmatmul.f32.gmra.mxu0 %v7921
    %v7985 = vpop.f32.mrf.mxu0
    %v7986 = vadd.f32 %v7909, %v7985
    %7987 = vmatmul.f32.gmra.mxu0 %v7924
    %v7988 = vpop.f32.mrf.mxu0
    %v7989 = vadd.f32 %v7909, %v7988
    %7990 = vmatmul.f32.gmra.mxu0 %v7927
    %v7991 = vpop.f32.mrf.mxu0
    %v7992 = vadd.f32 %v7909, %v7991
    %7993 = vmatmul.f32.gmra.mxu0 %v7930
    %v7994 = vpop.f32.mrf.mxu0
    %v7995 = vadd.f32 %v7909, %v7994
    %7996 = vmatmul.f32.gmra.mxu0 %v7933
    %v7997 = vpop.f32.mrf.mxu0
    %v7998 = vadd.f32 %v7909, %v7997
    %7999 = vmatmul.f32.gmra.mxu0 %v7936
    %v8000 = vpop.f32.mrf.mxu0
    %v8001 = vadd.f32 %v7909, %v8000
    %8002 = vmatmul.f32.gmra.mxu0 %v7939
    %v8003 = vpop.f32.mrf.mxu0
    %v8004 = vadd.f32 %v7909, %v8003
    %8005 = vmatmul.f32.gmra.mxu0 %v7942
    %v8006 = vpop.f32.mrf.mxu0
    %v8007 = vadd.f32 %v7909, %v8006
    %8008 = vmatmul.f32.gmra.mxu0 %v7945
    %v8009 = vpop.f32.mrf.mxu0
    %v8010 = vadd.f32 %v7909, %v8009
    %8011 = vmatmul.f32.gmra.mxu0 %v7948
    %v8012 = vpop.f32.mrf.mxu0
    %v8013 = vadd.f32 %v7909, %v8012
    %8014 = vmatmul.f32.gmra.mxu0 %v7951
    %v8015 = vpop.f32.mrf.mxu0
    %v8016 = vadd.f32 %v7909, %v8015
    %8017 = vmatmul.f32.gmra.mxu0 %v7954
    %v8018 = vpop.f32.mrf.mxu0
    %v8019 = vadd.f32 %v7909, %v8018
    %8020 = vmatmul.f32.gmra.mxu0 %v7957
    %v8021 = vpop.f32.mrf.mxu0
    %v8022 = vadd.f32 %v7909, %v8021
    %8023 = vdwg.mxu0
    %v8024 = vld [vmem:[#allocation2] sm:$0xff]
    %v8025 = vld [vmem:[#allocation2 + $0x8] sm:$0xff]
    %v8026 = vld [vmem:[#allocation2 + $0x10] sm:$0xff]
    %v8027 = vld [vmem:[#allocation2 + $0x18] sm:$0xff]
    %v8028 = vld [vmem:[#allocation2 + $0x20] sm:$0xff]
    %v8029 = vld [vmem:[#allocation2 + $0x28] sm:$0xff]
    %v8030 = vld [vmem:[#allocation2 + $0x30] sm:$0xff]
    %v8031 = vld [vmem:[#allocation2 + $0x38] sm:$0xff]
    %v8032 = vld [vmem:[#allocation2 + $0x40] sm:$0xff]
    %v8033 = vld [vmem:[#allocation2 + $0x48] sm:$0xff]
    %v8034 = vld [vmem:[#allocation2 + $0x50] sm:$0xff]
    %v8035 = vld [vmem:[#allocation2 + $0x58] sm:$0xff]
    %v8036 = vld [vmem:[#allocation2 + $0x60] sm:$0xff]
    %v8037 = vld [vmem:[#allocation2 + $0x68] sm:$0xff]
    %v8038 = vld [vmem:[#allocation2 + $0x70] sm:$0xff]
    %v8039 = vld [vmem:[#allocation2 + $0x78] sm:$0xff]
    %v8040 = vadd.f32 %v8024, %v7977
    %v8041 = vadd.f32 %v8025, %v7980
    %v8042 = vadd.f32 %v8026, %v7983
    %v8043 = vadd.f32 %v8027, %v7986
    %v8044 = vadd.f32 %v8028, %v7989
    %v8045 = vadd.f32 %v8029, %v7992
    %v8046 = vadd.f32 %v8030, %v7995
    %v8047 = vadd.f32 %v8031, %v7998
    %v8048 = vadd.f32 %v8032, %v8001
    %v8049 = vadd.f32 %v8033, %v8004
    %v8050 = vadd.f32 %v8034, %v8007
    %v8051 = vadd.f32 %v8035, %v8010
    %v8052 = vadd.f32 %v8036, %v8013
    %v8053 = vadd.f32 %v8037, %v8016
    %v8054 = vadd.f32 %v8038, %v8019
    %v8055 = vadd.f32 %v8039, %v8022
    %v8056 = vsel %vm321, %v8040, 0.0
    %8057 = vadd.xlane.f32.xlu0 %v8056
    %v8058 = vpop.xlane.xlu0 %8057
    %v8059 = vsel %vm321, %v8041, 0.0
    %8060 = vadd.xlane.f32.xlu0 %v8059
    %v8061 = vpop.xlane.xlu0 %8060
    %v8062 = vsel %vm321, %v8042, 0.0
    %8063 = vadd.xlane.f32.xlu0 %v8062
    %v8064 = vpop.xlane.xlu0 %8063
    %v8065 = vsel %vm321, %v8043, 0.0
    %8066 = vadd.xlane.f32.xlu0 %v8065
    %v8067 = vpop.xlane.xlu0 %8066
    %v8068 = vsel %vm321, %v8044, 0.0
    %8069 = vadd.xlane.f32.xlu0 %v8068
    %v8070 = vpop.xlane.xlu0 %8069
    %v8071 = vsel %vm321, %v8045, 0.0
    %8072 = vadd.xlane.f32.xlu0 %v8071
    %v8073 = vpop.xlane.xlu0 %8072
    %v8074 = vsel %vm321, %v8046, 0.0
    %8075 = vadd.xlane.f32.xlu0 %v8074
    %v8076 = vpop.xlane.xlu0 %8075
    %v8077 = vsel %vm321, %v8047, 0.0
    %8078 = vadd.xlane.f32.xlu0 %v8077
    %v8079 = vpop.xlane.xlu0 %8078
    %v8080 = vsel %vm321, %v8048, 0.0
    %8081 = vadd.xlane.f32.xlu0 %v8080
    %v8082 = vpop.xlane.xlu0 %8081
    %v8083 = vsel %vm321, %v8049, 0.0
    %8084 = vadd.xlane.f32.xlu0 %v8083
    %v8085 = vpop.xlane.xlu0 %8084
    %v8086 = vsel %vm321, %v8050, 0.0
    %8087 = vadd.xlane.f32.xlu0 %v8086
    %v8088 = vpop.xlane.xlu0 %8087
    %v8089 = vsel %vm321, %v8051, 0.0
    %8090 = vadd.xlane.f32.xlu0 %v8089
    %v8091 = vpop.xlane.xlu0 %8090
    %v8092 = vsel %vm321, %v8052, 0.0
    %8093 = vadd.xlane.f32.xlu0 %v8092
    %v8094 = vpop.xlane.xlu0 %8093
    %v8095 = vsel %vm321, %v8053, 0.0
    %8096 = vadd.xlane.f32.xlu0 %v8095
    %v8097 = vpop.xlane.xlu0 %8096
    %v8098 = vsel %vm321, %v8054, 0.0
    %8099 = vadd.xlane.f32.xlu0 %v8098
    %v8100 = vpop.xlane.xlu0 %8099
    %v8101 = vsel %vm321, %v8055, 0.0
    %8102 = vadd.xlane.f32.xlu0 %v8101
    %v8103 = vpop.xlane.xlu0 %8102
    %v8104 = vrcp.pop 64.0
    %v8105 = vmul.f32 64.0, %v8104
    %v8106 = vsub.f32 1.0, %v8105
    %v8107 = vmul.f32 %v8104, %v8106
    %v8108 = vadd.f32 %v8104, %v8107
    %vm8109 = vweird.f32 %v8104
    %v8110 = vsel %vm8109, %v8104, %v8108
    %v8111 = vmul.f32 %v8058, %v8110
    %v8112 = vmul.f32 %v8061, %v8110
    %v8113 = vmul.f32 %v8064, %v8110
    %v8114 = vmul.f32 %v8067, %v8110
    %v8115 = vmul.f32 %v8070, %v8110
    %v8116 = vmul.f32 %v8073, %v8110
    %v8117 = vmul.f32 %v8076, %v8110
    %v8118 = vmul.f32 %v8079, %v8110
    %v8119 = vmul.f32 %v8082, %v8110
    %v8120 = vmul.f32 %v8085, %v8110
    %v8121 = vmul.f32 %v8088, %v8110
    %v8122 = vmul.f32 %v8091, %v8110
    %v8123 = vmul.f32 %v8094, %v8110
    %v8124 = vmul.f32 %v8097, %v8110
    %v8125 = vmul.f32 %v8100, %v8110
    %v8126 = vmul.f32 %v8103, %v8110
    %v8127 = vsub.f32 %v8040, %v8111
    %v8128 = vsub.f32 %v8041, %v8112
    %v8129 = vsub.f32 %v8042, %v8113
    %v8130 = vsub.f32 %v8043, %v8114
    %v8131 = vsub.f32 %v8044, %v8115
    %v8132 = vsub.f32 %v8045, %v8116
    %v8133 = vsub.f32 %v8046, %v8117
    %v8134 = vsub.f32 %v8047, %v8118
    %v8135 = vsub.f32 %v8048, %v8119
    %v8136 = vsub.f32 %v8049, %v8120
    %v8137 = vsub.f32 %v8050, %v8121
    %v8138 = vsub.f32 %v8051, %v8122
    %v8139 = vsub.f32 %v8052, %v8123
    %v8140 = vsub.f32 %v8053, %v8124
    %v8141 = vsub.f32 %v8054, %v8125
    %v8142 = vsub.f32 %v8055, %v8126
    %v8143 = vmul.f32 %v8127, %v8127
    %v8144 = vmul.f32 %v8128, %v8128
    %v8145 = vmul.f32 %v8129, %v8129
    %v8146 = vmul.f32 %v8130, %v8130
    %v8147 = vmul.f32 %v8131, %v8131
    %v8148 = vmul.f32 %v8132, %v8132
    %v8149 = vmul.f32 %v8133, %v8133
    %v8150 = vmul.f32 %v8134, %v8134
    %v8151 = vmul.f32 %v8135, %v8135
    %v8152 = vmul.f32 %v8136, %v8136
    %v8153 = vmul.f32 %v8137, %v8137
    %v8154 = vmul.f32 %v8138, %v8138
    %v8155 = vmul.f32 %v8139, %v8139
    %v8156 = vmul.f32 %v8140, %v8140
    %v8157 = vmul.f32 %v8141, %v8141
    %v8158 = vmul.f32 %v8142, %v8142
    %v8159 = vsel %vm321, %v8143, 0.0
    %8160 = vadd.xlane.f32.xlu0 %v8159
    %v8161 = vpop.xlane.xlu0 %8160
    %v8162 = vsel %vm321, %v8144, 0.0
    %8163 = vadd.xlane.f32.xlu0 %v8162
    %v8164 = vpop.xlane.xlu0 %8163
    %v8165 = vsel %vm321, %v8145, 0.0
    %8166 = vadd.xlane.f32.xlu0 %v8165
    %v8167 = vpop.xlane.xlu0 %8166
    %v8168 = vsel %vm321, %v8146, 0.0
    %8169 = vadd.xlane.f32.xlu0 %v8168
    %v8170 = vpop.xlane.xlu0 %8169
    %v8171 = vsel %vm321, %v8147, 0.0
    %8172 = vadd.xlane.f32.xlu0 %v8171
    %v8173 = vpop.xlane.xlu0 %8172
    %v8174 = vsel %vm321, %v8148, 0.0
    %8175 = vadd.xlane.f32.xlu0 %v8174
    %v8176 = vpop.xlane.xlu0 %8175
    %v8177 = vsel %vm321, %v8149, 0.0
    %8178 = vadd.xlane.f32.xlu0 %v8177
    %v8179 = vpop.xlane.xlu0 %8178
    %v8180 = vsel %vm321, %v8150, 0.0
    %8181 = vadd.xlane.f32.xlu0 %v8180
    %v8182 = vpop.xlane.xlu0 %8181
    %v8183 = vsel %vm321, %v8151, 0.0
    %8184 = vadd.xlane.f32.xlu0 %v8183
    %v8185 = vpop.xlane.xlu0 %8184
    %v8186 = vsel %vm321, %v8152, 0.0
    %8187 = vadd.xlane.f32.xlu0 %v8186
    %v8188 = vpop.xlane.xlu0 %8187
    %v8189 = vsel %vm321, %v8153, 0.0
    %8190 = vadd.xlane.f32.xlu0 %v8189
    %v8191 = vpop.xlane.xlu0 %8190
    %v8192 = vsel %vm321, %v8154, 0.0
    %8193 = vadd.xlane.f32.xlu0 %v8192
    %v8194 = vpop.xlane.xlu0 %8193
    %v8195 = vsel %vm321, %v8155, 0.0
    %8196 = vadd.xlane.f32.xlu0 %v8195
    %v8197 = vpop.xlane.xlu0 %8196
    %v8198 = vsel %vm321, %v8156, 0.0
    %8199 = vadd.xlane.f32.xlu0 %v8198
    %v8200 = vpop.xlane.xlu0 %8199
    %v8201 = vsel %vm321, %v8157, 0.0
    %8202 = vadd.xlane.f32.xlu0 %v8201
    %v8203 = vpop.xlane.xlu0 %8202
    %v8204 = vsel %vm321, %v8158, 0.0
    %8205 = vadd.xlane.f32.xlu0 %v8204
    %v8206 = vpop.xlane.xlu0 %8205
    %v8207 = vmul.f32 %v8161, %v8110
    %v8208 = vmul.f32 %v8164, %v8110
    %v8209 = vmul.f32 %v8167, %v8110
    %v8210 = vmul.f32 %v8170, %v8110
    %v8211 = vmul.f32 %v8173, %v8110
    %v8212 = vmul.f32 %v8176, %v8110
    %v8213 = vmul.f32 %v8179, %v8110
    %v8214 = vmul.f32 %v8182, %v8110
    %v8215 = vmul.f32 %v8185, %v8110
    %v8216 = vmul.f32 %v8188, %v8110
    %v8217 = vmul.f32 %v8191, %v8110
    %v8218 = vmul.f32 %v8194, %v8110
    %v8219 = vmul.f32 %v8197, %v8110
    %v8220 = vmul.f32 %v8200, %v8110
    %v8221 = vmul.f32 %v8203, %v8110
    %v8222 = vmul.f32 %v8206, %v8110
    %v8223 = vadd.f32 %v8207, 1e-05
    %v8224 = vadd.f32 %v8208, 1e-05
    %v8225 = vadd.f32 %v8209, 1e-05
    %v8226 = vadd.f32 %v8210, 1e-05
    %v8227 = vadd.f32 %v8211, 1e-05
    %v8228 = vadd.f32 %v8212, 1e-05
    %v8229 = vadd.f32 %v8213, 1e-05
    %v8230 = vadd.f32 %v8214, 1e-05
    %v8231 = vadd.f32 %v8215, 1e-05
    %v8232 = vadd.f32 %v8216, 1e-05
    %v8233 = vadd.f32 %v8217, 1e-05
    %v8234 = vadd.f32 %v8218, 1e-05
    %v8235 = vadd.f32 %v8219, 1e-05
    %v8236 = vadd.f32 %v8220, 1e-05
    %v8237 = vadd.f32 %v8221, 1e-05
    %v8238 = vadd.f32 %v8222, 1e-05
    %v8239 = vrsqrt.pop %v8223
    %v8240 = vmul.f32 %v8239, %v8223
    %v8241 = vmul.f32 %v8240, %v8239
    %v8242 = vmul.f32 0.5, %v8241
    %v8243 = vsub.f32 1.5, %v8242
    %v8244 = vmul.f32 %v8239, %v8243
    %vm8245 = vweird.f32 %v8223
    %vm8246 = vweird.f32 %v8239
    %vm8247 = vmor %vm8245, %vm8246
    %v8248 = vsel %vm8247, %v8239, %v8244
    %v8249 = vrsqrt.pop %v8224
    %v8250 = vmul.f32 %v8249, %v8224
    %v8251 = vmul.f32 %v8250, %v8249
    %v8252 = vmul.f32 0.5, %v8251
    %v8253 = vsub.f32 1.5, %v8252
    %v8254 = vmul.f32 %v8249, %v8253
    %vm8255 = vweird.f32 %v8224
    %vm8256 = vweird.f32 %v8249
    %vm8257 = vmor %vm8255, %vm8256
    %v8258 = vsel %vm8257, %v8249, %v8254
    %v8259 = vrsqrt.pop %v8225
    %v8260 = vmul.f32 %v8259, %v8225
    %v8261 = vmul.f32 %v8260, %v8259
    %v8262 = vmul.f32 0.5, %v8261
    %v8263 = vsub.f32 1.5, %v8262
    %v8264 = vmul.f32 %v8259, %v8263
    %vm8265 = vweird.f32 %v8225
    %vm8266 = vweird.f32 %v8259
    %vm8267 = vmor %vm8265, %vm8266
    %v8268 = vsel %vm8267, %v8259, %v8264
    %v8269 = vrsqrt.pop %v8226
    %v8270 = vmul.f32 %v8269, %v8226
    %v8271 = vmul.f32 %v8270, %v8269
    %v8272 = vmul.f32 0.5, %v8271
    %v8273 = vsub.f32 1.5, %v8272
    %v8274 = vmul.f32 %v8269, %v8273
    %vm8275 = vweird.f32 %v8226
    %vm8276 = vweird.f32 %v8269
    %vm8277 = vmor %vm8275, %vm8276
    %v8278 = vsel %vm8277, %v8269, %v8274
    %v8279 = vrsqrt.pop %v8227
    %v8280 = vmul.f32 %v8279, %v8227
    %v8281 = vmul.f32 %v8280, %v8279
    %v8282 = vmul.f32 0.5, %v8281
    %v8283 = vsub.f32 1.5, %v8282
    %v8284 = vmul.f32 %v8279, %v8283
    %vm8285 = vweird.f32 %v8227
    %vm8286 = vweird.f32 %v8279
    %vm8287 = vmor %vm8285, %vm8286
    %v8288 = vsel %vm8287, %v8279, %v8284
    %v8289 = vrsqrt.pop %v8228
    %v8290 = vmul.f32 %v8289, %v8228
    %v8291 = vmul.f32 %v8290, %v8289
    %v8292 = vmul.f32 0.5, %v8291
    %v8293 = vsub.f32 1.5, %v8292
    %v8294 = vmul.f32 %v8289, %v8293
    %vm8295 = vweird.f32 %v8228
    %vm8296 = vweird.f32 %v8289
    %vm8297 = vmor %vm8295, %vm8296
    %v8298 = vsel %vm8297, %v8289, %v8294
    %v8299 = vrsqrt.pop %v8229
    %v8300 = vmul.f32 %v8299, %v8229
    %v8301 = vmul.f32 %v8300, %v8299
    %v8302 = vmul.f32 0.5, %v8301
    %v8303 = vsub.f32 1.5, %v8302
    %v8304 = vmul.f32 %v8299, %v8303
    %vm8305 = vweird.f32 %v8229
    %vm8306 = vweird.f32 %v8299
    %vm8307 = vmor %vm8305, %vm8306
    %v8308 = vsel %vm8307, %v8299, %v8304
    %v8309 = vrsqrt.pop %v8230
    %v8310 = vmul.f32 %v8309, %v8230
    %v8311 = vmul.f32 %v8310, %v8309
    %v8312 = vmul.f32 0.5, %v8311
    %v8313 = vsub.f32 1.5, %v8312
    %v8314 = vmul.f32 %v8309, %v8313
    %vm8315 = vweird.f32 %v8230
    %vm8316 = vweird.f32 %v8309
    %vm8317 = vmor %vm8315, %vm8316
    %v8318 = vsel %vm8317, %v8309, %v8314
    %v8319 = vrsqrt.pop %v8231
    %v8320 = vmul.f32 %v8319, %v8231
    %v8321 = vmul.f32 %v8320, %v8319
    %v8322 = vmul.f32 0.5, %v8321
    %v8323 = vsub.f32 1.5, %v8322
    %v8324 = vmul.f32 %v8319, %v8323
    %vm8325 = vweird.f32 %v8231
    %vm8326 = vweird.f32 %v8319
    %vm8327 = vmor %vm8325, %vm8326
    %v8328 = vsel %vm8327, %v8319, %v8324
    %v8329 = vrsqrt.pop %v8232
    %v8330 = vmul.f32 %v8329, %v8232
    %v8331 = vmul.f32 %v8330, %v8329
    %v8332 = vmul.f32 0.5, %v8331
    %v8333 = vsub.f32 1.5, %v8332
    %v8334 = vmul.f32 %v8329, %v8333
    %vm8335 = vweird.f32 %v8232
    %vm8336 = vweird.f32 %v8329
    %vm8337 = vmor %vm8335, %vm8336
    %v8338 = vsel %vm8337, %v8329, %v8334
    %v8339 = vrsqrt.pop %v8233
    %v8340 = vmul.f32 %v8339, %v8233
    %v8341 = vmul.f32 %v8340, %v8339
    %v8342 = vmul.f32 0.5, %v8341
    %v8343 = vsub.f32 1.5, %v8342
    %v8344 = vmul.f32 %v8339, %v8343
    %vm8345 = vweird.f32 %v8233
    %vm8346 = vweird.f32 %v8339
    %vm8347 = vmor %vm8345, %vm8346
    %v8348 = vsel %vm8347, %v8339, %v8344
    %v8349 = vrsqrt.pop %v8234
    %v8350 = vmul.f32 %v8349, %v8234
    %v8351 = vmul.f32 %v8350, %v8349
    %v8352 = vmul.f32 0.5, %v8351
    %v8353 = vsub.f32 1.5, %v8352
    %v8354 = vmul.f32 %v8349, %v8353
    %vm8355 = vweird.f32 %v8234
    %vm8356 = vweird.f32 %v8349
    %vm8357 = vmor %vm8355, %vm8356
    %v8358 = vsel %vm8357, %v8349, %v8354
    %v8359 = vrsqrt.pop %v8235
    %v8360 = vmul.f32 %v8359, %v8235
    %v8361 = vmul.f32 %v8360, %v8359
    %v8362 = vmul.f32 0.5, %v8361
    %v8363 = vsub.f32 1.5, %v8362
    %v8364 = vmul.f32 %v8359, %v8363
    %vm8365 = vweird.f32 %v8235
    %vm8366 = vweird.f32 %v8359
    %vm8367 = vmor %vm8365, %vm8366
    %v8368 = vsel %vm8367, %v8359, %v8364
    %v8369 = vrsqrt.pop %v8236
    %v8370 = vmul.f32 %v8369, %v8236
    %v8371 = vmul.f32 %v8370, %v8369
    %v8372 = vmul.f32 0.5, %v8371
    %v8373 = vsub.f32 1.5, %v8372
    %v8374 = vmul.f32 %v8369, %v8373
    %vm8375 = vweird.f32 %v8236
    %vm8376 = vweird.f32 %v8369
    %vm8377 = vmor %vm8375, %vm8376
    %v8378 = vsel %vm8377, %v8369, %v8374
    %v8379 = vrsqrt.pop %v8237
    %v8380 = vmul.f32 %v8379, %v8237
    %v8381 = vmul.f32 %v8380, %v8379
    %v8382 = vmul.f32 0.5, %v8381
    %v8383 = vsub.f32 1.5, %v8382
    %v8384 = vmul.f32 %v8379, %v8383
    %vm8385 = vweird.f32 %v8237
    %vm8386 = vweird.f32 %v8379
    %vm8387 = vmor %vm8385, %vm8386
    %v8388 = vsel %vm8387, %v8379, %v8384
    %v8389 = vrsqrt.pop %v8238
    %v8390 = vmul.f32 %v8389, %v8238
    %v8391 = vmul.f32 %v8390, %v8389
    %v8392 = vmul.f32 0.5, %v8391
    %v8393 = vsub.f32 1.5, %v8392
    %v8394 = vmul.f32 %v8389, %v8393
    %vm8395 = vweird.f32 %v8238
    %vm8396 = vweird.f32 %v8389
    %vm8397 = vmor %vm8395, %vm8396
    %v8398 = vsel %vm8397, %v8389, %v8394
    %v8399 = vmul.f32 %v8127, %v8248
    %v8400 = vmul.f32 %v8128, %v8258
    %v8401 = vmul.f32 %v8129, %v8268
    %v8402 = vmul.f32 %v8130, %v8278
    %v8403 = vmul.f32 %v8131, %v8288
    %v8404 = vmul.f32 %v8132, %v8298
    %v8405 = vmul.f32 %v8133, %v8308
    %v8406 = vmul.f32 %v8134, %v8318
    %v8407 = vmul.f32 %v8135, %v8328
    %v8408 = vmul.f32 %v8136, %v8338
    %v8409 = vmul.f32 %v8137, %v8348
    %v8410 = vmul.f32 %v8138, %v8358
    %v8411 = vmul.f32 %v8139, %v8368
    %v8412 = vmul.f32 %v8140, %v8378
    %v8413 = vmul.f32 %v8141, %v8388
    %v8414 = vmul.f32 %v8142, %v8398
    %v8415 = vld [vmem:[%s12] sm:$0xff]
    %v8416 = vld [vmem:[%s12 + $0x8] sm:$0xff]
    %v8417 = vld [vmem:[%s12 + $0x20] sm:$0xff]
    %v8418 = vld [vmem:[%s12 + $0x28] sm:$0xff]
    %v8419 = vld [vmem:[%s12 + $0x40] sm:$0xff]
    %v8420 = vld [vmem:[%s12 + $0x48] sm:$0xff]
    %v8421 = vld [vmem:[%s12 + $0x60] sm:$0xff]
    %v8422 = vld [vmem:[%s12 + $0x68] sm:$0xff]
    %v8423 = vld [vmem:[%s12 + $0x80] sm:$0xff]
    %v8424 = vld [vmem:[%s12 + $0x88] sm:$0xff]
    %v8425 = vld [vmem:[%s12 + $0xa0] sm:$0xff]
    %v8426 = vld [vmem:[%s12 + $0xa8] sm:$0xff]
    %v8427 = vld [vmem:[%s12 + $0xc0] sm:$0xff]
    %v8428 = vld [vmem:[%s12 + $0xc8] sm:$0xff]
    %v8429 = vld [vmem:[%s12 + $0xe0] sm:$0xff]
    %v8430 = vld [vmem:[%s12 + $0xe8] sm:$0xff]
    %v8431 = vld [vmem:[%s13] sm:$0x3]
    %v8433 = vperm.slane %v8431, 0
    %v8434 = vperm.slane %v8431, 1
    %v8438 = vsel %vm321, %v8399, 0
    %v8441 = vsel %vm321, %v8400, 0
    %v8444 = vsel %vm321, %v8401, 0
    %v8447 = vsel %vm321, %v8402, 0
    %v8450 = vsel %vm321, %v8403, 0
    %v8453 = vsel %vm321, %v8404, 0
    %v8456 = vsel %vm321, %v8405, 0
    %v8459 = vsel %vm321, %v8406, 0
    %v8462 = vsel %vm321, %v8407, 0
    %v8465 = vsel %vm321, %v8408, 0
    %v8468 = vsel %vm321, %v8409, 0
    %v8471 = vsel %vm321, %v8410, 0
    %v8474 = vsel %vm321, %v8411, 0
    %v8477 = vsel %vm321, %v8412, 0
    %v8480 = vsel %vm321, %v8413, 0
    %v8483 = vsel %vm321, %v8414, 0
    %8485 = vmatpush.msra.mxu0 0.0
    %8486 = vmatpush.msra.mxu0 0.0
    %8487 = vmatpush.msra.mxu0 0.0
    %8488 = vmatpush.msra.mxu0 0.0
    %8489 = vmatpush.msra.mxu0 0.0
    %8490 = vmatpush.msra.mxu0 0.0
    %8491 = vmatpush.msra.mxu0 0.0
    %8492 = vmatpush.msra.mxu0 0.0
    %8493 = vmatpush.msra.mxu0 %v8429
    %8494 = vmatpush.msra.mxu0 %v8427
    %8495 = vmatpush.msra.mxu0 %v8425
    %8496 = vmatpush.msra.mxu0 %v8423
    %8497 = vmatpush.msra.mxu0 %v8421
    %8498 = vmatpush.msra.mxu0 %v8419
    %8499 = vmatpush.msra.mxu0 %v8417
    %8500 = vmatpush.msra.mxu0 %v8415
    %8501 = vmatmul.f32.gmra.mxu0 %v8438
    %v8502 = vpop.f32.mrf.mxu0
    %v8503 = vadd.f32 %v8433, %v8502
    %8504 = vmatmul.f32.gmra.mxu0 %v8441
    %v8505 = vpop.f32.mrf.mxu0
    %v8506 = vadd.f32 %v8433, %v8505
    %8507 = vmatmul.f32.gmra.mxu0 %v8444
    %v8508 = vpop.f32.mrf.mxu0
    %v8509 = vadd.f32 %v8433, %v8508
    %8510 = vmatmul.f32.gmra.mxu0 %v8447
    %v8511 = vpop.f32.mrf.mxu0
    %v8512 = vadd.f32 %v8433, %v8511
    %8513 = vmatmul.f32.gmra.mxu0 %v8450
    %v8514 = vpop.f32.mrf.mxu0
    %v8515 = vadd.f32 %v8433, %v8514
    %8516 = vmatmul.f32.gmra.mxu0 %v8453
    %v8517 = vpop.f32.mrf.mxu0
    %v8518 = vadd.f32 %v8433, %v8517
    %8519 = vmatmul.f32.gmra.mxu0 %v8456
    %v8520 = vpop.f32.mrf.mxu0
    %v8521 = vadd.f32 %v8433, %v8520
    %8522 = vmatmul.f32.gmra.mxu0 %v8459
    %v8523 = vpop.f32.mrf.mxu0
    %v8524 = vadd.f32 %v8433, %v8523
    %8525 = vmatmul.f32.gmra.mxu0 %v8462
    %v8526 = vpop.f32.mrf.mxu0
    %v8527 = vadd.f32 %v8433, %v8526
    %8528 = vmatmul.f32.gmra.mxu0 %v8465
    %v8529 = vpop.f32.mrf.mxu0
    %v8530 = vadd.f32 %v8433, %v8529
    %8531 = vmatmul.f32.gmra.mxu0 %v8468
    %v8532 = vpop.f32.mrf.mxu0
    %v8533 = vadd.f32 %v8433, %v8532
    %8534 = vmatmul.f32.gmra.mxu0 %v8471
    %v8535 = vpop.f32.mrf.mxu0
    %v8536 = vadd.f32 %v8433, %v8535
    %8537 = vmatmul.f32.gmra.mxu0 %v8474
    %v8538 = vpop.f32.mrf.mxu0
    %v8539 = vadd.f32 %v8433, %v8538
    %8540 = vmatmul.f32.gmra.mxu0 %v8477
    %v8541 = vpop.f32.mrf.mxu0
    %v8542 = vadd.f32 %v8433, %v8541
    %8543 = vmatmul.f32.gmra.mxu0 %v8480
    %v8544 = vpop.f32.mrf.mxu0
    %v8545 = vadd.f32 %v8433, %v8544
    %8546 = vmatmul.f32.gmra.mxu0 %v8483
    %v8547 = vpop.f32.mrf.mxu0
    %v8548 = vadd.f32 %v8433, %v8547
    %8549 = vdwg.mxu0
    %8550 = vmatpush.msra.mxu0 0.0
    %8551 = vmatpush.msra.mxu0 0.0
    %8552 = vmatpush.msra.mxu0 0.0
    %8553 = vmatpush.msra.mxu0 0.0
    %8554 = vmatpush.msra.mxu0 0.0
    %8555 = vmatpush.msra.mxu0 0.0
    %8556 = vmatpush.msra.mxu0 0.0
    %8557 = vmatpush.msra.mxu0 0.0
    %8558 = vmatpush.msra.mxu0 %v8430
    %8559 = vmatpush.msra.mxu0 %v8428
    %8560 = vmatpush.msra.mxu0 %v8426
    %8561 = vmatpush.msra.mxu0 %v8424
    %8562 = vmatpush.msra.mxu0 %v8422
    %8563 = vmatpush.msra.mxu0 %v8420
    %8564 = vmatpush.msra.mxu0 %v8418
    %8565 = vmatpush.msra.mxu0 %v8416
    %8566 = vmatmul.f32.gmra.mxu0 %v8438
    %v8567 = vpop.f32.mrf.mxu0
    %v8568 = vadd.f32 %v8434, %v8567
    %8569 = vmatmul.f32.gmra.mxu0 %v8441
    %v8570 = vpop.f32.mrf.mxu0
    %v8571 = vadd.f32 %v8434, %v8570
    %8572 = vmatmul.f32.gmra.mxu0 %v8444
    %v8573 = vpop.f32.mrf.mxu0
    %v8574 = vadd.f32 %v8434, %v8573
    %8575 = vmatmul.f32.gmra.mxu0 %v8447
    %v8576 = vpop.f32.mrf.mxu0
    %v8577 = vadd.f32 %v8434, %v8576
    %8578 = vmatmul.f32.gmra.mxu0 %v8450
    %v8579 = vpop.f32.mrf.mxu0
    %v8580 = vadd.f32 %v8434, %v8579
    %8581 = vmatmul.f32.gmra.mxu0 %v8453
    %v8582 = vpop.f32.mrf.mxu0
    %v8583 = vadd.f32 %v8434, %v8582
    %8584 = vmatmul.f32.gmra.mxu0 %v8456
    %v8585 = vpop.f32.mrf.mxu0
    %v8586 = vadd.f32 %v8434, %v8585
    %8587 = vmatmul.f32.gmra.mxu0 %v8459
    %v8588 = vpop.f32.mrf.mxu0
    %v8589 = vadd.f32 %v8434, %v8588
    %8590 = vmatmul.f32.gmra.mxu0 %v8462
    %v8591 = vpop.f32.mrf.mxu0
    %v8592 = vadd.f32 %v8434, %v8591
    %8593 = vmatmul.f32.gmra.mxu0 %v8465
    %v8594 = vpop.f32.mrf.mxu0
    %v8595 = vadd.f32 %v8434, %v8594
    %8596 = vmatmul.f32.gmra.mxu0 %v8468
    %v8597 = vpop.f32.mrf.mxu0
    %v8598 = vadd.f32 %v8434, %v8597
    %8599 = vmatmul.f32.gmra.mxu0 %v8471
    %v8600 = vpop.f32.mrf.mxu0
    %v8601 = vadd.f32 %v8434, %v8600
    %8602 = vmatmul.f32.gmra.mxu0 %v8474
    %v8603 = vpop.f32.mrf.mxu0
    %v8604 = vadd.f32 %v8434, %v8603
    %8605 = vmatmul.f32.gmra.mxu0 %v8477
    %v8606 = vpop.f32.mrf.mxu0
    %v8607 = vadd.f32 %v8434, %v8606
    %8608 = vmatmul.f32.gmra.mxu0 %v8480
    %v8609 = vpop.f32.mrf.mxu0
    %v8610 = vadd.f32 %v8434, %v8609
    %8611 = vmatmul.f32.gmra.mxu0 %v8483
    %v8612 = vpop.f32.mrf.mxu0
    %v8613 = vadd.f32 %v8434, %v8612
    %8614 = vdwg.mxu0
    %v8615 = vmax.f32 %v8503, 0.0
    %v8616 = vmax.f32 %v8568, 0.0
    %v8617 = vmax.f32 %v8506, 0.0
    %v8618 = vmax.f32 %v8571, 0.0
    %v8619 = vmax.f32 %v8509, 0.0
    %v8620 = vmax.f32 %v8574, 0.0
    %v8621 = vmax.f32 %v8512, 0.0
    %v8622 = vmax.f32 %v8577, 0.0
    %v8623 = vmax.f32 %v8515, 0.0
    %v8624 = vmax.f32 %v8580, 0.0
    %v8625 = vmax.f32 %v8518, 0.0
    %v8626 = vmax.f32 %v8583, 0.0
    %v8627 = vmax.f32 %v8521, 0.0
    %v8628 = vmax.f32 %v8586, 0.0
    %v8629 = vmax.f32 %v8524, 0.0
    %v8630 = vmax.f32 %v8589, 0.0
    %v8631 = vmax.f32 %v8527, 0.0
    %v8632 = vmax.f32 %v8592, 0.0
    %v8633 = vmax.f32 %v8530, 0.0
    %v8634 = vmax.f32 %v8595, 0.0
    %v8635 = vmax.f32 %v8533, 0.0
    %v8636 = vmax.f32 %v8598, 0.0
    %v8637 = vmax.f32 %v8536, 0.0
    %v8638 = vmax.f32 %v8601, 0.0
    %v8639 = vmax.f32 %v8539, 0.0
    %v8640 = vmax.f32 %v8604, 0.0
    %v8641 = vmax.f32 %v8542, 0.0
    %v8642 = vmax.f32 %v8607, 0.0
    %v8643 = vmax.f32 %v8545, 0.0
    %v8644 = vmax.f32 %v8610, 0.0
    %v8645 = vmax.f32 %v8548, 0.0
    %v8646 = vmax.f32 %v8613, 0.0
    %v8647 = vld [vmem:[%s14] sm:$0xff]
    %v8648 = vld [vmem:[%s14 + $0x8] sm:$0xff]
    %v8649 = vld [vmem:[%s14 + $0x10] sm:$0xff]
    %v8650 = vld [vmem:[%s14 + $0x18] sm:$0xff]
    %v8651 = vld [vmem:[%s14 + $0x20] sm:$0xff]
    %v8652 = vld [vmem:[%s14 + $0x28] sm:$0xff]
    %v8653 = vld [vmem:[%s14 + $0x30] sm:$0xff]
    %v8654 = vld [vmem:[%s14 + $0x38] sm:$0xff]
    %v8655 = vld [vmem:[%s14 + $0x40] sm:$0xff]
    %v8656 = vld [vmem:[%s14 + $0x48] sm:$0xff]
    %v8657 = vld [vmem:[%s14 + $0x50] sm:$0xff]
    %v8658 = vld [vmem:[%s14 + $0x58] sm:$0xff]
    %v8659 = vld [vmem:[%s14 + $0x60] sm:$0xff]
    %v8660 = vld [vmem:[%s14 + $0x68] sm:$0xff]
    %v8661 = vld [vmem:[%s14 + $0x70] sm:$0xff]
    %v8662 = vld [vmem:[%s14 + $0x78] sm:$0xff]
    %v8663 = vld [vmem:[%s14 + $0x80] sm:$0xff]
    %v8664 = vld [vmem:[%s14 + $0x88] sm:$0xff]
    %v8665 = vld [vmem:[%s14 + $0x90] sm:$0xff]
    %v8666 = vld [vmem:[%s14 + $0x98] sm:$0xff]
    %v8667 = vld [vmem:[%s14 + $0xa0] sm:$0xff]
    %v8668 = vld [vmem:[%s14 + $0xa8] sm:$0xff]
    %v8669 = vld [vmem:[%s14 + $0xb0] sm:$0xff]
    %v8670 = vld [vmem:[%s14 + $0xb8] sm:$0xff]
    %v8671 = vld [vmem:[%s14 + $0xc0] sm:$0xff]
    %v8672 = vld [vmem:[%s14 + $0xc8] sm:$0xff]
    %v8673 = vld [vmem:[%s14 + $0xd0] sm:$0xff]
    %v8674 = vld [vmem:[%s14 + $0xd8] sm:$0xff]
    %v8675 = vld [vmem:[%s14 + $0xe0] sm:$0xff]
    %v8676 = vld [vmem:[%s14 + $0xe8] sm:$0xff]
    %v8677 = vld [vmem:[%s14 + $0xf0] sm:$0xff]
    %v8678 = vld [vmem:[%s14 + $0xf8] sm:$0xff]
    %v8679 = vld [vmem:[%s12 + $0x10] sm:$0xff]
    %v8680 = vld [vmem:[%s12 + $0x18] sm:$0xff]
    %v8681 = vld [vmem:[%s12 + $0x30] sm:$0xff]
    %v8682 = vld [vmem:[%s12 + $0x38] sm:$0xff]
    %v8683 = vld [vmem:[%s12 + $0x50] sm:$0xff]
    %v8684 = vld [vmem:[%s12 + $0x58] sm:$0xff]
    %v8685 = vld [vmem:[%s12 + $0x70] sm:$0xff]
    %v8686 = vld [vmem:[%s12 + $0x78] sm:$0xff]
    %v8687 = vld [vmem:[%s12 + $0x90] sm:$0xff]
    %v8688 = vld [vmem:[%s12 + $0x98] sm:$0xff]
    %v8689 = vld [vmem:[%s12 + $0xb0] sm:$0xff]
    %v8690 = vld [vmem:[%s12 + $0xb8] sm:$0xff]
    %v8691 = vld [vmem:[%s12 + $0xd0] sm:$0xff]
    %v8692 = vld [vmem:[%s12 + $0xd8] sm:$0xff]
    %v8693 = vld [vmem:[%s12 + $0xf0] sm:$0xff]
    %v8694 = vld [vmem:[%s12 + $0xf8] sm:$0xff]
    %v8695 = vld [vmem:[%s13 + $0x2] sm:$0x3]
    %v8697 = vperm.slane %v8695, 0
    %v8698 = vperm.slane %v8695, 1
    %8701 = vmatpush.msra.mxu0 0.0
    %8702 = vmatpush.msra.mxu0 0.0
    %8703 = vmatpush.msra.mxu0 0.0
    %8704 = vmatpush.msra.mxu0 0.0
    %8705 = vmatpush.msra.mxu0 0.0
    %8706 = vmatpush.msra.mxu0 0.0
    %8707 = vmatpush.msra.mxu0 0.0
    %8708 = vmatpush.msra.mxu0 0.0
    %8709 = vmatpush.msra.mxu0 %v8693
    %8710 = vmatpush.msra.mxu0 %v8691
    %8711 = vmatpush.msra.mxu0 %v8689
    %8712 = vmatpush.msra.mxu0 %v8687
    %8713 = vmatpush.msra.mxu0 %v8685
    %8714 = vmatpush.msra.mxu0 %v8683
    %8715 = vmatpush.msra.mxu0 %v8681
    %8716 = vmatpush.msra.mxu0 %v8679
    %8717 = vmatmul.f32.gmra.mxu0 %v8438
    %v8718 = vpop.f32.mrf.mxu0
    %v8719 = vadd.f32 %v8697, %v8718
    %8720 = vmatmul.f32.gmra.mxu0 %v8441
    %v8721 = vpop.f32.mrf.mxu0
    %v8722 = vadd.f32 %v8697, %v8721
    %8723 = vmatmul.f32.gmra.mxu0 %v8444
    %v8724 = vpop.f32.mrf.mxu0
    %v8725 = vadd.f32 %v8697, %v8724
    %8726 = vmatmul.f32.gmra.mxu0 %v8447
    %v8727 = vpop.f32.mrf.mxu0
    %v8728 = vadd.f32 %v8697, %v8727
    %8729 = vmatmul.f32.gmra.mxu0 %v8450
    %v8730 = vpop.f32.mrf.mxu0
    %v8731 = vadd.f32 %v8697, %v8730
    %8732 = vmatmul.f32.gmra.mxu0 %v8453
    %v8733 = vpop.f32.mrf.mxu0
    %v8734 = vadd.f32 %v8697, %v8733
    %8735 = vmatmul.f32.gmra.mxu0 %v8456
    %v8736 = vpop.f32.mrf.mxu0
    %v8737 = vadd.f32 %v8697, %v8736
    %8738 = vmatmul.f32.gmra.mxu0 %v8459
    %v8739 = vpop.f32.mrf.mxu0
    %v8740 = vadd.f32 %v8697, %v8739
    %8741 = vmatmul.f32.gmra.mxu0 %v8462
    %v8742 = vpop.f32.mrf.mxu0
    %v8743 = vadd.f32 %v8697, %v8742
    %8744 = vmatmul.f32.gmra.mxu0 %v8465
    %v8745 = vpop.f32.mrf.mxu0
    %v8746 = vadd.f32 %v8697, %v8745
    %8747 = vmatmul.f32.gmra.mxu0 %v8468
    %v8748 = vpop.f32.mrf.mxu0
    %v8749 = vadd.f32 %v8697, %v8748
    %8750 = vmatmul.f32.gmra.mxu0 %v8471
    %v8751 = vpop.f32.mrf.mxu0
    %v8752 = vadd.f32 %v8697, %v8751
    %8753 = vmatmul.f32.gmra.mxu0 %v8474
    %v8754 = vpop.f32.mrf.mxu0
    %v8755 = vadd.f32 %v8697, %v8754
    %8756 = vmatmul.f32.gmra.mxu0 %v8477
    %v8757 = vpop.f32.mrf.mxu0
    %v8758 = vadd.f32 %v8697, %v8757
    %8759 = vmatmul.f32.gmra.mxu0 %v8480
    %v8760 = vpop.f32.mrf.mxu0
    %v8761 = vadd.f32 %v8697, %v8760
    %8762 = vmatmul.f32.gmra.mxu0 %v8483
    %v8763 = vpop.f32.mrf.mxu0
    %v8764 = vadd.f32 %v8697, %v8763
    %8765 = vdwg.mxu0
    %8766 = vmatpush.msra.mxu0 0.0
    %8767 = vmatpush.msra.mxu0 0.0
    %8768 = vmatpush.msra.mxu0 0.0
    %8769 = vmatpush.msra.mxu0 0.0
    %8770 = vmatpush.msra.mxu0 0.0
    %8771 = vmatpush.msra.mxu0 0.0
    %8772 = vmatpush.msra.mxu0 0.0
    %8773 = vmatpush.msra.mxu0 0.0
    %8774 = vmatpush.msra.mxu0 %v8694
    %8775 = vmatpush.msra.mxu0 %v8692
    %8776 = vmatpush.msra.mxu0 %v8690
    %8777 = vmatpush.msra.mxu0 %v8688
    %8778 = vmatpush.msra.mxu0 %v8686
    %8779 = vmatpush.msra.mxu0 %v8684
    %8780 = vmatpush.msra.mxu0 %v8682
    %8781 = vmatpush.msra.mxu0 %v8680
    %8782 = vmatmul.f32.gmra.mxu0 %v8438
    %v8783 = vpop.f32.mrf.mxu0
    %v8784 = vadd.f32 %v8698, %v8783
    %8785 = vmatmul.f32.gmra.mxu0 %v8441
    %v8786 = vpop.f32.mrf.mxu0
    %v8787 = vadd.f32 %v8698, %v8786
    %8788 = vmatmul.f32.gmra.mxu0 %v8444
    %v8789 = vpop.f32.mrf.mxu0
    %v8790 = vadd.f32 %v8698, %v8789
    %8791 = vmatmul.f32.gmra.mxu0 %v8447
    %v8792 = vpop.f32.mrf.mxu0
    %v8793 = vadd.f32 %v8698, %v8792
    %8794 = vmatmul.f32.gmra.mxu0 %v8450
    %v8795 = vpop.f32.mrf.mxu0
    %v8796 = vadd.f32 %v8698, %v8795
    %8797 = vmatmul.f32.gmra.mxu0 %v8453
    %v8798 = vpop.f32.mrf.mxu0
    %v8799 = vadd.f32 %v8698, %v8798
    %8800 = vmatmul.f32.gmra.mxu0 %v8456
    %v8801 = vpop.f32.mrf.mxu0
    %v8802 = vadd.f32 %v8698, %v8801
    %8803 = vmatmul.f32.gmra.mxu0 %v8459
    %v8804 = vpop.f32.mrf.mxu0
    %v8805 = vadd.f32 %v8698, %v8804
    %8806 = vmatmul.f32.gmra.mxu0 %v8462
    %v8807 = vpop.f32.mrf.mxu0
    %v8808 = vadd.f32 %v8698, %v8807
    %8809 = vmatmul.f32.gmra.mxu0 %v8465
    %v8810 = vpop.f32.mrf.mxu0
    %v8811 = vadd.f32 %v8698, %v8810
    %8812 = vmatmul.f32.gmra.mxu0 %v8468
    %v8813 = vpop.f32.mrf.mxu0
    %v8814 = vadd.f32 %v8698, %v8813
    %8815 = vmatmul.f32.gmra.mxu0 %v8471
    %v8816 = vpop.f32.mrf.mxu0
    %v8817 = vadd.f32 %v8698, %v8816
    %8818 = vmatmul.f32.gmra.mxu0 %v8474
    %v8819 = vpop.f32.mrf.mxu0
    %v8820 = vadd.f32 %v8698, %v8819
    %8821 = vmatmul.f32.gmra.mxu0 %v8477
    %v8822 = vpop.f32.mrf.mxu0
    %v8823 = vadd.f32 %v8698, %v8822
    %8824 = vmatmul.f32.gmra.mxu0 %v8480
    %v8825 = vpop.f32.mrf.mxu0
    %v8826 = vadd.f32 %v8698, %v8825
    %8827 = vmatmul.f32.gmra.mxu0 %v8483
    %v8828 = vpop.f32.mrf.mxu0
    %v8829 = vadd.f32 %v8698, %v8828
    %8830 = vdwg.mxu0
    %v8831 = vmax.f32 %v8719, 0.0
    %v8832 = vmax.f32 %v8784, 0.0
    %v8833 = vmax.f32 %v8722, 0.0
    %v8834 = vmax.f32 %v8787, 0.0
    %v8835 = vmax.f32 %v8725, 0.0
    %v8836 = vmax.f32 %v8790, 0.0
    %v8837 = vmax.f32 %v8728, 0.0
    %v8838 = vmax.f32 %v8793, 0.0
    %v8839 = vmax.f32 %v8731, 0.0
    %v8840 = vmax.f32 %v8796, 0.0
    %v8841 = vmax.f32 %v8734, 0.0
    %v8842 = vmax.f32 %v8799, 0.0
    %v8843 = vmax.f32 %v8737, 0.0
    %v8844 = vmax.f32 %v8802, 0.0
    %v8845 = vmax.f32 %v8740, 0.0
    %v8846 = vmax.f32 %v8805, 0.0
    %v8847 = vmax.f32 %v8743, 0.0
    %v8848 = vmax.f32 %v8808, 0.0
    %v8849 = vmax.f32 %v8746, 0.0
    %v8850 = vmax.f32 %v8811, 0.0
    %v8851 = vmax.f32 %v8749, 0.0
    %v8852 = vmax.f32 %v8814, 0.0
    %v8853 = vmax.f32 %v8752, 0.0
    %v8854 = vmax.f32 %v8817, 0.0
    %v8855 = vmax.f32 %v8755, 0.0
    %v8856 = vmax.f32 %v8820, 0.0
    %v8857 = vmax.f32 %v8758, 0.0
    %v8858 = vmax.f32 %v8823, 0.0
    %v8859 = vmax.f32 %v8761, 0.0
    %v8860 = vmax.f32 %v8826, 0.0
    %v8861 = vmax.f32 %v8764, 0.0
    %v8862 = vmax.f32 %v8829, 0.0
    %v8863 = vld [vmem:[%s14 + $0x100] sm:$0xff]
    %v8864 = vld [vmem:[%s14 + $0x108] sm:$0xff]
    %v8865 = vld [vmem:[%s14 + $0x110] sm:$0xff]
    %v8866 = vld [vmem:[%s14 + $0x118] sm:$0xff]
    %v8867 = vld [vmem:[%s14 + $0x120] sm:$0xff]
    %v8868 = vld [vmem:[%s14 + $0x128] sm:$0xff]
    %v8869 = vld [vmem:[%s14 + $0x130] sm:$0xff]
    %v8870 = vld [vmem:[%s14 + $0x138] sm:$0xff]
    %v8871 = vld [vmem:[%s14 + $0x140] sm:$0xff]
    %v8872 = vld [vmem:[%s14 + $0x148] sm:$0xff]
    %v8873 = vld [vmem:[%s14 + $0x150] sm:$0xff]
    %v8874 = vld [vmem:[%s14 + $0x158] sm:$0xff]
    %v8875 = vld [vmem:[%s14 + $0x160] sm:$0xff]
    %v8876 = vld [vmem:[%s14 + $0x168] sm:$0xff]
    %v8877 = vld [vmem:[%s14 + $0x170] sm:$0xff]
    %v8878 = vld [vmem:[%s14 + $0x178] sm:$0xff]
    %v8879 = vld [vmem:[%s14 + $0x180] sm:$0xff]
    %v8880 = vld [vmem:[%s14 + $0x188] sm:$0xff]
    %v8881 = vld [vmem:[%s14 + $0x190] sm:$0xff]
    %v8882 = vld [vmem:[%s14 + $0x198] sm:$0xff]
    %v8883 = vld [vmem:[%s14 + $0x1a0] sm:$0xff]
    %v8884 = vld [vmem:[%s14 + $0x1a8] sm:$0xff]
    %v8885 = vld [vmem:[%s14 + $0x1b0] sm:$0xff]
    %v8886 = vld [vmem:[%s14 + $0x1b8] sm:$0xff]
    %v8887 = vld [vmem:[%s14 + $0x1c0] sm:$0xff]
    %v8888 = vld [vmem:[%s14 + $0x1c8] sm:$0xff]
    %v8889 = vld [vmem:[%s14 + $0x1d0] sm:$0xff]
    %v8890 = vld [vmem:[%s14 + $0x1d8] sm:$0xff]
    %v8891 = vld [vmem:[%s14 + $0x1e0] sm:$0xff]
    %v8892 = vld [vmem:[%s14 + $0x1e8] sm:$0xff]
    %v8893 = vld [vmem:[%s14 + $0x1f0] sm:$0xff]
    %v8894 = vld [vmem:[%s14 + $0x1f8] sm:$0xff]
    %8895 = vmatpush.msra.mxu0 %v8878
    %8896 = vmatpush.msra.mxu0 %v8877
    %8897 = vmatpush.msra.mxu0 %v8876
    %8898 = vmatpush.msra.mxu0 %v8875
    %8899 = vmatpush.msra.mxu0 %v8874
    %8900 = vmatpush.msra.mxu0 %v8873
    %8901 = vmatpush.msra.mxu0 %v8872
    %8902 = vmatpush.msra.mxu0 %v8871
    %8903 = vmatpush.msra.mxu0 %v8870
    %8904 = vmatpush.msra.mxu0 %v8869
    %8905 = vmatpush.msra.mxu0 %v8868
    %8906 = vmatpush.msra.mxu0 %v8867
    %8907 = vmatpush.msra.mxu0 %v8866
    %8908 = vmatpush.msra.mxu0 %v8865
    %8909 = vmatpush.msra.mxu0 %v8864
    %8910 = vmatpush.msra.mxu0 %v8863
    %8911 = vmatmul.f32.gmra.mxu0 %v8831
    %v8912 = vpop.f32.mrf.mxu0
    %v8913 = vadd.f32 0.0, %v8912
    %8914 = vmatmul.f32.gmra.mxu0 %v8833
    %v8915 = vpop.f32.mrf.mxu0
    %v8916 = vadd.f32 0.0, %v8915
    %8917 = vmatmul.f32.gmra.mxu0 %v8835
    %v8918 = vpop.f32.mrf.mxu0
    %v8919 = vadd.f32 0.0, %v8918
    %8920 = vmatmul.f32.gmra.mxu0 %v8837
    %v8921 = vpop.f32.mrf.mxu0
    %v8922 = vadd.f32 0.0, %v8921
    %8923 = vmatmul.f32.gmra.mxu0 %v8839
    %v8924 = vpop.f32.mrf.mxu0
    %v8925 = vadd.f32 0.0, %v8924
    %8926 = vmatmul.f32.gmra.mxu0 %v8841
    %v8927 = vpop.f32.mrf.mxu0
    %v8928 = vadd.f32 0.0, %v8927
    %8929 = vmatmul.f32.gmra.mxu0 %v8843
    %v8930 = vpop.f32.mrf.mxu0
    %v8931 = vadd.f32 0.0, %v8930
    %8932 = vmatmul.f32.gmra.mxu0 %v8845
    %v8933 = vpop.f32.mrf.mxu0
    %v8934 = vadd.f32 0.0, %v8933
    %8935 = vmatmul.f32.gmra.mxu0 %v8847
    %v8936 = vpop.f32.mrf.mxu0
    %v8937 = vadd.f32 0.0, %v8936
    %8938 = vmatmul.f32.gmra.mxu0 %v8849
    %v8939 = vpop.f32.mrf.mxu0
    %v8940 = vadd.f32 0.0, %v8939
    %8941 = vmatmul.f32.gmra.mxu0 %v8851
    %v8942 = vpop.f32.mrf.mxu0
    %v8943 = vadd.f32 0.0, %v8942
    %8944 = vmatmul.f32.gmra.mxu0 %v8853
    %v8945 = vpop.f32.mrf.mxu0
    %v8946 = vadd.f32 0.0, %v8945
    %8947 = vmatmul.f32.gmra.mxu0 %v8855
    %v8948 = vpop.f32.mrf.mxu0
    %v8949 = vadd.f32 0.0, %v8948
    %8950 = vmatmul.f32.gmra.mxu0 %v8857
    %v8951 = vpop.f32.mrf.mxu0
    %v8952 = vadd.f32 0.0, %v8951
    %8953 = vmatmul.f32.gmra.mxu0 %v8859
    %v8954 = vpop.f32.mrf.mxu0
    %v8955 = vadd.f32 0.0, %v8954
    %8956 = vmatmul.f32.gmra.mxu0 %v8861
    %v8957 = vpop.f32.mrf.mxu0
    %v8958 = vadd.f32 0.0, %v8957
    %8959 = vdwg.mxu0
    %8960 = vmatpush.msra.mxu0 %v8894
    %8961 = vmatpush.msra.mxu0 %v8893
    %8962 = vmatpush.msra.mxu0 %v8892
    %8963 = vmatpush.msra.mxu0 %v8891
    %8964 = vmatpush.msra.mxu0 %v8890
    %8965 = vmatpush.msra.mxu0 %v8889
    %8966 = vmatpush.msra.mxu0 %v8888
    %8967 = vmatpush.msra.mxu0 %v8887
    %8968 = vmatpush.msra.mxu0 %v8886
    %8969 = vmatpush.msra.mxu0 %v8885
    %8970 = vmatpush.msra.mxu0 %v8884
    %8971 = vmatpush.msra.mxu0 %v8883
    %8972 = vmatpush.msra.mxu0 %v8882
    %8973 = vmatpush.msra.mxu0 %v8881
    %8974 = vmatpush.msra.mxu0 %v8880
    %8975 = vmatpush.msra.mxu0 %v8879
    %8976 = vmatmul.f32.gmra.mxu0 %v8832
    %v8977 = vpop.f32.mrf.mxu0
    %v8978 = vadd.f32 %v8913, %v8977
    %8979 = vmatmul.f32.gmra.mxu0 %v8834
    %v8980 = vpop.f32.mrf.mxu0
    %v8981 = vadd.f32 %v8916, %v8980
    %8982 = vmatmul.f32.gmra.mxu0 %v8836
    %v8983 = vpop.f32.mrf.mxu0
    %v8984 = vadd.f32 %v8919, %v8983
    %8985 = vmatmul.f32.gmra.mxu0 %v8838
    %v8986 = vpop.f32.mrf.mxu0
    %v8987 = vadd.f32 %v8922, %v8986
    %8988 = vmatmul.f32.gmra.mxu0 %v8840
    %v8989 = vpop.f32.mrf.mxu0
    %v8990 = vadd.f32 %v8925, %v8989
    %8991 = vmatmul.f32.gmra.mxu0 %v8842
    %v8992 = vpop.f32.mrf.mxu0
    %v8993 = vadd.f32 %v8928, %v8992
    %8994 = vmatmul.f32.gmra.mxu0 %v8844
    %v8995 = vpop.f32.mrf.mxu0
    %v8996 = vadd.f32 %v8931, %v8995
    %8997 = vmatmul.f32.gmra.mxu0 %v8846
    %v8998 = vpop.f32.mrf.mxu0
    %v8999 = vadd.f32 %v8934, %v8998
    %9000 = vmatmul.f32.gmra.mxu0 %v8848
    %v9001 = vpop.f32.mrf.mxu0
    %v9002 = vadd.f32 %v8937, %v9001
    %9003 = vmatmul.f32.gmra.mxu0 %v8850
    %v9004 = vpop.f32.mrf.mxu0
    %v9005 = vadd.f32 %v8940, %v9004
    %9006 = vmatmul.f32.gmra.mxu0 %v8852
    %v9007 = vpop.f32.mrf.mxu0
    %v9008 = vadd.f32 %v8943, %v9007
    %9009 = vmatmul.f32.gmra.mxu0 %v8854
    %v9010 = vpop.f32.mrf.mxu0
    %v9011 = vadd.f32 %v8946, %v9010
    %9012 = vmatmul.f32.gmra.mxu0 %v8856
    %v9013 = vpop.f32.mrf.mxu0
    %v9014 = vadd.f32 %v8949, %v9013
    %9015 = vmatmul.f32.gmra.mxu0 %v8858
    %v9016 = vpop.f32.mrf.mxu0
    %v9017 = vadd.f32 %v8952, %v9016
    %9018 = vmatmul.f32.gmra.mxu0 %v8860
    %v9019 = vpop.f32.mrf.mxu0
    %v9020 = vadd.f32 %v8955, %v9019
    %9021 = vmatmul.f32.gmra.mxu0 %v8862
    %v9022 = vpop.f32.mrf.mxu0
    %v9023 = vadd.f32 %v8958, %v9022
    %9024 = vdwg.mxu0
    %9025 = vmatpush.msra.mxu0 %v8662
    %9026 = vmatpush.msra.mxu0 %v8661
    %9027 = vmatpush.msra.mxu0 %v8660
    %9028 = vmatpush.msra.mxu0 %v8659
    %9029 = vmatpush.msra.mxu0 %v8658
    %9030 = vmatpush.msra.mxu0 %v8657
    %9031 = vmatpush.msra.mxu0 %v8656
    %9032 = vmatpush.msra.mxu0 %v8655
    %9033 = vmatpush.msra.mxu0 %v8654
    %9034 = vmatpush.msra.mxu0 %v8653
    %9035 = vmatpush.msra.mxu0 %v8652
    %9036 = vmatpush.msra.mxu0 %v8651
    %9037 = vmatpush.msra.mxu0 %v8650
    %9038 = vmatpush.msra.mxu0 %v8649
    %9039 = vmatpush.msra.mxu0 %v8648
    %9040 = vmatpush.msra.mxu0 %v8647
    %9041 = vmatmul.f32.gmra.mxu0 %v8615
    %v9042 = vpop.f32.mrf.mxu0
    %v9043 = vadd.f32 %v8978, %v9042
    %9044 = vmatmul.f32.gmra.mxu0 %v8617
    %v9045 = vpop.f32.mrf.mxu0
    %v9046 = vadd.f32 %v8981, %v9045
    %9047 = vmatmul.f32.gmra.mxu0 %v8619
    %v9048 = vpop.f32.mrf.mxu0
    %v9049 = vadd.f32 %v8984, %v9048
    %9050 = vmatmul.f32.gmra.mxu0 %v8621
    %v9051 = vpop.f32.mrf.mxu0
    %v9052 = vadd.f32 %v8987, %v9051
    %9053 = vmatmul.f32.gmra.mxu0 %v8623
    %v9054 = vpop.f32.mrf.mxu0
    %v9055 = vadd.f32 %v8990, %v9054
    %9056 = vmatmul.f32.gmra.mxu0 %v8625
    %v9057 = vpop.f32.mrf.mxu0
    %v9058 = vadd.f32 %v8993, %v9057
    %9059 = vmatmul.f32.gmra.mxu0 %v8627
    %v9060 = vpop.f32.mrf.mxu0
    %v9061 = vadd.f32 %v8996, %v9060
    %9062 = vmatmul.f32.gmra.mxu0 %v8629
    %v9063 = vpop.f32.mrf.mxu0
    %v9064 = vadd.f32 %v8999, %v9063
    %9065 = vmatmul.f32.gmra.mxu0 %v8631
    %v9066 = vpop.f32.mrf.mxu0
    %v9067 = vadd.f32 %v9002, %v9066
    %9068 = vmatmul.f32.gmra.mxu0 %v8633
    %v9069 = vpop.f32.mrf.mxu0
    %v9070 = vadd.f32 %v9005, %v9069
    %9071 = vmatmul.f32.gmra.mxu0 %v8635
    %v9072 = vpop.f32.mrf.mxu0
    %v9073 = vadd.f32 %v9008, %v9072
    %9074 = vmatmul.f32.gmra.mxu0 %v8637
    %v9075 = vpop.f32.mrf.mxu0
    %v9076 = vadd.f32 %v9011, %v9075
    %9077 = vmatmul.f32.gmra.mxu0 %v8639
    %v9078 = vpop.f32.mrf.mxu0
    %v9079 = vadd.f32 %v9014, %v9078
    %9080 = vmatmul.f32.gmra.mxu0 %v8641
    %v9081 = vpop.f32.mrf.mxu0
    %v9082 = vadd.f32 %v9017, %v9081
    %9083 = vmatmul.f32.gmra.mxu0 %v8643
    %v9084 = vpop.f32.mrf.mxu0
    %v9085 = vadd.f32 %v9020, %v9084
    %9086 = vmatmul.f32.gmra.mxu0 %v8645
    %v9087 = vpop.f32.mrf.mxu0
    %v9088 = vadd.f32 %v9023, %v9087
    %9089 = vdwg.mxu0
    %9090 = vmatpush.msra.mxu0 %v8678
    %9091 = vmatpush.msra.mxu0 %v8677
    %9092 = vmatpush.msra.mxu0 %v8676
    %9093 = vmatpush.msra.mxu0 %v8675
    %9094 = vmatpush.msra.mxu0 %v8674
    %9095 = vmatpush.msra.mxu0 %v8673
    %9096 = vmatpush.msra.mxu0 %v8672
    %9097 = vmatpush.msra.mxu0 %v8671
    %9098 = vmatpush.msra.mxu0 %v8670
    %9099 = vmatpush.msra.mxu0 %v8669
    %9100 = vmatpush.msra.mxu0 %v8668
    %9101 = vmatpush.msra.mxu0 %v8667
    %9102 = vmatpush.msra.mxu0 %v8666
    %9103 = vmatpush.msra.mxu0 %v8665
    %9104 = vmatpush.msra.mxu0 %v8664
    %9105 = vmatpush.msra.mxu0 %v8663
    %9106 = vmatmul.f32.gmra.mxu0 %v8616
    %v9107 = vpop.f32.mrf.mxu0
    %v9108 = vadd.f32 %v9043, %v9107
    %9109 = vmatmul.f32.gmra.mxu0 %v8618
    %v9110 = vpop.f32.mrf.mxu0
    %v9111 = vadd.f32 %v9046, %v9110
    %9112 = vmatmul.f32.gmra.mxu0 %v8620
    %v9113 = vpop.f32.mrf.mxu0
    %v9114 = vadd.f32 %v9049, %v9113
    %9115 = vmatmul.f32.gmra.mxu0 %v8622
    %v9116 = vpop.f32.mrf.mxu0
    %v9117 = vadd.f32 %v9052, %v9116
    %9118 = vmatmul.f32.gmra.mxu0 %v8624
    %v9119 = vpop.f32.mrf.mxu0
    %v9120 = vadd.f32 %v9055, %v9119
    %9121 = vmatmul.f32.gmra.mxu0 %v8626
    %v9122 = vpop.f32.mrf.mxu0
    %v9123 = vadd.f32 %v9058, %v9122
    %9124 = vmatmul.f32.gmra.mxu0 %v8628
    %v9125 = vpop.f32.mrf.mxu0
    %v9126 = vadd.f32 %v9061, %v9125
    %9127 = vmatmul.f32.gmra.mxu0 %v8630
    %v9128 = vpop.f32.mrf.mxu0
    %v9129 = vadd.f32 %v9064, %v9128
    %9130 = vmatmul.f32.gmra.mxu0 %v8632
    %v9131 = vpop.f32.mrf.mxu0
    %v9132 = vadd.f32 %v9067, %v9131
    %9133 = vmatmul.f32.gmra.mxu0 %v8634
    %v9134 = vpop.f32.mrf.mxu0
    %v9135 = vadd.f32 %v9070, %v9134
    %9136 = vmatmul.f32.gmra.mxu0 %v8636
    %v9137 = vpop.f32.mrf.mxu0
    %v9138 = vadd.f32 %v9073, %v9137
    %9139 = vmatmul.f32.gmra.mxu0 %v8638
    %v9140 = vpop.f32.mrf.mxu0
    %v9141 = vadd.f32 %v9076, %v9140
    %9142 = vmatmul.f32.gmra.mxu0 %v8640
    %v9143 = vpop.f32.mrf.mxu0
    %v9144 = vadd.f32 %v9079, %v9143
    %9145 = vmatmul.f32.gmra.mxu0 %v8642
    %v9146 = vpop.f32.mrf.mxu0
    %v9147 = vadd.f32 %v9082, %v9146
    %9148 = vmatmul.f32.gmra.mxu0 %v8644
    %v9149 = vpop.f32.mrf.mxu0
    %v9150 = vadd.f32 %v9085, %v9149
    %9151 = vmatmul.f32.gmra.mxu0 %v8646
    %v9152 = vpop.f32.mrf.mxu0
    %v9153 = vadd.f32 %v9088, %v9152
    %9154 = vdwg.mxu0
    %v9155 = vadd.f32 %v8399, %v9108
    %v9156 = vadd.f32 %v8400, %v9111
    %v9157 = vadd.f32 %v8401, %v9114
    %v9158 = vadd.f32 %v8402, %v9117
    %v9159 = vadd.f32 %v8403, %v9120
    %v9160 = vadd.f32 %v8404, %v9123
    %v9161 = vadd.f32 %v8405, %v9126
    %v9162 = vadd.f32 %v8406, %v9129
    %v9163 = vadd.f32 %v8407, %v9132
    %v9164 = vadd.f32 %v8408, %v9135
    %v9165 = vadd.f32 %v8409, %v9138
    %v9166 = vadd.f32 %v8410, %v9141
    %v9167 = vadd.f32 %v8411, %v9144
    %v9168 = vadd.f32 %v8412, %v9147
    %v9169 = vadd.f32 %v8413, %v9150
    %v9170 = vadd.f32 %v8414, %v9153
    %v9171 = vld [vmem:[%s15] sm:$0x1]
    %v9173 = vperm.slane %v9171, 0
    %v9175 = vadd.f32 %v9155, %v9173
    %v9176 = vadd.f32 %v9156, %v9173
    %v9177 = vadd.f32 %v9157, %v9173
    %v9178 = vadd.f32 %v9158, %v9173
    %v9179 = vadd.f32 %v9159, %v9173
    %v9180 = vadd.f32 %v9160, %v9173
    %v9181 = vadd.f32 %v9161, %v9173
    %v9182 = vadd.f32 %v9162, %v9173
    %v9183 = vadd.f32 %v9163, %v9173
    %v9184 = vadd.f32 %v9164, %v9173
    %v9185 = vadd.f32 %v9165, %v9173
    %v9186 = vadd.f32 %v9166, %v9173
    %v9187 = vadd.f32 %v9167, %v9173
    %v9188 = vadd.f32 %v9168, %v9173
    %v9189 = vadd.f32 %v9169, %v9173
    %v9190 = vadd.f32 %v9170, %v9173
    %v9191 = vsel %vm321, %v9175, 0.0
    %9192 = vadd.xlane.f32.xlu0 %v9191
    %v9193 = vpop.xlane.xlu0 %9192
    %v9194 = vsel %vm321, %v9176, 0.0
    %9195 = vadd.xlane.f32.xlu0 %v9194
    %v9196 = vpop.xlane.xlu0 %9195
    %v9197 = vsel %vm321, %v9177, 0.0
    %9198 = vadd.xlane.f32.xlu0 %v9197
    %v9199 = vpop.xlane.xlu0 %9198
    %v9200 = vsel %vm321, %v9178, 0.0
    %9201 = vadd.xlane.f32.xlu0 %v9200
    %v9202 = vpop.xlane.xlu0 %9201
    %v9203 = vsel %vm321, %v9179, 0.0
    %9204 = vadd.xlane.f32.xlu0 %v9203
    %v9205 = vpop.xlane.xlu0 %9204
    %v9206 = vsel %vm321, %v9180, 0.0
    %9207 = vadd.xlane.f32.xlu0 %v9206
    %v9208 = vpop.xlane.xlu0 %9207
    %v9209 = vsel %vm321, %v9181, 0.0
    %9210 = vadd.xlane.f32.xlu0 %v9209
    %v9211 = vpop.xlane.xlu0 %9210
    %v9212 = vsel %vm321, %v9182, 0.0
    %9213 = vadd.xlane.f32.xlu0 %v9212
    %v9214 = vpop.xlane.xlu0 %9213
    %v9215 = vsel %vm321, %v9183, 0.0
    %9216 = vadd.xlane.f32.xlu0 %v9215
    %v9217 = vpop.xlane.xlu0 %9216
    %v9218 = vsel %vm321, %v9184, 0.0
    %9219 = vadd.xlane.f32.xlu0 %v9218
    %v9220 = vpop.xlane.xlu0 %9219
    %v9221 = vsel %vm321, %v9185, 0.0
    %9222 = vadd.xlane.f32.xlu0 %v9221
    %v9223 = vpop.xlane.xlu0 %9222
    %v9224 = vsel %vm321, %v9186, 0.0
    %9225 = vadd.xlane.f32.xlu0 %v9224
    %v9226 = vpop.xlane.xlu0 %9225
    %v9227 = vsel %vm321, %v9187, 0.0
    %9228 = vadd.xlane.f32.xlu0 %v9227
    %v9229 = vpop.xlane.xlu0 %9228
    %v9230 = vsel %vm321, %v9188, 0.0
    %9231 = vadd.xlane.f32.xlu0 %v9230
    %v9232 = vpop.xlane.xlu0 %9231
    %v9233 = vsel %vm321, %v9189, 0.0
    %9234 = vadd.xlane.f32.xlu0 %v9233
    %v9235 = vpop.xlane.xlu0 %9234
    %v9236 = vsel %vm321, %v9190, 0.0
    %9237 = vadd.xlane.f32.xlu0 %v9236
    %v9238 = vpop.xlane.xlu0 %9237
    %v9239 = vmul.f32 %v9193, %v8110
    %v9240 = vmul.f32 %v9196, %v8110
    %v9241 = vmul.f32 %v9199, %v8110
    %v9242 = vmul.f32 %v9202, %v8110
    %v9243 = vmul.f32 %v9205, %v8110
    %v9244 = vmul.f32 %v9208, %v8110
    %v9245 = vmul.f32 %v9211, %v8110
    %v9246 = vmul.f32 %v9214, %v8110
    %v9247 = vmul.f32 %v9217, %v8110
    %v9248 = vmul.f32 %v9220, %v8110
    %v9249 = vmul.f32 %v9223, %v8110
    %v9250 = vmul.f32 %v9226, %v8110
    %v9251 = vmul.f32 %v9229, %v8110
    %v9252 = vmul.f32 %v9232, %v8110
    %v9253 = vmul.f32 %v9235, %v8110
    %v9254 = vmul.f32 %v9238, %v8110
    %v9255 = vsub.f32 %v9175, %v9239
    %v9256 = vsub.f32 %v9176, %v9240
    %v9257 = vsub.f32 %v9177, %v9241
    %v9258 = vsub.f32 %v9178, %v9242
    %v9259 = vsub.f32 %v9179, %v9243
    %v9260 = vsub.f32 %v9180, %v9244
    %v9261 = vsub.f32 %v9181, %v9245
    %v9262 = vsub.f32 %v9182, %v9246
    %v9263 = vsub.f32 %v9183, %v9247
    %v9264 = vsub.f32 %v9184, %v9248
    %v9265 = vsub.f32 %v9185, %v9249
    %v9266 = vsub.f32 %v9186, %v9250
    %v9267 = vsub.f32 %v9187, %v9251
    %v9268 = vsub.f32 %v9188, %v9252
    %v9269 = vsub.f32 %v9189, %v9253
    %v9270 = vsub.f32 %v9190, %v9254
    %v9271 = vmul.f32 %v9255, %v9255
    %v9272 = vmul.f32 %v9256, %v9256
    %v9273 = vmul.f32 %v9257, %v9257
    %v9274 = vmul.f32 %v9258, %v9258
    %v9275 = vmul.f32 %v9259, %v9259
    %v9276 = vmul.f32 %v9260, %v9260
    %v9277 = vmul.f32 %v9261, %v9261
    %v9278 = vmul.f32 %v9262, %v9262
    %v9279 = vmul.f32 %v9263, %v9263
    %v9280 = vmul.f32 %v9264, %v9264
    %v9281 = vmul.f32 %v9265, %v9265
    %v9282 = vmul.f32 %v9266, %v9266
    %v9283 = vmul.f32 %v9267, %v9267
    %v9284 = vmul.f32 %v9268, %v9268
    %v9285 = vmul.f32 %v9269, %v9269
    %v9286 = vmul.f32 %v9270, %v9270
    %v9287 = vsel %vm321, %v9271, 0.0
    %9288 = vadd.xlane.f32.xlu0 %v9287
    %v9289 = vpop.xlane.xlu0 %9288
    %v9290 = vsel %vm321, %v9272, 0.0
    %9291 = vadd.xlane.f32.xlu0 %v9290
    %v9292 = vpop.xlane.xlu0 %9291
    %v9293 = vsel %vm321, %v9273, 0.0
    %9294 = vadd.xlane.f32.xlu0 %v9293
    %v9295 = vpop.xlane.xlu0 %9294
    %v9296 = vsel %vm321, %v9274, 0.0
    %9297 = vadd.xlane.f32.xlu0 %v9296
    %v9298 = vpop.xlane.xlu0 %9297
    %v9299 = vsel %vm321, %v9275, 0.0
    %9300 = vadd.xlane.f32.xlu0 %v9299
    %v9301 = vpop.xlane.xlu0 %9300
    %v9302 = vsel %vm321, %v9276, 0.0
    %9303 = vadd.xlane.f32.xlu0 %v9302
    %v9304 = vpop.xlane.xlu0 %9303
    %v9305 = vsel %vm321, %v9277, 0.0
    %9306 = vadd.xlane.f32.xlu0 %v9305
    %v9307 = vpop.xlane.xlu0 %9306
    %v9308 = vsel %vm321, %v9278, 0.0
    %9309 = vadd.xlane.f32.xlu0 %v9308
    %v9310 = vpop.xlane.xlu0 %9309
    %v9311 = vsel %vm321, %v9279, 0.0
    %9312 = vadd.xlane.f32.xlu0 %v9311
    %v9313 = vpop.xlane.xlu0 %9312
    %v9314 = vsel %vm321, %v9280, 0.0
    %9315 = vadd.xlane.f32.xlu0 %v9314
    %v9316 = vpop.xlane.xlu0 %9315
    %v9317 = vsel %vm321, %v9281, 0.0
    %9318 = vadd.xlane.f32.xlu0 %v9317
    %v9319 = vpop.xlane.xlu0 %9318
    %v9320 = vsel %vm321, %v9282, 0.0
    %9321 = vadd.xlane.f32.xlu0 %v9320
    %v9322 = vpop.xlane.xlu0 %9321
    %v9323 = vsel %vm321, %v9283, 0.0
    %9324 = vadd.xlane.f32.xlu0 %v9323
    %v9325 = vpop.xlane.xlu0 %9324
    %v9326 = vsel %vm321, %v9284, 0.0
    %9327 = vadd.xlane.f32.xlu0 %v9326
    %v9328 = vpop.xlane.xlu0 %9327
    %v9329 = vsel %vm321, %v9285, 0.0
    %9330 = vadd.xlane.f32.xlu0 %v9329
    %v9331 = vpop.xlane.xlu0 %9330
    %v9332 = vsel %vm321, %v9286, 0.0
    %9333 = vadd.xlane.f32.xlu0 %v9332
    %v9334 = vpop.xlane.xlu0 %9333
    %v9335 = vmul.f32 %v9289, %v8110
    %v9336 = vmul.f32 %v9292, %v8110
    %v9337 = vmul.f32 %v9295, %v8110
    %v9338 = vmul.f32 %v9298, %v8110
    %v9339 = vmul.f32 %v9301, %v8110
    %v9340 = vmul.f32 %v9304, %v8110
    %v9341 = vmul.f32 %v9307, %v8110
    %v9342 = vmul.f32 %v9310, %v8110
    %v9343 = vmul.f32 %v9313, %v8110
    %v9344 = vmul.f32 %v9316, %v8110
    %v9345 = vmul.f32 %v9319, %v8110
    %v9346 = vmul.f32 %v9322, %v8110
    %v9347 = vmul.f32 %v9325, %v8110
    %v9348 = vmul.f32 %v9328, %v8110
    %v9349 = vmul.f32 %v9331, %v8110
    %v9350 = vmul.f32 %v9334, %v8110
    %v9351 = vadd.f32 %v9335, 1e-05
    %v9352 = vadd.f32 %v9336, 1e-05
    %v9353 = vadd.f32 %v9337, 1e-05
    %v9354 = vadd.f32 %v9338, 1e-05
    %v9355 = vadd.f32 %v9339, 1e-05
    %v9356 = vadd.f32 %v9340, 1e-05
    %v9357 = vadd.f32 %v9341, 1e-05
    %v9358 = vadd.f32 %v9342, 1e-05
    %v9359 = vadd.f32 %v9343, 1e-05
    %v9360 = vadd.f32 %v9344, 1e-05
    %v9361 = vadd.f32 %v9345, 1e-05
    %v9362 = vadd.f32 %v9346, 1e-05
    %v9363 = vadd.f32 %v9347, 1e-05
    %v9364 = vadd.f32 %v9348, 1e-05
    %v9365 = vadd.f32 %v9349, 1e-05
    %v9366 = vadd.f32 %v9350, 1e-05
    %v9367 = vrsqrt.pop %v9351
    %v9368 = vmul.f32 %v9367, %v9351
    %v9369 = vmul.f32 %v9368, %v9367
    %v9370 = vmul.f32 0.5, %v9369
    %v9371 = vsub.f32 1.5, %v9370
    %v9372 = vmul.f32 %v9367, %v9371
    %vm9373 = vweird.f32 %v9351
    %vm9374 = vweird.f32 %v9367
    %vm9375 = vmor %vm9373, %vm9374
    %v9376 = vsel %vm9375, %v9367, %v9372
    %v9377 = vrsqrt.pop %v9352
    %v9378 = vmul.f32 %v9377, %v9352
    %v9379 = vmul.f32 %v9378, %v9377
    %v9380 = vmul.f32 0.5, %v9379
    %v9381 = vsub.f32 1.5, %v9380
    %v9382 = vmul.f32 %v9377, %v9381
    %vm9383 = vweird.f32 %v9352
    %vm9384 = vweird.f32 %v9377
    %vm9385 = vmor %vm9383, %vm9384
    %v9386 = vsel %vm9385, %v9377, %v9382
    %v9387 = vrsqrt.pop %v9353
    %v9388 = vmul.f32 %v9387, %v9353
    %v9389 = vmul.f32 %v9388, %v9387
    %v9390 = vmul.f32 0.5, %v9389
    %v9391 = vsub.f32 1.5, %v9390
    %v9392 = vmul.f32 %v9387, %v9391
    %vm9393 = vweird.f32 %v9353
    %vm9394 = vweird.f32 %v9387
    %vm9395 = vmor %vm9393, %vm9394
    %v9396 = vsel %vm9395, %v9387, %v9392
    %v9397 = vrsqrt.pop %v9354
    %v9398 = vmul.f32 %v9397, %v9354
    %v9399 = vmul.f32 %v9398, %v9397
    %v9400 = vmul.f32 0.5, %v9399
    %v9401 = vsub.f32 1.5, %v9400
    %v9402 = vmul.f32 %v9397, %v9401
    %vm9403 = vweird.f32 %v9354
    %vm9404 = vweird.f32 %v9397
    %vm9405 = vmor %vm9403, %vm9404
    %v9406 = vsel %vm9405, %v9397, %v9402
    %v9407 = vrsqrt.pop %v9355
    %v9408 = vmul.f32 %v9407, %v9355
    %v9409 = vmul.f32 %v9408, %v9407
    %v9410 = vmul.f32 0.5, %v9409
    %v9411 = vsub.f32 1.5, %v9410
    %v9412 = vmul.f32 %v9407, %v9411
    %vm9413 = vweird.f32 %v9355
    %vm9414 = vweird.f32 %v9407
    %vm9415 = vmor %vm9413, %vm9414
    %v9416 = vsel %vm9415, %v9407, %v9412
    %v9417 = vrsqrt.pop %v9356
    %v9418 = vmul.f32 %v9417, %v9356
    %v9419 = vmul.f32 %v9418, %v9417
    %v9420 = vmul.f32 0.5, %v9419
    %v9421 = vsub.f32 1.5, %v9420
    %v9422 = vmul.f32 %v9417, %v9421
    %vm9423 = vweird.f32 %v9356
    %vm9424 = vweird.f32 %v9417
    %vm9425 = vmor %vm9423, %vm9424
    %v9426 = vsel %vm9425, %v9417, %v9422
    %v9427 = vrsqrt.pop %v9357
    %v9428 = vmul.f32 %v9427, %v9357
    %v9429 = vmul.f32 %v9428, %v9427
    %v9430 = vmul.f32 0.5, %v9429
    %v9431 = vsub.f32 1.5, %v9430
    %v9432 = vmul.f32 %v9427, %v9431
    %vm9433 = vweird.f32 %v9357
    %vm9434 = vweird.f32 %v9427
    %vm9435 = vmor %vm9433, %vm9434
    %v9436 = vsel %vm9435, %v9427, %v9432
    %v9437 = vrsqrt.pop %v9358
    %v9438 = vmul.f32 %v9437, %v9358
    %v9439 = vmul.f32 %v9438, %v9437
    %v9440 = vmul.f32 0.5, %v9439
    %v9441 = vsub.f32 1.5, %v9440
    %v9442 = vmul.f32 %v9437, %v9441
    %vm9443 = vweird.f32 %v9358
    %vm9444 = vweird.f32 %v9437
    %vm9445 = vmor %vm9443, %vm9444
    %v9446 = vsel %vm9445, %v9437, %v9442
    %v9447 = vrsqrt.pop %v9359
    %v9448 = vmul.f32 %v9447, %v9359
    %v9449 = vmul.f32 %v9448, %v9447
    %v9450 = vmul.f32 0.5, %v9449
    %v9451 = vsub.f32 1.5, %v9450
    %v9452 = vmul.f32 %v9447, %v9451
    %vm9453 = vweird.f32 %v9359
    %vm9454 = vweird.f32 %v9447
    %vm9455 = vmor %vm9453, %vm9454
    %v9456 = vsel %vm9455, %v9447, %v9452
    %v9457 = vrsqrt.pop %v9360
    %v9458 = vmul.f32 %v9457, %v9360
    %v9459 = vmul.f32 %v9458, %v9457
    %v9460 = vmul.f32 0.5, %v9459
    %v9461 = vsub.f32 1.5, %v9460
    %v9462 = vmul.f32 %v9457, %v9461
    %vm9463 = vweird.f32 %v9360
    %vm9464 = vweird.f32 %v9457
    %vm9465 = vmor %vm9463, %vm9464
    %v9466 = vsel %vm9465, %v9457, %v9462
    %v9467 = vrsqrt.pop %v9361
    %v9468 = vmul.f32 %v9467, %v9361
    %v9469 = vmul.f32 %v9468, %v9467
    %v9470 = vmul.f32 0.5, %v9469
    %v9471 = vsub.f32 1.5, %v9470
    %v9472 = vmul.f32 %v9467, %v9471
    %vm9473 = vweird.f32 %v9361
    %vm9474 = vweird.f32 %v9467
    %vm9475 = vmor %vm9473, %vm9474
    %v9476 = vsel %vm9475, %v9467, %v9472
    %v9477 = vrsqrt.pop %v9362
    %v9478 = vmul.f32 %v9477, %v9362
    %v9479 = vmul.f32 %v9478, %v9477
    %v9480 = vmul.f32 0.5, %v9479
    %v9481 = vsub.f32 1.5, %v9480
    %v9482 = vmul.f32 %v9477, %v9481
    %vm9483 = vweird.f32 %v9362
    %vm9484 = vweird.f32 %v9477
    %vm9485 = vmor %vm9483, %vm9484
    %v9486 = vsel %vm9485, %v9477, %v9482
    %v9487 = vrsqrt.pop %v9363
    %v9488 = vmul.f32 %v9487, %v9363
    %v9489 = vmul.f32 %v9488, %v9487
    %v9490 = vmul.f32 0.5, %v9489
    %v9491 = vsub.f32 1.5, %v9490
    %v9492 = vmul.f32 %v9487, %v9491
    %vm9493 = vweird.f32 %v9363
    %vm9494 = vweird.f32 %v9487
    %vm9495 = vmor %vm9493, %vm9494
    %v9496 = vsel %vm9495, %v9487, %v9492
    %v9497 = vrsqrt.pop %v9364
    %v9498 = vmul.f32 %v9497, %v9364
    %v9499 = vmul.f32 %v9498, %v9497
    %v9500 = vmul.f32 0.5, %v9499
    %v9501 = vsub.f32 1.5, %v9500
    %v9502 = vmul.f32 %v9497, %v9501
    %vm9503 = vweird.f32 %v9364
    %vm9504 = vweird.f32 %v9497
    %vm9505 = vmor %vm9503, %vm9504
    %v9506 = vsel %vm9505, %v9497, %v9502
    %v9507 = vrsqrt.pop %v9365
    %v9508 = vmul.f32 %v9507, %v9365
    %v9509 = vmul.f32 %v9508, %v9507
    %v9510 = vmul.f32 0.5, %v9509
    %v9511 = vsub.f32 1.5, %v9510
    %v9512 = vmul.f32 %v9507, %v9511
    %vm9513 = vweird.f32 %v9365
    %vm9514 = vweird.f32 %v9507
    %vm9515 = vmor %vm9513, %vm9514
    %v9516 = vsel %vm9515, %v9507, %v9512
    %v9517 = vrsqrt.pop %v9366
    %v9518 = vmul.f32 %v9517, %v9366
    %v9519 = vmul.f32 %v9518, %v9517
    %v9520 = vmul.f32 0.5, %v9519
    %v9521 = vsub.f32 1.5, %v9520
    %v9522 = vmul.f32 %v9517, %v9521
    %vm9523 = vweird.f32 %v9366
    %vm9524 = vweird.f32 %v9517
    %vm9525 = vmor %vm9523, %vm9524
    %v9526 = vsel %vm9525, %v9517, %v9522
    %v9527 = vmul.f32 %v9255, %v9376
    %v9528 = vmul.f32 %v9256, %v9386
    %v9529 = vmul.f32 %v9257, %v9396
    %v9530 = vmul.f32 %v9258, %v9406
    %v9531 = vmul.f32 %v9259, %v9416
    %v9532 = vmul.f32 %v9260, %v9426
    %v9533 = vmul.f32 %v9261, %v9436
    %v9534 = vmul.f32 %v9262, %v9446
    %v9535 = vmul.f32 %v9263, %v9456
    %v9536 = vmul.f32 %v9264, %v9466
    %v9537 = vmul.f32 %v9265, %v9476
    %v9538 = vmul.f32 %v9266, %v9486
    %v9539 = vmul.f32 %v9267, %v9496
    %v9540 = vmul.f32 %v9268, %v9506
    %v9541 = vmul.f32 %v9269, %v9516
    %v9542 = vmul.f32 %v9270, %v9526
    %v9543 = vld [vmem:[%s16] sm:$0xff]
    %v9544 = vld [vmem:[%s16 + $0x8] sm:$0xff]
    %v9545 = vld [vmem:[%s16 + $0x10] sm:$0xff]
    %v9546 = vld [vmem:[%s16 + $0x18] sm:$0xff]
    %v9547 = vld [vmem:[%s16 + $0x20] sm:$0xff]
    %v9548 = vld [vmem:[%s16 + $0x28] sm:$0xff]
    %v9549 = vld [vmem:[%s16 + $0x30] sm:$0xff]
    %v9550 = vld [vmem:[%s16 + $0x38] sm:$0xff]
    %v9551 = vld [vmem:[%s17] sm:$0x1]
    %v9553 = vperm.slane %v9551, 0
    %v9556 = vsel %vm321, %v9527, 0
    %v9559 = vsel %vm321, %v9528, 0
    %v9562 = vsel %vm321, %v9529, 0
    %v9565 = vsel %vm321, %v9530, 0
    %v9568 = vsel %vm321, %v9531, 0
    %v9571 = vsel %vm321, %v9532, 0
    %v9574 = vsel %vm321, %v9533, 0
    %v9577 = vsel %vm321, %v9534, 0
    %v9580 = vsel %vm321, %v9535, 0
    %v9583 = vsel %vm321, %v9536, 0
    %v9586 = vsel %vm321, %v9537, 0
    %v9589 = vsel %vm321, %v9538, 0
    %v9592 = vsel %vm321, %v9539, 0
    %v9595 = vsel %vm321, %v9540, 0
    %v9598 = vsel %vm321, %v9541, 0
    %v9601 = vsel %vm321, %v9542, 0
    %9603 = vmatpush.msra.mxu0 0.0
    %9604 = vmatpush.msra.mxu0 0.0
    %9605 = vmatpush.msra.mxu0 0.0
    %9606 = vmatpush.msra.mxu0 0.0
    %9607 = vmatpush.msra.mxu0 0.0
    %9608 = vmatpush.msra.mxu0 0.0
    %9609 = vmatpush.msra.mxu0 0.0
    %9610 = vmatpush.msra.mxu0 0.0
    %9611 = vmatpush.msra.mxu0 %v9550
    %9612 = vmatpush.msra.mxu0 %v9549
    %9613 = vmatpush.msra.mxu0 %v9548
    %9614 = vmatpush.msra.mxu0 %v9547
    %9615 = vmatpush.msra.mxu0 %v9546
    %9616 = vmatpush.msra.mxu0 %v9545
    %9617 = vmatpush.msra.mxu0 %v9544
    %9618 = vmatpush.msra.mxu0 %v9543
    %9619 = vmatmul.f32.gmra.mxu0 %v9556
    %v9620 = vpop.f32.mrf.mxu0
    %v9621 = vadd.f32 %v9553, %v9620
    %9622 = vmatmul.f32.gmra.mxu0 %v9559
    %v9623 = vpop.f32.mrf.mxu0
    %v9624 = vadd.f32 %v9553, %v9623
    %9625 = vmatmul.f32.gmra.mxu0 %v9562
    %v9626 = vpop.f32.mrf.mxu0
    %v9627 = vadd.f32 %v9553, %v9626
    %9628 = vmatmul.f32.gmra.mxu0 %v9565
    %v9629 = vpop.f32.mrf.mxu0
    %v9630 = vadd.f32 %v9553, %v9629
    %9631 = vmatmul.f32.gmra.mxu0 %v9568
    %v9632 = vpop.f32.mrf.mxu0
    %v9633 = vadd.f32 %v9553, %v9632
    %9634 = vmatmul.f32.gmra.mxu0 %v9571
    %v9635 = vpop.f32.mrf.mxu0
    %v9636 = vadd.f32 %v9553, %v9635
    %9637 = vmatmul.f32.gmra.mxu0 %v9574
    %v9638 = vpop.f32.mrf.mxu0
    %v9639 = vadd.f32 %v9553, %v9638
    %9640 = vmatmul.f32.gmra.mxu0 %v9577
    %v9641 = vpop.f32.mrf.mxu0
    %v9642 = vadd.f32 %v9553, %v9641
    %9643 = vmatmul.f32.gmra.mxu0 %v9580
    %v9644 = vpop.f32.mrf.mxu0
    %v9645 = vadd.f32 %v9553, %v9644
    %9646 = vmatmul.f32.gmra.mxu0 %v9583
    %v9647 = vpop.f32.mrf.mxu0
    %v9648 = vadd.f32 %v9553, %v9647
    %9649 = vmatmul.f32.gmra.mxu0 %v9586
    %v9650 = vpop.f32.mrf.mxu0
    %v9651 = vadd.f32 %v9553, %v9650
    %9652 = vmatmul.f32.gmra.mxu0 %v9589
    %v9653 = vpop.f32.mrf.mxu0
    %v9654 = vadd.f32 %v9553, %v9653
    %9655 = vmatmul.f32.gmra.mxu0 %v9592
    %v9656 = vpop.f32.mrf.mxu0
    %v9657 = vadd.f32 %v9553, %v9656
    %9658 = vmatmul.f32.gmra.mxu0 %v9595
    %v9659 = vpop.f32.mrf.mxu0
    %v9660 = vadd.f32 %v9553, %v9659
    %9661 = vmatmul.f32.gmra.mxu0 %v9598
    %v9662 = vpop.f32.mrf.mxu0
    %v9663 = vadd.f32 %v9553, %v9662
    %9664 = vmatmul.f32.gmra.mxu0 %v9601
    %v9665 = vpop.f32.mrf.mxu0
    %v9666 = vadd.f32 %v9553, %v9665
    %9667 = vdwg.mxu0
    %vm9668 = vcmask 31744
    %v9669 = vsel %vm9668, %v9621, -inf
    %9670 = vmax.xlane.f32.xlu0 %v9669
    %v9671 = vpop.xlane.xlu0 %9670
    %v9672 = vsel %vm9668, %v9624, -inf
    %9673 = vmax.xlane.f32.xlu0 %v9672
    %v9674 = vpop.xlane.xlu0 %9673
    %v9675 = vsel %vm9668, %v9627, -inf
    %9676 = vmax.xlane.f32.xlu0 %v9675
    %v9677 = vpop.xlane.xlu0 %9676
    %v9678 = vsel %vm9668, %v9630, -inf
    %9679 = vmax.xlane.f32.xlu0 %v9678
    %v9680 = vpop.xlane.xlu0 %9679
    %v9681 = vsel %vm9668, %v9633, -inf
    %9682 = vmax.xlane.f32.xlu0 %v9681
    %v9683 = vpop.xlane.xlu0 %9682
    %v9684 = vsel %vm9668, %v9636, -inf
    %9685 = vmax.xlane.f32.xlu0 %v9684
    %v9686 = vpop.xlane.xlu0 %9685
    %v9687 = vsel %vm9668, %v9639, -inf
    %9688 = vmax.xlane.f32.xlu0 %v9687
    %v9689 = vpop.xlane.xlu0 %9688
    %v9690 = vsel %vm9668, %v9642, -inf
    %9691 = vmax.xlane.f32.xlu0 %v9690
    %v9692 = vpop.xlane.xlu0 %9691
    %v9693 = vsel %vm9668, %v9645, -inf
    %9694 = vmax.xlane.f32.xlu0 %v9693
    %v9695 = vpop.xlane.xlu0 %9694
    %v9696 = vsel %vm9668, %v9648, -inf
    %9697 = vmax.xlane.f32.xlu0 %v9696
    %v9698 = vpop.xlane.xlu0 %9697
    %v9699 = vsel %vm9668, %v9651, -inf
    %9700 = vmax.xlane.f32.xlu0 %v9699
    %v9701 = vpop.xlane.xlu0 %9700
    %v9702 = vsel %vm9668, %v9654, -inf
    %9703 = vmax.xlane.f32.xlu0 %v9702
    %v9704 = vpop.xlane.xlu0 %9703
    %v9705 = vsel %vm9668, %v9657, -inf
    %9706 = vmax.xlane.f32.xlu0 %v9705
    %v9707 = vpop.xlane.xlu0 %9706
    %v9708 = vsel %vm9668, %v9660, -inf
    %9709 = vmax.xlane.f32.xlu0 %v9708
    %v9710 = vpop.xlane.xlu0 %9709
    %v9711 = vsel %vm9668, %v9663, -inf
    %9712 = vmax.xlane.f32.xlu0 %v9711
    %v9713 = vpop.xlane.xlu0 %9712
    %v9714 = vsel %vm9668, %v9666, -inf
    %9715 = vmax.xlane.f32.xlu0 %v9714
    %v9716 = vpop.xlane.xlu0 %9715
    %v9717 = vsub.f32 %v9621, %v9671
    %v9718 = vsub.f32 %v9624, %v9674
    %v9719 = vsub.f32 %v9627, %v9677
    %v9720 = vsub.f32 %v9630, %v9680
    %v9721 = vsub.f32 %v9633, %v9683
    %v9722 = vsub.f32 %v9636, %v9686
    %v9723 = vsub.f32 %v9639, %v9689
    %v9724 = vsub.f32 %v9642, %v9692
    %v9725 = vsub.f32 %v9645, %v9695
    %v9726 = vsub.f32 %v9648, %v9698
    %v9727 = vsub.f32 %v9651, %v9701
    %v9728 = vsub.f32 %v9654, %v9704
    %v9729 = vsub.f32 %v9657, %v9707
    %v9730 = vsub.f32 %v9660, %v9710
    %v9731 = vsub.f32 %v9663, %v9713
    %v9732 = vsub.f32 %v9666, %v9716
    %v9733 = vmul.f32 %v9717, 1.442695
    %v9734 = vpow.pop %v9733
    %v9735 = vmul.f32 %v9718, 1.442695
    %v9736 = vpow.pop %v9735
    %v9737 = vmul.f32 %v9719, 1.442695
    %v9738 = vpow.pop %v9737
    %v9739 = vmul.f32 %v9720, 1.442695
    %v9740 = vpow.pop %v9739
    %v9741 = vmul.f32 %v9721, 1.442695
    %v9742 = vpow.pop %v9741
    %v9743 = vmul.f32 %v9722, 1.442695
    %v9744 = vpow.pop %v9743
    %v9745 = vmul.f32 %v9723, 1.442695
    %v9746 = vpow.pop %v9745
    %v9747 = vmul.f32 %v9724, 1.442695
    %v9748 = vpow.pop %v9747
    %v9749 = vmul.f32 %v9725, 1.442695
    %v9750 = vpow.pop %v9749
    %v9751 = vmul.f32 %v9726, 1.442695
    %v9752 = vpow.pop %v9751
    %v9753 = vmul.f32 %v9727, 1.442695
    %v9754 = vpow.pop %v9753
    %v9755 = vmul.f32 %v9728, 1.442695
    %v9756 = vpow.pop %v9755
    %v9757 = vmul.f32 %v9729, 1.442695
    %v9758 = vpow.pop %v9757
    %v9759 = vmul.f32 %v9730, 1.442695
    %v9760 = vpow.pop %v9759
    %v9761 = vmul.f32 %v9731, 1.442695
    %v9762 = vpow.pop %v9761
    %v9763 = vmul.f32 %v9732, 1.442695
    %v9764 = vpow.pop %v9763
    %v9765 = vsel %vm9668, %v9734, 0.0
    %9766 = vadd.xlane.f32.xlu0 %v9765
    %v9767 = vpop.xlane.xlu0 %9766
    %v9768 = vsel %vm9668, %v9736, 0.0
    %9769 = vadd.xlane.f32.xlu0 %v9768
    %v9770 = vpop.xlane.xlu0 %9769
    %v9771 = vsel %vm9668, %v9738, 0.0
    %9772 = vadd.xlane.f32.xlu0 %v9771
    %v9773 = vpop.xlane.xlu0 %9772
    %v9774 = vsel %vm9668, %v9740, 0.0
    %9775 = vadd.xlane.f32.xlu0 %v9774
    %v9776 = vpop.xlane.xlu0 %9775
    %v9777 = vsel %vm9668, %v9742, 0.0
    %9778 = vadd.xlane.f32.xlu0 %v9777
    %v9779 = vpop.xlane.xlu0 %9778
    %v9780 = vsel %vm9668, %v9744, 0.0
    %9781 = vadd.xlane.f32.xlu0 %v9780
    %v9782 = vpop.xlane.xlu0 %9781
    %v9783 = vsel %vm9668, %v9746, 0.0
    %9784 = vadd.xlane.f32.xlu0 %v9783
    %v9785 = vpop.xlane.xlu0 %9784
    %v9786 = vsel %vm9668, %v9748, 0.0
    %9787 = vadd.xlane.f32.xlu0 %v9786
    %v9788 = vpop.xlane.xlu0 %9787
    %v9789 = vsel %vm9668, %v9750, 0.0
    %9790 = vadd.xlane.f32.xlu0 %v9789
    %v9791 = vpop.xlane.xlu0 %9790
    %v9792 = vsel %vm9668, %v9752, 0.0
    %9793 = vadd.xlane.f32.xlu0 %v9792
    %v9794 = vpop.xlane.xlu0 %9793
    %v9795 = vsel %vm9668, %v9754, 0.0
    %9796 = vadd.xlane.f32.xlu0 %v9795
    %v9797 = vpop.xlane.xlu0 %9796
    %v9798 = vsel %vm9668, %v9756, 0.0
    %9799 = vadd.xlane.f32.xlu0 %v9798
    %v9800 = vpop.xlane.xlu0 %9799
    %v9801 = vsel %vm9668, %v9758, 0.0
    %9802 = vadd.xlane.f32.xlu0 %v9801
    %v9803 = vpop.xlane.xlu0 %9802
    %v9804 = vsel %vm9668, %v9760, 0.0
    %9805 = vadd.xlane.f32.xlu0 %v9804
    %v9806 = vpop.xlane.xlu0 %9805
    %v9807 = vsel %vm9668, %v9762, 0.0
    %9808 = vadd.xlane.f32.xlu0 %v9807
    %v9809 = vpop.xlane.xlu0 %9808
    %v9810 = vsel %vm9668, %v9764, 0.0
    %9811 = vadd.xlane.f32.xlu0 %v9810
    %v9812 = vpop.xlane.xlu0 %9811
    %v9813 = vrcp.pop %v9767
    %v9814 = vmul.f32 %v9767, %v9813
    %v9815 = vsub.f32 1.0, %v9814
    %v9816 = vmul.f32 %v9813, %v9815
    %v9817 = vadd.f32 %v9813, %v9816
    %vm9818 = vweird.f32 %v9767
    %vm9819 = vweird.f32 %v9813
    %vm9820 = vmor %vm9818, %vm9819
    %v9821 = vsel %vm9820, %v9813, %v9817
    %v9822 = vand.u32 2147483647, %v9767
    %vm9823 = vcmp.eq.f32.partialorder %v9822, 8.507059e+37
    %v9824 = vand.u32 %v9767, 2147483648
    %v9825 = vor.u32 1.1754944e-38, %v9824
    %v9826 = vsel %vm9823, %v9825, %v9821
    %v9827 = vmul.f32 %v9734, %v9826
    %v9828 = vrcp.pop %v9770
    %v9829 = vmul.f32 %v9770, %v9828
    %v9830 = vsub.f32 1.0, %v9829
    %v9831 = vmul.f32 %v9828, %v9830
    %v9832 = vadd.f32 %v9828, %v9831
    %vm9833 = vweird.f32 %v9770
    %vm9834 = vweird.f32 %v9828
    %vm9835 = vmor %vm9833, %vm9834
    %v9836 = vsel %vm9835, %v9828, %v9832
    %v9837 = vand.u32 2147483647, %v9770
    %vm9838 = vcmp.eq.f32.partialorder %v9837, 8.507059e+37
    %v9839 = vand.u32 %v9770, 2147483648
    %v9840 = vor.u32 1.1754944e-38, %v9839
    %v9841 = vsel %vm9838, %v9840, %v9836
    %v9842 = vmul.f32 %v9736, %v9841
    %v9843 = vrcp.pop %v9773
    %v9844 = vmul.f32 %v9773, %v9843
    %v9845 = vsub.f32 1.0, %v9844
    %v9846 = vmul.f32 %v9843, %v9845
    %v9847 = vadd.f32 %v9843, %v9846
    %vm9848 = vweird.f32 %v9773
    %vm9849 = vweird.f32 %v9843
    %vm9850 = vmor %vm9848, %vm9849
    %v9851 = vsel %vm9850, %v9843, %v9847
    %v9852 = vand.u32 2147483647, %v9773
    %vm9853 = vcmp.eq.f32.partialorder %v9852, 8.507059e+37
    %v9854 = vand.u32 %v9773, 2147483648
    %v9855 = vor.u32 1.1754944e-38, %v9854
    %v9856 = vsel %vm9853, %v9855, %v9851
    %v9857 = vmul.f32 %v9738, %v9856
    %v9858 = vrcp.pop %v9776
    %v9859 = vmul.f32 %v9776, %v9858
    %v9860 = vsub.f32 1.0, %v9859
    %v9861 = vmul.f32 %v9858, %v9860
    %v9862 = vadd.f32 %v9858, %v9861
    %vm9863 = vweird.f32 %v9776
    %vm9864 = vweird.f32 %v9858
    %vm9865 = vmor %vm9863, %vm9864
    %v9866 = vsel %vm9865, %v9858, %v9862
    %v9867 = vand.u32 2147483647, %v9776
    %vm9868 = vcmp.eq.f32.partialorder %v9867, 8.507059e+37
    %v9869 = vand.u32 %v9776, 2147483648
    %v9870 = vor.u32 1.1754944e-38, %v9869
    %v9871 = vsel %vm9868, %v9870, %v9866
    %v9872 = vmul.f32 %v9740, %v9871
    %v9873 = vrcp.pop %v9779
    %v9874 = vmul.f32 %v9779, %v9873
    %v9875 = vsub.f32 1.0, %v9874
    %v9876 = vmul.f32 %v9873, %v9875
    %v9877 = vadd.f32 %v9873, %v9876
    %vm9878 = vweird.f32 %v9779
    %vm9879 = vweird.f32 %v9873
    %vm9880 = vmor %vm9878, %vm9879
    %v9881 = vsel %vm9880, %v9873, %v9877
    %v9882 = vand.u32 2147483647, %v9779
    %vm9883 = vcmp.eq.f32.partialorder %v9882, 8.507059e+37
    %v9884 = vand.u32 %v9779, 2147483648
    %v9885 = vor.u32 1.1754944e-38, %v9884
    %v9886 = vsel %vm9883, %v9885, %v9881
    %v9887 = vmul.f32 %v9742, %v9886
    %v9888 = vrcp.pop %v9782
    %v9889 = vmul.f32 %v9782, %v9888
    %v9890 = vsub.f32 1.0, %v9889
    %v9891 = vmul.f32 %v9888, %v9890
    %v9892 = vadd.f32 %v9888, %v9891
    %vm9893 = vweird.f32 %v9782
    %vm9894 = vweird.f32 %v9888
    %vm9895 = vmor %vm9893, %vm9894
    %v9896 = vsel %vm9895, %v9888, %v9892
    %v9897 = vand.u32 2147483647, %v9782
    %vm9898 = vcmp.eq.f32.partialorder %v9897, 8.507059e+37
    %v9899 = vand.u32 %v9782, 2147483648
    %v9900 = vor.u32 1.1754944e-38, %v9899
    %v9901 = vsel %vm9898, %v9900, %v9896
    %v9902 = vmul.f32 %v9744, %v9901
    %v9903 = vrcp.pop %v9785
    %v9904 = vmul.f32 %v9785, %v9903
    %v9905 = vsub.f32 1.0, %v9904
    %v9906 = vmul.f32 %v9903, %v9905
    %v9907 = vadd.f32 %v9903, %v9906
    %vm9908 = vweird.f32 %v9785
    %vm9909 = vweird.f32 %v9903
    %vm9910 = vmor %vm9908, %vm9909
    %v9911 = vsel %vm9910, %v9903, %v9907
    %v9912 = vand.u32 2147483647, %v9785
    %vm9913 = vcmp.eq.f32.partialorder %v9912, 8.507059e+37
    %v9914 = vand.u32 %v9785, 2147483648
    %v9915 = vor.u32 1.1754944e-38, %v9914
    %v9916 = vsel %vm9913, %v9915, %v9911
    %v9917 = vmul.f32 %v9746, %v9916
    %v9918 = vrcp.pop %v9788
    %v9919 = vmul.f32 %v9788, %v9918
    %v9920 = vsub.f32 1.0, %v9919
    %v9921 = vmul.f32 %v9918, %v9920
    %v9922 = vadd.f32 %v9918, %v9921
    %vm9923 = vweird.f32 %v9788
    %vm9924 = vweird.f32 %v9918
    %vm9925 = vmor %vm9923, %vm9924
    %v9926 = vsel %vm9925, %v9918, %v9922
    %v9927 = vand.u32 2147483647, %v9788
    %vm9928 = vcmp.eq.f32.partialorder %v9927, 8.507059e+37
    %v9929 = vand.u32 %v9788, 2147483648
    %v9930 = vor.u32 1.1754944e-38, %v9929
    %v9931 = vsel %vm9928, %v9930, %v9926
    %v9932 = vmul.f32 %v9748, %v9931
    %v9933 = vrcp.pop %v9791
    %v9934 = vmul.f32 %v9791, %v9933
    %v9935 = vsub.f32 1.0, %v9934
    %v9936 = vmul.f32 %v9933, %v9935
    %v9937 = vadd.f32 %v9933, %v9936
    %vm9938 = vweird.f32 %v9791
    %vm9939 = vweird.f32 %v9933
    %vm9940 = vmor %vm9938, %vm9939
    %v9941 = vsel %vm9940, %v9933, %v9937
    %v9942 = vand.u32 2147483647, %v9791
    %vm9943 = vcmp.eq.f32.partialorder %v9942, 8.507059e+37
    %v9944 = vand.u32 %v9791, 2147483648
    %v9945 = vor.u32 1.1754944e-38, %v9944
    %v9946 = vsel %vm9943, %v9945, %v9941
    %v9947 = vmul.f32 %v9750, %v9946
    %v9948 = vrcp.pop %v9794
    %v9949 = vmul.f32 %v9794, %v9948
    %v9950 = vsub.f32 1.0, %v9949
    %v9951 = vmul.f32 %v9948, %v9950
    %v9952 = vadd.f32 %v9948, %v9951
    %vm9953 = vweird.f32 %v9794
    %vm9954 = vweird.f32 %v9948
    %vm9955 = vmor %vm9953, %vm9954
    %v9956 = vsel %vm9955, %v9948, %v9952
    %v9957 = vand.u32 2147483647, %v9794
    %vm9958 = vcmp.eq.f32.partialorder %v9957, 8.507059e+37
    %v9959 = vand.u32 %v9794, 2147483648
    %v9960 = vor.u32 1.1754944e-38, %v9959
    %v9961 = vsel %vm9958, %v9960, %v9956
    %v9962 = vmul.f32 %v9752, %v9961
    %v9963 = vrcp.pop %v9797
    %v9964 = vmul.f32 %v9797, %v9963
    %v9965 = vsub.f32 1.0, %v9964
    %v9966 = vmul.f32 %v9963, %v9965
    %v9967 = vadd.f32 %v9963, %v9966
    %vm9968 = vweird.f32 %v9797
    %vm9969 = vweird.f32 %v9963
    %vm9970 = vmor %vm9968, %vm9969
    %v9971 = vsel %vm9970, %v9963, %v9967
    %v9972 = vand.u32 2147483647, %v9797
    %vm9973 = vcmp.eq.f32.partialorder %v9972, 8.507059e+37
    %v9974 = vand.u32 %v9797, 2147483648
    %v9975 = vor.u32 1.1754944e-38, %v9974
    %v9976 = vsel %vm9973, %v9975, %v9971
    %v9977 = vmul.f32 %v9754, %v9976
    %v9978 = vrcp.pop %v9800
    %v9979 = vmul.f32 %v9800, %v9978
    %v9980 = vsub.f32 1.0, %v9979
    %v9981 = vmul.f32 %v9978, %v9980
    %v9982 = vadd.f32 %v9978, %v9981
    %vm9983 = vweird.f32 %v9800
    %vm9984 = vweird.f32 %v9978
    %vm9985 = vmor %vm9983, %vm9984
    %v9986 = vsel %vm9985, %v9978, %v9982
    %v9987 = vand.u32 2147483647, %v9800
    %vm9988 = vcmp.eq.f32.partialorder %v9987, 8.507059e+37
    %v9989 = vand.u32 %v9800, 2147483648
    %v9990 = vor.u32 1.1754944e-38, %v9989
    %v9991 = vsel %vm9988, %v9990, %v9986
    %v9992 = vmul.f32 %v9756, %v9991
    %v9993 = vrcp.pop %v9803
    %v9994 = vmul.f32 %v9803, %v9993
    %v9995 = vsub.f32 1.0, %v9994
    %v9996 = vmul.f32 %v9993, %v9995
    %v9997 = vadd.f32 %v9993, %v9996
    %vm9998 = vweird.f32 %v9803
    %vm9999 = vweird.f32 %v9993
    %vm10000 = vmor %vm9998, %vm9999
    %v10001 = vsel %vm10000, %v9993, %v9997
    %v10002 = vand.u32 2147483647, %v9803
    %vm10003 = vcmp.eq.f32.partialorder %v10002, 8.507059e+37
    %v10004 = vand.u32 %v9803, 2147483648
    %v10005 = vor.u32 1.1754944e-38, %v10004
    %v10006 = vsel %vm10003, %v10005, %v10001
    %v10007 = vmul.f32 %v9758, %v10006
    %v10008 = vrcp.pop %v9806
    %v10009 = vmul.f32 %v9806, %v10008
    %v10010 = vsub.f32 1.0, %v10009
    %v10011 = vmul.f32 %v10008, %v10010
    %v10012 = vadd.f32 %v10008, %v10011
    %vm10013 = vweird.f32 %v9806
    %vm10014 = vweird.f32 %v10008
    %vm10015 = vmor %vm10013, %vm10014
    %v10016 = vsel %vm10015, %v10008, %v10012
    %v10017 = vand.u32 2147483647, %v9806
    %vm10018 = vcmp.eq.f32.partialorder %v10017, 8.507059e+37
    %v10019 = vand.u32 %v9806, 2147483648
    %v10020 = vor.u32 1.1754944e-38, %v10019
    %v10021 = vsel %vm10018, %v10020, %v10016
    %v10022 = vmul.f32 %v9760, %v10021
    %v10023 = vrcp.pop %v9809
    %v10024 = vmul.f32 %v9809, %v10023
    %v10025 = vsub.f32 1.0, %v10024
    %v10026 = vmul.f32 %v10023, %v10025
    %v10027 = vadd.f32 %v10023, %v10026
    %vm10028 = vweird.f32 %v9809
    %vm10029 = vweird.f32 %v10023
    %vm10030 = vmor %vm10028, %vm10029
    %v10031 = vsel %vm10030, %v10023, %v10027
    %v10032 = vand.u32 2147483647, %v9809
    %vm10033 = vcmp.eq.f32.partialorder %v10032, 8.507059e+37
    %v10034 = vand.u32 %v9809, 2147483648
    %v10035 = vor.u32 1.1754944e-38, %v10034
    %v10036 = vsel %vm10033, %v10035, %v10031
    %v10037 = vmul.f32 %v9762, %v10036
    %v10038 = vrcp.pop %v9812
    %v10039 = vmul.f32 %v9812, %v10038
    %v10040 = vsub.f32 1.0, %v10039
    %v10041 = vmul.f32 %v10038, %v10040
    %v10042 = vadd.f32 %v10038, %v10041
    %vm10043 = vweird.f32 %v9812
    %vm10044 = vweird.f32 %v10038
    %vm10045 = vmor %vm10043, %vm10044
    %v10046 = vsel %vm10045, %v10038, %v10042
    %v10047 = vand.u32 2147483647, %v9812
    %vm10048 = vcmp.eq.f32.partialorder %v10047, 8.507059e+37
    %v10049 = vand.u32 %v9812, 2147483648
    %v10050 = vor.u32 1.1754944e-38, %v10049
    %v10051 = vsel %vm10048, %v10050, %v10046
    %v10052 = vmul.f32 %v9764, %v10051
    %10053 = vst.msk [vmem:[%s21] sm:$0xff] %vm9668, %v9827
    %10054 = vst.msk [vmem:[%s21 + $0x8] sm:$0xff] %vm9668, %v9842
    %10055 = vst.msk [vmem:[%s21 + $0x10] sm:$0xff] %vm9668, %v9857
    %10056 = vst.msk [vmem:[%s21 + $0x18] sm:$0xff] %vm9668, %v9872
    %10057 = vst.msk [vmem:[%s21 + $0x20] sm:$0xff] %vm9668, %v9887
    %10058 = vst.msk [vmem:[%s21 + $0x28] sm:$0xff] %vm9668, %v9902
    %10059 = vst.msk [vmem:[%s21 + $0x30] sm:$0xff] %vm9668, %v9917
    %10060 = vst.msk [vmem:[%s21 + $0x38] sm:$0xff] %vm9668, %v9932
    %10061 = vst.msk [vmem:[%s21 + $0x40] sm:$0xff] %vm9668, %v9947
    %10062 = vst.msk [vmem:[%s21 + $0x48] sm:$0xff] %vm9668, %v9962
    %10063 = vst.msk [vmem:[%s21 + $0x50] sm:$0xff] %vm9668, %v9977
    %10064 = vst.msk [vmem:[%s21 + $0x58] sm:$0xff] %vm9668, %v9992
    %10065 = vst.msk [vmem:[%s21 + $0x60] sm:$0xff] %vm9668, %v10007
    %10066 = vst.msk [vmem:[%s21 + $0x68] sm:$0xff] %vm9668, %v10022
    %10067 = vst.msk [vmem:[%s21 + $0x70] sm:$0xff] %vm9668, %v10037
    %10068 = vst.msk [vmem:[%s21 + $0x78] sm:$0xff] %vm9668, %v10052
    // Predicated region
    $region90: #{grtrans_forward.1} parent=1 // pred_check
      _
    $region91: #{grtrans_forward.1} parent=1 // pred_check_branch
      %10070 = sbr.rel (0) target = $region93
    $region92: #{grtrans_forward.1} parent=1 // pred_region
      _
    $region93: #{grtrans_forward.1} parent=1 // pred_fallthru
      _
    // Predicated region
    $region94: #{grtrans_forward.1} parent=1 // pred_check
      _
    $region95: #{grtrans_forward.1} parent=1 // pred_check_branch
      %10072 = sbr.rel (0) target = $region97
    $region96: #{grtrans_forward.1} parent=1 // pred_region
      %10074 = vsyncadd [#allocation8], 0
      %s10075 = sshll.u32 [#allocation10], 4
      %s10076 = int_to_ptr.vmem [resolvable:$true] %s10075
      %s10077 = sshll.u32 %s22, 4
      %s10078 = int_to_ptr.hbm [resolvable:$true] %s10077
      %10083 = dma.vmem_to_hbm [thread:$0]  %s10076, 2048, %s10078, [#allocation8], 128, 128, 8
    $region97: #{grtrans_forward.1} parent=1 // pred_fallthru
      _
    // Predicated region
    $region98: #{grtrans_forward.1} parent=1 // pred_check
      _
    $region99: #{grtrans_forward.1} parent=1 // pred_check_branch
      %10085 = sbr.rel (0) target = $region101
    $region100: #{grtrans_forward.1} parent=1 // pred_region
      _
    $region101: #{grtrans_forward.1} parent=1 // pred_fallthru
      _
    // Predicated region
    $region102: #{grtrans_forward.1} parent=1 // pred_check
      _
    $region103: #{grtrans_forward.1} parent=1 // pred_check_branch
      %10087 = sbr.rel (0) target = $region105
    $region104: #{grtrans_forward.1} parent=1 // pred_region
      %10089 = dma.done [#allocation8], 2048
    $region105: #{grtrans_forward.1} parent=1 // pred_fallthru
      _
    %10090 = vsyncpa [#allocation8], 1
    %10091 = vsyncpa [#allocation9], 1

</llo_original>
